<compile_context>
chip_gen: v6e
topology: v6e:2x2x1
jax: 0.10.0
libtpu: 0.0.40
codegen_flags: <defaults>
</compile_context>

<pallas_src>
import jax
import jax.numpy as jnp
import numpy as np
from jax.experimental import pallas as pl
from jax.experimental.pallas import tpu as pltpu

LANE = 128  # lane-dense padding for the logits store


# ----------------------------------------------------------------------------
# Fused kernel: input projection + bidirectional recurrence + classifier head
# ----------------------------------------------------------------------------
def bilstm_classifier_kernel(x_ref, wih_ref, bias_ref, whh_f_ref, whh_b_ref,
                             w1f_ref, w1b_ref, b1_ref, w2_ref, b2_ref,
                             out_ref, gx_sc):
    """Shapes:
       x_ref   : (T*B, D)  bf16   time-major flattened (row = t*B + b)
       wih_ref : (D, 8H)   bf16   [W_ih_fwd | W_ih_bwd] (pre-transposed)
       bias_ref: (1, 8H)   f32    [b_fwd | b_bwd]  (b_ih + b_hh per direction)
       whh_*   : (H, 4H)   bf16   recurrent weights (pre-transposed)
       w1f/w1b : (H, 64)   f32    top/bottom halves of classifier W1^T
       b1      : (1, 64)   f32
       w2      : (64, 128) f32    lane-padded W2^T
       b2      : (1, 128)  f32    lane-padded
       out_ref : (B, 128)  f32    lane-padded logits
       gx_sc   : (T*B, 8H) f32    VMEM scratch for the hoisted input projection
    """
    B = out_ref.shape[0]
    TB = x_ref.shape[0]
    T = TB // B
    H = whh_f_ref.shape[0]
    H4 = 4 * H

    # ---- Hoisted input projection: one big matmul for both directions ----
    gx_sc[...] = (jnp.dot(x_ref[...], wih_ref[...],
                          preferred_element_type=jnp.float32) + bias_ref[...])

    def lstm_cell(gates, c):
        # PyTorch gate order: i, f, g, o
        i_g = jax.nn.sigmoid(gates[:, 0 * H:1 * H])
        f_g = jax.nn.sigmoid(gates[:, 1 * H:2 * H])
        g_g = jnp.tanh(gates[:, 2 * H:3 * H])
        o_g = jax.nn.sigmoid(gates[:, 3 * H:4 * H])
        c_new = f_g * c + i_g * g_g
        h_new = o_g * jnp.tanh(c_new)
        return h_new, c_new

    def step(t, carry):
        h_f, c_f, h_b, c_b = carry
        off_f = pl.multiple_of(t * B, B)             # forward direction: timestep t
        off_b = pl.multiple_of((T - 1 - t) * B, B)   # backward direction: timestep T-1-t
        gx_f = gx_sc[pl.ds(off_f, B), :H4]
        gx_b = gx_sc[pl.ds(off_b, B), H4:]
        gates_f = gx_f + jnp.dot(h_f.astype(jnp.bfloat16), whh_f_ref[...],
                                 preferred_element_type=jnp.float32)
        gates_b = gx_b + jnp.dot(h_b.astype(jnp.bfloat16), whh_b_ref[...],
                                 preferred_element_type=jnp.float32)
        h_f, c_f = lstm_cell(gates_f, c_f)
        h_b, c_b = lstm_cell(gates_b, c_b)
        return h_f, c_f, h_b, c_b

    zeros = jnp.zeros((B, H), jnp.float32)
    h_f, c_f, h_b, c_b = jax.lax.fori_loop(
        0, T, step, (zeros, zeros, zeros, zeros), unroll=True)

    # ---- Classifier: Linear(2H->64) -> ReLU -> Dropout(eval identity) -> Linear ----
    # concat(h_fwd, h_bwd) @ W1^T expressed as a split matmul sum (no in-kernel concat).
    z1 = (jnp.dot(h_f, w1f_ref[...], preferred_element_type=jnp.float32)
          + jnp.dot(h_b, w1b_ref[...], preferred_element_type=jnp.float32)
          + b1_ref[...])
    z1 = jnp.maximum(z1, 0.0)
    logits = jnp.dot(z1, w2_ref[...], preferred_element_type=jnp.float32) + b2_ref[...]
    out_ref[...] = logits.astype(out_ref.dtype)


# ----------------------------------------------------------------------------
# Wrapper
# ----------------------------------------------------------------------------
def lstm_classifier_forward(x, params):
    """x: (B, T, D) float32 (batch_first).  Returns (B, num_classes) float32."""
    B, T, D = x.shape
    H = params["w_hh_fwd_t"].shape[0]
    C = params["w2_t"].shape[1]

    # Time-major flatten (row = t*B + b); bf16 MXU operands.
    x_tm = jnp.transpose(x, (1, 0, 2)).reshape(T * B, D).astype(jnp.bfloat16)
    wih = jnp.concatenate([params["w_ih_fwd_t"], params["w_ih_bwd_t"]],
                          axis=1).astype(jnp.bfloat16)                 # (D, 8H)
    bias = jnp.concatenate([params["b_fwd"], params["b_bwd"]], axis=1)  # (1, 8H) f32
    whh_f = params["w_hh_fwd_t"].astype(jnp.bfloat16)                   # (H, 4H)
    whh_b = params["w_hh_bwd_t"].astype(jnp.bfloat16)                   # (H, 4H)
    w1f = params["w1_t"][:H]                                            # (H, 64)
    w1b = params["w1_t"][H:]                                            # (H, 64)
    # Pad final linear to 128 output lanes (lane-dense store); slice after the call.
    w2 = jnp.zeros((params["w2_t"].shape[0], LANE), jnp.float32).at[:, :C].set(params["w2_t"])
    b2 = jnp.zeros((1, LANE), jnp.float32).at[:, :C].set(params["b2"])

    out_pad = pl.pallas_call(
        bilstm_classifier_kernel,
        out_shape=jax.ShapeDtypeStruct((B, LANE), jnp.float32),
        scratch_shapes=[pltpu.VMEM((T * B, 8 * H), jnp.float32)],
    )(x_tm, wih, bias, whh_f, whh_b, w1f, w1b, params["b1"], w2, b2)
    return out_pad[:, :C]


# ----------------------------------------------------------------------------
# Pure-JAX reference (mirrors the kernel's bf16-operand / f32-accumulate math)
# ----------------------------------------------------------------------------
def _ref_forward(x, params):
    B, T, D = x.shape
    H = params["w_hh_fwd_t"].shape[0]
    x_tm = jnp.transpose(x, (1, 0, 2)).astype(jnp.bfloat16)  # (T, B, D)

    def run_dir(x_seq, w_ih, w_hh, bias):
        w_ih = w_ih.astype(jnp.bfloat16)
        w_hh = w_hh.astype(jnp.bfloat16)

        def step(carry, x_t):
            h, c = carry
            gates = (jnp.dot(x_t, w_ih, preferred_element_type=jnp.float32)
                     + jnp.dot(h.astype(jnp.bfloat16), w_hh,
                               preferred_element_type=jnp.float32)
                     + bias)
            i_g = jax.nn.sigmoid(gates[:, 0 * H:1 * H])
            f_g = jax.nn.sigmoid(gates[:, 1 * H:2 * H])
            g_g = jnp.tanh(gates[:, 2 * H:3 * H])
            o_g = jax.nn.sigmoid(gates[:, 3 * H:4 * H])
            c = f_g * c + i_g * g_g
            h = o_g * jnp.tanh(c)
            return (h, c), None

        init = (jnp.zeros((B, H), jnp.float32), jnp.zeros((B, H), jnp.float32))
        (h, _), _ = jax.lax.scan(step, init, x_seq)
        return h

    h_fwd = run_dir(x_tm, params["w_ih_fwd_t"], params["w_hh_fwd_t"], params["b_fwd"])
    h_bwd = run_dir(x_tm[::-1], params["w_ih_bwd_t"], params["w_hh_bwd_t"], params["b_bwd"])
    h_final = jnp.concatenate([h_fwd, h_bwd], axis=1)
    z1 = jnp.maximum(h_final @ params["w1_t"] + params["b1"], 0.0)
    return z1 @ params["w2_t"] + params["b2"]


# ----------------------------------------------------------------------------
# Deterministic parameter init (PyTorch-style uniform ranges, synthetic weights)
# ----------------------------------------------------------------------------
def init_params(key, input_dim, hidden_dim, clf_hidden, num_classes):
    ks = jax.random.split(key, 12)
    k_lstm = 1.0 / np.sqrt(hidden_dim)

    def u(k, shape, bound):
        return jax.random.uniform(k, shape, jnp.float32, -bound, bound)

    H4 = 4 * hidden_dim
    params = {
        # pre-transposed: (D, 4H) and (H, 4H); combined bias b_ih + b_hh as (1, 4H)
        "w_ih_fwd_t": u(ks[0], (input_dim, H4), k_lstm),
        "w_hh_fwd_t": u(ks[1], (hidden_dim, H4), k_lstm),
        "b_fwd": u(ks[2], (1, H4), k_lstm) + u(ks[3], (1, H4), k_lstm),
        "w_ih_bwd_t": u(ks[4], (input_dim, H4), k_lstm),
        "w_hh_bwd_t": u(ks[5], (hidden_dim, H4), k_lstm),
        "b_bwd": u(ks[6], (1, H4), k_lstm) + u(ks[7], (1, H4), k_lstm),
    }
    k1 = 1.0 / np.sqrt(2 * hidden_dim)
    k2 = 1.0 / np.sqrt(clf_hidden)
    params["w1_t"] = u(ks[8], (2 * hidden_dim, clf_hidden), k1)
    params["b1"] = u(ks[9], (1, clf_hidden), k1)
    params["w2_t"] = u(ks[10], (clf_hidden, num_classes), k2)
    params["b2"] = u(ks[11], (1, num_classes), k2)
    return params


if __name__ == "__main__":
    # Small shapes consistent with the module (input_dim scaled down from 768).
    B, T, D, H = 8, 16, 256, 128
    CLF_HIDDEN, NUM_CLASSES = 64, 2

    key = jax.random.PRNGKey(0)
    k_x, k_p = jax.random.split(key)
    x = jax.random.normal(k_x, (B, T, D), jnp.float32)
    params = init_params(k_p, D, H, CLF_HIDDEN, NUM_CLASSES)

    fwd = jax.jit(lstm_classifier_forward)
    out = jax.block_until_ready(fwd(x, params))
    assert out.shape == (B, NUM_CLASSES), out.shape

    ref = jax.block_until_ready(_ref_forward(x, params))
    np.testing.assert_allclose(np.asarray(out), np.asarray(ref), atol=1e-2, rtol=1e-2)

    print("KERNEL_OK")
</pallas_src>

<mosaic_0001>
module attributes {stable_mosaic.version = 11 : i64} {
  func.func @bilstm_classifier_kernel(%arg0: memref<128x256xbf16, #tpu.memory_space<vmem>>, %arg1: memref<256x1024xbf16, #tpu.memory_space<vmem>>, %arg2: memref<1x1024xf32, #tpu.memory_space<vmem>>, %arg3: memref<128x512xbf16, #tpu.memory_space<vmem>>, %arg4: memref<128x512xbf16, #tpu.memory_space<vmem>>, %arg5: memref<128x64xf32, #tpu.memory_space<vmem>>, %arg6: memref<128x64xf32, #tpu.memory_space<vmem>>, %arg7: memref<1x64xf32, #tpu.memory_space<vmem>>, %arg8: memref<64x128xf32, #tpu.memory_space<vmem>>, %arg9: memref<1x128xf32, #tpu.memory_space<vmem>>, %arg10: memref<8x128xf32, #tpu.memory_space<vmem>>, %arg11: memref<128x1024xf32, #tpu.memory_space<vmem>>) attributes {dimension_semantics = [], scalar_prefetch = 0 : i64, scratch_operands = 1 : i64, tpu.core_type = #tpu.core_type<tc>} {
    %c0 = arith.constant 0 : index
    %c0_0 = arith.constant 0 : index
    %0 = vector.load %arg0[%c0, %c0_0] : memref<128x256xbf16, #tpu.memory_space<vmem>>, vector<128x256xbf16>
    %c0_1 = arith.constant 0 : index
    %c0_2 = arith.constant 0 : index
    %1 = vector.load %arg1[%c0_1, %c0_2] : memref<256x1024xbf16, #tpu.memory_space<vmem>>, vector<256x1024xbf16>
    %cst = arith.constant dense<0.000000e+00> : vector<128x1024xf32>
    %2 = tpu.matmul %0, %1, %cst {dimension_numbers = #tpu.dot_dimension_numbers<[1], [0], [0], [1], [0, 0, 1, 1], [], []>} : vector<128x256xbf16>, vector<256x1024xbf16>, vector<128x1024xf32> -> vector<128x1024xf32>
    %c0_3 = arith.constant 0 : index
    %c0_4 = arith.constant 0 : index
    %3 = vector.load %arg2[%c0_3, %c0_4] : memref<1x1024xf32, #tpu.memory_space<vmem>>, vector<1x1024xf32>
    %4 = vector.broadcast %3 : vector<1x1024xf32> to vector<128x1024xf32>
    %5 = arith.addf %2, %4 : vector<128x1024xf32>
    %c0_5 = arith.constant 0 : index
    %c0_6 = arith.constant 0 : index
    %6 = vector.load %arg11[%c0_5, %c0_6] : memref<128x1024xf32, #tpu.memory_space<vmem>>, vector<128x1024xf32>
    tpu.vector_store %arg11[%c0_5, %c0_6], %5 {strides = array<i32>} : memref<128x1024xf32, #tpu.memory_space<vmem>>, vector<128x1024xf32>,
    %cst_7 = arith.constant 0.000000e+00 : f32
    %7 = vector.broadcast %cst_7 : f32 to vector<8x128xf32>
    %c0_i32 = arith.constant 0 : i32
    %c8_i32 = arith.constant 8 : i32
    %8 = arith.muli %c0_i32, %c8_i32 : i32
    %9 = tpu.assume_multiple %8, 8 : i32
    %c15_i32 = arith.constant 15 : i32
    %10 = arith.subi %c15_i32, %c0_i32 : i32
    %c8_i32_8 = arith.constant 8 : i32
    %11 = arith.muli %10, %c8_i32_8 : i32
    %12 = tpu.assume_multiple %11, 8 : i32
    %13 = arith.index_cast %9 : i32 to index
    %c0_9 = arith.constant 0 : index
    %14 = vector.load %arg11[%13, %c0_9] : memref<128x1024xf32, #tpu.memory_space<vmem>>, vector<8x512xf32>
    %15 = arith.index_cast %12 : i32 to index
    %c512 = arith.constant 512 : index
    %16 = vector.load %arg11[%15, %c512] : memref<128x1024xf32, #tpu.memory_space<vmem>>, vector<8x512xf32>
    %17 = arith.truncf %7 : vector<8x128xf32> to vector<8x128xbf16>
    %c0_10 = arith.constant 0 : index
    %c0_11 = arith.constant 0 : index
    %18 = vector.load %arg3[%c0_10, %c0_11] : memref<128x512xbf16, #tpu.memory_space<vmem>>, vector<128x512xbf16>
    %cst_12 = arith.constant dense<0.000000e+00> : vector<8x512xf32>
    %19 = tpu.matmul %17, %18, %cst_12 {dimension_numbers = #tpu.dot_dimension_numbers<[1], [0], [0], [1], [0, 0, 1, 1], [], []>} : vector<8x128xbf16>, vector<128x512xbf16>, vector<8x512xf32> -> vector<8x512xf32>
    %20 = arith.addf %14, %19 : vector<8x512xf32>
    %21 = arith.truncf %7 : vector<8x128xf32> to vector<8x128xbf16>
    %c0_13 = arith.constant 0 : index
    %c0_14 = arith.constant 0 : index
    %22 = vector.load %arg4[%c0_13, %c0_14] : memref<128x512xbf16, #tpu.memory_space<vmem>>, vector<128x512xbf16>
    %cst_15 = arith.constant dense<0.000000e+00> : vector<8x512xf32>
    %23 = tpu.matmul %21, %22, %cst_15 {dimension_numbers = #tpu.dot_dimension_numbers<[1], [0], [0], [1], [0, 0, 1, 1], [], []>} : vector<8x128xbf16>, vector<128x512xbf16>, vector<8x512xf32> -> vector<8x512xf32>
    %24 = arith.addf %16, %23 : vector<8x512xf32>
    %25 = vector.extract_strided_slice %20 {offsets = [0, 0], sizes = [8, 128], strides = [1, 1]} : vector<8x512xf32> to vector<8x128xf32>
    %26 = arith.negf %25 : vector<8x128xf32>
    %27 = math.exp %26 : vector<8x128xf32>
    %cst_16 = arith.constant 1.000000e+00 : f32
    %28 = vector.broadcast %cst_16 : f32 to vector<8x128xf32>
    %29 = arith.addf %28, %27 : vector<8x128xf32>
    %30 = arith.divf %28, %29 : vector<8x128xf32>
    %31 = vector.extract_strided_slice %20 {offsets = [0, 128], sizes = [8, 128], strides = [1, 1]} : vector<8x512xf32> to vector<8x128xf32>
    %32 = arith.negf %31 : vector<8x128xf32>
    %33 = math.exp %32 : vector<8x128xf32>
    %cst_17 = arith.constant 1.000000e+00 : f32
    %34 = vector.broadcast %cst_17 : f32 to vector<8x128xf32>
    %35 = arith.addf %34, %33 : vector<8x128xf32>
    %36 = arith.divf %34, %35 : vector<8x128xf32>
    %37 = vector.extract_strided_slice %20 {offsets = [0, 256], sizes = [8, 128], strides = [1, 1]} : vector<8x512xf32> to vector<8x128xf32>
    %38 = math.tanh %37 : vector<8x128xf32>
    %39 = vector.extract_strided_slice %20 {offsets = [0, 384], sizes = [8, 128], strides = [1, 1]} : vector<8x512xf32> to vector<8x128xf32>
    %40 = arith.negf %39 : vector<8x128xf32>
    %41 = math.exp %40 : vector<8x128xf32>
    %cst_18 = arith.constant 1.000000e+00 : f32
    %42 = vector.broadcast %cst_18 : f32 to vector<8x128xf32>
    %43 = arith.addf %42, %41 : vector<8x128xf32>
    %44 = arith.divf %42, %43 : vector<8x128xf32>
    %45 = arith.mulf %36, %7 : vector<8x128xf32>
    %46 = arith.mulf %30, %38 : vector<8x128xf32>
    %47 = arith.addf %45, %46 : vector<8x128xf32>
    %48 = math.tanh %47 : vector<8x128xf32>
    %49 = arith.mulf %44, %48 : vector<8x128xf32>
    %50 = vector.extract_strided_slice %24 {offsets = [0, 0], sizes = [8, 128], strides = [1, 1]} : vector<8x512xf32> to vector<8x128xf32>
    %51 = arith.negf %50 : vector<8x128xf32>
    %52 = math.exp %51 : vector<8x128xf32>
    %cst_19 = arith.constant 1.000000e+00 : f32
    %53 = vector.broadcast %cst_19 : f32 to vector<8x128xf32>
    %54 = arith.addf %53, %52 : vector<8x128xf32>
    %55 = arith.divf %53, %54 : vector<8x128xf32>
    %56 = vector.extract_strided_slice %24 {offsets = [0, 128], sizes = [8, 128], strides = [1, 1]} : vector<8x512xf32> to vector<8x128xf32>
    %57 = arith.negf %56 : vector<8x128xf32>
    %58 = math.exp %57 : vector<8x128xf32>
    %cst_20 = arith.constant 1.000000e+00 : f32
    %59 = vector.broadcast %cst_20 : f32 to vector<8x128xf32>
    %60 = arith.addf %59, %58 : vector<8x128xf32>
    %61 = arith.divf %59, %60 : vector<8x128xf32>
    %62 = vector.extract_strided_slice %24 {offsets = [0, 256], sizes = [8, 128], strides = [1, 1]} : vector<8x512xf32> to vector<8x128xf32>
    %63 = math.tanh %62 : vector<8x128xf32>
    %64 = vector.extract_strided_slice %24 {offsets = [0, 384], sizes = [8, 128], strides = [1, 1]} : vector<8x512xf32> to vector<8x128xf32>
    %65 = arith.negf %64 : vector<8x128xf32>
    %66 = math.exp %65 : vector<8x128xf32>
    %cst_21 = arith.constant 1.000000e+00 : f32
    %67 = vector.broadcast %cst_21 : f32 to vector<8x128xf32>
    %68 = arith.addf %67, %66 : vector<8x128xf32>
    %69 = arith.divf %67, %68 : vector<8x128xf32>
    %70 = arith.mulf %61, %7 : vector<8x128xf32>
    %71 = arith.mulf %55, %63 : vector<8x128xf32>
    %72 = arith.addf %70, %71 : vector<8x128xf32>
    %73 = math.tanh %72 : vector<8x128xf32>
    %74 = arith.mulf %69, %73 : vector<8x128xf32>
    %c1_i32 = arith.constant 1 : i32
    %c8_i32_22 = arith.constant 8 : i32
    %75 = arith.muli %c1_i32, %c8_i32_22 : i32
    %76 = tpu.assume_multiple %75, 8 : i32
    %c15_i32_23 = arith.constant 15 : i32
    %77 = arith.subi %c15_i32_23, %c1_i32 : i32
    %c8_i32_24 = arith.constant 8 : i32
    %78 = arith.muli %77, %c8_i32_24 : i32
    %79 = tpu.assume_multiple %78, 8 : i32
    %80 = arith.index_cast %76 : i32 to index
    %c0_25 = arith.constant 0 : index
    %81 = vector.load %arg11[%80, %c0_25] : memref<128x1024xf32, #tpu.memory_space<vmem>>, vector<8x512xf32>
    %82 = arith.index_cast %79 : i32 to index
    %c512_26 = arith.constant 512 : index
    %83 = vector.load %arg11[%82, %c512_26] : memref<128x1024xf32, #tpu.memory_space<vmem>>, vector<8x512xf32>
    %84 = arith.truncf %49 : vector<8x128xf32> to vector<8x128xbf16>
    %c0_27 = arith.constant 0 : index
    %c0_28 = arith.constant 0 : index
    %85 = vector.load %arg3[%c0_27, %c0_28] : memref<128x512xbf16, #tpu.memory_space<vmem>>, vector<128x512xbf16>
    %cst_29 = arith.constant dense<0.000000e+00> : vector<8x512xf32>
    %86 = tpu.matmul %84, %85, %cst_29 {dimension_numbers = #tpu.dot_dimension_numbers<[1], [0], [0], [1], [0, 0, 1, 1], [], []>} : vector<8x128xbf16>, vector<128x512xbf16>, vector<8x512xf32> -> vector<8x512xf32>
    %87 = arith.addf %81, %86 : vector<8x512xf32>
    %88 = arith.truncf %74 : vector<8x128xf32> to vector<8x128xbf16>
    %c0_30 = arith.constant 0 : index
    %c0_31 = arith.constant 0 : index
    %89 = vector.load %arg4[%c0_30, %c0_31] : memref<128x512xbf16, #tpu.memory_space<vmem>>, vector<128x512xbf16>
    %cst_32 = arith.constant dense<0.000000e+00> : vector<8x512xf32>
    %90 = tpu.matmul %88, %89, %cst_32 {dimension_numbers = #tpu.dot_dimension_numbers<[1], [0], [0], [1], [0, 0, 1, 1], [], []>} : vector<8x128xbf16>, vector<128x512xbf16>, vector<8x512xf32> -> vector<8x512xf32>
    %91 = arith.addf %83, %90 : vector<8x512xf32>
    %92 = vector.extract_strided_slice %87 {offsets = [0, 0], sizes = [8, 128], strides = [1, 1]} : vector<8x512xf32> to vector<8x128xf32>
    %93 = arith.negf %92 : vector<8x128xf32>
    %94 = math.exp %93 : vector<8x128xf32>
    %cst_33 = arith.constant 1.000000e+00 : f32
    %95 = vector.broadcast %cst_33 : f32 to vector<8x128xf32>
    %96 = arith.addf %95, %94 : vector<8x128xf32>
    %97 = arith.divf %95, %96 : vector<8x128xf32>
    %98 = vector.extract_strided_slice %87 {offsets = [0, 128], sizes = [8, 128], strides = [1, 1]} : vector<8x512xf32> to vector<8x128xf32>
    %99 = arith.negf %98 : vector<8x128xf32>
    %100 = math.exp %99 : vector<8x128xf32>
    %cst_34 = arith.constant 1.000000e+00 : f32
    %101 = vector.broadcast %cst_34 : f32 to vector<8x128xf32>
    %102 = arith.addf %101, %100 : vector<8x128xf32>
    %103 = arith.divf %101, %102 : vector<8x128xf32>
    %104 = vector.extract_strided_slice %87 {offsets = [0, 256], sizes = [8, 128], strides = [1, 1]} : vector<8x512xf32> to vector<8x128xf32>
    %105 = math.tanh %104 : vector<8x128xf32>
    %106 = vector.extract_strided_slice %87 {offsets = [0, 384], sizes = [8, 128], strides = [1, 1]} : vector<8x512xf32> to vector<8x128xf32>
    %107 = arith.negf %106 : vector<8x128xf32>
    %108 = math.exp %107 : vector<8x128xf32>
    %cst_35 = arith.constant 1.000000e+00 : f32
    %109 = vector.broadcast %cst_35 : f32 to vector<8x128xf32>
    %110 = arith.addf %109, %108 : vector<8x128xf32>
    %111 = arith.divf %109, %110 : vector<8x128xf32>
    %112 = arith.mulf %103, %47 : vector<8x128xf32>
    %113 = arith.mulf %97, %105 : vector<8x128xf32>
    %114 = arith.addf %112, %113 : vector<8x128xf32>
    %115 = math.tanh %114 : vector<8x128xf32>
    %116 = arith.mulf %111, %115 : vector<8x128xf32>
    %117 = vector.extract_strided_slice %91 {offsets = [0, 0], sizes = [8, 128], strides = [1, 1]} : vector<8x512xf32> to vector<8x128xf32>
    %118 = arith.negf %117 : vector<8x128xf32>
    %119 = math.exp %118 : vector<8x128xf32>
    %cst_36 = arith.constant 1.000000e+00 : f32
    %120 = vector.broadcast %cst_36 : f32 to vector<8x128xf32>
    %121 = arith.addf %120, %119 : vector<8x128xf32>
    %122 = arith.divf %120, %121 : vector<8x128xf32>
    %123 = vector.extract_strided_slice %91 {offsets = [0, 128], sizes = [8, 128], strides = [1, 1]} : vector<8x512xf32> to vector<8x128xf32>
    %124 = arith.negf %123 : vector<8x128xf32>
    %125 = math.exp %124 : vector<8x128xf32>
    %cst_37 = arith.constant 1.000000e+00 : f32
    %126 = vector.broadcast %cst_37 : f32 to vector<8x128xf32>
    %127 = arith.addf %126, %125 : vector<8x128xf32>
    %128 = arith.divf %126, %127 : vector<8x128xf32>
    %129 = vector.extract_strided_slice %91 {offsets = [0, 256], sizes = [8, 128], strides = [1, 1]} : vector<8x512xf32> to vector<8x128xf32>
    %130 = math.tanh %129 : vector<8x128xf32>
    %131 = vector.extract_strided_slice %91 {offsets = [0, 384], sizes = [8, 128], strides = [1, 1]} : vector<8x512xf32> to vector<8x128xf32>
    %132 = arith.negf %131 : vector<8x128xf32>
    %133 = math.exp %132 : vector<8x128xf32>
    %cst_38 = arith.constant 1.000000e+00 : f32
    %134 = vector.broadcast %cst_38 : f32 to vector<8x128xf32>
    %135 = arith.addf %134, %133 : vector<8x128xf32>
    %136 = arith.divf %134, %135 : vector<8x128xf32>
    %137 = arith.mulf %128, %72 : vector<8x128xf32>
    %138 = arith.mulf %122, %130 : vector<8x128xf32>
    %139 = arith.addf %137, %138 : vector<8x128xf32>
    %140 = math.tanh %139 : vector<8x128xf32>
    %141 = arith.mulf %136, %140 : vector<8x128xf32>
    %c2_i32 = arith.constant 2 : i32
    %c8_i32_39 = arith.constant 8 : i32
    %142 = arith.muli %c2_i32, %c8_i32_39 : i32
    %143 = tpu.assume_multiple %142, 8 : i32
    %c15_i32_40 = arith.constant 15 : i32
    %144 = arith.subi %c15_i32_40, %c2_i32 : i32
    %c8_i32_41 = arith.constant 8 : i32
    %145 = arith.muli %144, %c8_i32_41 : i32
    %146 = tpu.assume_multiple %145, 8 : i32
    %147 = arith.index_cast %143 : i32 to index
    %c0_42 = arith.constant 0 : index
    %148 = vector.load %arg11[%147, %c0_42] : memref<128x1024xf32, #tpu.memory_space<vmem>>, vector<8x512xf32>
    %149 = arith.index_cast %146 : i32 to index
    %c512_43 = arith.constant 512 : index
    %150 = vector.load %arg11[%149, %c512_43] : memref<128x1024xf32, #tpu.memory_space<vmem>>, vector<8x512xf32>
    %151 = arith.truncf %116 : vector<8x128xf32> to vector<8x128xbf16>
    %c0_44 = arith.constant 0 : index
    %c0_45 = arith.constant 0 : index
    %152 = vector.load %arg3[%c0_44, %c0_45] : memref<128x512xbf16, #tpu.memory_space<vmem>>, vector<128x512xbf16>
    %cst_46 = arith.constant dense<0.000000e+00> : vector<8x512xf32>
    %153 = tpu.matmul %151, %152, %cst_46 {dimension_numbers = #tpu.dot_dimension_numbers<[1], [0], [0], [1], [0, 0, 1, 1], [], []>} : vector<8x128xbf16>, vector<128x512xbf16>, vector<8x512xf32> -> vector<8x512xf32>
    %154 = arith.addf %148, %153 : vector<8x512xf32>
    %155 = arith.truncf %141 : vector<8x128xf32> to vector<8x128xbf16>
    %c0_47 = arith.constant 0 : index
    %c0_48 = arith.constant 0 : index
    %156 = vector.load %arg4[%c0_47, %c0_48] : memref<128x512xbf16, #tpu.memory_space<vmem>>, vector<128x512xbf16>
    %cst_49 = arith.constant dense<0.000000e+00> : vector<8x512xf32>
    %157 = tpu.matmul %155, %156, %cst_49 {dimension_numbers = #tpu.dot_dimension_numbers<[1], [0], [0], [1], [0, 0, 1, 1], [], []>} : vector<8x128xbf16>, vector<128x512xbf16>, vector<8x512xf32> -> vector<8x512xf32>
    %158 = arith.addf %150, %157 : vector<8x512xf32>
    %159 = vector.extract_strided_slice %154 {offsets = [0, 0], sizes = [8, 128], strides = [1, 1]} : vector<8x512xf32> to vector<8x128xf32>
    %160 = arith.negf %159 : vector<8x128xf32>
    %161 = math.exp %160 : vector<8x128xf32>
    %cst_50 = arith.constant 1.000000e+00 : f32
    %162 = vector.broadcast %cst_50 : f32 to vector<8x128xf32>
    %163 = arith.addf %162, %161 : vector<8x128xf32>
    %164 = arith.divf %162, %163 : vector<8x128xf32>
    %165 = vector.extract_strided_slice %154 {offsets = [0, 128], sizes = [8, 128], strides = [1, 1]} : vector<8x512xf32> to vector<8x128xf32>
    %166 = arith.negf %165 : vector<8x128xf32>
    %167 = math.exp %166 : vector<8x128xf32>
    %cst_51 = arith.constant 1.000000e+00 : f32
    %168 = vector.broadcast %cst_51 : f32 to vector<8x128xf32>
    %169 = arith.addf %168, %167 : vector<8x128xf32>
    %170 = arith.divf %168, %169 : vector<8x128xf32>
    %171 = vector.extract_strided_slice %154 {offsets = [0, 256], sizes = [8, 128], strides = [1, 1]} : vector<8x512xf32> to vector<8x128xf32>
    %172 = math.tanh %171 : vector<8x128xf32>
    %173 = vector.extract_strided_slice %154 {offsets = [0, 384], sizes = [8, 128], strides = [1, 1]} : vector<8x512xf32> to vector<8x128xf32>
    %174 = arith.negf %173 : vector<8x128xf32>
    %175 = math.exp %174 : vector<8x128xf32>
    %cst_52 = arith.constant 1.000000e+00 : f32
    %176 = vector.broadcast %cst_52 : f32 to vector<8x128xf32>
    %177 = arith.addf %176, %175 : vector<8x128xf32>
    %178 = arith.divf %176, %177 : vector<8x128xf32>
    %179 = arith.mulf %170, %114 : vector<8x128xf32>
    %180 = arith.mulf %164, %172 : vector<8x128xf32>
    %181 = arith.addf %179, %180 : vector<8x128xf32>
    %182 = math.tanh %181 : vector<8x128xf32>
    %183 = arith.mulf %178, %182 : vector<8x128xf32>
    %184 = vector.extract_strided_slice %158 {offsets = [0, 0], sizes = [8, 128], strides = [1, 1]} : vector<8x512xf32> to vector<8x128xf32>
    %185 = arith.negf %184 : vector<8x128xf32>
    %186 = math.exp %185 : vector<8x128xf32>
    %cst_53 = arith.constant 1.000000e+00 : f32
    %187 = vector.broadcast %cst_53 : f32 to vector<8x128xf32>
    %188 = arith.addf %187, %186 : vector<8x128xf32>
    %189 = arith.divf %187, %188 : vector<8x128xf32>
    %190 = vector.extract_strided_slice %158 {offsets = [0, 128], sizes = [8, 128], strides = [1, 1]} : vector<8x512xf32> to vector<8x128xf32>
    %191 = arith.negf %190 : vector<8x128xf32>
    %192 = math.exp %191 : vector<8x128xf32>
    %cst_54 = arith.constant 1.000000e+00 : f32
    %193 = vector.broadcast %cst_54 : f32 to vector<8x128xf32>
    %194 = arith.addf %193, %192 : vector<8x128xf32>
    %195 = arith.divf %193, %194 : vector<8x128xf32>
    %196 = vector.extract_strided_slice %158 {offsets = [0, 256], sizes = [8, 128], strides = [1, 1]} : vector<8x512xf32> to vector<8x128xf32>
    %197 = math.tanh %196 : vector<8x128xf32>
    %198 = vector.extract_strided_slice %158 {offsets = [0, 384], sizes = [8, 128], strides = [1, 1]} : vector<8x512xf32> to vector<8x128xf32>
    %199 = arith.negf %198 : vector<8x128xf32>
    %200 = math.exp %199 : vector<8x128xf32>
    %cst_55 = arith.constant 1.000000e+00 : f32
    %201 = vector.broadcast %cst_55 : f32 to vector<8x128xf32>
    %202 = arith.addf %201, %200 : vector<8x128xf32>
    %203 = arith.divf %201, %202 : vector<8x128xf32>
    %204 = arith.mulf %195, %139 : vector<8x128xf32>
    %205 = arith.mulf %189, %197 : vector<8x128xf32>
    %206 = arith.addf %204, %205 : vector<8x128xf32>
    %207 = math.tanh %206 : vector<8x128xf32>
    %208 = arith.mulf %203, %207 : vector<8x128xf32>
    %c3_i32 = arith.constant 3 : i32
    %c8_i32_56 = arith.constant 8 : i32
    %209 = arith.muli %c3_i32, %c8_i32_56 : i32
    %210 = tpu.assume_multiple %209, 8 : i32
    %c15_i32_57 = arith.constant 15 : i32
    %211 = arith.subi %c15_i32_57, %c3_i32 : i32
    %c8_i32_58 = arith.constant 8 : i32
    %212 = arith.muli %211, %c8_i32_58 : i32
    %213 = tpu.assume_multiple %212, 8 : i32
    %214 = arith.index_cast %210 : i32 to index
    %c0_59 = arith.constant 0 : index
    %215 = vector.load %arg11[%214, %c0_59] : memref<128x1024xf32, #tpu.memory_space<vmem>>, vector<8x512xf32>
    %216 = arith.index_cast %213 : i32 to index
    %c512_60 = arith.constant 512 : index
    %217 = vector.load %arg11[%216, %c512_60] : memref<128x1024xf32, #tpu.memory_space<vmem>>, vector<8x512xf32>
    %218 = arith.truncf %183 : vector<8x128xf32> to vector<8x128xbf16>
    %c0_61 = arith.constant 0 : index
    %c0_62 = arith.constant 0 : index
    %219 = vector.load %arg3[%c0_61, %c0_62] : memref<128x512xbf16, #tpu.memory_space<vmem>>, vector<128x512xbf16>
    %cst_63 = arith.constant dense<0.000000e+00> : vector<8x512xf32>
    %220 = tpu.matmul %218, %219, %cst_63 {dimension_numbers = #tpu.dot_dimension_numbers<[1], [0], [0], [1], [0, 0, 1, 1], [], []>} : vector<8x128xbf16>, vector<128x512xbf16>, vector<8x512xf32> -> vector<8x512xf32>
    %221 = arith.addf %215, %220 : vector<8x512xf32>
    %222 = arith.truncf %208 : vector<8x128xf32> to vector<8x128xbf16>
    %c0_64 = arith.constant 0 : index
    %c0_65 = arith.constant 0 : index
    %223 = vector.load %arg4[%c0_64, %c0_65] : memref<128x512xbf16, #tpu.memory_space<vmem>>, vector<128x512xbf16>
    %cst_66 = arith.constant dense<0.000000e+00> : vector<8x512xf32>
    %224 = tpu.matmul %222, %223, %cst_66 {dimension_numbers = #tpu.dot_dimension_numbers<[1], [0], [0], [1], [0, 0, 1, 1], [], []>} : vector<8x128xbf16>, vector<128x512xbf16>, vector<8x512xf32> -> vector<8x512xf32>
    %225 = arith.addf %217, %224 : vector<8x512xf32>
    %226 = vector.extract_strided_slice %221 {offsets = [0, 0], sizes = [8, 128], strides = [1, 1]} : vector<8x512xf32> to vector<8x128xf32>
    %227 = arith.negf %226 : vector<8x128xf32>
    %228 = math.exp %227 : vector<8x128xf32>
    %cst_67 = arith.constant 1.000000e+00 : f32
    %229 = vector.broadcast %cst_67 : f32 to vector<8x128xf32>
    %230 = arith.addf %229, %228 : vector<8x128xf32>
    %231 = arith.divf %229, %230 : vector<8x128xf32>
    %232 = vector.extract_strided_slice %221 {offsets = [0, 128], sizes = [8, 128], strides = [1, 1]} : vector<8x512xf32> to vector<8x128xf32>
    %233 = arith.negf %232 : vector<8x128xf32>
    %234 = math.exp %233 : vector<8x128xf32>
    %cst_68 = arith.constant 1.000000e+00 : f32
    %235 = vector.broadcast %cst_68 : f32 to vector<8x128xf32>
    %236 = arith.addf %235, %234 : vector<8x128xf32>
    %237 = arith.divf %235, %236 : vector<8x128xf32>
    %238 = vector.extract_strided_slice %221 {offsets = [0, 256], sizes = [8, 128], strides = [1, 1]} : vector<8x512xf32> to vector<8x128xf32>
    %239 = math.tanh %238 : vector<8x128xf32>
    %240 = vector.extract_strided_slice %221 {offsets = [0, 384], sizes = [8, 128], strides = [1, 1]} : vector<8x512xf32> to vector<8x128xf32>
    %241 = arith.negf %240 : vector<8x128xf32>
    %242 = math.exp %241 : vector<8x128xf32>
    %cst_69 = arith.constant 1.000000e+00 : f32
    %243 = vector.broadcast %cst_69 : f32 to vector<8x128xf32>
    %244 = arith.addf %243, %242 : vector<8x128xf32>
    %245 = arith.divf %243, %244 : vector<8x128xf32>
    %246 = arith.mulf %237, %181 : vector<8x128xf32>
    %247 = arith.mulf %231, %239 : vector<8x128xf32>
    %248 = arith.addf %246, %247 : vector<8x128xf32>
    %249 = math.tanh %248 : vector<8x128xf32>
    %250 = arith.mulf %245, %249 : vector<8x128xf32>
    %251 = vector.extract_strided_slice %225 {offsets = [0, 0], sizes = [8, 128], strides = [1, 1]} : vector<8x512xf32> to vector<8x128xf32>
    %252 = arith.negf %251 : vector<8x128xf32>
    %253 = math.exp %252 : vector<8x128xf32>
    %cst_70 = arith.constant 1.000000e+00 : f32
    %254 = vector.broadcast %cst_70 : f32 to vector<8x128xf32>
    %255 = arith.addf %254, %253 : vector<8x128xf32>
    %256 = arith.divf %254, %255 : vector<8x128xf32>
    %257 = vector.extract_strided_slice %225 {offsets = [0, 128], sizes = [8, 128], strides = [1, 1]} : vector<8x512xf32> to vector<8x128xf32>
    %258 = arith.negf %257 : vector<8x128xf32>
    %259 = math.exp %258 : vector<8x128xf32>
    %cst_71 = arith.constant 1.000000e+00 : f32
    %260 = vector.broadcast %cst_71 : f32 to vector<8x128xf32>
    %261 = arith.addf %260, %259 : vector<8x128xf32>
    %262 = arith.divf %260, %261 : vector<8x128xf32>
    %263 = vector.extract_strided_slice %225 {offsets = [0, 256], sizes = [8, 128], strides = [1, 1]} : vector<8x512xf32> to vector<8x128xf32>
    %264 = math.tanh %263 : vector<8x128xf32>
    %265 = vector.extract_strided_slice %225 {offsets = [0, 384], sizes = [8, 128], strides = [1, 1]} : vector<8x512xf32> to vector<8x128xf32>
    %266 = arith.negf %265 : vector<8x128xf32>
    %267 = math.exp %266 : vector<8x128xf32>
    %cst_72 = arith.constant 1.000000e+00 : f32
    %268 = vector.broadcast %cst_72 : f32 to vector<8x128xf32>
    %269 = arith.addf %268, %267 : vector<8x128xf32>
    %270 = arith.divf %268, %269 : vector<8x128xf32>
    %271 = arith.mulf %262, %206 : vector<8x128xf32>
    %272 = arith.mulf %256, %264 : vector<8x128xf32>
    %273 = arith.addf %271, %272 : vector<8x128xf32>
    %274 = math.tanh %273 : vector<8x128xf32>
    %275 = arith.mulf %270, %274 : vector<8x128xf32>
    %c4_i32 = arith.constant 4 : i32
    %c8_i32_73 = arith.constant 8 : i32
    %276 = arith.muli %c4_i32, %c8_i32_73 : i32
    %277 = tpu.assume_multiple %276, 8 : i32
    %c15_i32_74 = arith.constant 15 : i32
    %278 = arith.subi %c15_i32_74, %c4_i32 : i32
    %c8_i32_75 = arith.constant 8 : i32
    %279 = arith.muli %278, %c8_i32_75 : i32
    %280 = tpu.assume_multiple %279, 8 : i32
    %281 = arith.index_cast %277 : i32 to index
    %c0_76 = arith.constant 0 : index
    %282 = vector.load %arg11[%281, %c0_76] : memref<128x1024xf32, #tpu.memory_space<vmem>>, vector<8x512xf32>
    %283 = arith.index_cast %280 : i32 to index
    %c512_77 = arith.constant 512 : index
    %284 = vector.load %arg11[%283, %c512_77] : memref<128x1024xf32, #tpu.memory_space<vmem>>, vector<8x512xf32>
    %285 = arith.truncf %250 : vector<8x128xf32> to vector<8x128xbf16>
    %c0_78 = arith.constant 0 : index
    %c0_79 = arith.constant 0 : index
    %286 = vector.load %arg3[%c0_78, %c0_79] : memref<128x512xbf16, #tpu.memory_space<vmem>>, vector<128x512xbf16>
    %cst_80 = arith.constant dense<0.000000e+00> : vector<8x512xf32>
    %287 = tpu.matmul %285, %286, %cst_80 {dimension_numbers = #tpu.dot_dimension_numbers<[1], [0], [0], [1], [0, 0, 1, 1], [], []>} : vector<8x128xbf16>, vector<128x512xbf16>, vector<8x512xf32> -> vector<8x512xf32>
    %288 = arith.addf %282, %287 : vector<8x512xf32>
    %289 = arith.truncf %275 : vector<8x128xf32> to vector<8x128xbf16>
    %c0_81 = arith.constant 0 : index
    %c0_82 = arith.constant 0 : index
    %290 = vector.load %arg4[%c0_81, %c0_82] : memref<128x512xbf16, #tpu.memory_space<vmem>>, vector<128x512xbf16>
    %cst_83 = arith.constant dense<0.000000e+00> : vector<8x512xf32>
    %291 = tpu.matmul %289, %290, %cst_83 {dimension_numbers = #tpu.dot_dimension_numbers<[1], [0], [0], [1], [0, 0, 1, 1], [], []>} : vector<8x128xbf16>, vector<128x512xbf16>, vector<8x512xf32> -> vector<8x512xf32>
    %292 = arith.addf %284, %291 : vector<8x512xf32>
    %293 = vector.extract_strided_slice %288 {offsets = [0, 0], sizes = [8, 128], strides = [1, 1]} : vector<8x512xf32> to vector<8x128xf32>
    %294 = arith.negf %293 : vector<8x128xf32>
    %295 = math.exp %294 : vector<8x128xf32>
    %cst_84 = arith.constant 1.000000e+00 : f32
    %296 = vector.broadcast %cst_84 : f32 to vector<8x128xf32>
    %297 = arith.addf %296, %295 : vector<8x128xf32>
    %298 = arith.divf %296, %297 : vector<8x128xf32>
    %299 = vector.extract_strided_slice %288 {offsets = [0, 128], sizes = [8, 128], strides = [1, 1]} : vector<8x512xf32> to vector<8x128xf32>
    %300 = arith.negf %299 : vector<8x128xf32>
    %301 = math.exp %300 : vector<8x128xf32>
    %cst_85 = arith.constant 1.000000e+00 : f32
    %302 = vector.broadcast %cst_85 : f32 to vector<8x128xf32>
    %303 = arith.addf %302, %301 : vector<8x128xf32>
    %304 = arith.divf %302, %303 : vector<8x128xf32>
    %305 = vector.extract_strided_slice %288 {offsets = [0, 256], sizes = [8, 128], strides = [1, 1]} : vector<8x512xf32> to vector<8x128xf32>
    %306 = math.tanh %305 : vector<8x128xf32>
    %307 = vector.extract_strided_slice %288 {offsets = [0, 384], sizes = [8, 128], strides = [1, 1]} : vector<8x512xf32> to vector<8x128xf32>
    %308 = arith.negf %307 : vector<8x128xf32>
    %309 = math.exp %308 : vector<8x128xf32>
    %cst_86 = arith.constant 1.000000e+00 : f32
    %310 = vector.broadcast %cst_86 : f32 to vector<8x128xf32>
    %311 = arith.addf %310, %309 : vector<8x128xf32>
    %312 = arith.divf %310, %311 : vector<8x128xf32>
    %313 = arith.mulf %304, %248 : vector<8x128xf32>
    %314 = arith.mulf %298, %306 : vector<8x128xf32>
    %315 = arith.addf %313, %314 : vector<8x128xf32>
    %316 = math.tanh %315 : vector<8x128xf32>
    %317 = arith.mulf %312, %316 : vector<8x128xf32>
    %318 = vector.extract_strided_slice %292 {offsets = [0, 0], sizes = [8, 128], strides = [1, 1]} : vector<8x512xf32> to vector<8x128xf32>
    %319 = arith.negf %318 : vector<8x128xf32>
    %320 = math.exp %319 : vector<8x128xf32>
    %cst_87 = arith.constant 1.000000e+00 : f32
    %321 = vector.broadcast %cst_87 : f32 to vector<8x128xf32>
    %322 = arith.addf %321, %320 : vector<8x128xf32>
    %323 = arith.divf %321, %322 : vector<8x128xf32>
    %324 = vector.extract_strided_slice %292 {offsets = [0, 128], sizes = [8, 128], strides = [1, 1]} : vector<8x512xf32> to vector<8x128xf32>
    %325 = arith.negf %324 : vector<8x128xf32>
    %326 = math.exp %325 : vector<8x128xf32>
    %cst_88 = arith.constant 1.000000e+00 : f32
    %327 = vector.broadcast %cst_88 : f32 to vector<8x128xf32>
    %328 = arith.addf %327, %326 : vector<8x128xf32>
    %329 = arith.divf %327, %328 : vector<8x128xf32>
    %330 = vector.extract_strided_slice %292 {offsets = [0, 256], sizes = [8, 128], strides = [1, 1]} : vector<8x512xf32> to vector<8x128xf32>
    %331 = math.tanh %330 : vector<8x128xf32>
    %332 = vector.extract_strided_slice %292 {offsets = [0, 384], sizes = [8, 128], strides = [1, 1]} : vector<8x512xf32> to vector<8x128xf32>
    %333 = arith.negf %332 : vector<8x128xf32>
    %334 = math.exp %333 : vector<8x128xf32>
    %cst_89 = arith.constant 1.000000e+00 : f32
    %335 = vector.broadcast %cst_89 : f32 to vector<8x128xf32>
    %336 = arith.addf %335, %334 : vector<8x128xf32>
    %337 = arith.divf %335, %336 : vector<8x128xf32>
    %338 = arith.mulf %329, %273 : vector<8x128xf32>
    %339 = arith.mulf %323, %331 : vector<8x128xf32>
    %340 = arith.addf %338, %339 : vector<8x128xf32>
    %341 = math.tanh %340 : vector<8x128xf32>
    %342 = arith.mulf %337, %341 : vector<8x128xf32>
    %c5_i32 = arith.constant 5 : i32
    %c8_i32_90 = arith.constant 8 : i32
    %343 = arith.muli %c5_i32, %c8_i32_90 : i32
    %344 = tpu.assume_multiple %343, 8 : i32
    %c15_i32_91 = arith.constant 15 : i32
    %345 = arith.subi %c15_i32_91, %c5_i32 : i32
    %c8_i32_92 = arith.constant 8 : i32
    %346 = arith.muli %345, %c8_i32_92 : i32
    %347 = tpu.assume_multiple %346, 8 : i32
    %348 = arith.index_cast %344 : i32 to index
    %c0_93 = arith.constant 0 : index
    %349 = vector.load %arg11[%348, %c0_93] : memref<128x1024xf32, #tpu.memory_space<vmem>>, vector<8x512xf32>
    %350 = arith.index_cast %347 : i32 to index
    %c512_94 = arith.constant 512 : index
    %351 = vector.load %arg11[%350, %c512_94] : memref<128x1024xf32, #tpu.memory_space<vmem>>, vector<8x512xf32>
    %352 = arith.truncf %317 : vector<8x128xf32> to vector<8x128xbf16>
    %c0_95 = arith.constant 0 : index
    %c0_96 = arith.constant 0 : index
    %353 = vector.load %arg3[%c0_95, %c0_96] : memref<128x512xbf16, #tpu.memory_space<vmem>>, vector<128x512xbf16>
    %cst_97 = arith.constant dense<0.000000e+00> : vector<8x512xf32>
    %354 = tpu.matmul %352, %353, %cst_97 {dimension_numbers = #tpu.dot_dimension_numbers<[1], [0], [0], [1], [0, 0, 1, 1], [], []>} : vector<8x128xbf16>, vector<128x512xbf16>, vector<8x512xf32> -> vector<8x512xf32>
    %355 = arith.addf %349, %354 : vector<8x512xf32>
    %356 = arith.truncf %342 : vector<8x128xf32> to vector<8x128xbf16>
    %c0_98 = arith.constant 0 : index
    %c0_99 = arith.constant 0 : index
    %357 = vector.load %arg4[%c0_98, %c0_99] : memref<128x512xbf16, #tpu.memory_space<vmem>>, vector<128x512xbf16>
    %cst_100 = arith.constant dense<0.000000e+00> : vector<8x512xf32>
    %358 = tpu.matmul %356, %357, %cst_100 {dimension_numbers = #tpu.dot_dimension_numbers<[1], [0], [0], [1], [0, 0, 1, 1], [], []>} : vector<8x128xbf16>, vector<128x512xbf16>, vector<8x512xf32> -> vector<8x512xf32>
    %359 = arith.addf %351, %358 : vector<8x512xf32>
    %360 = vector.extract_strided_slice %355 {offsets = [0, 0], sizes = [8, 128], strides = [1, 1]} : vector<8x512xf32> to vector<8x128xf32>
    %361 = arith.negf %360 : vector<8x128xf32>
    %362 = math.exp %361 : vector<8x128xf32>
    %cst_101 = arith.constant 1.000000e+00 : f32
    %363 = vector.broadcast %cst_101 : f32 to vector<8x128xf32>
    %364 = arith.addf %363, %362 : vector<8x128xf32>
    %365 = arith.divf %363, %364 : vector<8x128xf32>
    %366 = vector.extract_strided_slice %355 {offsets = [0, 128], sizes = [8, 128], strides = [1, 1]} : vector<8x512xf32> to vector<8x128xf32>
    %367 = arith.negf %366 : vector<8x128xf32>
    %368 = math.exp %367 : vector<8x128xf32>
    %cst_102 = arith.constant 1.000000e+00 : f32
    %369 = vector.broadcast %cst_102 : f32 to vector<8x128xf32>
    %370 = arith.addf %369, %368 : vector<8x128xf32>
    %371 = arith.divf %369, %370 : vector<8x128xf32>
    %372 = vector.extract_strided_slice %355 {offsets = [0, 256], sizes = [8, 128], strides = [1, 1]} : vector<8x512xf32> to vector<8x128xf32>
    %373 = math.tanh %372 : vector<8x128xf32>
    %374 = vector.extract_strided_slice %355 {offsets = [0, 384], sizes = [8, 128], strides = [1, 1]} : vector<8x512xf32> to vector<8x128xf32>
    %375 = arith.negf %374 : vector<8x128xf32>
    %376 = math.exp %375 : vector<8x128xf32>
    %cst_103 = arith.constant 1.000000e+00 : f32
    %377 = vector.broadcast %cst_103 : f32 to vector<8x128xf32>
    %378 = arith.addf %377, %376 : vector<8x128xf32>
    %379 = arith.divf %377, %378 : vector<8x128xf32>
    %380 = arith.mulf %371, %315 : vector<8x128xf32>
    %381 = arith.mulf %365, %373 : vector<8x128xf32>
    %382 = arith.addf %380, %381 : vector<8x128xf32>
    %383 = math.tanh %382 : vector<8x128xf32>
    %384 = arith.mulf %379, %383 : vector<8x128xf32>
    %385 = vector.extract_strided_slice %359 {offsets = [0, 0], sizes = [8, 128], strides = [1, 1]} : vector<8x512xf32> to vector<8x128xf32>
    %386 = arith.negf %385 : vector<8x128xf32>
    %387 = math.exp %386 : vector<8x128xf32>
    %cst_104 = arith.constant 1.000000e+00 : f32
    %388 = vector.broadcast %cst_104 : f32 to vector<8x128xf32>
    %389 = arith.addf %388, %387 : vector<8x128xf32>
    %390 = arith.divf %388, %389 : vector<8x128xf32>
    %391 = vector.extract_strided_slice %359 {offsets = [0, 128], sizes = [8, 128], strides = [1, 1]} : vector<8x512xf32> to vector<8x128xf32>
    %392 = arith.negf %391 : vector<8x128xf32>
    %393 = math.exp %392 : vector<8x128xf32>
    %cst_105 = arith.constant 1.000000e+00 : f32
    %394 = vector.broadcast %cst_105 : f32 to vector<8x128xf32>
    %395 = arith.addf %394, %393 : vector<8x128xf32>
    %396 = arith.divf %394, %395 : vector<8x128xf32>
    %397 = vector.extract_strided_slice %359 {offsets = [0, 256], sizes = [8, 128], strides = [1, 1]} : vector<8x512xf32> to vector<8x128xf32>
    %398 = math.tanh %397 : vector<8x128xf32>
    %399 = vector.extract_strided_slice %359 {offsets = [0, 384], sizes = [8, 128], strides = [1, 1]} : vector<8x512xf32> to vector<8x128xf32>
    %400 = arith.negf %399 : vector<8x128xf32>
    %401 = math.exp %400 : vector<8x128xf32>
    %cst_106 = arith.constant 1.000000e+00 : f32
    %402 = vector.broadcast %cst_106 : f32 to vector<8x128xf32>
    %403 = arith.addf %402, %401 : vector<8x128xf32>
    %404 = arith.divf %402, %403 : vector<8x128xf32>
    %405 = arith.mulf %396, %340 : vector<8x128xf32>
    %406 = arith.mulf %390, %398 : vector<8x128xf32>
    %407 = arith.addf %405, %406 : vector<8x128xf32>
    %408 = math.tanh %407 : vector<8x128xf32>
    %409 = arith.mulf %404, %408 : vector<8x128xf32>
    %c6_i32 = arith.constant 6 : i32
    %c8_i32_107 = arith.constant 8 : i32
    %410 = arith.muli %c6_i32, %c8_i32_107 : i32
    %411 = tpu.assume_multiple %410, 8 : i32
    %c15_i32_108 = arith.constant 15 : i32
    %412 = arith.subi %c15_i32_108, %c6_i32 : i32
    %c8_i32_109 = arith.constant 8 : i32
    %413 = arith.muli %412, %c8_i32_109 : i32
    %414 = tpu.assume_multiple %413, 8 : i32
    %415 = arith.index_cast %411 : i32 to index
    %c0_110 = arith.constant 0 : index
    %416 = vector.load %arg11[%415, %c0_110] : memref<128x1024xf32, #tpu.memory_space<vmem>>, vector<8x512xf32>
    %417 = arith.index_cast %414 : i32 to index
    %c512_111 = arith.constant 512 : index
    %418 = vector.load %arg11[%417, %c512_111] : memref<128x1024xf32, #tpu.memory_space<vmem>>, vector<8x512xf32>
    %419 = arith.truncf %384 : vector<8x128xf32> to vector<8x128xbf16>
    %c0_112 = arith.constant 0 : index
    %c0_113 = arith.constant 0 : index
    %420 = vector.load %arg3[%c0_112, %c0_113] : memref<128x512xbf16, #tpu.memory_space<vmem>>, vector<128x512xbf16>
    %cst_114 = arith.constant dense<0.000000e+00> : vector<8x512xf32>
    %421 = tpu.matmul %419, %420, %cst_114 {dimension_numbers = #tpu.dot_dimension_numbers<[1], [0], [0], [1], [0, 0, 1, 1], [], []>} : vector<8x128xbf16>, vector<128x512xbf16>, vector<8x512xf32> -> vector<8x512xf32>
    %422 = arith.addf %416, %421 : vector<8x512xf32>
    %423 = arith.truncf %409 : vector<8x128xf32> to vector<8x128xbf16>
    %c0_115 = arith.constant 0 : index
    %c0_116 = arith.constant 0 : index
    %424 = vector.load %arg4[%c0_115, %c0_116] : memref<128x512xbf16, #tpu.memory_space<vmem>>, vector<128x512xbf16>
    %cst_117 = arith.constant dense<0.000000e+00> : vector<8x512xf32>
    %425 = tpu.matmul %423, %424, %cst_117 {dimension_numbers = #tpu.dot_dimension_numbers<[1], [0], [0], [1], [0, 0, 1, 1], [], []>} : vector<8x128xbf16>, vector<128x512xbf16>, vector<8x512xf32> -> vector<8x512xf32>
    %426 = arith.addf %418, %425 : vector<8x512xf32>
    %427 = vector.extract_strided_slice %422 {offsets = [0, 0], sizes = [8, 128], strides = [1, 1]} : vector<8x512xf32> to vector<8x128xf32>
    %428 = arith.negf %427 : vector<8x128xf32>
    %429 = math.exp %428 : vector<8x128xf32>
    %cst_118 = arith.constant 1.000000e+00 : f32
    %430 = vector.broadcast %cst_118 : f32 to vector<8x128xf32>
    %431 = arith.addf %430, %429 : vector<8x128xf32>
    %432 = arith.divf %430, %431 : vector<8x128xf32>
    %433 = vector.extract_strided_slice %422 {offsets = [0, 128], sizes = [8, 128], strides = [1, 1]} : vector<8x512xf32> to vector<8x128xf32>
    %434 = arith.negf %433 : vector<8x128xf32>
    %435 = math.exp %434 : vector<8x128xf32>
    %cst_119 = arith.constant 1.000000e+00 : f32
    %436 = vector.broadcast %cst_119 : f32 to vector<8x128xf32>
    %437 = arith.addf %436, %435 : vector<8x128xf32>
    %438 = arith.divf %436, %437 : vector<8x128xf32>
    %439 = vector.extract_strided_slice %422 {offsets = [0, 256], sizes = [8, 128], strides = [1, 1]} : vector<8x512xf32> to vector<8x128xf32>
    %440 = math.tanh %439 : vector<8x128xf32>
    %441 = vector.extract_strided_slice %422 {offsets = [0, 384], sizes = [8, 128], strides = [1, 1]} : vector<8x512xf32> to vector<8x128xf32>
    %442 = arith.negf %441 : vector<8x128xf32>
    %443 = math.exp %442 : vector<8x128xf32>
    %cst_120 = arith.constant 1.000000e+00 : f32
    %444 = vector.broadcast %cst_120 : f32 to vector<8x128xf32>
    %445 = arith.addf %444, %443 : vector<8x128xf32>
    %446 = arith.divf %444, %445 : vector<8x128xf32>
    %447 = arith.mulf %438, %382 : vector<8x128xf32>
    %448 = arith.mulf %432, %440 : vector<8x128xf32>
    %449 = arith.addf %447, %448 : vector<8x128xf32>
    %450 = math.tanh %449 : vector<8x128xf32>
    %451 = arith.mulf %446, %450 : vector<8x128xf32>
    %452 = vector.extract_strided_slice %426 {offsets = [0, 0], sizes = [8, 128], strides = [1, 1]} : vector<8x512xf32> to vector<8x128xf32>
    %453 = arith.negf %452 : vector<8x128xf32>
    %454 = math.exp %453 : vector<8x128xf32>
    %cst_121 = arith.constant 1.000000e+00 : f32
    %455 = vector.broadcast %cst_121 : f32 to vector<8x128xf32>
    %456 = arith.addf %455, %454 : vector<8x128xf32>
    %457 = arith.divf %455, %456 : vector<8x128xf32>
    %458 = vector.extract_strided_slice %426 {offsets = [0, 128], sizes = [8, 128], strides = [1, 1]} : vector<8x512xf32> to vector<8x128xf32>
    %459 = arith.negf %458 : vector<8x128xf32>
    %460 = math.exp %459 : vector<8x128xf32>
    %cst_122 = arith.constant 1.000000e+00 : f32
    %461 = vector.broadcast %cst_122 : f32 to vector<8x128xf32>
    %462 = arith.addf %461, %460 : vector<8x128xf32>
    %463 = arith.divf %461, %462 : vector<8x128xf32>
    %464 = vector.extract_strided_slice %426 {offsets = [0, 256], sizes = [8, 128], strides = [1, 1]} : vector<8x512xf32> to vector<8x128xf32>
    %465 = math.tanh %464 : vector<8x128xf32>
    %466 = vector.extract_strided_slice %426 {offsets = [0, 384], sizes = [8, 128], strides = [1, 1]} : vector<8x512xf32> to vector<8x128xf32>
    %467 = arith.negf %466 : vector<8x128xf32>
    %468 = math.exp %467 : vector<8x128xf32>
    %cst_123 = arith.constant 1.000000e+00 : f32
    %469 = vector.broadcast %cst_123 : f32 to vector<8x128xf32>
    %470 = arith.addf %469, %468 : vector<8x128xf32>
    %471 = arith.divf %469, %470 : vector<8x128xf32>
    %472 = arith.mulf %463, %407 : vector<8x128xf32>
    %473 = arith.mulf %457, %465 : vector<8x128xf32>
    %474 = arith.addf %472, %473 : vector<8x128xf32>
    %475 = math.tanh %474 : vector<8x128xf32>
    %476 = arith.mulf %471, %475 : vector<8x128xf32>
    %c7_i32 = arith.constant 7 : i32
    %c8_i32_124 = arith.constant 8 : i32
    %477 = arith.muli %c7_i32, %c8_i32_124 : i32
    %478 = tpu.assume_multiple %477, 8 : i32
    %c15_i32_125 = arith.constant 15 : i32
    %479 = arith.subi %c15_i32_125, %c7_i32 : i32
    %c8_i32_126 = arith.constant 8 : i32
    %480 = arith.muli %479, %c8_i32_126 : i32
    %481 = tpu.assume_multiple %480, 8 : i32
    %482 = arith.index_cast %478 : i32 to index
    %c0_127 = arith.constant 0 : index
    %483 = vector.load %arg11[%482, %c0_127] : memref<128x1024xf32, #tpu.memory_space<vmem>>, vector<8x512xf32>
    %484 = arith.index_cast %481 : i32 to index
    %c512_128 = arith.constant 512 : index
    %485 = vector.load %arg11[%484, %c512_128] : memref<128x1024xf32, #tpu.memory_space<vmem>>, vector<8x512xf32>
    %486 = arith.truncf %451 : vector<8x128xf32> to vector<8x128xbf16>
    %c0_129 = arith.constant 0 : index
    %c0_130 = arith.constant 0 : index
    %487 = vector.load %arg3[%c0_129, %c0_130] : memref<128x512xbf16, #tpu.memory_space<vmem>>, vector<128x512xbf16>
    %cst_131 = arith.constant dense<0.000000e+00> : vector<8x512xf32>
    %488 = tpu.matmul %486, %487, %cst_131 {dimension_numbers = #tpu.dot_dimension_numbers<[1], [0], [0], [1], [0, 0, 1, 1], [], []>} : vector<8x128xbf16>, vector<128x512xbf16>, vector<8x512xf32> -> vector<8x512xf32>
    %489 = arith.addf %483, %488 : vector<8x512xf32>
    %490 = arith.truncf %476 : vector<8x128xf32> to vector<8x128xbf16>
    %c0_132 = arith.constant 0 : index
    %c0_133 = arith.constant 0 : index
    %491 = vector.load %arg4[%c0_132, %c0_133] : memref<128x512xbf16, #tpu.memory_space<vmem>>, vector<128x512xbf16>
    %cst_134 = arith.constant dense<0.000000e+00> : vector<8x512xf32>
    %492 = tpu.matmul %490, %491, %cst_134 {dimension_numbers = #tpu.dot_dimension_numbers<[1], [0], [0], [1], [0, 0, 1, 1], [], []>} : vector<8x128xbf16>, vector<128x512xbf16>, vector<8x512xf32> -> vector<8x512xf32>
    %493 = arith.addf %485, %492 : vector<8x512xf32>
    %494 = vector.extract_strided_slice %489 {offsets = [0, 0], sizes = [8, 128], strides = [1, 1]} : vector<8x512xf32> to vector<8x128xf32>
    %495 = arith.negf %494 : vector<8x128xf32>
    %496 = math.exp %495 : vector<8x128xf32>
    %cst_135 = arith.constant 1.000000e+00 : f32
    %497 = vector.broadcast %cst_135 : f32 to vector<8x128xf32>
    %498 = arith.addf %497, %496 : vector<8x128xf32>
    %499 = arith.divf %497, %498 : vector<8x128xf32>
    %500 = vector.extract_strided_slice %489 {offsets = [0, 128], sizes = [8, 128], strides = [1, 1]} : vector<8x512xf32> to vector<8x128xf32>
    %501 = arith.negf %500 : vector<8x128xf32>
    %502 = math.exp %501 : vector<8x128xf32>
    %cst_136 = arith.constant 1.000000e+00 : f32
    %503 = vector.broadcast %cst_136 : f32 to vector<8x128xf32>
    %504 = arith.addf %503, %502 : vector<8x128xf32>
    %505 = arith.divf %503, %504 : vector<8x128xf32>
    %506 = vector.extract_strided_slice %489 {offsets = [0, 256], sizes = [8, 128], strides = [1, 1]} : vector<8x512xf32> to vector<8x128xf32>
    %507 = math.tanh %506 : vector<8x128xf32>
    %508 = vector.extract_strided_slice %489 {offsets = [0, 384], sizes = [8, 128], strides = [1, 1]} : vector<8x512xf32> to vector<8x128xf32>
    %509 = arith.negf %508 : vector<8x128xf32>
    %510 = math.exp %509 : vector<8x128xf32>
    %cst_137 = arith.constant 1.000000e+00 : f32
    %511 = vector.broadcast %cst_137 : f32 to vector<8x128xf32>
    %512 = arith.addf %511, %510 : vector<8x128xf32>
    %513 = arith.divf %511, %512 : vector<8x128xf32>
    %514 = arith.mulf %505, %449 : vector<8x128xf32>
    %515 = arith.mulf %499, %507 : vector<8x128xf32>
    %516 = arith.addf %514, %515 : vector<8x128xf32>
    %517 = math.tanh %516 : vector<8x128xf32>
    %518 = arith.mulf %513, %517 : vector<8x128xf32>
    %519 = vector.extract_strided_slice %493 {offsets = [0, 0], sizes = [8, 128], strides = [1, 1]} : vector<8x512xf32> to vector<8x128xf32>
    %520 = arith.negf %519 : vector<8x128xf32>
    %521 = math.exp %520 : vector<8x128xf32>
    %cst_138 = arith.constant 1.000000e+00 : f32
    %522 = vector.broadcast %cst_138 : f32 to vector<8x128xf32>
    %523 = arith.addf %522, %521 : vector<8x128xf32>
    %524 = arith.divf %522, %523 : vector<8x128xf32>
    %525 = vector.extract_strided_slice %493 {offsets = [0, 128], sizes = [8, 128], strides = [1, 1]} : vector<8x512xf32> to vector<8x128xf32>
    %526 = arith.negf %525 : vector<8x128xf32>
    %527 = math.exp %526 : vector<8x128xf32>
    %cst_139 = arith.constant 1.000000e+00 : f32
    %528 = vector.broadcast %cst_139 : f32 to vector<8x128xf32>
    %529 = arith.addf %528, %527 : vector<8x128xf32>
    %530 = arith.divf %528, %529 : vector<8x128xf32>
    %531 = vector.extract_strided_slice %493 {offsets = [0, 256], sizes = [8, 128], strides = [1, 1]} : vector<8x512xf32> to vector<8x128xf32>
    %532 = math.tanh %531 : vector<8x128xf32>
    %533 = vector.extract_strided_slice %493 {offsets = [0, 384], sizes = [8, 128], strides = [1, 1]} : vector<8x512xf32> to vector<8x128xf32>
    %534 = arith.negf %533 : vector<8x128xf32>
    %535 = math.exp %534 : vector<8x128xf32>
    %cst_140 = arith.constant 1.000000e+00 : f32
    %536 = vector.broadcast %cst_140 : f32 to vector<8x128xf32>
    %537 = arith.addf %536, %535 : vector<8x128xf32>
    %538 = arith.divf %536, %537 : vector<8x128xf32>
    %539 = arith.mulf %530, %474 : vector<8x128xf32>
    %540 = arith.mulf %524, %532 : vector<8x128xf32>
    %541 = arith.addf %539, %540 : vector<8x128xf32>
    %542 = math.tanh %541 : vector<8x128xf32>
    %543 = arith.mulf %538, %542 : vector<8x128xf32>
    %c8_i32_141 = arith.constant 8 : i32
    %c8_i32_142 = arith.constant 8 : i32
    %544 = arith.muli %c8_i32_141, %c8_i32_142 : i32
    %545 = tpu.assume_multiple %544, 8 : i32
    %c15_i32_143 = arith.constant 15 : i32
    %546 = arith.subi %c15_i32_143, %c8_i32_141 : i32
    %c8_i32_144 = arith.constant 8 : i32
    %547 = arith.muli %546, %c8_i32_144 : i32
    %548 = tpu.assume_multiple %547, 8 : i32
    %549 = arith.index_cast %545 : i32 to index
    %c0_145 = arith.constant 0 : index
    %550 = vector.load %arg11[%549, %c0_145] : memref<128x1024xf32, #tpu.memory_space<vmem>>, vector<8x512xf32>
    %551 = arith.index_cast %548 : i32 to index
    %c512_146 = arith.constant 512 : index
    %552 = vector.load %arg11[%551, %c512_146] : memref<128x1024xf32, #tpu.memory_space<vmem>>, vector<8x512xf32>
    %553 = arith.truncf %518 : vector<8x128xf32> to vector<8x128xbf16>
    %c0_147 = arith.constant 0 : index
    %c0_148 = arith.constant 0 : index
    %554 = vector.load %arg3[%c0_147, %c0_148] : memref<128x512xbf16, #tpu.memory_space<vmem>>, vector<128x512xbf16>
    %cst_149 = arith.constant dense<0.000000e+00> : vector<8x512xf32>
    %555 = tpu.matmul %553, %554, %cst_149 {dimension_numbers = #tpu.dot_dimension_numbers<[1], [0], [0], [1], [0, 0, 1, 1], [], []>} : vector<8x128xbf16>, vector<128x512xbf16>, vector<8x512xf32> -> vector<8x512xf32>
    %556 = arith.addf %550, %555 : vector<8x512xf32>
    %557 = arith.truncf %543 : vector<8x128xf32> to vector<8x128xbf16>
    %c0_150 = arith.constant 0 : index
    %c0_151 = arith.constant 0 : index
    %558 = vector.load %arg4[%c0_150, %c0_151] : memref<128x512xbf16, #tpu.memory_space<vmem>>, vector<128x512xbf16>
    %cst_152 = arith.constant dense<0.000000e+00> : vector<8x512xf32>
    %559 = tpu.matmul %557, %558, %cst_152 {dimension_numbers = #tpu.dot_dimension_numbers<[1], [0], [0], [1], [0, 0, 1, 1], [], []>} : vector<8x128xbf16>, vector<128x512xbf16>, vector<8x512xf32> -> vector<8x512xf32>
    %560 = arith.addf %552, %559 : vector<8x512xf32>
    %561 = vector.extract_strided_slice %556 {offsets = [0, 0], sizes = [8, 128], strides = [1, 1]} : vector<8x512xf32> to vector<8x128xf32>
    %562 = arith.negf %561 : vector<8x128xf32>
    %563 = math.exp %562 : vector<8x128xf32>
    %cst_153 = arith.constant 1.000000e+00 : f32
    %564 = vector.broadcast %cst_153 : f32 to vector<8x128xf32>
    %565 = arith.addf %564, %563 : vector<8x128xf32>
    %566 = arith.divf %564, %565 : vector<8x128xf32>
    %567 = vector.extract_strided_slice %556 {offsets = [0, 128], sizes = [8, 128], strides = [1, 1]} : vector<8x512xf32> to vector<8x128xf32>
    %568 = arith.negf %567 : vector<8x128xf32>
    %569 = math.exp %568 : vector<8x128xf32>
    %cst_154 = arith.constant 1.000000e+00 : f32
    %570 = vector.broadcast %cst_154 : f32 to vector<8x128xf32>
    %571 = arith.addf %570, %569 : vector<8x128xf32>
    %572 = arith.divf %570, %571 : vector<8x128xf32>
    %573 = vector.extract_strided_slice %556 {offsets = [0, 256], sizes = [8, 128], strides = [1, 1]} : vector<8x512xf32> to vector<8x128xf32>
    %574 = math.tanh %573 : vector<8x128xf32>
    %575 = vector.extract_strided_slice %556 {offsets = [0, 384], sizes = [8, 128], strides = [1, 1]} : vector<8x512xf32> to vector<8x128xf32>
    %576 = arith.negf %575 : vector<8x128xf32>
    %577 = math.exp %576 : vector<8x128xf32>
    %cst_155 = arith.constant 1.000000e+00 : f32
    %578 = vector.broadcast %cst_155 : f32 to vector<8x128xf32>
    %579 = arith.addf %578, %577 : vector<8x128xf32>
    %580 = arith.divf %578, %579 : vector<8x128xf32>
    %581 = arith.mulf %572, %516 : vector<8x128xf32>
    %582 = arith.mulf %566, %574 : vector<8x128xf32>
    %583 = arith.addf %581, %582 : vector<8x128xf32>
    %584 = math.tanh %583 : vector<8x128xf32>
    %585 = arith.mulf %580, %584 : vector<8x128xf32>
    %586 = vector.extract_strided_slice %560 {offsets = [0, 0], sizes = [8, 128], strides = [1, 1]} : vector<8x512xf32> to vector<8x128xf32>
    %587 = arith.negf %586 : vector<8x128xf32>
    %588 = math.exp %587 : vector<8x128xf32>
    %cst_156 = arith.constant 1.000000e+00 : f32
    %589 = vector.broadcast %cst_156 : f32 to vector<8x128xf32>
    %590 = arith.addf %589, %588 : vector<8x128xf32>
    %591 = arith.divf %589, %590 : vector<8x128xf32>
    %592 = vector.extract_strided_slice %560 {offsets = [0, 128], sizes = [8, 128], strides = [1, 1]} : vector<8x512xf32> to vector<8x128xf32>
    %593 = arith.negf %592 : vector<8x128xf32>
    %594 = math.exp %593 : vector<8x128xf32>
    %cst_157 = arith.constant 1.000000e+00 : f32
    %595 = vector.broadcast %cst_157 : f32 to vector<8x128xf32>
    %596 = arith.addf %595, %594 : vector<8x128xf32>
    %597 = arith.divf %595, %596 : vector<8x128xf32>
    %598 = vector.extract_strided_slice %560 {offsets = [0, 256], sizes = [8, 128], strides = [1, 1]} : vector<8x512xf32> to vector<8x128xf32>
    %599 = math.tanh %598 : vector<8x128xf32>
    %600 = vector.extract_strided_slice %560 {offsets = [0, 384], sizes = [8, 128], strides = [1, 1]} : vector<8x512xf32> to vector<8x128xf32>
    %601 = arith.negf %600 : vector<8x128xf32>
    %602 = math.exp %601 : vector<8x128xf32>
    %cst_158 = arith.constant 1.000000e+00 : f32
    %603 = vector.broadcast %cst_158 : f32 to vector<8x128xf32>
    %604 = arith.addf %603, %602 : vector<8x128xf32>
    %605 = arith.divf %603, %604 : vector<8x128xf32>
    %606 = arith.mulf %597, %541 : vector<8x128xf32>
    %607 = arith.mulf %591, %599 : vector<8x128xf32>
    %608 = arith.addf %606, %607 : vector<8x128xf32>
    %609 = math.tanh %608 : vector<8x128xf32>
    %610 = arith.mulf %605, %609 : vector<8x128xf32>
    %c9_i32 = arith.constant 9 : i32
    %c8_i32_159 = arith.constant 8 : i32
    %611 = arith.muli %c9_i32, %c8_i32_159 : i32
    %612 = tpu.assume_multiple %611, 8 : i32
    %c15_i32_160 = arith.constant 15 : i32
    %613 = arith.subi %c15_i32_160, %c9_i32 : i32
    %c8_i32_161 = arith.constant 8 : i32
    %614 = arith.muli %613, %c8_i32_161 : i32
    %615 = tpu.assume_multiple %614, 8 : i32
    %616 = arith.index_cast %612 : i32 to index
    %c0_162 = arith.constant 0 : index
    %617 = vector.load %arg11[%616, %c0_162] : memref<128x1024xf32, #tpu.memory_space<vmem>>, vector<8x512xf32>
    %618 = arith.index_cast %615 : i32 to index
    %c512_163 = arith.constant 512 : index
    %619 = vector.load %arg11[%618, %c512_163] : memref<128x1024xf32, #tpu.memory_space<vmem>>, vector<8x512xf32>
    %620 = arith.truncf %585 : vector<8x128xf32> to vector<8x128xbf16>
    %c0_164 = arith.constant 0 : index
    %c0_165 = arith.constant 0 : index
    %621 = vector.load %arg3[%c0_164, %c0_165] : memref<128x512xbf16, #tpu.memory_space<vmem>>, vector<128x512xbf16>
    %cst_166 = arith.constant dense<0.000000e+00> : vector<8x512xf32>
    %622 = tpu.matmul %620, %621, %cst_166 {dimension_numbers = #tpu.dot_dimension_numbers<[1], [0], [0], [1], [0, 0, 1, 1], [], []>} : vector<8x128xbf16>, vector<128x512xbf16>, vector<8x512xf32> -> vector<8x512xf32>
    %623 = arith.addf %617, %622 : vector<8x512xf32>
    %624 = arith.truncf %610 : vector<8x128xf32> to vector<8x128xbf16>
    %c0_167 = arith.constant 0 : index
    %c0_168 = arith.constant 0 : index
    %625 = vector.load %arg4[%c0_167, %c0_168] : memref<128x512xbf16, #tpu.memory_space<vmem>>, vector<128x512xbf16>
    %cst_169 = arith.constant dense<0.000000e+00> : vector<8x512xf32>
    %626 = tpu.matmul %624, %625, %cst_169 {dimension_numbers = #tpu.dot_dimension_numbers<[1], [0], [0], [1], [0, 0, 1, 1], [], []>} : vector<8x128xbf16>, vector<128x512xbf16>, vector<8x512xf32> -> vector<8x512xf32>
    %627 = arith.addf %619, %626 : vector<8x512xf32>
    %628 = vector.extract_strided_slice %623 {offsets = [0, 0], sizes = [8, 128], strides = [1, 1]} : vector<8x512xf32> to vector<8x128xf32>
    %629 = arith.negf %628 : vector<8x128xf32>
    %630 = math.exp %629 : vector<8x128xf32>
    %cst_170 = arith.constant 1.000000e+00 : f32
    %631 = vector.broadcast %cst_170 : f32 to vector<8x128xf32>
    %632 = arith.addf %631, %630 : vector<8x128xf32>
    %633 = arith.divf %631, %632 : vector<8x128xf32>
    %634 = vector.extract_strided_slice %623 {offsets = [0, 128], sizes = [8, 128], strides = [1, 1]} : vector<8x512xf32> to vector<8x128xf32>
    %635 = arith.negf %634 : vector<8x128xf32>
    %636 = math.exp %635 : vector<8x128xf32>
    %cst_171 = arith.constant 1.000000e+00 : f32
    %637 = vector.broadcast %cst_171 : f32 to vector<8x128xf32>
    %638 = arith.addf %637, %636 : vector<8x128xf32>
    %639 = arith.divf %637, %638 : vector<8x128xf32>
    %640 = vector.extract_strided_slice %623 {offsets = [0, 256], sizes = [8, 128], strides = [1, 1]} : vector<8x512xf32> to vector<8x128xf32>
    %641 = math.tanh %640 : vector<8x128xf32>
    %642 = vector.extract_strided_slice %623 {offsets = [0, 384], sizes = [8, 128], strides = [1, 1]} : vector<8x512xf32> to vector<8x128xf32>
    %643 = arith.negf %642 : vector<8x128xf32>
    %644 = math.exp %643 : vector<8x128xf32>
    %cst_172 = arith.constant 1.000000e+00 : f32
    %645 = vector.broadcast %cst_172 : f32 to vector<8x128xf32>
    %646 = arith.addf %645, %644 : vector<8x128xf32>
    %647 = arith.divf %645, %646 : vector<8x128xf32>
    %648 = arith.mulf %639, %583 : vector<8x128xf32>
    %649 = arith.mulf %633, %641 : vector<8x128xf32>
    %650 = arith.addf %648, %649 : vector<8x128xf32>
    %651 = math.tanh %650 : vector<8x128xf32>
    %652 = arith.mulf %647, %651 : vector<8x128xf32>
    %653 = vector.extract_strided_slice %627 {offsets = [0, 0], sizes = [8, 128], strides = [1, 1]} : vector<8x512xf32> to vector<8x128xf32>
    %654 = arith.negf %653 : vector<8x128xf32>
    %655 = math.exp %654 : vector<8x128xf32>
    %cst_173 = arith.constant 1.000000e+00 : f32
    %656 = vector.broadcast %cst_173 : f32 to vector<8x128xf32>
    %657 = arith.addf %656, %655 : vector<8x128xf32>
    %658 = arith.divf %656, %657 : vector<8x128xf32>
    %659 = vector.extract_strided_slice %627 {offsets = [0, 128], sizes = [8, 128], strides = [1, 1]} : vector<8x512xf32> to vector<8x128xf32>
    %660 = arith.negf %659 : vector<8x128xf32>
    %661 = math.exp %660 : vector<8x128xf32>
    %cst_174 = arith.constant 1.000000e+00 : f32
    %662 = vector.broadcast %cst_174 : f32 to vector<8x128xf32>
    %663 = arith.addf %662, %661 : vector<8x128xf32>
    %664 = arith.divf %662, %663 : vector<8x128xf32>
    %665 = vector.extract_strided_slice %627 {offsets = [0, 256], sizes = [8, 128], strides = [1, 1]} : vector<8x512xf32> to vector<8x128xf32>
    %666 = math.tanh %665 : vector<8x128xf32>
    %667 = vector.extract_strided_slice %627 {offsets = [0, 384], sizes = [8, 128], strides = [1, 1]} : vector<8x512xf32> to vector<8x128xf32>
    %668 = arith.negf %667 : vector<8x128xf32>
    %669 = math.exp %668 : vector<8x128xf32>
    %cst_175 = arith.constant 1.000000e+00 : f32
    %670 = vector.broadcast %cst_175 : f32 to vector<8x128xf32>
    %671 = arith.addf %670, %669 : vector<8x128xf32>
    %672 = arith.divf %670, %671 : vector<8x128xf32>
    %673 = arith.mulf %664, %608 : vector<8x128xf32>
    %674 = arith.mulf %658, %666 : vector<8x128xf32>
    %675 = arith.addf %673, %674 : vector<8x128xf32>
    %676 = math.tanh %675 : vector<8x128xf32>
    %677 = arith.mulf %672, %676 : vector<8x128xf32>
    %c10_i32 = arith.constant 10 : i32
    %c8_i32_176 = arith.constant 8 : i32
    %678 = arith.muli %c10_i32, %c8_i32_176 : i32
    %679 = tpu.assume_multiple %678, 8 : i32
    %c15_i32_177 = arith.constant 15 : i32
    %680 = arith.subi %c15_i32_177, %c10_i32 : i32
    %c8_i32_178 = arith.constant 8 : i32
    %681 = arith.muli %680, %c8_i32_178 : i32
    %682 = tpu.assume_multiple %681, 8 : i32
    %683 = arith.index_cast %679 : i32 to index
    %c0_179 = arith.constant 0 : index
    %684 = vector.load %arg11[%683, %c0_179] : memref<128x1024xf32, #tpu.memory_space<vmem>>, vector<8x512xf32>
    %685 = arith.index_cast %682 : i32 to index
    %c512_180 = arith.constant 512 : index
    %686 = vector.load %arg11[%685, %c512_180] : memref<128x1024xf32, #tpu.memory_space<vmem>>, vector<8x512xf32>
    %687 = arith.truncf %652 : vector<8x128xf32> to vector<8x128xbf16>
    %c0_181 = arith.constant 0 : index
    %c0_182 = arith.constant 0 : index
    %688 = vector.load %arg3[%c0_181, %c0_182] : memref<128x512xbf16, #tpu.memory_space<vmem>>, vector<128x512xbf16>
    %cst_183 = arith.constant dense<0.000000e+00> : vector<8x512xf32>
    %689 = tpu.matmul %687, %688, %cst_183 {dimension_numbers = #tpu.dot_dimension_numbers<[1], [0], [0], [1], [0, 0, 1, 1], [], []>} : vector<8x128xbf16>, vector<128x512xbf16>, vector<8x512xf32> -> vector<8x512xf32>
    %690 = arith.addf %684, %689 : vector<8x512xf32>
    %691 = arith.truncf %677 : vector<8x128xf32> to vector<8x128xbf16>
    %c0_184 = arith.constant 0 : index
    %c0_185 = arith.constant 0 : index
    %692 = vector.load %arg4[%c0_184, %c0_185] : memref<128x512xbf16, #tpu.memory_space<vmem>>, vector<128x512xbf16>
    %cst_186 = arith.constant dense<0.000000e+00> : vector<8x512xf32>
    %693 = tpu.matmul %691, %692, %cst_186 {dimension_numbers = #tpu.dot_dimension_numbers<[1], [0], [0], [1], [0, 0, 1, 1], [], []>} : vector<8x128xbf16>, vector<128x512xbf16>, vector<8x512xf32> -> vector<8x512xf32>
    %694 = arith.addf %686, %693 : vector<8x512xf32>
    %695 = vector.extract_strided_slice %690 {offsets = [0, 0], sizes = [8, 128], strides = [1, 1]} : vector<8x512xf32> to vector<8x128xf32>
    %696 = arith.negf %695 : vector<8x128xf32>
    %697 = math.exp %696 : vector<8x128xf32>
    %cst_187 = arith.constant 1.000000e+00 : f32
    %698 = vector.broadcast %cst_187 : f32 to vector<8x128xf32>
    %699 = arith.addf %698, %697 : vector<8x128xf32>
    %700 = arith.divf %698, %699 : vector<8x128xf32>
    %701 = vector.extract_strided_slice %690 {offsets = [0, 128], sizes = [8, 128], strides = [1, 1]} : vector<8x512xf32> to vector<8x128xf32>
    %702 = arith.negf %701 : vector<8x128xf32>
    %703 = math.exp %702 : vector<8x128xf32>
    %cst_188 = arith.constant 1.000000e+00 : f32
    %704 = vector.broadcast %cst_188 : f32 to vector<8x128xf32>
    %705 = arith.addf %704, %703 : vector<8x128xf32>
    %706 = arith.divf %704, %705 : vector<8x128xf32>
    %707 = vector.extract_strided_slice %690 {offsets = [0, 256], sizes = [8, 128], strides = [1, 1]} : vector<8x512xf32> to vector<8x128xf32>
    %708 = math.tanh %707 : vector<8x128xf32>
    %709 = vector.extract_strided_slice %690 {offsets = [0, 384], sizes = [8, 128], strides = [1, 1]} : vector<8x512xf32> to vector<8x128xf32>
    %710 = arith.negf %709 : vector<8x128xf32>
    %711 = math.exp %710 : vector<8x128xf32>
    %cst_189 = arith.constant 1.000000e+00 : f32
    %712 = vector.broadcast %cst_189 : f32 to vector<8x128xf32>
    %713 = arith.addf %712, %711 : vector<8x128xf32>
    %714 = arith.divf %712, %713 : vector<8x128xf32>
    %715 = arith.mulf %706, %650 : vector<8x128xf32>
    %716 = arith.mulf %700, %708 : vector<8x128xf32>
    %717 = arith.addf %715, %716 : vector<8x128xf32>
    %718 = math.tanh %717 : vector<8x128xf32>
    %719 = arith.mulf %714, %718 : vector<8x128xf32>
    %720 = vector.extract_strided_slice %694 {offsets = [0, 0], sizes = [8, 128], strides = [1, 1]} : vector<8x512xf32> to vector<8x128xf32>
    %721 = arith.negf %720 : vector<8x128xf32>
    %722 = math.exp %721 : vector<8x128xf32>
    %cst_190 = arith.constant 1.000000e+00 : f32
    %723 = vector.broadcast %cst_190 : f32 to vector<8x128xf32>
    %724 = arith.addf %723, %722 : vector<8x128xf32>
    %725 = arith.divf %723, %724 : vector<8x128xf32>
    %726 = vector.extract_strided_slice %694 {offsets = [0, 128], sizes = [8, 128], strides = [1, 1]} : vector<8x512xf32> to vector<8x128xf32>
    %727 = arith.negf %726 : vector<8x128xf32>
    %728 = math.exp %727 : vector<8x128xf32>
    %cst_191 = arith.constant 1.000000e+00 : f32
    %729 = vector.broadcast %cst_191 : f32 to vector<8x128xf32>
    %730 = arith.addf %729, %728 : vector<8x128xf32>
    %731 = arith.divf %729, %730 : vector<8x128xf32>
    %732 = vector.extract_strided_slice %694 {offsets = [0, 256], sizes = [8, 128], strides = [1, 1]} : vector<8x512xf32> to vector<8x128xf32>
    %733 = math.tanh %732 : vector<8x128xf32>
    %734 = vector.extract_strided_slice %694 {offsets = [0, 384], sizes = [8, 128], strides = [1, 1]} : vector<8x512xf32> to vector<8x128xf32>
    %735 = arith.negf %734 : vector<8x128xf32>
    %736 = math.exp %735 : vector<8x128xf32>
    %cst_192 = arith.constant 1.000000e+00 : f32
    %737 = vector.broadcast %cst_192 : f32 to vector<8x128xf32>
    %738 = arith.addf %737, %736 : vector<8x128xf32>
    %739 = arith.divf %737, %738 : vector<8x128xf32>
    %740 = arith.mulf %731, %675 : vector<8x128xf32>
    %741 = arith.mulf %725, %733 : vector<8x128xf32>
    %742 = arith.addf %740, %741 : vector<8x128xf32>
    %743 = math.tanh %742 : vector<8x128xf32>
    %744 = arith.mulf %739, %743 : vector<8x128xf32>
    %c11_i32 = arith.constant 11 : i32
    %c8_i32_193 = arith.constant 8 : i32
    %745 = arith.muli %c11_i32, %c8_i32_193 : i32
    %746 = tpu.assume_multiple %745, 8 : i32
    %c15_i32_194 = arith.constant 15 : i32
    %747 = arith.subi %c15_i32_194, %c11_i32 : i32
    %c8_i32_195 = arith.constant 8 : i32
    %748 = arith.muli %747, %c8_i32_195 : i32
    %749 = tpu.assume_multiple %748, 8 : i32
    %750 = arith.index_cast %746 : i32 to index
    %c0_196 = arith.constant 0 : index
    %751 = vector.load %arg11[%750, %c0_196] : memref<128x1024xf32, #tpu.memory_space<vmem>>, vector<8x512xf32>
    %752 = arith.index_cast %749 : i32 to index
    %c512_197 = arith.constant 512 : index
    %753 = vector.load %arg11[%752, %c512_197] : memref<128x1024xf32, #tpu.memory_space<vmem>>, vector<8x512xf32>
    %754 = arith.truncf %719 : vector<8x128xf32> to vector<8x128xbf16>
    %c0_198 = arith.constant 0 : index
    %c0_199 = arith.constant 0 : index
    %755 = vector.load %arg3[%c0_198, %c0_199] : memref<128x512xbf16, #tpu.memory_space<vmem>>, vector<128x512xbf16>
    %cst_200 = arith.constant dense<0.000000e+00> : vector<8x512xf32>
    %756 = tpu.matmul %754, %755, %cst_200 {dimension_numbers = #tpu.dot_dimension_numbers<[1], [0], [0], [1], [0, 0, 1, 1], [], []>} : vector<8x128xbf16>, vector<128x512xbf16>, vector<8x512xf32> -> vector<8x512xf32>
    %757 = arith.addf %751, %756 : vector<8x512xf32>
    %758 = arith.truncf %744 : vector<8x128xf32> to vector<8x128xbf16>
    %c0_201 = arith.constant 0 : index
    %c0_202 = arith.constant 0 : index
    %759 = vector.load %arg4[%c0_201, %c0_202] : memref<128x512xbf16, #tpu.memory_space<vmem>>, vector<128x512xbf16>
    %cst_203 = arith.constant dense<0.000000e+00> : vector<8x512xf32>
    %760 = tpu.matmul %758, %759, %cst_203 {dimension_numbers = #tpu.dot_dimension_numbers<[1], [0], [0], [1], [0, 0, 1, 1], [], []>} : vector<8x128xbf16>, vector<128x512xbf16>, vector<8x512xf32> -> vector<8x512xf32>
    %761 = arith.addf %753, %760 : vector<8x512xf32>
    %762 = vector.extract_strided_slice %757 {offsets = [0, 0], sizes = [8, 128], strides = [1, 1]} : vector<8x512xf32> to vector<8x128xf32>
    %763 = arith.negf %762 : vector<8x128xf32>
    %764 = math.exp %763 : vector<8x128xf32>
    %cst_204 = arith.constant 1.000000e+00 : f32
    %765 = vector.broadcast %cst_204 : f32 to vector<8x128xf32>
    %766 = arith.addf %765, %764 : vector<8x128xf32>
    %767 = arith.divf %765, %766 : vector<8x128xf32>
    %768 = vector.extract_strided_slice %757 {offsets = [0, 128], sizes = [8, 128], strides = [1, 1]} : vector<8x512xf32> to vector<8x128xf32>
    %769 = arith.negf %768 : vector<8x128xf32>
    %770 = math.exp %769 : vector<8x128xf32>
    %cst_205 = arith.constant 1.000000e+00 : f32
    %771 = vector.broadcast %cst_205 : f32 to vector<8x128xf32>
    %772 = arith.addf %771, %770 : vector<8x128xf32>
    %773 = arith.divf %771, %772 : vector<8x128xf32>
    %774 = vector.extract_strided_slice %757 {offsets = [0, 256], sizes = [8, 128], strides = [1, 1]} : vector<8x512xf32> to vector<8x128xf32>
    %775 = math.tanh %774 : vector<8x128xf32>
    %776 = vector.extract_strided_slice %757 {offsets = [0, 384], sizes = [8, 128], strides = [1, 1]} : vector<8x512xf32> to vector<8x128xf32>
    %777 = arith.negf %776 : vector<8x128xf32>
    %778 = math.exp %777 : vector<8x128xf32>
    %cst_206 = arith.constant 1.000000e+00 : f32
    %779 = vector.broadcast %cst_206 : f32 to vector<8x128xf32>
    %780 = arith.addf %779, %778 : vector<8x128xf32>
    %781 = arith.divf %779, %780 : vector<8x128xf32>
    %782 = arith.mulf %773, %717 : vector<8x128xf32>
    %783 = arith.mulf %767, %775 : vector<8x128xf32>
    %784 = arith.addf %782, %783 : vector<8x128xf32>
    %785 = math.tanh %784 : vector<8x128xf32>
    %786 = arith.mulf %781, %785 : vector<8x128xf32>
    %787 = vector.extract_strided_slice %761 {offsets = [0, 0], sizes = [8, 128], strides = [1, 1]} : vector<8x512xf32> to vector<8x128xf32>
    %788 = arith.negf %787 : vector<8x128xf32>
    %789 = math.exp %788 : vector<8x128xf32>
    %cst_207 = arith.constant 1.000000e+00 : f32
    %790 = vector.broadcast %cst_207 : f32 to vector<8x128xf32>
    %791 = arith.addf %790, %789 : vector<8x128xf32>
    %792 = arith.divf %790, %791 : vector<8x128xf32>
    %793 = vector.extract_strided_slice %761 {offsets = [0, 128], sizes = [8, 128], strides = [1, 1]} : vector<8x512xf32> to vector<8x128xf32>
    %794 = arith.negf %793 : vector<8x128xf32>
    %795 = math.exp %794 : vector<8x128xf32>
    %cst_208 = arith.constant 1.000000e+00 : f32
    %796 = vector.broadcast %cst_208 : f32 to vector<8x128xf32>
    %797 = arith.addf %796, %795 : vector<8x128xf32>
    %798 = arith.divf %796, %797 : vector<8x128xf32>
    %799 = vector.extract_strided_slice %761 {offsets = [0, 256], sizes = [8, 128], strides = [1, 1]} : vector<8x512xf32> to vector<8x128xf32>
    %800 = math.tanh %799 : vector<8x128xf32>
    %801 = vector.extract_strided_slice %761 {offsets = [0, 384], sizes = [8, 128], strides = [1, 1]} : vector<8x512xf32> to vector<8x128xf32>
    %802 = arith.negf %801 : vector<8x128xf32>
    %803 = math.exp %802 : vector<8x128xf32>
    %cst_209 = arith.constant 1.000000e+00 : f32
    %804 = vector.broadcast %cst_209 : f32 to vector<8x128xf32>
    %805 = arith.addf %804, %803 : vector<8x128xf32>
    %806 = arith.divf %804, %805 : vector<8x128xf32>
    %807 = arith.mulf %798, %742 : vector<8x128xf32>
    %808 = arith.mulf %792, %800 : vector<8x128xf32>
    %809 = arith.addf %807, %808 : vector<8x128xf32>
    %810 = math.tanh %809 : vector<8x128xf32>
    %811 = arith.mulf %806, %810 : vector<8x128xf32>
    %c12_i32 = arith.constant 12 : i32
    %c8_i32_210 = arith.constant 8 : i32
    %812 = arith.muli %c12_i32, %c8_i32_210 : i32
    %813 = tpu.assume_multiple %812, 8 : i32
    %c15_i32_211 = arith.constant 15 : i32
    %814 = arith.subi %c15_i32_211, %c12_i32 : i32
    %c8_i32_212 = arith.constant 8 : i32
    %815 = arith.muli %814, %c8_i32_212 : i32
    %816 = tpu.assume_multiple %815, 8 : i32
    %817 = arith.index_cast %813 : i32 to index
    %c0_213 = arith.constant 0 : index
    %818 = vector.load %arg11[%817, %c0_213] : memref<128x1024xf32, #tpu.memory_space<vmem>>, vector<8x512xf32>
    %819 = arith.index_cast %816 : i32 to index
    %c512_214 = arith.constant 512 : index
    %820 = vector.load %arg11[%819, %c512_214] : memref<128x1024xf32, #tpu.memory_space<vmem>>, vector<8x512xf32>
    %821 = arith.truncf %786 : vector<8x128xf32> to vector<8x128xbf16>
    %c0_215 = arith.constant 0 : index
    %c0_216 = arith.constant 0 : index
    %822 = vector.load %arg3[%c0_215, %c0_216] : memref<128x512xbf16, #tpu.memory_space<vmem>>, vector<128x512xbf16>
    %cst_217 = arith.constant dense<0.000000e+00> : vector<8x512xf32>
    %823 = tpu.matmul %821, %822, %cst_217 {dimension_numbers = #tpu.dot_dimension_numbers<[1], [0], [0], [1], [0, 0, 1, 1], [], []>} : vector<8x128xbf16>, vector<128x512xbf16>, vector<8x512xf32> -> vector<8x512xf32>
    %824 = arith.addf %818, %823 : vector<8x512xf32>
    %825 = arith.truncf %811 : vector<8x128xf32> to vector<8x128xbf16>
    %c0_218 = arith.constant 0 : index
    %c0_219 = arith.constant 0 : index
    %826 = vector.load %arg4[%c0_218, %c0_219] : memref<128x512xbf16, #tpu.memory_space<vmem>>, vector<128x512xbf16>
    %cst_220 = arith.constant dense<0.000000e+00> : vector<8x512xf32>
    %827 = tpu.matmul %825, %826, %cst_220 {dimension_numbers = #tpu.dot_dimension_numbers<[1], [0], [0], [1], [0, 0, 1, 1], [], []>} : vector<8x128xbf16>, vector<128x512xbf16>, vector<8x512xf32> -> vector<8x512xf32>
    %828 = arith.addf %820, %827 : vector<8x512xf32>
    %829 = vector.extract_strided_slice %824 {offsets = [0, 0], sizes = [8, 128], strides = [1, 1]} : vector<8x512xf32> to vector<8x128xf32>
    %830 = arith.negf %829 : vector<8x128xf32>
    %831 = math.exp %830 : vector<8x128xf32>
    %cst_221 = arith.constant 1.000000e+00 : f32
    %832 = vector.broadcast %cst_221 : f32 to vector<8x128xf32>
    %833 = arith.addf %832, %831 : vector<8x128xf32>
    %834 = arith.divf %832, %833 : vector<8x128xf32>
    %835 = vector.extract_strided_slice %824 {offsets = [0, 128], sizes = [8, 128], strides = [1, 1]} : vector<8x512xf32> to vector<8x128xf32>
    %836 = arith.negf %835 : vector<8x128xf32>
    %837 = math.exp %836 : vector<8x128xf32>
    %cst_222 = arith.constant 1.000000e+00 : f32
    %838 = vector.broadcast %cst_222 : f32 to vector<8x128xf32>
    %839 = arith.addf %838, %837 : vector<8x128xf32>
    %840 = arith.divf %838, %839 : vector<8x128xf32>
    %841 = vector.extract_strided_slice %824 {offsets = [0, 256], sizes = [8, 128], strides = [1, 1]} : vector<8x512xf32> to vector<8x128xf32>
    %842 = math.tanh %841 : vector<8x128xf32>
    %843 = vector.extract_strided_slice %824 {offsets = [0, 384], sizes = [8, 128], strides = [1, 1]} : vector<8x512xf32> to vector<8x128xf32>
    %844 = arith.negf %843 : vector<8x128xf32>
    %845 = math.exp %844 : vector<8x128xf32>
    %cst_223 = arith.constant 1.000000e+00 : f32
    %846 = vector.broadcast %cst_223 : f32 to vector<8x128xf32>
    %847 = arith.addf %846, %845 : vector<8x128xf32>
    %848 = arith.divf %846, %847 : vector<8x128xf32>
    %849 = arith.mulf %840, %784 : vector<8x128xf32>
    %850 = arith.mulf %834, %842 : vector<8x128xf32>
    %851 = arith.addf %849, %850 : vector<8x128xf32>
    %852 = math.tanh %851 : vector<8x128xf32>
    %853 = arith.mulf %848, %852 : vector<8x128xf32>
    %854 = vector.extract_strided_slice %828 {offsets = [0, 0], sizes = [8, 128], strides = [1, 1]} : vector<8x512xf32> to vector<8x128xf32>
    %855 = arith.negf %854 : vector<8x128xf32>
    %856 = math.exp %855 : vector<8x128xf32>
    %cst_224 = arith.constant 1.000000e+00 : f32
    %857 = vector.broadcast %cst_224 : f32 to vector<8x128xf32>
    %858 = arith.addf %857, %856 : vector<8x128xf32>
    %859 = arith.divf %857, %858 : vector<8x128xf32>
    %860 = vector.extract_strided_slice %828 {offsets = [0, 128], sizes = [8, 128], strides = [1, 1]} : vector<8x512xf32> to vector<8x128xf32>
    %861 = arith.negf %860 : vector<8x128xf32>
    %862 = math.exp %861 : vector<8x128xf32>
    %cst_225 = arith.constant 1.000000e+00 : f32
    %863 = vector.broadcast %cst_225 : f32 to vector<8x128xf32>
    %864 = arith.addf %863, %862 : vector<8x128xf32>
    %865 = arith.divf %863, %864 : vector<8x128xf32>
    %866 = vector.extract_strided_slice %828 {offsets = [0, 256], sizes = [8, 128], strides = [1, 1]} : vector<8x512xf32> to vector<8x128xf32>
    %867 = math.tanh %866 : vector<8x128xf32>
    %868 = vector.extract_strided_slice %828 {offsets = [0, 384], sizes = [8, 128], strides = [1, 1]} : vector<8x512xf32> to vector<8x128xf32>
    %869 = arith.negf %868 : vector<8x128xf32>
    %870 = math.exp %869 : vector<8x128xf32>
    %cst_226 = arith.constant 1.000000e+00 : f32
    %871 = vector.broadcast %cst_226 : f32 to vector<8x128xf32>
    %872 = arith.addf %871, %870 : vector<8x128xf32>
    %873 = arith.divf %871, %872 : vector<8x128xf32>
    %874 = arith.mulf %865, %809 : vector<8x128xf32>
    %875 = arith.mulf %859, %867 : vector<8x128xf32>
    %876 = arith.addf %874, %875 : vector<8x128xf32>
    %877 = math.tanh %876 : vector<8x128xf32>
    %878 = arith.mulf %873, %877 : vector<8x128xf32>
    %c13_i32 = arith.constant 13 : i32
    %c8_i32_227 = arith.constant 8 : i32
    %879 = arith.muli %c13_i32, %c8_i32_227 : i32
    %880 = tpu.assume_multiple %879, 8 : i32
    %c15_i32_228 = arith.constant 15 : i32
    %881 = arith.subi %c15_i32_228, %c13_i32 : i32
    %c8_i32_229 = arith.constant 8 : i32
    %882 = arith.muli %881, %c8_i32_229 : i32
    %883 = tpu.assume_multiple %882, 8 : i32
    %884 = arith.index_cast %880 : i32 to index
    %c0_230 = arith.constant 0 : index
    %885 = vector.load %arg11[%884, %c0_230] : memref<128x1024xf32, #tpu.memory_space<vmem>>, vector<8x512xf32>
    %886 = arith.index_cast %883 : i32 to index
    %c512_231 = arith.constant 512 : index
    %887 = vector.load %arg11[%886, %c512_231] : memref<128x1024xf32, #tpu.memory_space<vmem>>, vector<8x512xf32>
    %888 = arith.truncf %853 : vector<8x128xf32> to vector<8x128xbf16>
    %c0_232 = arith.constant 0 : index
    %c0_233 = arith.constant 0 : index
    %889 = vector.load %arg3[%c0_232, %c0_233] : memref<128x512xbf16, #tpu.memory_space<vmem>>, vector<128x512xbf16>
    %cst_234 = arith.constant dense<0.000000e+00> : vector<8x512xf32>
    %890 = tpu.matmul %888, %889, %cst_234 {dimension_numbers = #tpu.dot_dimension_numbers<[1], [0], [0], [1], [0, 0, 1, 1], [], []>} : vector<8x128xbf16>, vector<128x512xbf16>, vector<8x512xf32> -> vector<8x512xf32>
    %891 = arith.addf %885, %890 : vector<8x512xf32>
    %892 = arith.truncf %878 : vector<8x128xf32> to vector<8x128xbf16>
    %c0_235 = arith.constant 0 : index
    %c0_236 = arith.constant 0 : index
    %893 = vector.load %arg4[%c0_235, %c0_236] : memref<128x512xbf16, #tpu.memory_space<vmem>>, vector<128x512xbf16>
    %cst_237 = arith.constant dense<0.000000e+00> : vector<8x512xf32>
    %894 = tpu.matmul %892, %893, %cst_237 {dimension_numbers = #tpu.dot_dimension_numbers<[1], [0], [0], [1], [0, 0, 1, 1], [], []>} : vector<8x128xbf16>, vector<128x512xbf16>, vector<8x512xf32> -> vector<8x512xf32>
    %895 = arith.addf %887, %894 : vector<8x512xf32>
    %896 = vector.extract_strided_slice %891 {offsets = [0, 0], sizes = [8, 128], strides = [1, 1]} : vector<8x512xf32> to vector<8x128xf32>
    %897 = arith.negf %896 : vector<8x128xf32>
    %898 = math.exp %897 : vector<8x128xf32>
    %cst_238 = arith.constant 1.000000e+00 : f32
    %899 = vector.broadcast %cst_238 : f32 to vector<8x128xf32>
    %900 = arith.addf %899, %898 : vector<8x128xf32>
    %901 = arith.divf %899, %900 : vector<8x128xf32>
    %902 = vector.extract_strided_slice %891 {offsets = [0, 128], sizes = [8, 128], strides = [1, 1]} : vector<8x512xf32> to vector<8x128xf32>
    %903 = arith.negf %902 : vector<8x128xf32>
    %904 = math.exp %903 : vector<8x128xf32>
    %cst_239 = arith.constant 1.000000e+00 : f32
    %905 = vector.broadcast %cst_239 : f32 to vector<8x128xf32>
    %906 = arith.addf %905, %904 : vector<8x128xf32>
    %907 = arith.divf %905, %906 : vector<8x128xf32>
    %908 = vector.extract_strided_slice %891 {offsets = [0, 256], sizes = [8, 128], strides = [1, 1]} : vector<8x512xf32> to vector<8x128xf32>
    %909 = math.tanh %908 : vector<8x128xf32>
    %910 = vector.extract_strided_slice %891 {offsets = [0, 384], sizes = [8, 128], strides = [1, 1]} : vector<8x512xf32> to vector<8x128xf32>
    %911 = arith.negf %910 : vector<8x128xf32>
    %912 = math.exp %911 : vector<8x128xf32>
    %cst_240 = arith.constant 1.000000e+00 : f32
    %913 = vector.broadcast %cst_240 : f32 to vector<8x128xf32>
    %914 = arith.addf %913, %912 : vector<8x128xf32>
    %915 = arith.divf %913, %914 : vector<8x128xf32>
    %916 = arith.mulf %907, %851 : vector<8x128xf32>
    %917 = arith.mulf %901, %909 : vector<8x128xf32>
    %918 = arith.addf %916, %917 : vector<8x128xf32>
    %919 = math.tanh %918 : vector<8x128xf32>
    %920 = arith.mulf %915, %919 : vector<8x128xf32>
    %921 = vector.extract_strided_slice %895 {offsets = [0, 0], sizes = [8, 128], strides = [1, 1]} : vector<8x512xf32> to vector<8x128xf32>
    %922 = arith.negf %921 : vector<8x128xf32>
    %923 = math.exp %922 : vector<8x128xf32>
    %cst_241 = arith.constant 1.000000e+00 : f32
    %924 = vector.broadcast %cst_241 : f32 to vector<8x128xf32>
    %925 = arith.addf %924, %923 : vector<8x128xf32>
    %926 = arith.divf %924, %925 : vector<8x128xf32>
    %927 = vector.extract_strided_slice %895 {offsets = [0, 128], sizes = [8, 128], strides = [1, 1]} : vector<8x512xf32> to vector<8x128xf32>
    %928 = arith.negf %927 : vector<8x128xf32>
    %929 = math.exp %928 : vector<8x128xf32>
    %cst_242 = arith.constant 1.000000e+00 : f32
    %930 = vector.broadcast %cst_242 : f32 to vector<8x128xf32>
    %931 = arith.addf %930, %929 : vector<8x128xf32>
    %932 = arith.divf %930, %931 : vector<8x128xf32>
    %933 = vector.extract_strided_slice %895 {offsets = [0, 256], sizes = [8, 128], strides = [1, 1]} : vector<8x512xf32> to vector<8x128xf32>
    %934 = math.tanh %933 : vector<8x128xf32>
    %935 = vector.extract_strided_slice %895 {offsets = [0, 384], sizes = [8, 128], strides = [1, 1]} : vector<8x512xf32> to vector<8x128xf32>
    %936 = arith.negf %935 : vector<8x128xf32>
    %937 = math.exp %936 : vector<8x128xf32>
    %cst_243 = arith.constant 1.000000e+00 : f32
    %938 = vector.broadcast %cst_243 : f32 to vector<8x128xf32>
    %939 = arith.addf %938, %937 : vector<8x128xf32>
    %940 = arith.divf %938, %939 : vector<8x128xf32>
    %941 = arith.mulf %932, %876 : vector<8x128xf32>
    %942 = arith.mulf %926, %934 : vector<8x128xf32>
    %943 = arith.addf %941, %942 : vector<8x128xf32>
    %944 = math.tanh %943 : vector<8x128xf32>
    %945 = arith.mulf %940, %944 : vector<8x128xf32>
    %c14_i32 = arith.constant 14 : i32
    %c8_i32_244 = arith.constant 8 : i32
    %946 = arith.muli %c14_i32, %c8_i32_244 : i32
    %947 = tpu.assume_multiple %946, 8 : i32
    %c15_i32_245 = arith.constant 15 : i32
    %948 = arith.subi %c15_i32_245, %c14_i32 : i32
    %c8_i32_246 = arith.constant 8 : i32
    %949 = arith.muli %948, %c8_i32_246 : i32
    %950 = tpu.assume_multiple %949, 8 : i32
    %951 = arith.index_cast %947 : i32 to index
    %c0_247 = arith.constant 0 : index
    %952 = vector.load %arg11[%951, %c0_247] : memref<128x1024xf32, #tpu.memory_space<vmem>>, vector<8x512xf32>
    %953 = arith.index_cast %950 : i32 to index
    %c512_248 = arith.constant 512 : index
    %954 = vector.load %arg11[%953, %c512_248] : memref<128x1024xf32, #tpu.memory_space<vmem>>, vector<8x512xf32>
    %955 = arith.truncf %920 : vector<8x128xf32> to vector<8x128xbf16>
    %c0_249 = arith.constant 0 : index
    %c0_250 = arith.constant 0 : index
    %956 = vector.load %arg3[%c0_249, %c0_250] : memref<128x512xbf16, #tpu.memory_space<vmem>>, vector<128x512xbf16>
    %cst_251 = arith.constant dense<0.000000e+00> : vector<8x512xf32>
    %957 = tpu.matmul %955, %956, %cst_251 {dimension_numbers = #tpu.dot_dimension_numbers<[1], [0], [0], [1], [0, 0, 1, 1], [], []>} : vector<8x128xbf16>, vector<128x512xbf16>, vector<8x512xf32> -> vector<8x512xf32>
    %958 = arith.addf %952, %957 : vector<8x512xf32>
    %959 = arith.truncf %945 : vector<8x128xf32> to vector<8x128xbf16>
    %c0_252 = arith.constant 0 : index
    %c0_253 = arith.constant 0 : index
    %960 = vector.load %arg4[%c0_252, %c0_253] : memref<128x512xbf16, #tpu.memory_space<vmem>>, vector<128x512xbf16>
    %cst_254 = arith.constant dense<0.000000e+00> : vector<8x512xf32>
    %961 = tpu.matmul %959, %960, %cst_254 {dimension_numbers = #tpu.dot_dimension_numbers<[1], [0], [0], [1], [0, 0, 1, 1], [], []>} : vector<8x128xbf16>, vector<128x512xbf16>, vector<8x512xf32> -> vector<8x512xf32>
    %962 = arith.addf %954, %961 : vector<8x512xf32>
    %963 = vector.extract_strided_slice %958 {offsets = [0, 0], sizes = [8, 128], strides = [1, 1]} : vector<8x512xf32> to vector<8x128xf32>
    %964 = arith.negf %963 : vector<8x128xf32>
    %965 = math.exp %964 : vector<8x128xf32>
    %cst_255 = arith.constant 1.000000e+00 : f32
    %966 = vector.broadcast %cst_255 : f32 to vector<8x128xf32>
    %967 = arith.addf %966, %965 : vector<8x128xf32>
    %968 = arith.divf %966, %967 : vector<8x128xf32>
    %969 = vector.extract_strided_slice %958 {offsets = [0, 128], sizes = [8, 128], strides = [1, 1]} : vector<8x512xf32> to vector<8x128xf32>
    %970 = arith.negf %969 : vector<8x128xf32>
    %971 = math.exp %970 : vector<8x128xf32>
    %cst_256 = arith.constant 1.000000e+00 : f32
    %972 = vector.broadcast %cst_256 : f32 to vector<8x128xf32>
    %973 = arith.addf %972, %971 : vector<8x128xf32>
    %974 = arith.divf %972, %973 : vector<8x128xf32>
    %975 = vector.extract_strided_slice %958 {offsets = [0, 256], sizes = [8, 128], strides = [1, 1]} : vector<8x512xf32> to vector<8x128xf32>
    %976 = math.tanh %975 : vector<8x128xf32>
    %977 = vector.extract_strided_slice %958 {offsets = [0, 384], sizes = [8, 128], strides = [1, 1]} : vector<8x512xf32> to vector<8x128xf32>
    %978 = arith.negf %977 : vector<8x128xf32>
    %979 = math.exp %978 : vector<8x128xf32>
    %cst_257 = arith.constant 1.000000e+00 : f32
    %980 = vector.broadcast %cst_257 : f32 to vector<8x128xf32>
    %981 = arith.addf %980, %979 : vector<8x128xf32>
    %982 = arith.divf %980, %981 : vector<8x128xf32>
    %983 = arith.mulf %974, %918 : vector<8x128xf32>
    %984 = arith.mulf %968, %976 : vector<8x128xf32>
    %985 = arith.addf %983, %984 : vector<8x128xf32>
    %986 = math.tanh %985 : vector<8x128xf32>
    %987 = arith.mulf %982, %986 : vector<8x128xf32>
    %988 = vector.extract_strided_slice %962 {offsets = [0, 0], sizes = [8, 128], strides = [1, 1]} : vector<8x512xf32> to vector<8x128xf32>
    %989 = arith.negf %988 : vector<8x128xf32>
    %990 = math.exp %989 : vector<8x128xf32>
    %cst_258 = arith.constant 1.000000e+00 : f32
    %991 = vector.broadcast %cst_258 : f32 to vector<8x128xf32>
    %992 = arith.addf %991, %990 : vector<8x128xf32>
    %993 = arith.divf %991, %992 : vector<8x128xf32>
    %994 = vector.extract_strided_slice %962 {offsets = [0, 128], sizes = [8, 128], strides = [1, 1]} : vector<8x512xf32> to vector<8x128xf32>
    %995 = arith.negf %994 : vector<8x128xf32>
    %996 = math.exp %995 : vector<8x128xf32>
    %cst_259 = arith.constant 1.000000e+00 : f32
    %997 = vector.broadcast %cst_259 : f32 to vector<8x128xf32>
    %998 = arith.addf %997, %996 : vector<8x128xf32>
    %999 = arith.divf %997, %998 : vector<8x128xf32>
    %1000 = vector.extract_strided_slice %962 {offsets = [0, 256], sizes = [8, 128], strides = [1, 1]} : vector<8x512xf32> to vector<8x128xf32>
    %1001 = math.tanh %1000 : vector<8x128xf32>
    %1002 = vector.extract_strided_slice %962 {offsets = [0, 384], sizes = [8, 128], strides = [1, 1]} : vector<8x512xf32> to vector<8x128xf32>
    %1003 = arith.negf %1002 : vector<8x128xf32>
    %1004 = math.exp %1003 : vector<8x128xf32>
    %cst_260 = arith.constant 1.000000e+00 : f32
    %1005 = vector.broadcast %cst_260 : f32 to vector<8x128xf32>
    %1006 = arith.addf %1005, %1004 : vector<8x128xf32>
    %1007 = arith.divf %1005, %1006 : vector<8x128xf32>
    %1008 = arith.mulf %999, %943 : vector<8x128xf32>
    %1009 = arith.mulf %993, %1001 : vector<8x128xf32>
    %1010 = arith.addf %1008, %1009 : vector<8x128xf32>
    %1011 = math.tanh %1010 : vector<8x128xf32>
    %1012 = arith.mulf %1007, %1011 : vector<8x128xf32>
    %c15_i32_261 = arith.constant 15 : i32
    %c8_i32_262 = arith.constant 8 : i32
    %1013 = arith.muli %c15_i32_261, %c8_i32_262 : i32
    %1014 = tpu.assume_multiple %1013, 8 : i32
    %c15_i32_263 = arith.constant 15 : i32
    %1015 = arith.subi %c15_i32_263, %c15_i32_261 : i32
    %c8_i32_264 = arith.constant 8 : i32
    %1016 = arith.muli %1015, %c8_i32_264 : i32
    %1017 = tpu.assume_multiple %1016, 8 : i32
    %1018 = arith.index_cast %1014 : i32 to index
    %c0_265 = arith.constant 0 : index
    %1019 = vector.load %arg11[%1018, %c0_265] : memref<128x1024xf32, #tpu.memory_space<vmem>>, vector<8x512xf32>
    %1020 = arith.index_cast %1017 : i32 to index
    %c512_266 = arith.constant 512 : index
    %1021 = vector.load %arg11[%1020, %c512_266] : memref<128x1024xf32, #tpu.memory_space<vmem>>, vector<8x512xf32>
    %1022 = arith.truncf %987 : vector<8x128xf32> to vector<8x128xbf16>
    %c0_267 = arith.constant 0 : index
    %c0_268 = arith.constant 0 : index
    %1023 = vector.load %arg3[%c0_267, %c0_268] : memref<128x512xbf16, #tpu.memory_space<vmem>>, vector<128x512xbf16>
    %cst_269 = arith.constant dense<0.000000e+00> : vector<8x512xf32>
    %1024 = tpu.matmul %1022, %1023, %cst_269 {dimension_numbers = #tpu.dot_dimension_numbers<[1], [0], [0], [1], [0, 0, 1, 1], [], []>} : vector<8x128xbf16>, vector<128x512xbf16>, vector<8x512xf32> -> vector<8x512xf32>
    %1025 = arith.addf %1019, %1024 : vector<8x512xf32>
    %1026 = arith.truncf %1012 : vector<8x128xf32> to vector<8x128xbf16>
    %c0_270 = arith.constant 0 : index
    %c0_271 = arith.constant 0 : index
    %1027 = vector.load %arg4[%c0_270, %c0_271] : memref<128x512xbf16, #tpu.memory_space<vmem>>, vector<128x512xbf16>
    %cst_272 = arith.constant dense<0.000000e+00> : vector<8x512xf32>
    %1028 = tpu.matmul %1026, %1027, %cst_272 {dimension_numbers = #tpu.dot_dimension_numbers<[1], [0], [0], [1], [0, 0, 1, 1], [], []>} : vector<8x128xbf16>, vector<128x512xbf16>, vector<8x512xf32> -> vector<8x512xf32>
    %1029 = arith.addf %1021, %1028 : vector<8x512xf32>
    %1030 = vector.extract_strided_slice %1025 {offsets = [0, 0], sizes = [8, 128], strides = [1, 1]} : vector<8x512xf32> to vector<8x128xf32>
    %1031 = arith.negf %1030 : vector<8x128xf32>
    %1032 = math.exp %1031 : vector<8x128xf32>
    %cst_273 = arith.constant 1.000000e+00 : f32
    %1033 = vector.broadcast %cst_273 : f32 to vector<8x128xf32>
    %1034 = arith.addf %1033, %1032 : vector<8x128xf32>
    %1035 = arith.divf %1033, %1034 : vector<8x128xf32>
    %1036 = vector.extract_strided_slice %1025 {offsets = [0, 128], sizes = [8, 128], strides = [1, 1]} : vector<8x512xf32> to vector<8x128xf32>
    %1037 = arith.negf %1036 : vector<8x128xf32>
    %1038 = math.exp %1037 : vector<8x128xf32>
    %cst_274 = arith.constant 1.000000e+00 : f32
    %1039 = vector.broadcast %cst_274 : f32 to vector<8x128xf32>
    %1040 = arith.addf %1039, %1038 : vector<8x128xf32>
    %1041 = arith.divf %1039, %1040 : vector<8x128xf32>
    %1042 = vector.extract_strided_slice %1025 {offsets = [0, 256], sizes = [8, 128], strides = [1, 1]} : vector<8x512xf32> to vector<8x128xf32>
    %1043 = math.tanh %1042 : vector<8x128xf32>
    %1044 = vector.extract_strided_slice %1025 {offsets = [0, 384], sizes = [8, 128], strides = [1, 1]} : vector<8x512xf32> to vector<8x128xf32>
    %1045 = arith.negf %1044 : vector<8x128xf32>
    %1046 = math.exp %1045 : vector<8x128xf32>
    %cst_275 = arith.constant 1.000000e+00 : f32
    %1047 = vector.broadcast %cst_275 : f32 to vector<8x128xf32>
    %1048 = arith.addf %1047, %1046 : vector<8x128xf32>
    %1049 = arith.divf %1047, %1048 : vector<8x128xf32>
    %1050 = arith.mulf %1041, %985 : vector<8x128xf32>
    %1051 = arith.mulf %1035, %1043 : vector<8x128xf32>
    %1052 = arith.addf %1050, %1051 : vector<8x128xf32>
    %1053 = math.tanh %1052 : vector<8x128xf32>
    %1054 = arith.mulf %1049, %1053 : vector<8x128xf32>
    %1055 = vector.extract_strided_slice %1029 {offsets = [0, 0], sizes = [8, 128], strides = [1, 1]} : vector<8x512xf32> to vector<8x128xf32>
    %1056 = arith.negf %1055 : vector<8x128xf32>
    %1057 = math.exp %1056 : vector<8x128xf32>
    %cst_276 = arith.constant 1.000000e+00 : f32
    %1058 = vector.broadcast %cst_276 : f32 to vector<8x128xf32>
    %1059 = arith.addf %1058, %1057 : vector<8x128xf32>
    %1060 = arith.divf %1058, %1059 : vector<8x128xf32>
    %1061 = vector.extract_strided_slice %1029 {offsets = [0, 128], sizes = [8, 128], strides = [1, 1]} : vector<8x512xf32> to vector<8x128xf32>
    %1062 = arith.negf %1061 : vector<8x128xf32>
    %1063 = math.exp %1062 : vector<8x128xf32>
    %cst_277 = arith.constant 1.000000e+00 : f32
    %1064 = vector.broadcast %cst_277 : f32 to vector<8x128xf32>
    %1065 = arith.addf %1064, %1063 : vector<8x128xf32>
    %1066 = arith.divf %1064, %1065 : vector<8x128xf32>
    %1067 = vector.extract_strided_slice %1029 {offsets = [0, 256], sizes = [8, 128], strides = [1, 1]} : vector<8x512xf32> to vector<8x128xf32>
    %1068 = math.tanh %1067 : vector<8x128xf32>
    %1069 = vector.extract_strided_slice %1029 {offsets = [0, 384], sizes = [8, 128], strides = [1, 1]} : vector<8x512xf32> to vector<8x128xf32>
    %1070 = arith.negf %1069 : vector<8x128xf32>
    %1071 = math.exp %1070 : vector<8x128xf32>
    %cst_278 = arith.constant 1.000000e+00 : f32
    %1072 = vector.broadcast %cst_278 : f32 to vector<8x128xf32>
    %1073 = arith.addf %1072, %1071 : vector<8x128xf32>
    %1074 = arith.divf %1072, %1073 : vector<8x128xf32>
    %1075 = arith.mulf %1066, %1010 : vector<8x128xf32>
    %1076 = arith.mulf %1060, %1068 : vector<8x128xf32>
    %1077 = arith.addf %1075, %1076 : vector<8x128xf32>
    %1078 = math.tanh %1077 : vector<8x128xf32>
    %1079 = arith.mulf %1074, %1078 : vector<8x128xf32>
    %c16_i32 = arith.constant 16 : i32
    %c0_279 = arith.constant 0 : index
    %c0_280 = arith.constant 0 : index
    %1080 = vector.load %arg5[%c0_279, %c0_280] : memref<128x64xf32, #tpu.memory_space<vmem>>, vector<128x64xf32>
    %cst_281 = arith.constant dense<0.000000e+00> : vector<8x64xf32>
    %1081 = tpu.matmul %1054, %1080, %cst_281 {dimension_numbers = #tpu.dot_dimension_numbers<[1], [0], [0], [1], [0, 0, 1, 1], [], []>} : vector<8x128xf32>, vector<128x64xf32>, vector<8x64xf32> -> vector<8x64xf32>
    %c0_282 = arith.constant 0 : index
    %c0_283 = arith.constant 0 : index
    %1082 = vector.load %arg6[%c0_282, %c0_283] : memref<128x64xf32, #tpu.memory_space<vmem>>, vector<128x64xf32>
    %cst_284 = arith.constant dense<0.000000e+00> : vector<8x64xf32>
    %1083 = tpu.matmul %1079, %1082, %cst_284 {dimension_numbers = #tpu.dot_dimension_numbers<[1], [0], [0], [1], [0, 0, 1, 1], [], []>} : vector<8x128xf32>, vector<128x64xf32>, vector<8x64xf32> -> vector<8x64xf32>
    %1084 = arith.addf %1081, %1083 : vector<8x64xf32>
    %c0_285 = arith.constant 0 : index
    %c0_286 = arith.constant 0 : index
    %1085 = vector.load %arg7[%c0_285, %c0_286] : memref<1x64xf32, #tpu.memory_space<vmem>>, vector<1x64xf32>
    %1086 = vector.broadcast %1085 : vector<1x64xf32> to vector<8x64xf32>
    %1087 = arith.addf %1084, %1086 : vector<8x64xf32>
    %cst_287 = arith.constant 0.000000e+00 : f32
    %1088 = vector.broadcast %cst_287 : f32 to vector<8x64xf32>
    %1089 = arith.maximumf %1087, %1088 : vector<8x64xf32>
    %c0_288 = arith.constant 0 : index
    %c0_289 = arith.constant 0 : index
    %1090 = vector.load %arg8[%c0_288, %c0_289] : memref<64x128xf32, #tpu.memory_space<vmem>>, vector<64x128xf32>
    %cst_290 = arith.constant dense<0.000000e+00> : vector<8x128xf32>
    %1091 = tpu.matmul %1089, %1090, %cst_290 {dimension_numbers = #tpu.dot_dimension_numbers<[1], [0], [0], [1], [0, 0, 1, 1], [], []>} : vector<8x64xf32>, vector<64x128xf32>, vector<8x128xf32> -> vector<8x128xf32>
    %c0_291 = arith.constant 0 : index
    %c0_292 = arith.constant 0 : index
    %1092 = vector.load %arg9[%c0_291, %c0_292] : memref<1x128xf32, #tpu.memory_space<vmem>>, vector<1x128xf32>
    %1093 = vector.broadcast %1092 : vector<1x128xf32> to vector<8x128xf32>
    %1094 = arith.addf %1091, %1093 : vector<8x128xf32>
    %c0_293 = arith.constant 0 : index
    %c0_294 = arith.constant 0 : index
    %1095 = vector.load %arg10[%c0_293, %c0_294] : memref<8x128xf32, #tpu.memory_space<vmem>>, vector<8x128xf32>
    tpu.vector_store %arg10[%c0_293, %c0_294], %1094 {strides = array<i32>} : memref<8x128xf32, #tpu.memory_space<vmem>>, vector<8x128xf32>,
    return
  }
}

</mosaic_0001>

<llo_original>
// kernel: lstm_classifier_forward.1
$region0: #{lstm_classifier_forward.1}
  #allocation0 [shape = 'u32[]', space=smem, size = 0x4, offset = 0x4, fixed_abs, tag = 'smem constant byte address 0x4 - core index']
  #allocation1 [shape = 'u32[144,128]{1,0:T(1,128)}', space=vmem, size = 0x12000, scoped, tag = 'internal scratch']
  #allocation2 [shape = 'f32[128,1024]{1,0:T(8,128)}', space=vmem, size = 0x80000, scoped, tag = 'scratch operand']
  %s0 = inlined_call_operand.vmem [shape: bf16[128,256], index: 0, kind: input, shape index: {}]
  %s1 = inlined_call_operand.vmem [shape: bf16[256,1024], index: 1, kind: input, shape index: {}]
  %s2 = inlined_call_operand.vmem [shape: f32[1,1024], index: 2, kind: input, shape index: {}]
  %s3 = inlined_call_operand.vmem [shape: bf16[128,512], index: 3, kind: input, shape index: {}]
  %s4 = inlined_call_operand.vmem [shape: bf16[128,512], index: 4, kind: input, shape index: {}]
  %s5 = inlined_call_operand.vmem [shape: f32[128,64], index: 5, kind: input, shape index: {}]
  %s6 = inlined_call_operand.vmem [shape: f32[128,64], index: 6, kind: input, shape index: {}]
  %s7 = inlined_call_operand.vmem [shape: f32[1,64], index: 7, kind: input, shape index: {}]
  %s8 = inlined_call_operand.vmem [shape: f32[64,128], index: 8, kind: input, shape index: {}]
  %s9 = inlined_call_operand.vmem [shape: f32[1,128], index: 9, kind: input, shape index: {}]
  %s10 = inlined_call_operand.vmem [shape: f32[8,128], index: 10, kind: output, shape index: {}]
  %s11 = sld [smem:[#allocation0]]
  $region50: #{lstm_classifier_forward.1} parent=0
    _
  %s13 = ssub.s32 1, %s11
  %s14 = scalar_select 0, %s13, %s11
  // Predicated region
  $region2: #{lstm_classifier_forward.1} parent=0 // pred_check
    _
  $region3: #{lstm_classifier_forward.1} parent=0 // pred_check_branch
    %16 = sbr.rel (0) target = $region5
  $region4: #{lstm_classifier_forward.1} parent=0 // pred_region
    _
  $region5: #{lstm_classifier_forward.1} parent=0 // pred_fallthru
    _
  // Predicated region
  $region6: #{lstm_classifier_forward.1} parent=0 // pred_check
    _
  $region7: #{lstm_classifier_forward.1} parent=0 // pred_check_branch
    %18 = sbr.rel (0) target = $region9
  $region8: #{lstm_classifier_forward.1} parent=0 // pred_region
    _
  $region9: #{lstm_classifier_forward.1} parent=0 // pred_fallthru
    _
  // Predicated region
  $region10: #{lstm_classifier_forward.1} parent=0 // pred_check
    _
  $region11: #{lstm_classifier_forward.1} parent=0 // pred_check_branch
    %20 = sbr.rel (0) target = $region13
  $region12: #{lstm_classifier_forward.1} parent=0 // pred_region
    _
  $region13: #{lstm_classifier_forward.1} parent=0 // pred_fallthru
    _
  // Predicated region
  $region14: #{lstm_classifier_forward.1} parent=0 // pred_check
    _
  $region15: #{lstm_classifier_forward.1} parent=0 // pred_check_branch
    %22 = sbr.rel (0) target = $region17
  $region16: #{lstm_classifier_forward.1} parent=0 // pred_region
    _
  $region17: #{lstm_classifier_forward.1} parent=0 // pred_fallthru
    _
  // Predicated region
  $region18: #{lstm_classifier_forward.1} parent=0 // pred_check
    _
  $region19: #{lstm_classifier_forward.1} parent=0 // pred_check_branch
    %24 = sbr.rel (0) target = $region21
  $region20: #{lstm_classifier_forward.1} parent=0 // pred_region
    _
  $region21: #{lstm_classifier_forward.1} parent=0 // pred_fallthru
    _
  // Predicated region
  $region22: #{lstm_classifier_forward.1} parent=0 // pred_check
    _
  $region23: #{lstm_classifier_forward.1} parent=0 // pred_check_branch
    %26 = sbr.rel (0) target = $region25
  $region24: #{lstm_classifier_forward.1} parent=0 // pred_region
    _
  $region25: #{lstm_classifier_forward.1} parent=0 // pred_fallthru
    _
  // Predicated region
  $region26: #{lstm_classifier_forward.1} parent=0 // pred_check
    _
  $region27: #{lstm_classifier_forward.1} parent=0 // pred_check_branch
    %28 = sbr.rel (0) target = $region29
  $region28: #{lstm_classifier_forward.1} parent=0 // pred_region
    _
  $region29: #{lstm_classifier_forward.1} parent=0 // pred_fallthru
    _
  // Predicated region
  $region30: #{lstm_classifier_forward.1} parent=0 // pred_check
    _
  $region31: #{lstm_classifier_forward.1} parent=0 // pred_check_branch
    %30 = sbr.rel (0) target = $region33
  $region32: #{lstm_classifier_forward.1} parent=0 // pred_region
    _
  $region33: #{lstm_classifier_forward.1} parent=0 // pred_fallthru
    _
  // Predicated region
  $region34: #{lstm_classifier_forward.1} parent=0 // pred_check
    _
  $region35: #{lstm_classifier_forward.1} parent=0 // pred_check_branch
    %32 = sbr.rel (0) target = $region37
  $region36: #{lstm_classifier_forward.1} parent=0 // pred_region
    _
  $region37: #{lstm_classifier_forward.1} parent=0 // pred_fallthru
    _
  // Predicated region
  $region38: #{lstm_classifier_forward.1} parent=0 // pred_check
    _
  $region39: #{lstm_classifier_forward.1} parent=0 // pred_check_branch
    %34 = sbr.rel (0) target = $region41
  $region40: #{lstm_classifier_forward.1} parent=0 // pred_region
    _
  $region41: #{lstm_classifier_forward.1} parent=0 // pred_fallthru
    _
  %v36 = vld [vmem:[%s0] sm:$0xff]
  %v37 = vld [vmem:[%s0 + $0x8] sm:$0xff]
  %v38 = vld [vmem:[%s0 + $0x10] sm:$0xff]
  %v39 = vld [vmem:[%s0 + $0x18] sm:$0xff]
  %v40 = vld [vmem:[%s0 + $0x20] sm:$0xff]
  %v41 = vld [vmem:[%s0 + $0x28] sm:$0xff]
  %v42 = vld [vmem:[%s0 + $0x30] sm:$0xff]
  %v43 = vld [vmem:[%s0 + $0x38] sm:$0xff]
  %v44 = vld [vmem:[%s0 + $0x40] sm:$0xff]
  %v45 = vld [vmem:[%s0 + $0x48] sm:$0xff]
  %v46 = vld [vmem:[%s0 + $0x50] sm:$0xff]
  %v47 = vld [vmem:[%s0 + $0x58] sm:$0xff]
  %v48 = vld [vmem:[%s0 + $0x60] sm:$0xff]
  %v49 = vld [vmem:[%s0 + $0x68] sm:$0xff]
  %v50 = vld [vmem:[%s0 + $0x70] sm:$0xff]
  %v51 = vld [vmem:[%s0 + $0x78] sm:$0xff]
  %v52 = vld [vmem:[%s1] sm:$0xff]
  %v53 = vld [vmem:[%s1 + $0x8] sm:$0xff]
  %v54 = vld [vmem:[%s1 + $0x10] sm:$0xff]
  %v55 = vld [vmem:[%s1 + $0x18] sm:$0xff]
  %v56 = vld [vmem:[%s1 + $0x20] sm:$0xff]
  %v57 = vld [vmem:[%s1 + $0x28] sm:$0xff]
  %v58 = vld [vmem:[%s1 + $0x30] sm:$0xff]
  %v59 = vld [vmem:[%s1 + $0x38] sm:$0xff]
  %v60 = vld [vmem:[%s1 + $0x40] sm:$0xff]
  %v61 = vld [vmem:[%s1 + $0x48] sm:$0xff]
  %v62 = vld [vmem:[%s1 + $0x50] sm:$0xff]
  %v63 = vld [vmem:[%s1 + $0x58] sm:$0xff]
  %v64 = vld [vmem:[%s1 + $0x60] sm:$0xff]
  %v65 = vld [vmem:[%s1 + $0x68] sm:$0xff]
  %v66 = vld [vmem:[%s1 + $0x70] sm:$0xff]
  %v67 = vld [vmem:[%s1 + $0x78] sm:$0xff]
  %v68 = vld [vmem:[%s1 + $0x80] sm:$0xff]
  %v69 = vld [vmem:[%s1 + $0x88] sm:$0xff]
  %v70 = vld [vmem:[%s1 + $0x90] sm:$0xff]
  %v71 = vld [vmem:[%s1 + $0x98] sm:$0xff]
  %v72 = vld [vmem:[%s1 + $0xa0] sm:$0xff]
  %v73 = vld [vmem:[%s1 + $0xa8] sm:$0xff]
  %v74 = vld [vmem:[%s1 + $0xb0] sm:$0xff]
  %v75 = vld [vmem:[%s1 + $0xb8] sm:$0xff]
  %v76 = vld [vmem:[%s1 + $0xc0] sm:$0xff]
  %v77 = vld [vmem:[%s1 + $0xc8] sm:$0xff]
  %v78 = vld [vmem:[%s1 + $0xd0] sm:$0xff]
  %v79 = vld [vmem:[%s1 + $0xd8] sm:$0xff]
  %v80 = vld [vmem:[%s1 + $0xe0] sm:$0xff]
  %v81 = vld [vmem:[%s1 + $0xe8] sm:$0xff]
  %v82 = vld [vmem:[%s1 + $0xf0] sm:$0xff]
  %v83 = vld [vmem:[%s1 + $0xf8] sm:$0xff]
  %v84 = vld [vmem:[%s1 + $0x100] sm:$0xff]
  %v85 = vld [vmem:[%s1 + $0x108] sm:$0xff]
  %v86 = vld [vmem:[%s1 + $0x110] sm:$0xff]
  %v87 = vld [vmem:[%s1 + $0x118] sm:$0xff]
  %v88 = vld [vmem:[%s1 + $0x120] sm:$0xff]
  %v89 = vld [vmem:[%s1 + $0x128] sm:$0xff]
  %v90 = vld [vmem:[%s1 + $0x130] sm:$0xff]
  %v91 = vld [vmem:[%s1 + $0x138] sm:$0xff]
  %v92 = vld [vmem:[%s1 + $0x140] sm:$0xff]
  %v93 = vld [vmem:[%s1 + $0x148] sm:$0xff]
  %v94 = vld [vmem:[%s1 + $0x150] sm:$0xff]
  %v95 = vld [vmem:[%s1 + $0x158] sm:$0xff]
  %v96 = vld [vmem:[%s1 + $0x160] sm:$0xff]
  %v97 = vld [vmem:[%s1 + $0x168] sm:$0xff]
  %v98 = vld [vmem:[%s1 + $0x170] sm:$0xff]
  %v99 = vld [vmem:[%s1 + $0x178] sm:$0xff]
  %v100 = vld [vmem:[%s1 + $0x180] sm:$0xff]
  %v101 = vld [vmem:[%s1 + $0x188] sm:$0xff]
  %v102 = vld [vmem:[%s1 + $0x190] sm:$0xff]
  %v103 = vld [vmem:[%s1 + $0x198] sm:$0xff]
  %v104 = vld [vmem:[%s1 + $0x1a0] sm:$0xff]
  %v105 = vld [vmem:[%s1 + $0x1a8] sm:$0xff]
  %v106 = vld [vmem:[%s1 + $0x1b0] sm:$0xff]
  %v107 = vld [vmem:[%s1 + $0x1b8] sm:$0xff]
  %v108 = vld [vmem:[%s1 + $0x1c0] sm:$0xff]
  %v109 = vld [vmem:[%s1 + $0x1c8] sm:$0xff]
  %v110 = vld [vmem:[%s1 + $0x1d0] sm:$0xff]
  %v111 = vld [vmem:[%s1 + $0x1d8] sm:$0xff]
  %v112 = vld [vmem:[%s1 + $0x1e0] sm:$0xff]
  %v113 = vld [vmem:[%s1 + $0x1e8] sm:$0xff]
  %v114 = vld [vmem:[%s1 + $0x1f0] sm:$0xff]
  %v115 = vld [vmem:[%s1 + $0x1f8] sm:$0xff]
  %v116 = vld [vmem:[%s1 + $0x200] sm:$0xff]
  %v117 = vld [vmem:[%s1 + $0x208] sm:$0xff]
  %v118 = vld [vmem:[%s1 + $0x210] sm:$0xff]
  %v119 = vld [vmem:[%s1 + $0x218] sm:$0xff]
  %v120 = vld [vmem:[%s1 + $0x220] sm:$0xff]
  %v121 = vld [vmem:[%s1 + $0x228] sm:$0xff]
  %v122 = vld [vmem:[%s1 + $0x230] sm:$0xff]
  %v123 = vld [vmem:[%s1 + $0x238] sm:$0xff]
  %v124 = vld [vmem:[%s1 + $0x240] sm:$0xff]
  %v125 = vld [vmem:[%s1 + $0x248] sm:$0xff]
  %v126 = vld [vmem:[%s1 + $0x250] sm:$0xff]
  %v127 = vld [vmem:[%s1 + $0x258] sm:$0xff]
  %v128 = vld [vmem:[%s1 + $0x260] sm:$0xff]
  %v129 = vld [vmem:[%s1 + $0x268] sm:$0xff]
  %v130 = vld [vmem:[%s1 + $0x270] sm:$0xff]
  %v131 = vld [vmem:[%s1 + $0x278] sm:$0xff]
  %v132 = vld [vmem:[%s1 + $0x280] sm:$0xff]
  %v133 = vld [vmem:[%s1 + $0x288] sm:$0xff]
  %v134 = vld [vmem:[%s1 + $0x290] sm:$0xff]
  %v135 = vld [vmem:[%s1 + $0x298] sm:$0xff]
  %v136 = vld [vmem:[%s1 + $0x2a0] sm:$0xff]
  %v137 = vld [vmem:[%s1 + $0x2a8] sm:$0xff]
  %v138 = vld [vmem:[%s1 + $0x2b0] sm:$0xff]
  %v139 = vld [vmem:[%s1 + $0x2b8] sm:$0xff]
  %v140 = vld [vmem:[%s1 + $0x2c0] sm:$0xff]
  %v141 = vld [vmem:[%s1 + $0x2c8] sm:$0xff]
  %v142 = vld [vmem:[%s1 + $0x2d0] sm:$0xff]
  %v143 = vld [vmem:[%s1 + $0x2d8] sm:$0xff]
  %v144 = vld [vmem:[%s1 + $0x2e0] sm:$0xff]
  %v145 = vld [vmem:[%s1 + $0x2e8] sm:$0xff]
  %v146 = vld [vmem:[%s1 + $0x2f0] sm:$0xff]
  %v147 = vld [vmem:[%s1 + $0x2f8] sm:$0xff]
  %v148 = vld [vmem:[%s1 + $0x300] sm:$0xff]
  %v149 = vld [vmem:[%s1 + $0x308] sm:$0xff]
  %v150 = vld [vmem:[%s1 + $0x310] sm:$0xff]
  %v151 = vld [vmem:[%s1 + $0x318] sm:$0xff]
  %v152 = vld [vmem:[%s1 + $0x320] sm:$0xff]
  %v153 = vld [vmem:[%s1 + $0x328] sm:$0xff]
  %v154 = vld [vmem:[%s1 + $0x330] sm:$0xff]
  %v155 = vld [vmem:[%s1 + $0x338] sm:$0xff]
  %v156 = vld [vmem:[%s1 + $0x340] sm:$0xff]
  %v157 = vld [vmem:[%s1 + $0x348] sm:$0xff]
  %v158 = vld [vmem:[%s1 + $0x350] sm:$0xff]
  %v159 = vld [vmem:[%s1 + $0x358] sm:$0xff]
  %v160 = vld [vmem:[%s1 + $0x360] sm:$0xff]
  %v161 = vld [vmem:[%s1 + $0x368] sm:$0xff]
  %v162 = vld [vmem:[%s1 + $0x370] sm:$0xff]
  %v163 = vld [vmem:[%s1 + $0x378] sm:$0xff]
  %v164 = vld [vmem:[%s1 + $0x380] sm:$0xff]
  %v165 = vld [vmem:[%s1 + $0x388] sm:$0xff]
  %v166 = vld [vmem:[%s1 + $0x390] sm:$0xff]
  %v167 = vld [vmem:[%s1 + $0x398] sm:$0xff]
  %v168 = vld [vmem:[%s1 + $0x3a0] sm:$0xff]
  %v169 = vld [vmem:[%s1 + $0x3a8] sm:$0xff]
  %v170 = vld [vmem:[%s1 + $0x3b0] sm:$0xff]
  %v171 = vld [vmem:[%s1 + $0x3b8] sm:$0xff]
  %v172 = vld [vmem:[%s1 + $0x3c0] sm:$0xff]
  %v173 = vld [vmem:[%s1 + $0x3c8] sm:$0xff]
  %v174 = vld [vmem:[%s1 + $0x3d0] sm:$0xff]
  %v175 = vld [vmem:[%s1 + $0x3d8] sm:$0xff]
  %v176 = vld [vmem:[%s1 + $0x3e0] sm:$0xff]
  %v177 = vld [vmem:[%s1 + $0x3e8] sm:$0xff]
  %v178 = vld [vmem:[%s1 + $0x3f0] sm:$0xff]
  %v179 = vld [vmem:[%s1 + $0x3f8] sm:$0xff]
  %v180 = vld [vmem:[%s2] sm:$0xff]
  %v182 = vlaneseq
  %v183 = vshrl.u32 %v182, 7
  %v184 = vsub.s32 0, %v183
  %v185 = vrot.slane %v180, %v184
  %v186 = vlaneseq
  %v187 = vshrl.u32 %v186, 7
  %v188 = vsub.s32 1, %v187
  %v189 = vrot.slane %v180, %v188
  %v190 = vlaneseq
  %v191 = vshrl.u32 %v190, 7
  %v192 = vsub.s32 2, %v191
  %v193 = vrot.slane %v180, %v192
  %v194 = vlaneseq
  %v195 = vshrl.u32 %v194, 7
  %v196 = vsub.s32 3, %v195
  %v197 = vrot.slane %v180, %v196
  %v198 = vlaneseq
  %v199 = vshrl.u32 %v198, 7
  %v200 = vsub.s32 4, %v199
  %v201 = vrot.slane %v180, %v200
  %v202 = vlaneseq
  %v203 = vshrl.u32 %v202, 7
  %v204 = vsub.s32 5, %v203
  %v205 = vrot.slane %v180, %v204
  %v206 = vlaneseq
  %v207 = vshrl.u32 %v206, 7
  %v208 = vsub.s32 6, %v207
  %v209 = vrot.slane %v180, %v208
  %v210 = vlaneseq
  %v211 = vshrl.u32 %v210, 7
  %v212 = vsub.s32 7, %v211
  %v213 = vrot.slane %v180, %v212
  %v238 = vunpack.c.l.b16 %v36
  %v239 = vunpack.c.h.b16 %v36
  %v240 = vunpack.c.l.b16 %v37
  %v241 = vunpack.c.h.b16 %v37
  %v242 = vunpack.c.l.b16 %v38
  %v243 = vunpack.c.h.b16 %v38
  %v244 = vunpack.c.l.b16 %v39
  %v245 = vunpack.c.h.b16 %v39
  %v246 = vunpack.c.l.b16 %v40
  %v247 = vunpack.c.h.b16 %v40
  %v248 = vunpack.c.l.b16 %v41
  %v249 = vunpack.c.h.b16 %v41
  %v250 = vunpack.c.l.b16 %v42
  %v251 = vunpack.c.h.b16 %v42
  %v252 = vunpack.c.l.b16 %v43
  %v253 = vunpack.c.h.b16 %v43
  %v254 = vunpack.c.l.b16 %v44
  %v255 = vunpack.c.h.b16 %v44
  %v256 = vunpack.c.l.b16 %v45
  %v257 = vunpack.c.h.b16 %v45
  %v258 = vunpack.c.l.b16 %v46
  %v259 = vunpack.c.h.b16 %v46
  %v260 = vunpack.c.l.b16 %v47
  %v261 = vunpack.c.h.b16 %v47
  %v262 = vunpack.c.l.b16 %v48
  %v263 = vunpack.c.h.b16 %v48
  %v264 = vunpack.c.l.b16 %v49
  %v265 = vunpack.c.h.b16 %v49
  %v266 = vunpack.c.l.b16 %v50
  %v267 = vunpack.c.h.b16 %v50
  %v268 = vunpack.c.l.b16 %v51
  %v269 = vunpack.c.h.b16 %v51
  %v270 = vpack.c.b16 %v240, %v238
  %v271 = vpack.c.b16 %v241, %v239
  %v272 = vpack.c.b16 %v244, %v242
  %v273 = vpack.c.b16 %v245, %v243
  %v274 = vpack.c.b16 %v248, %v246
  %v275 = vpack.c.b16 %v249, %v247
  %v276 = vpack.c.b16 %v252, %v250
  %v277 = vpack.c.b16 %v253, %v251
  %v278 = vpack.c.b16 %v256, %v254
  %v279 = vpack.c.b16 %v257, %v255
  %v280 = vpack.c.b16 %v260, %v258
  %v281 = vpack.c.b16 %v261, %v259
  %v282 = vpack.c.b16 %v264, %v262
  %v283 = vpack.c.b16 %v265, %v263
  %v284 = vpack.c.b16 %v268, %v266
  %v285 = vpack.c.b16 %v269, %v267
  %v430 = vunpack.c.l.b16 %v52
  %v431 = vunpack.c.h.b16 %v52
  %v432 = vunpack.c.l.b16 %v53
  %v433 = vunpack.c.h.b16 %v53
  %v434 = vunpack.c.l.b16 %v54
  %v435 = vunpack.c.h.b16 %v54
  %v436 = vunpack.c.l.b16 %v55
  %v437 = vunpack.c.h.b16 %v55
  %v438 = vunpack.c.l.b16 %v56
  %v439 = vunpack.c.h.b16 %v56
  %v440 = vunpack.c.l.b16 %v57
  %v441 = vunpack.c.h.b16 %v57
  %v442 = vunpack.c.l.b16 %v58
  %v443 = vunpack.c.h.b16 %v58
  %v444 = vunpack.c.l.b16 %v59
  %v445 = vunpack.c.h.b16 %v59
  %v446 = vunpack.c.l.b16 %v60
  %v447 = vunpack.c.h.b16 %v60
  %v448 = vunpack.c.l.b16 %v61
  %v449 = vunpack.c.h.b16 %v61
  %v450 = vunpack.c.l.b16 %v62
  %v451 = vunpack.c.h.b16 %v62
  %v452 = vunpack.c.l.b16 %v63
  %v453 = vunpack.c.h.b16 %v63
  %v454 = vunpack.c.l.b16 %v64
  %v455 = vunpack.c.h.b16 %v64
  %v456 = vunpack.c.l.b16 %v65
  %v457 = vunpack.c.h.b16 %v65
  %v458 = vunpack.c.l.b16 %v66
  %v459 = vunpack.c.h.b16 %v66
  %v460 = vunpack.c.l.b16 %v67
  %v461 = vunpack.c.h.b16 %v67
  %v462 = vunpack.c.l.b16 %v68
  %v463 = vunpack.c.h.b16 %v68
  %v464 = vunpack.c.l.b16 %v69
  %v465 = vunpack.c.h.b16 %v69
  %v466 = vunpack.c.l.b16 %v70
  %v467 = vunpack.c.h.b16 %v70
  %v468 = vunpack.c.l.b16 %v71
  %v469 = vunpack.c.h.b16 %v71
  %v470 = vunpack.c.l.b16 %v72
  %v471 = vunpack.c.h.b16 %v72
  %v472 = vunpack.c.l.b16 %v73
  %v473 = vunpack.c.h.b16 %v73
  %v474 = vunpack.c.l.b16 %v74
  %v475 = vunpack.c.h.b16 %v74
  %v476 = vunpack.c.l.b16 %v75
  %v477 = vunpack.c.h.b16 %v75
  %v478 = vunpack.c.l.b16 %v76
  %v479 = vunpack.c.h.b16 %v76
  %v480 = vunpack.c.l.b16 %v77
  %v481 = vunpack.c.h.b16 %v77
  %v482 = vunpack.c.l.b16 %v78
  %v483 = vunpack.c.h.b16 %v78
  %v484 = vunpack.c.l.b16 %v79
  %v485 = vunpack.c.h.b16 %v79
  %v486 = vunpack.c.l.b16 %v80
  %v487 = vunpack.c.h.b16 %v80
  %v488 = vunpack.c.l.b16 %v81
  %v489 = vunpack.c.h.b16 %v81
  %v490 = vunpack.c.l.b16 %v82
  %v491 = vunpack.c.h.b16 %v82
  %v492 = vunpack.c.l.b16 %v83
  %v493 = vunpack.c.h.b16 %v83
  %v494 = vunpack.c.l.b16 %v84
  %v495 = vunpack.c.h.b16 %v84
  %v496 = vunpack.c.l.b16 %v85
  %v497 = vunpack.c.h.b16 %v85
  %v498 = vunpack.c.l.b16 %v86
  %v499 = vunpack.c.h.b16 %v86
  %v500 = vunpack.c.l.b16 %v87
  %v501 = vunpack.c.h.b16 %v87
  %v502 = vunpack.c.l.b16 %v88
  %v503 = vunpack.c.h.b16 %v88
  %v504 = vunpack.c.l.b16 %v89
  %v505 = vunpack.c.h.b16 %v89
  %v506 = vunpack.c.l.b16 %v90
  %v507 = vunpack.c.h.b16 %v90
  %v508 = vunpack.c.l.b16 %v91
  %v509 = vunpack.c.h.b16 %v91
  %v510 = vunpack.c.l.b16 %v92
  %v511 = vunpack.c.h.b16 %v92
  %v512 = vunpack.c.l.b16 %v93
  %v513 = vunpack.c.h.b16 %v93
  %v514 = vunpack.c.l.b16 %v94
  %v515 = vunpack.c.h.b16 %v94
  %v516 = vunpack.c.l.b16 %v95
  %v517 = vunpack.c.h.b16 %v95
  %v518 = vunpack.c.l.b16 %v96
  %v519 = vunpack.c.h.b16 %v96
  %v520 = vunpack.c.l.b16 %v97
  %v521 = vunpack.c.h.b16 %v97
  %v522 = vunpack.c.l.b16 %v98
  %v523 = vunpack.c.h.b16 %v98
  %v524 = vunpack.c.l.b16 %v99
  %v525 = vunpack.c.h.b16 %v99
  %v526 = vunpack.c.l.b16 %v100
  %v527 = vunpack.c.h.b16 %v100
  %v528 = vunpack.c.l.b16 %v101
  %v529 = vunpack.c.h.b16 %v101
  %v530 = vunpack.c.l.b16 %v102
  %v531 = vunpack.c.h.b16 %v102
  %v532 = vunpack.c.l.b16 %v103
  %v533 = vunpack.c.h.b16 %v103
  %v534 = vunpack.c.l.b16 %v104
  %v535 = vunpack.c.h.b16 %v104
  %v536 = vunpack.c.l.b16 %v105
  %v537 = vunpack.c.h.b16 %v105
  %v538 = vunpack.c.l.b16 %v106
  %v539 = vunpack.c.h.b16 %v106
  %v540 = vunpack.c.l.b16 %v107
  %v541 = vunpack.c.h.b16 %v107
  %v542 = vunpack.c.l.b16 %v108
  %v543 = vunpack.c.h.b16 %v108
  %v544 = vunpack.c.l.b16 %v109
  %v545 = vunpack.c.h.b16 %v109
  %v546 = vunpack.c.l.b16 %v110
  %v547 = vunpack.c.h.b16 %v110
  %v548 = vunpack.c.l.b16 %v111
  %v549 = vunpack.c.h.b16 %v111
  %v550 = vunpack.c.l.b16 %v112
  %v551 = vunpack.c.h.b16 %v112
  %v552 = vunpack.c.l.b16 %v113
  %v553 = vunpack.c.h.b16 %v113
  %v554 = vunpack.c.l.b16 %v114
  %v555 = vunpack.c.h.b16 %v114
  %v556 = vunpack.c.l.b16 %v115
  %v557 = vunpack.c.h.b16 %v115
  %v558 = vunpack.c.l.b16 %v116
  %v559 = vunpack.c.h.b16 %v116
  %v560 = vunpack.c.l.b16 %v117
  %v561 = vunpack.c.h.b16 %v117
  %v562 = vunpack.c.l.b16 %v118
  %v563 = vunpack.c.h.b16 %v118
  %v564 = vunpack.c.l.b16 %v119
  %v565 = vunpack.c.h.b16 %v119
  %v566 = vunpack.c.l.b16 %v120
  %v567 = vunpack.c.h.b16 %v120
  %v568 = vunpack.c.l.b16 %v121
  %v569 = vunpack.c.h.b16 %v121
  %v570 = vunpack.c.l.b16 %v122
  %v571 = vunpack.c.h.b16 %v122
  %v572 = vunpack.c.l.b16 %v123
  %v573 = vunpack.c.h.b16 %v123
  %v574 = vunpack.c.l.b16 %v124
  %v575 = vunpack.c.h.b16 %v124
  %v576 = vunpack.c.l.b16 %v125
  %v577 = vunpack.c.h.b16 %v125
  %v578 = vunpack.c.l.b16 %v126
  %v579 = vunpack.c.h.b16 %v126
  %v580 = vunpack.c.l.b16 %v127
  %v581 = vunpack.c.h.b16 %v127
  %v582 = vunpack.c.l.b16 %v128
  %v583 = vunpack.c.h.b16 %v128
  %v584 = vunpack.c.l.b16 %v129
  %v585 = vunpack.c.h.b16 %v129
  %v586 = vunpack.c.l.b16 %v130
  %v587 = vunpack.c.h.b16 %v130
  %v588 = vunpack.c.l.b16 %v131
  %v589 = vunpack.c.h.b16 %v131
  %v590 = vunpack.c.l.b16 %v132
  %v591 = vunpack.c.h.b16 %v132
  %v592 = vunpack.c.l.b16 %v133
  %v593 = vunpack.c.h.b16 %v133
  %v594 = vunpack.c.l.b16 %v134
  %v595 = vunpack.c.h.b16 %v134
  %v596 = vunpack.c.l.b16 %v135
  %v597 = vunpack.c.h.b16 %v135
  %v598 = vunpack.c.l.b16 %v136
  %v599 = vunpack.c.h.b16 %v136
  %v600 = vunpack.c.l.b16 %v137
  %v601 = vunpack.c.h.b16 %v137
  %v602 = vunpack.c.l.b16 %v138
  %v603 = vunpack.c.h.b16 %v138
  %v604 = vunpack.c.l.b16 %v139
  %v605 = vunpack.c.h.b16 %v139
  %v606 = vunpack.c.l.b16 %v140
  %v607 = vunpack.c.h.b16 %v140
  %v608 = vunpack.c.l.b16 %v141
  %v609 = vunpack.c.h.b16 %v141
  %v610 = vunpack.c.l.b16 %v142
  %v611 = vunpack.c.h.b16 %v142
  %v612 = vunpack.c.l.b16 %v143
  %v613 = vunpack.c.h.b16 %v143
  %v614 = vunpack.c.l.b16 %v144
  %v615 = vunpack.c.h.b16 %v144
  %v616 = vunpack.c.l.b16 %v145
  %v617 = vunpack.c.h.b16 %v145
  %v618 = vunpack.c.l.b16 %v146
  %v619 = vunpack.c.h.b16 %v146
  %v620 = vunpack.c.l.b16 %v147
  %v621 = vunpack.c.h.b16 %v147
  %v622 = vunpack.c.l.b16 %v148
  %v623 = vunpack.c.h.b16 %v148
  %v624 = vunpack.c.l.b16 %v149
  %v625 = vunpack.c.h.b16 %v149
  %v626 = vunpack.c.l.b16 %v150
  %v627 = vunpack.c.h.b16 %v150
  %v628 = vunpack.c.l.b16 %v151
  %v629 = vunpack.c.h.b16 %v151
  %v630 = vunpack.c.l.b16 %v152
  %v631 = vunpack.c.h.b16 %v152
  %v632 = vunpack.c.l.b16 %v153
  %v633 = vunpack.c.h.b16 %v153
  %v634 = vunpack.c.l.b16 %v154
  %v635 = vunpack.c.h.b16 %v154
  %v636 = vunpack.c.l.b16 %v155
  %v637 = vunpack.c.h.b16 %v155
  %v638 = vunpack.c.l.b16 %v156
  %v639 = vunpack.c.h.b16 %v156
  %v640 = vunpack.c.l.b16 %v157
  %v641 = vunpack.c.h.b16 %v157
  %v642 = vunpack.c.l.b16 %v158
  %v643 = vunpack.c.h.b16 %v158
  %v644 = vunpack.c.l.b16 %v159
  %v645 = vunpack.c.h.b16 %v159
  %v646 = vunpack.c.l.b16 %v160
  %v647 = vunpack.c.h.b16 %v160
  %v648 = vunpack.c.l.b16 %v161
  %v649 = vunpack.c.h.b16 %v161
  %v650 = vunpack.c.l.b16 %v162
  %v651 = vunpack.c.h.b16 %v162
  %v652 = vunpack.c.l.b16 %v163
  %v653 = vunpack.c.h.b16 %v163
  %v654 = vunpack.c.l.b16 %v164
  %v655 = vunpack.c.h.b16 %v164
  %v656 = vunpack.c.l.b16 %v165
  %v657 = vunpack.c.h.b16 %v165
  %v658 = vunpack.c.l.b16 %v166
  %v659 = vunpack.c.h.b16 %v166
  %v660 = vunpack.c.l.b16 %v167
  %v661 = vunpack.c.h.b16 %v167
  %v662 = vunpack.c.l.b16 %v168
  %v663 = vunpack.c.h.b16 %v168
  %v664 = vunpack.c.l.b16 %v169
  %v665 = vunpack.c.h.b16 %v169
  %v666 = vunpack.c.l.b16 %v170
  %v667 = vunpack.c.h.b16 %v170
  %v668 = vunpack.c.l.b16 %v171
  %v669 = vunpack.c.h.b16 %v171
  %v670 = vunpack.c.l.b16 %v172
  %v671 = vunpack.c.h.b16 %v172
  %v672 = vunpack.c.l.b16 %v173
  %v673 = vunpack.c.h.b16 %v173
  %v674 = vunpack.c.l.b16 %v174
  %v675 = vunpack.c.h.b16 %v174
  %v676 = vunpack.c.l.b16 %v175
  %v677 = vunpack.c.h.b16 %v175
  %v678 = vunpack.c.l.b16 %v176
  %v679 = vunpack.c.h.b16 %v176
  %v680 = vunpack.c.l.b16 %v177
  %v681 = vunpack.c.h.b16 %v177
  %v682 = vunpack.c.l.b16 %v178
  %v683 = vunpack.c.h.b16 %v178
  %v684 = vunpack.c.l.b16 %v179
  %v685 = vunpack.c.h.b16 %v179
  %v686 = vpack.c.b16 %v438, %v430
  %v687 = vpack.c.b16 %v439, %v431
  %v688 = vpack.c.b16 %v440, %v432
  %v689 = vpack.c.b16 %v441, %v433
  %v690 = vpack.c.b16 %v442, %v434
  %v691 = vpack.c.b16 %v443, %v435
  %v692 = vpack.c.b16 %v444, %v436
  %v693 = vpack.c.b16 %v445, %v437
  %v694 = vpack.c.b16 %v454, %v446
  %v695 = vpack.c.b16 %v455, %v447
  %v696 = vpack.c.b16 %v456, %v448
  %v697 = vpack.c.b16 %v457, %v449
  %v698 = vpack.c.b16 %v458, %v450
  %v699 = vpack.c.b16 %v459, %v451
  %v700 = vpack.c.b16 %v460, %v452
  %v701 = vpack.c.b16 %v461, %v453
  %v702 = vpack.c.b16 %v470, %v462
  %v703 = vpack.c.b16 %v471, %v463
  %v704 = vpack.c.b16 %v472, %v464
  %v705 = vpack.c.b16 %v473, %v465
  %v706 = vpack.c.b16 %v474, %v466
  %v707 = vpack.c.b16 %v475, %v467
  %v708 = vpack.c.b16 %v476, %v468
  %v709 = vpack.c.b16 %v477, %v469
  %v710 = vpack.c.b16 %v486, %v478
  %v711 = vpack.c.b16 %v487, %v479
  %v712 = vpack.c.b16 %v488, %v480
  %v713 = vpack.c.b16 %v489, %v481
  %v714 = vpack.c.b16 %v490, %v482
  %v715 = vpack.c.b16 %v491, %v483
  %v716 = vpack.c.b16 %v492, %v484
  %v717 = vpack.c.b16 %v493, %v485
  %v718 = vpack.c.b16 %v502, %v494
  %v719 = vpack.c.b16 %v503, %v495
  %v720 = vpack.c.b16 %v504, %v496
  %v721 = vpack.c.b16 %v505, %v497
  %v722 = vpack.c.b16 %v506, %v498
  %v723 = vpack.c.b16 %v507, %v499
  %v724 = vpack.c.b16 %v508, %v500
  %v725 = vpack.c.b16 %v509, %v501
  %v726 = vpack.c.b16 %v518, %v510
  %v727 = vpack.c.b16 %v519, %v511
  %v728 = vpack.c.b16 %v520, %v512
  %v729 = vpack.c.b16 %v521, %v513
  %v730 = vpack.c.b16 %v522, %v514
  %v731 = vpack.c.b16 %v523, %v515
  %v732 = vpack.c.b16 %v524, %v516
  %v733 = vpack.c.b16 %v525, %v517
  %v734 = vpack.c.b16 %v534, %v526
  %v735 = vpack.c.b16 %v535, %v527
  %v736 = vpack.c.b16 %v536, %v528
  %v737 = vpack.c.b16 %v537, %v529
  %v738 = vpack.c.b16 %v538, %v530
  %v739 = vpack.c.b16 %v539, %v531
  %v740 = vpack.c.b16 %v540, %v532
  %v741 = vpack.c.b16 %v541, %v533
  %v742 = vpack.c.b16 %v550, %v542
  %v743 = vpack.c.b16 %v551, %v543
  %v744 = vpack.c.b16 %v552, %v544
  %v745 = vpack.c.b16 %v553, %v545
  %v746 = vpack.c.b16 %v554, %v546
  %v747 = vpack.c.b16 %v555, %v547
  %v748 = vpack.c.b16 %v556, %v548
  %v749 = vpack.c.b16 %v557, %v549
  %v750 = vpack.c.b16 %v566, %v558
  %v751 = vpack.c.b16 %v567, %v559
  %v752 = vpack.c.b16 %v568, %v560
  %v753 = vpack.c.b16 %v569, %v561
  %v754 = vpack.c.b16 %v570, %v562
  %v755 = vpack.c.b16 %v571, %v563
  %v756 = vpack.c.b16 %v572, %v564
  %v757 = vpack.c.b16 %v573, %v565
  %v758 = vpack.c.b16 %v582, %v574
  %v759 = vpack.c.b16 %v583, %v575
  %v760 = vpack.c.b16 %v584, %v576
  %v761 = vpack.c.b16 %v585, %v577
  %v762 = vpack.c.b16 %v586, %v578
  %v763 = vpack.c.b16 %v587, %v579
  %v764 = vpack.c.b16 %v588, %v580
  %v765 = vpack.c.b16 %v589, %v581
  %v766 = vpack.c.b16 %v598, %v590
  %v767 = vpack.c.b16 %v599, %v591
  %v768 = vpack.c.b16 %v600, %v592
  %v769 = vpack.c.b16 %v601, %v593
  %v770 = vpack.c.b16 %v602, %v594
  %v771 = vpack.c.b16 %v603, %v595
  %v772 = vpack.c.b16 %v604, %v596
  %v773 = vpack.c.b16 %v605, %v597
  %v774 = vpack.c.b16 %v614, %v606
  %v775 = vpack.c.b16 %v615, %v607
  %v776 = vpack.c.b16 %v616, %v608
  %v777 = vpack.c.b16 %v617, %v609
  %v778 = vpack.c.b16 %v618, %v610
  %v779 = vpack.c.b16 %v619, %v611
  %v780 = vpack.c.b16 %v620, %v612
  %v781 = vpack.c.b16 %v621, %v613
  %v782 = vpack.c.b16 %v630, %v622
  %v783 = vpack.c.b16 %v631, %v623
  %v784 = vpack.c.b16 %v632, %v624
  %v785 = vpack.c.b16 %v633, %v625
  %v786 = vpack.c.b16 %v634, %v626
  %v787 = vpack.c.b16 %v635, %v627
  %v788 = vpack.c.b16 %v636, %v628
  %v789 = vpack.c.b16 %v637, %v629
  %v790 = vpack.c.b16 %v646, %v638
  %v791 = vpack.c.b16 %v647, %v639
  %v792 = vpack.c.b16 %v648, %v640
  %v793 = vpack.c.b16 %v649, %v641
  %v794 = vpack.c.b16 %v650, %v642
  %v795 = vpack.c.b16 %v651, %v643
  %v796 = vpack.c.b16 %v652, %v644
  %v797 = vpack.c.b16 %v653, %v645
  %v798 = vpack.c.b16 %v662, %v654
  %v799 = vpack.c.b16 %v663, %v655
  %v800 = vpack.c.b16 %v664, %v656
  %v801 = vpack.c.b16 %v665, %v657
  %v802 = vpack.c.b16 %v666, %v658
  %v803 = vpack.c.b16 %v667, %v659
  %v804 = vpack.c.b16 %v668, %v660
  %v805 = vpack.c.b16 %v669, %v661
  %v806 = vpack.c.b16 %v678, %v670
  %v807 = vpack.c.b16 %v679, %v671
  %v808 = vpack.c.b16 %v680, %v672
  %v809 = vpack.c.b16 %v681, %v673
  %v810 = vpack.c.b16 %v682, %v674
  %v811 = vpack.c.b16 %v683, %v675
  %v812 = vpack.c.b16 %v684, %v676
  %v813 = vpack.c.b16 %v685, %v677
  %942 = vmatprep.subr.bf16.mxu0 %v743
  %943 = vmatpush1.bf16.msra.mxu0 %v742
  %944 = vmatprep.subr.bf16.mxu0 %v735
  %945 = vmatpush1.bf16.msra.mxu0 %v734
  %946 = vmatprep.subr.bf16.mxu0 %v727
  %947 = vmatpush1.bf16.msra.mxu0 %v726
  %948 = vmatprep.subr.bf16.mxu0 %v719
  %949 = vmatpush1.bf16.msra.mxu0 %v718
  %950 = vmatprep.subr.bf16.mxu0 %v711
  %951 = vmatpush1.bf16.msra.mxu0 %v710
  %952 = vmatprep.subr.bf16.mxu0 %v703
  %953 = vmatpush1.bf16.msra.mxu0 %v702
  %954 = vmatprep.subr.bf16.mxu0 %v695
  %955 = vmatpush1.bf16.msra.mxu0 %v694
  %956 = vmatprep.subr.bf16.mxu0 %v687
  %957 = vmatpush1.bf16.msra.mxu0 %v686
  %958 = vmatprep.subr.bf16.mxu0 %v807
  %959 = vmatpush2.bf16.msra.mxu0 %v806
  %960 = vmatprep.subr.bf16.mxu0 %v799
  %961 = vmatpush2.bf16.msra.mxu0 %v798
  %962 = vmatprep.subr.bf16.mxu0 %v791
  %963 = vmatpush2.bf16.msra.mxu0 %v790
  %964 = vmatprep.subr.bf16.mxu0 %v783
  %965 = vmatpush2.bf16.msra.mxu0 %v782
  %966 = vmatprep.subr.bf16.mxu0 %v775
  %967 = vmatpush2.bf16.msra.mxu0 %v774
  %968 = vmatprep.subr.bf16.mxu0 %v767
  %969 = vmatpush2.bf16.msra.mxu0 %v766
  %970 = vmatprep.subr.bf16.mxu0 %v759
  %971 = vmatpush2.bf16.msra.mxu0 %v758
  %972 = vmatprep.subr.bf16.mxu0 %v751
  %973 = vmatpush2.bf16.msra.mxu0 %v750
  %974 = vmatprep.mubr.bf16.mxu0 %v271
  %975 = vmatmul.mubr.bf16.gmra.mxu0 %v270
  %v976 = vpop.f32.mrf.mxu0
  %v977 = vadd.f32 %v185, %v976
  %v978 = vpop.f32.mrf.mxu0
  %v979 = vadd.f32 %v189, %v978
  %v980 = vpop.f32.mrf.mxu0
  %v981 = vadd.f32 %v185, %v980
  %v982 = vpop.f32.mrf.mxu0
  %v983 = vadd.f32 %v189, %v982
  %984 = vmatprep.mubr.bf16.mxu0 %v273
  %985 = vmatmul.mubr.bf16.gmra.mxu0 %v272
  %v986 = vpop.f32.mrf.mxu0
  %v987 = vadd.f32 %v185, %v986
  %v988 = vpop.f32.mrf.mxu0
  %v989 = vadd.f32 %v189, %v988
  %v990 = vpop.f32.mrf.mxu0
  %v991 = vadd.f32 %v185, %v990
  %v992 = vpop.f32.mrf.mxu0
  %v993 = vadd.f32 %v189, %v992
  %994 = vmatprep.mubr.bf16.mxu0 %v275
  %995 = vmatmul.mubr.bf16.gmra.mxu0 %v274
  %v996 = vpop.f32.mrf.mxu0
  %v997 = vadd.f32 %v185, %v996
  %v998 = vpop.f32.mrf.mxu0
  %v999 = vadd.f32 %v189, %v998
  %v1000 = vpop.f32.mrf.mxu0
  %v1001 = vadd.f32 %v185, %v1000
  %v1002 = vpop.f32.mrf.mxu0
  %v1003 = vadd.f32 %v189, %v1002
  %1004 = vmatprep.mubr.bf16.mxu0 %v277
  %1005 = vmatmul.mubr.bf16.gmra.mxu0 %v276
  %v1006 = vpop.f32.mrf.mxu0
  %v1007 = vadd.f32 %v185, %v1006
  %v1008 = vpop.f32.mrf.mxu0
  %v1009 = vadd.f32 %v189, %v1008
  %v1010 = vpop.f32.mrf.mxu0
  %v1011 = vadd.f32 %v185, %v1010
  %v1012 = vpop.f32.mrf.mxu0
  %v1013 = vadd.f32 %v189, %v1012
  %1014 = vmatprep.mubr.bf16.mxu0 %v279
  %1015 = vmatmul.mubr.bf16.gmra.mxu0 %v278
  %v1016 = vpop.f32.mrf.mxu0
  %v1017 = vadd.f32 %v185, %v1016
  %v1018 = vpop.f32.mrf.mxu0
  %v1019 = vadd.f32 %v189, %v1018
  %v1020 = vpop.f32.mrf.mxu0
  %v1021 = vadd.f32 %v185, %v1020
  %v1022 = vpop.f32.mrf.mxu0
  %v1023 = vadd.f32 %v189, %v1022
  %1024 = vmatprep.mubr.bf16.mxu0 %v281
  %1025 = vmatmul.mubr.bf16.gmra.mxu0 %v280
  %v1026 = vpop.f32.mrf.mxu0
  %v1027 = vadd.f32 %v185, %v1026
  %v1028 = vpop.f32.mrf.mxu0
  %v1029 = vadd.f32 %v189, %v1028
  %v1030 = vpop.f32.mrf.mxu0
  %v1031 = vadd.f32 %v185, %v1030
  %v1032 = vpop.f32.mrf.mxu0
  %v1033 = vadd.f32 %v189, %v1032
  %1034 = vmatprep.mubr.bf16.mxu0 %v283
  %1035 = vmatmul.mubr.bf16.gmra.mxu0 %v282
  %v1036 = vpop.f32.mrf.mxu0
  %v1037 = vadd.f32 %v185, %v1036
  %v1038 = vpop.f32.mrf.mxu0
  %v1039 = vadd.f32 %v189, %v1038
  %v1040 = vpop.f32.mrf.mxu0
  %v1041 = vadd.f32 %v185, %v1040
  %v1042 = vpop.f32.mrf.mxu0
  %v1043 = vadd.f32 %v189, %v1042
  %1044 = vmatprep.mubr.bf16.mxu0 %v285
  %1045 = vmatmul.mubr.bf16.gmra.mxu0 %v284
  %v1046 = vpop.f32.mrf.mxu0
  %v1047 = vadd.f32 %v185, %v1046
  %v1048 = vpop.f32.mrf.mxu0
  %v1049 = vadd.f32 %v189, %v1048
  %v1050 = vpop.f32.mrf.mxu0
  %v1051 = vadd.f32 %v185, %v1050
  %v1052 = vpop.f32.mrf.mxu0
  %v1053 = vadd.f32 %v189, %v1052
  %1054 = vdwg.mxu0
  %1055 = vmatprep.subr.bf16.mxu0 %v745
  %1056 = vmatpush1.bf16.msra.mxu0 %v744
  %1057 = vmatprep.subr.bf16.mxu0 %v737
  %1058 = vmatpush1.bf16.msra.mxu0 %v736
  %1059 = vmatprep.subr.bf16.mxu0 %v729
  %1060 = vmatpush1.bf16.msra.mxu0 %v728
  %1061 = vmatprep.subr.bf16.mxu0 %v721
  %1062 = vmatpush1.bf16.msra.mxu0 %v720
  %1063 = vmatprep.subr.bf16.mxu0 %v713
  %1064 = vmatpush1.bf16.msra.mxu0 %v712
  %1065 = vmatprep.subr.bf16.mxu0 %v705
  %1066 = vmatpush1.bf16.msra.mxu0 %v704
  %1067 = vmatprep.subr.bf16.mxu0 %v697
  %1068 = vmatpush1.bf16.msra.mxu0 %v696
  %1069 = vmatprep.subr.bf16.mxu0 %v689
  %1070 = vmatpush1.bf16.msra.mxu0 %v688
  %1071 = vmatprep.subr.bf16.mxu0 %v809
  %1072 = vmatpush2.bf16.msra.mxu0 %v808
  %1073 = vmatprep.subr.bf16.mxu0 %v801
  %1074 = vmatpush2.bf16.msra.mxu0 %v800
  %1075 = vmatprep.subr.bf16.mxu0 %v793
  %1076 = vmatpush2.bf16.msra.mxu0 %v792
  %1077 = vmatprep.subr.bf16.mxu0 %v785
  %1078 = vmatpush2.bf16.msra.mxu0 %v784
  %1079 = vmatprep.subr.bf16.mxu0 %v777
  %1080 = vmatpush2.bf16.msra.mxu0 %v776
  %1081 = vmatprep.subr.bf16.mxu0 %v769
  %1082 = vmatpush2.bf16.msra.mxu0 %v768
  %1083 = vmatprep.subr.bf16.mxu0 %v761
  %1084 = vmatpush2.bf16.msra.mxu0 %v760
  %1085 = vmatprep.subr.bf16.mxu0 %v753
  %1086 = vmatpush2.bf16.msra.mxu0 %v752
  %1087 = vmatprep.mubr.bf16.mxu0 %v271
  %1088 = vmatmul.mubr.bf16.gmra.mxu0 %v270
  %v1089 = vpop.f32.mrf.mxu0
  %v1090 = vadd.f32 %v193, %v1089
  %v1091 = vpop.f32.mrf.mxu0
  %v1092 = vadd.f32 %v197, %v1091
  %v1093 = vpop.f32.mrf.mxu0
  %v1094 = vadd.f32 %v193, %v1093
  %v1095 = vpop.f32.mrf.mxu0
  %v1096 = vadd.f32 %v197, %v1095
  %1097 = vmatprep.mubr.bf16.mxu0 %v273
  %1098 = vmatmul.mubr.bf16.gmra.mxu0 %v272
  %v1099 = vpop.f32.mrf.mxu0
  %v1100 = vadd.f32 %v193, %v1099
  %v1101 = vpop.f32.mrf.mxu0
  %v1102 = vadd.f32 %v197, %v1101
  %v1103 = vpop.f32.mrf.mxu0
  %v1104 = vadd.f32 %v193, %v1103
  %v1105 = vpop.f32.mrf.mxu0
  %v1106 = vadd.f32 %v197, %v1105
  %1107 = vmatprep.mubr.bf16.mxu0 %v275
  %1108 = vmatmul.mubr.bf16.gmra.mxu0 %v274
  %v1109 = vpop.f32.mrf.mxu0
  %v1110 = vadd.f32 %v193, %v1109
  %v1111 = vpop.f32.mrf.mxu0
  %v1112 = vadd.f32 %v197, %v1111
  %v1113 = vpop.f32.mrf.mxu0
  %v1114 = vadd.f32 %v193, %v1113
  %v1115 = vpop.f32.mrf.mxu0
  %v1116 = vadd.f32 %v197, %v1115
  %1117 = vmatprep.mubr.bf16.mxu0 %v277
  %1118 = vmatmul.mubr.bf16.gmra.mxu0 %v276
  %v1119 = vpop.f32.mrf.mxu0
  %v1120 = vadd.f32 %v193, %v1119
  %v1121 = vpop.f32.mrf.mxu0
  %v1122 = vadd.f32 %v197, %v1121
  %v1123 = vpop.f32.mrf.mxu0
  %v1124 = vadd.f32 %v193, %v1123
  %v1125 = vpop.f32.mrf.mxu0
  %v1126 = vadd.f32 %v197, %v1125
  %1127 = vmatprep.mubr.bf16.mxu0 %v279
  %1128 = vmatmul.mubr.bf16.gmra.mxu0 %v278
  %v1129 = vpop.f32.mrf.mxu0
  %v1130 = vadd.f32 %v193, %v1129
  %v1131 = vpop.f32.mrf.mxu0
  %v1132 = vadd.f32 %v197, %v1131
  %v1133 = vpop.f32.mrf.mxu0
  %v1134 = vadd.f32 %v193, %v1133
  %v1135 = vpop.f32.mrf.mxu0
  %v1136 = vadd.f32 %v197, %v1135
  %1137 = vmatprep.mubr.bf16.mxu0 %v281
  %1138 = vmatmul.mubr.bf16.gmra.mxu0 %v280
  %v1139 = vpop.f32.mrf.mxu0
  %v1140 = vadd.f32 %v193, %v1139
  %v1141 = vpop.f32.mrf.mxu0
  %v1142 = vadd.f32 %v197, %v1141
  %v1143 = vpop.f32.mrf.mxu0
  %v1144 = vadd.f32 %v193, %v1143
  %v1145 = vpop.f32.mrf.mxu0
  %v1146 = vadd.f32 %v197, %v1145
  %1147 = vmatprep.mubr.bf16.mxu0 %v283
  %1148 = vmatmul.mubr.bf16.gmra.mxu0 %v282
  %v1149 = vpop.f32.mrf.mxu0
  %v1150 = vadd.f32 %v193, %v1149
  %v1151 = vpop.f32.mrf.mxu0
  %v1152 = vadd.f32 %v197, %v1151
  %v1153 = vpop.f32.mrf.mxu0
  %v1154 = vadd.f32 %v193, %v1153
  %v1155 = vpop.f32.mrf.mxu0
  %v1156 = vadd.f32 %v197, %v1155
  %1157 = vmatprep.mubr.bf16.mxu0 %v285
  %1158 = vmatmul.mubr.bf16.gmra.mxu0 %v284
  %v1159 = vpop.f32.mrf.mxu0
  %v1160 = vadd.f32 %v193, %v1159
  %v1161 = vpop.f32.mrf.mxu0
  %v1162 = vadd.f32 %v197, %v1161
  %v1163 = vpop.f32.mrf.mxu0
  %v1164 = vadd.f32 %v193, %v1163
  %v1165 = vpop.f32.mrf.mxu0
  %v1166 = vadd.f32 %v197, %v1165
  %1167 = vdwg.mxu0
  %1168 = vmatprep.subr.bf16.mxu0 %v747
  %1169 = vmatpush1.bf16.msra.mxu0 %v746
  %1170 = vmatprep.subr.bf16.mxu0 %v739
  %1171 = vmatpush1.bf16.msra.mxu0 %v738
  %1172 = vmatprep.subr.bf16.mxu0 %v731
  %1173 = vmatpush1.bf16.msra.mxu0 %v730
  %1174 = vmatprep.subr.bf16.mxu0 %v723
  %1175 = vmatpush1.bf16.msra.mxu0 %v722
  %1176 = vmatprep.subr.bf16.mxu0 %v715
  %1177 = vmatpush1.bf16.msra.mxu0 %v714
  %1178 = vmatprep.subr.bf16.mxu0 %v707
  %1179 = vmatpush1.bf16.msra.mxu0 %v706
  %1180 = vmatprep.subr.bf16.mxu0 %v699
  %1181 = vmatpush1.bf16.msra.mxu0 %v698
  %1182 = vmatprep.subr.bf16.mxu0 %v691
  %1183 = vmatpush1.bf16.msra.mxu0 %v690
  %1184 = vmatprep.subr.bf16.mxu0 %v811
  %1185 = vmatpush2.bf16.msra.mxu0 %v810
  %1186 = vmatprep.subr.bf16.mxu0 %v803
  %1187 = vmatpush2.bf16.msra.mxu0 %v802
  %1188 = vmatprep.subr.bf16.mxu0 %v795
  %1189 = vmatpush2.bf16.msra.mxu0 %v794
  %1190 = vmatprep.subr.bf16.mxu0 %v787
  %1191 = vmatpush2.bf16.msra.mxu0 %v786
  %1192 = vmatprep.subr.bf16.mxu0 %v779
  %1193 = vmatpush2.bf16.msra.mxu0 %v778
  %1194 = vmatprep.subr.bf16.mxu0 %v771
  %1195 = vmatpush2.bf16.msra.mxu0 %v770
  %1196 = vmatprep.subr.bf16.mxu0 %v763
  %1197 = vmatpush2.bf16.msra.mxu0 %v762
  %1198 = vmatprep.subr.bf16.mxu0 %v755
  %1199 = vmatpush2.bf16.msra.mxu0 %v754
  %1200 = vmatprep.mubr.bf16.mxu0 %v271
  %1201 = vmatmul.mubr.bf16.gmra.mxu0 %v270
  %v1202 = vpop.f32.mrf.mxu0
  %v1203 = vadd.f32 %v201, %v1202
  %v1204 = vpop.f32.mrf.mxu0
  %v1205 = vadd.f32 %v205, %v1204
  %v1206 = vpop.f32.mrf.mxu0
  %v1207 = vadd.f32 %v201, %v1206
  %v1208 = vpop.f32.mrf.mxu0
  %v1209 = vadd.f32 %v205, %v1208
  %1210 = vmatprep.mubr.bf16.mxu0 %v273
  %1211 = vmatmul.mubr.bf16.gmra.mxu0 %v272
  %v1212 = vpop.f32.mrf.mxu0
  %v1213 = vadd.f32 %v201, %v1212
  %v1214 = vpop.f32.mrf.mxu0
  %v1215 = vadd.f32 %v205, %v1214
  %v1216 = vpop.f32.mrf.mxu0
  %v1217 = vadd.f32 %v201, %v1216
  %v1218 = vpop.f32.mrf.mxu0
  %v1219 = vadd.f32 %v205, %v1218
  %1220 = vmatprep.mubr.bf16.mxu0 %v275
  %1221 = vmatmul.mubr.bf16.gmra.mxu0 %v274
  %v1222 = vpop.f32.mrf.mxu0
  %v1223 = vadd.f32 %v201, %v1222
  %v1224 = vpop.f32.mrf.mxu0
  %v1225 = vadd.f32 %v205, %v1224
  %v1226 = vpop.f32.mrf.mxu0
  %v1227 = vadd.f32 %v201, %v1226
  %v1228 = vpop.f32.mrf.mxu0
  %v1229 = vadd.f32 %v205, %v1228
  %1230 = vmatprep.mubr.bf16.mxu0 %v277
  %1231 = vmatmul.mubr.bf16.gmra.mxu0 %v276
  %v1232 = vpop.f32.mrf.mxu0
  %v1233 = vadd.f32 %v201, %v1232
  %v1234 = vpop.f32.mrf.mxu0
  %v1235 = vadd.f32 %v205, %v1234
  %v1236 = vpop.f32.mrf.mxu0
  %v1237 = vadd.f32 %v201, %v1236
  %v1238 = vpop.f32.mrf.mxu0
  %v1239 = vadd.f32 %v205, %v1238
  %1240 = vmatprep.mubr.bf16.mxu0 %v279
  %1241 = vmatmul.mubr.bf16.gmra.mxu0 %v278
  %v1242 = vpop.f32.mrf.mxu0
  %v1243 = vadd.f32 %v201, %v1242
  %v1244 = vpop.f32.mrf.mxu0
  %v1245 = vadd.f32 %v205, %v1244
  %v1246 = vpop.f32.mrf.mxu0
  %v1247 = vadd.f32 %v201, %v1246
  %v1248 = vpop.f32.mrf.mxu0
  %v1249 = vadd.f32 %v205, %v1248
  %1250 = vmatprep.mubr.bf16.mxu0 %v281
  %1251 = vmatmul.mubr.bf16.gmra.mxu0 %v280
  %v1252 = vpop.f32.mrf.mxu0
  %v1253 = vadd.f32 %v201, %v1252
  %v1254 = vpop.f32.mrf.mxu0
  %v1255 = vadd.f32 %v205, %v1254
  %v1256 = vpop.f32.mrf.mxu0
  %v1257 = vadd.f32 %v201, %v1256
  %v1258 = vpop.f32.mrf.mxu0
  %v1259 = vadd.f32 %v205, %v1258
  %1260 = vmatprep.mubr.bf16.mxu0 %v283
  %1261 = vmatmul.mubr.bf16.gmra.mxu0 %v282
  %v1262 = vpop.f32.mrf.mxu0
  %v1263 = vadd.f32 %v201, %v1262
  %v1264 = vpop.f32.mrf.mxu0
  %v1265 = vadd.f32 %v205, %v1264
  %v1266 = vpop.f32.mrf.mxu0
  %v1267 = vadd.f32 %v201, %v1266
  %v1268 = vpop.f32.mrf.mxu0
  %v1269 = vadd.f32 %v205, %v1268
  %1270 = vmatprep.mubr.bf16.mxu0 %v285
  %1271 = vmatmul.mubr.bf16.gmra.mxu0 %v284
  %v1272 = vpop.f32.mrf.mxu0
  %v1273 = vadd.f32 %v201, %v1272
  %v1274 = vpop.f32.mrf.mxu0
  %v1275 = vadd.f32 %v205, %v1274
  %v1276 = vpop.f32.mrf.mxu0
  %v1277 = vadd.f32 %v201, %v1276
  %v1278 = vpop.f32.mrf.mxu0
  %v1279 = vadd.f32 %v205, %v1278
  %1280 = vdwg.mxu0
  %1281 = vmatprep.subr.bf16.mxu0 %v749
  %1282 = vmatpush1.bf16.msra.mxu0 %v748
  %1283 = vmatprep.subr.bf16.mxu0 %v741
  %1284 = vmatpush1.bf16.msra.mxu0 %v740
  %1285 = vmatprep.subr.bf16.mxu0 %v733
  %1286 = vmatpush1.bf16.msra.mxu0 %v732
  %1287 = vmatprep.subr.bf16.mxu0 %v725
  %1288 = vmatpush1.bf16.msra.mxu0 %v724
  %1289 = vmatprep.subr.bf16.mxu0 %v717
  %1290 = vmatpush1.bf16.msra.mxu0 %v716
  %1291 = vmatprep.subr.bf16.mxu0 %v709
  %1292 = vmatpush1.bf16.msra.mxu0 %v708
  %1293 = vmatprep.subr.bf16.mxu0 %v701
  %1294 = vmatpush1.bf16.msra.mxu0 %v700
  %1295 = vmatprep.subr.bf16.mxu0 %v693
  %1296 = vmatpush1.bf16.msra.mxu0 %v692
  %1297 = vmatprep.subr.bf16.mxu0 %v813
  %1298 = vmatpush2.bf16.msra.mxu0 %v812
  %1299 = vmatprep.subr.bf16.mxu0 %v805
  %1300 = vmatpush2.bf16.msra.mxu0 %v804
  %1301 = vmatprep.subr.bf16.mxu0 %v797
  %1302 = vmatpush2.bf16.msra.mxu0 %v796
  %1303 = vmatprep.subr.bf16.mxu0 %v789
  %1304 = vmatpush2.bf16.msra.mxu0 %v788
  %1305 = vmatprep.subr.bf16.mxu0 %v781
  %1306 = vmatpush2.bf16.msra.mxu0 %v780
  %1307 = vmatprep.subr.bf16.mxu0 %v773
  %1308 = vmatpush2.bf16.msra.mxu0 %v772
  %1309 = vmatprep.subr.bf16.mxu0 %v765
  %1310 = vmatpush2.bf16.msra.mxu0 %v764
  %1311 = vmatprep.subr.bf16.mxu0 %v757
  %1312 = vmatpush2.bf16.msra.mxu0 %v756
  %1313 = vmatprep.mubr.bf16.mxu0 %v271
  %1314 = vmatmul.mubr.bf16.gmra.mxu0 %v270
  %v1315 = vpop.f32.mrf.mxu0
  %v1316 = vadd.f32 %v209, %v1315
  %v1317 = vpop.f32.mrf.mxu0
  %v1318 = vadd.f32 %v213, %v1317
  %v1319 = vpop.f32.mrf.mxu0
  %v1320 = vadd.f32 %v209, %v1319
  %v1321 = vpop.f32.mrf.mxu0
  %v1322 = vadd.f32 %v213, %v1321
  %1323 = vmatprep.mubr.bf16.mxu0 %v273
  %1324 = vmatmul.mubr.bf16.gmra.mxu0 %v272
  %v1325 = vpop.f32.mrf.mxu0
  %v1326 = vadd.f32 %v209, %v1325
  %v1327 = vpop.f32.mrf.mxu0
  %v1328 = vadd.f32 %v213, %v1327
  %v1329 = vpop.f32.mrf.mxu0
  %v1330 = vadd.f32 %v209, %v1329
  %v1331 = vpop.f32.mrf.mxu0
  %v1332 = vadd.f32 %v213, %v1331
  %1333 = vmatprep.mubr.bf16.mxu0 %v275
  %1334 = vmatmul.mubr.bf16.gmra.mxu0 %v274
  %v1335 = vpop.f32.mrf.mxu0
  %v1336 = vadd.f32 %v209, %v1335
  %v1337 = vpop.f32.mrf.mxu0
  %v1338 = vadd.f32 %v213, %v1337
  %v1339 = vpop.f32.mrf.mxu0
  %v1340 = vadd.f32 %v209, %v1339
  %v1341 = vpop.f32.mrf.mxu0
  %v1342 = vadd.f32 %v213, %v1341
  %1343 = vmatprep.mubr.bf16.mxu0 %v277
  %1344 = vmatmul.mubr.bf16.gmra.mxu0 %v276
  %v1345 = vpop.f32.mrf.mxu0
  %v1346 = vadd.f32 %v209, %v1345
  %v1347 = vpop.f32.mrf.mxu0
  %v1348 = vadd.f32 %v213, %v1347
  %v1349 = vpop.f32.mrf.mxu0
  %v1350 = vadd.f32 %v209, %v1349
  %v1351 = vpop.f32.mrf.mxu0
  %v1352 = vadd.f32 %v213, %v1351
  %1353 = vmatprep.mubr.bf16.mxu0 %v279
  %1354 = vmatmul.mubr.bf16.gmra.mxu0 %v278
  %v1355 = vpop.f32.mrf.mxu0
  %v1356 = vadd.f32 %v209, %v1355
  %v1357 = vpop.f32.mrf.mxu0
  %v1358 = vadd.f32 %v213, %v1357
  %v1359 = vpop.f32.mrf.mxu0
  %v1360 = vadd.f32 %v209, %v1359
  %v1361 = vpop.f32.mrf.mxu0
  %v1362 = vadd.f32 %v213, %v1361
  %1363 = vmatprep.mubr.bf16.mxu0 %v281
  %1364 = vmatmul.mubr.bf16.gmra.mxu0 %v280
  %v1365 = vpop.f32.mrf.mxu0
  %v1366 = vadd.f32 %v209, %v1365
  %v1367 = vpop.f32.mrf.mxu0
  %v1368 = vadd.f32 %v213, %v1367
  %v1369 = vpop.f32.mrf.mxu0
  %v1370 = vadd.f32 %v209, %v1369
  %v1371 = vpop.f32.mrf.mxu0
  %v1372 = vadd.f32 %v213, %v1371
  %1373 = vmatprep.mubr.bf16.mxu0 %v283
  %1374 = vmatmul.mubr.bf16.gmra.mxu0 %v282
  %v1375 = vpop.f32.mrf.mxu0
  %v1376 = vadd.f32 %v209, %v1375
  %v1377 = vpop.f32.mrf.mxu0
  %v1378 = vadd.f32 %v213, %v1377
  %v1379 = vpop.f32.mrf.mxu0
  %v1380 = vadd.f32 %v209, %v1379
  %v1381 = vpop.f32.mrf.mxu0
  %v1382 = vadd.f32 %v213, %v1381
  %1383 = vmatprep.mubr.bf16.mxu0 %v285
  %1384 = vmatmul.mubr.bf16.gmra.mxu0 %v284
  %v1385 = vpop.f32.mrf.mxu0
  %v1386 = vadd.f32 %v209, %v1385
  %v1387 = vpop.f32.mrf.mxu0
  %v1388 = vadd.f32 %v213, %v1387
  %v1389 = vpop.f32.mrf.mxu0
  %v1390 = vadd.f32 %v209, %v1389
  %v1391 = vpop.f32.mrf.mxu0
  %v1392 = vadd.f32 %v213, %v1391
  %1393 = vdwg.mxu0
  %1394 = vst [vmem:[#allocation2] sm:$0xff] %v977
  %1395 = vst [vmem:[#allocation2 + $0x8] sm:$0xff] %v979
  %1396 = vst [vmem:[#allocation2 + $0x10] sm:$0xff] %v1090
  %1397 = vst [vmem:[#allocation2 + $0x18] sm:$0xff] %v1092
  %1398 = vst [vmem:[#allocation2 + $0x20] sm:$0xff] %v1203
  %1399 = vst [vmem:[#allocation2 + $0x28] sm:$0xff] %v1205
  %1400 = vst [vmem:[#allocation2 + $0x30] sm:$0xff] %v1316
  %1401 = vst [vmem:[#allocation2 + $0x38] sm:$0xff] %v1318
  %1402 = vst [vmem:[#allocation2 + $0x40] sm:$0xff] %v981
  %1403 = vst [vmem:[#allocation2 + $0x48] sm:$0xff] %v983
  %1404 = vst [vmem:[#allocation2 + $0x50] sm:$0xff] %v1094
  %1405 = vst [vmem:[#allocation2 + $0x58] sm:$0xff] %v1096
  %1406 = vst [vmem:[#allocation2 + $0x60] sm:$0xff] %v1207
  %1407 = vst [vmem:[#allocation2 + $0x68] sm:$0xff] %v1209
  %1408 = vst [vmem:[#allocation2 + $0x70] sm:$0xff] %v1320
  %1409 = vst [vmem:[#allocation2 + $0x78] sm:$0xff] %v1322
  %1410 = vst [vmem:[#allocation2 + $0x80] sm:$0xff] %v987
  %1411 = vst [vmem:[#allocation2 + $0x88] sm:$0xff] %v989
  %1412 = vst [vmem:[#allocation2 + $0x90] sm:$0xff] %v1100
  %1413 = vst [vmem:[#allocation2 + $0x98] sm:$0xff] %v1102
  %1414 = vst [vmem:[#allocation2 + $0xa0] sm:$0xff] %v1213
  %1415 = vst [vmem:[#allocation2 + $0xa8] sm:$0xff] %v1215
  %1416 = vst [vmem:[#allocation2 + $0xb0] sm:$0xff] %v1326
  %1417 = vst [vmem:[#allocation2 + $0xb8] sm:$0xff] %v1328
  %1418 = vst [vmem:[#allocation2 + $0xc0] sm:$0xff] %v991
  %1419 = vst [vmem:[#allocation2 + $0xc8] sm:$0xff] %v993
  %1420 = vst [vmem:[#allocation2 + $0xd0] sm:$0xff] %v1104
  %1421 = vst [vmem:[#allocation2 + $0xd8] sm:$0xff] %v1106
  %1422 = vst [vmem:[#allocation2 + $0xe0] sm:$0xff] %v1217
  %1423 = vst [vmem:[#allocation2 + $0xe8] sm:$0xff] %v1219
  %1424 = vst [vmem:[#allocation2 + $0xf0] sm:$0xff] %v1330
  %1425 = vst [vmem:[#allocation2 + $0xf8] sm:$0xff] %v1332
  %1426 = vst [vmem:[#allocation2 + $0x100] sm:$0xff] %v997
  %1427 = vst [vmem:[#allocation2 + $0x108] sm:$0xff] %v999
  %1428 = vst [vmem:[#allocation2 + $0x110] sm:$0xff] %v1110
  %1429 = vst [vmem:[#allocation2 + $0x118] sm:$0xff] %v1112
  %1430 = vst [vmem:[#allocation2 + $0x120] sm:$0xff] %v1223
  %1431 = vst [vmem:[#allocation2 + $0x128] sm:$0xff] %v1225
  %1432 = vst [vmem:[#allocation2 + $0x130] sm:$0xff] %v1336
  %1433 = vst [vmem:[#allocation2 + $0x138] sm:$0xff] %v1338
  %1434 = vst [vmem:[#allocation2 + $0x140] sm:$0xff] %v1001
  %1435 = vst [vmem:[#allocation2 + $0x148] sm:$0xff] %v1003
  %1436 = vst [vmem:[#allocation2 + $0x150] sm:$0xff] %v1114
  %1437 = vst [vmem:[#allocation2 + $0x158] sm:$0xff] %v1116
  %1438 = vst [vmem:[#allocation2 + $0x160] sm:$0xff] %v1227
  %1439 = vst [vmem:[#allocation2 + $0x168] sm:$0xff] %v1229
  %1440 = vst [vmem:[#allocation2 + $0x170] sm:$0xff] %v1340
  %1441 = vst [vmem:[#allocation2 + $0x178] sm:$0xff] %v1342
  %1442 = vst [vmem:[#allocation2 + $0x180] sm:$0xff] %v1007
  %1443 = vst [vmem:[#allocation2 + $0x188] sm:$0xff] %v1009
  %1444 = vst [vmem:[#allocation2 + $0x190] sm:$0xff] %v1120
  %1445 = vst [vmem:[#allocation2 + $0x198] sm:$0xff] %v1122
  %1446 = vst [vmem:[#allocation2 + $0x1a0] sm:$0xff] %v1233
  %1447 = vst [vmem:[#allocation2 + $0x1a8] sm:$0xff] %v1235
  %1448 = vst [vmem:[#allocation2 + $0x1b0] sm:$0xff] %v1346
  %1449 = vst [vmem:[#allocation2 + $0x1b8] sm:$0xff] %v1348
  %1450 = vst [vmem:[#allocation2 + $0x1c0] sm:$0xff] %v1011
  %1451 = vst [vmem:[#allocation2 + $0x1c8] sm:$0xff] %v1013
  %1452 = vst [vmem:[#allocation2 + $0x1d0] sm:$0xff] %v1124
  %1453 = vst [vmem:[#allocation2 + $0x1d8] sm:$0xff] %v1126
  %1454 = vst [vmem:[#allocation2 + $0x1e0] sm:$0xff] %v1237
  %1455 = vst [vmem:[#allocation2 + $0x1e8] sm:$0xff] %v1239
  %1456 = vst [vmem:[#allocation2 + $0x1f0] sm:$0xff] %v1350
  %1457 = vst [vmem:[#allocation2 + $0x1f8] sm:$0xff] %v1352
  %1458 = vst [vmem:[#allocation2 + $0x200] sm:$0xff] %v1017
  %1459 = vst [vmem:[#allocation2 + $0x208] sm:$0xff] %v1019
  %1460 = vst [vmem:[#allocation2 + $0x210] sm:$0xff] %v1130
  %1461 = vst [vmem:[#allocation2 + $0x218] sm:$0xff] %v1132
  %1462 = vst [vmem:[#allocation2 + $0x220] sm:$0xff] %v1243
  %1463 = vst [vmem:[#allocation2 + $0x228] sm:$0xff] %v1245
  %1464 = vst [vmem:[#allocation2 + $0x230] sm:$0xff] %v1356
  %1465 = vst [vmem:[#allocation2 + $0x238] sm:$0xff] %v1358
  %1466 = vst [vmem:[#allocation2 + $0x240] sm:$0xff] %v1021
  %1467 = vst [vmem:[#allocation2 + $0x248] sm:$0xff] %v1023
  %1468 = vst [vmem:[#allocation2 + $0x250] sm:$0xff] %v1134
  %1469 = vst [vmem:[#allocation2 + $0x258] sm:$0xff] %v1136
  %1470 = vst [vmem:[#allocation2 + $0x260] sm:$0xff] %v1247
  %1471 = vst [vmem:[#allocation2 + $0x268] sm:$0xff] %v1249
  %1472 = vst [vmem:[#allocation2 + $0x270] sm:$0xff] %v1360
  %1473 = vst [vmem:[#allocation2 + $0x278] sm:$0xff] %v1362
  %1474 = vst [vmem:[#allocation2 + $0x280] sm:$0xff] %v1027
  %1475 = vst [vmem:[#allocation2 + $0x288] sm:$0xff] %v1029
  %1476 = vst [vmem:[#allocation2 + $0x290] sm:$0xff] %v1140
  %1477 = vst [vmem:[#allocation2 + $0x298] sm:$0xff] %v1142
  %1478 = vst [vmem:[#allocation2 + $0x2a0] sm:$0xff] %v1253
  %1479 = vst [vmem:[#allocation2 + $0x2a8] sm:$0xff] %v1255
  %1480 = vst [vmem:[#allocation2 + $0x2b0] sm:$0xff] %v1366
  %1481 = vst [vmem:[#allocation2 + $0x2b8] sm:$0xff] %v1368
  %1482 = vst [vmem:[#allocation2 + $0x2c0] sm:$0xff] %v1031
  %1483 = vst [vmem:[#allocation2 + $0x2c8] sm:$0xff] %v1033
  %1484 = vst [vmem:[#allocation2 + $0x2d0] sm:$0xff] %v1144
  %1485 = vst [vmem:[#allocation2 + $0x2d8] sm:$0xff] %v1146
  %1486 = vst [vmem:[#allocation2 + $0x2e0] sm:$0xff] %v1257
  %1487 = vst [vmem:[#allocation2 + $0x2e8] sm:$0xff] %v1259
  %1488 = vst [vmem:[#allocation2 + $0x2f0] sm:$0xff] %v1370
  %1489 = vst [vmem:[#allocation2 + $0x2f8] sm:$0xff] %v1372
  %1490 = vst [vmem:[#allocation2 + $0x300] sm:$0xff] %v1037
  %1491 = vst [vmem:[#allocation2 + $0x308] sm:$0xff] %v1039
  %1492 = vst [vmem:[#allocation2 + $0x310] sm:$0xff] %v1150
  %1493 = vst [vmem:[#allocation2 + $0x318] sm:$0xff] %v1152
  %1494 = vst [vmem:[#allocation2 + $0x320] sm:$0xff] %v1263
  %1495 = vst [vmem:[#allocation2 + $0x328] sm:$0xff] %v1265
  %1496 = vst [vmem:[#allocation2 + $0x330] sm:$0xff] %v1376
  %1497 = vst [vmem:[#allocation2 + $0x338] sm:$0xff] %v1378
  %1498 = vst [vmem:[#allocation2 + $0x340] sm:$0xff] %v1041
  %1499 = vst [vmem:[#allocation2 + $0x348] sm:$0xff] %v1043
  %1500 = vst [vmem:[#allocation2 + $0x350] sm:$0xff] %v1154
  %1501 = vst [vmem:[#allocation2 + $0x358] sm:$0xff] %v1156
  %1502 = vst [vmem:[#allocation2 + $0x360] sm:$0xff] %v1267
  %1503 = vst [vmem:[#allocation2 + $0x368] sm:$0xff] %v1269
  %1504 = vst [vmem:[#allocation2 + $0x370] sm:$0xff] %v1380
  %1505 = vst [vmem:[#allocation2 + $0x378] sm:$0xff] %v1382
  %1506 = vst [vmem:[#allocation2 + $0x380] sm:$0xff] %v1047
  %1507 = vst [vmem:[#allocation2 + $0x388] sm:$0xff] %v1049
  %1508 = vst [vmem:[#allocation2 + $0x390] sm:$0xff] %v1160
  %1509 = vst [vmem:[#allocation2 + $0x398] sm:$0xff] %v1162
  %1510 = vst [vmem:[#allocation2 + $0x3a0] sm:$0xff] %v1273
  %1511 = vst [vmem:[#allocation2 + $0x3a8] sm:$0xff] %v1275
  %1512 = vst [vmem:[#allocation2 + $0x3b0] sm:$0xff] %v1386
  %1513 = vst [vmem:[#allocation2 + $0x3b8] sm:$0xff] %v1388
  %1514 = vst [vmem:[#allocation2 + $0x3c0] sm:$0xff] %v1051
  %1515 = vst [vmem:[#allocation2 + $0x3c8] sm:$0xff] %v1053
  %1516 = vst [vmem:[#allocation2 + $0x3d0] sm:$0xff] %v1164
  %1517 = vst [vmem:[#allocation2 + $0x3d8] sm:$0xff] %v1166
  %1518 = vst [vmem:[#allocation2 + $0x3e0] sm:$0xff] %v1277
  %1519 = vst [vmem:[#allocation2 + $0x3e8] sm:$0xff] %v1279
  %1520 = vst [vmem:[#allocation2 + $0x3f0] sm:$0xff] %v1390
  %1521 = vst [vmem:[#allocation2 + $0x3f8] sm:$0xff] %v1392
  %s1522 = smul.u32 0, 8
  %s1523 = smul.addr %s1522, 8
  %s1524 = scalar_lea.vmem [#allocation2], %s1523
  %v1525 = vld [vmem:[%s1524] sm:$0xff]
  %v1526 = vld [vmem:[%s1524 + $0x8] sm:$0xff]
  %v1527 = vld [vmem:[%s1524 + $0x10] sm:$0xff]
  %v1528 = vld [vmem:[%s1524 + $0x18] sm:$0xff]
  %s1529 = smul.u32 15, 8
  %s1530 = smul.addr %s1529, 8
  %s1531 = scalar_lea.vmem [#allocation2], %s1530
  %v1532 = vld [vmem:[%s1531 + $0x20] sm:$0xff]
  %v1533 = vld [vmem:[%s1531 + $0x28] sm:$0xff]
  %v1534 = vld [vmem:[%s1531 + $0x30] sm:$0xff]
  %v1535 = vld [vmem:[%s1531 + $0x38] sm:$0xff]
  %v1536 = vld [vmem:[%s3] sm:$0xff]
  %v1537 = vld [vmem:[%s3 + $0x8] sm:$0xff]
  %v1538 = vld [vmem:[%s3 + $0x10] sm:$0xff]
  %v1539 = vld [vmem:[%s3 + $0x18] sm:$0xff]
  %v1540 = vld [vmem:[%s3 + $0x20] sm:$0xff]
  %v1541 = vld [vmem:[%s3 + $0x28] sm:$0xff]
  %v1542 = vld [vmem:[%s3 + $0x30] sm:$0xff]
  %v1543 = vld [vmem:[%s3 + $0x38] sm:$0xff]
  %v1544 = vld [vmem:[%s3 + $0x40] sm:$0xff]
  %v1545 = vld [vmem:[%s3 + $0x48] sm:$0xff]
  %v1546 = vld [vmem:[%s3 + $0x50] sm:$0xff]
  %v1547 = vld [vmem:[%s3 + $0x58] sm:$0xff]
  %v1548 = vld [vmem:[%s3 + $0x60] sm:$0xff]
  %v1549 = vld [vmem:[%s3 + $0x68] sm:$0xff]
  %v1550 = vld [vmem:[%s3 + $0x70] sm:$0xff]
  %v1551 = vld [vmem:[%s3 + $0x78] sm:$0xff]
  %v1552 = vld [vmem:[%s3 + $0x80] sm:$0xff]
  %v1553 = vld [vmem:[%s3 + $0x88] sm:$0xff]
  %v1554 = vld [vmem:[%s3 + $0x90] sm:$0xff]
  %v1555 = vld [vmem:[%s3 + $0x98] sm:$0xff]
  %v1556 = vld [vmem:[%s3 + $0xa0] sm:$0xff]
  %v1557 = vld [vmem:[%s3 + $0xa8] sm:$0xff]
  %v1558 = vld [vmem:[%s3 + $0xb0] sm:$0xff]
  %v1559 = vld [vmem:[%s3 + $0xb8] sm:$0xff]
  %v1560 = vld [vmem:[%s3 + $0xc0] sm:$0xff]
  %v1561 = vld [vmem:[%s3 + $0xc8] sm:$0xff]
  %v1562 = vld [vmem:[%s3 + $0xd0] sm:$0xff]
  %v1563 = vld [vmem:[%s3 + $0xd8] sm:$0xff]
  %v1564 = vld [vmem:[%s3 + $0xe0] sm:$0xff]
  %v1565 = vld [vmem:[%s3 + $0xe8] sm:$0xff]
  %v1566 = vld [vmem:[%s3 + $0xf0] sm:$0xff]
  %v1567 = vld [vmem:[%s3 + $0xf8] sm:$0xff]
  %v1600 = vunpack.c.l.b16 %v1536
  %v1601 = vunpack.c.h.b16 %v1536
  %v1602 = vunpack.c.l.b16 %v1537
  %v1603 = vunpack.c.h.b16 %v1537
  %v1604 = vunpack.c.l.b16 %v1538
  %v1605 = vunpack.c.h.b16 %v1538
  %v1606 = vunpack.c.l.b16 %v1539
  %v1607 = vunpack.c.h.b16 %v1539
  %v1608 = vunpack.c.l.b16 %v1540
  %v1609 = vunpack.c.h.b16 %v1540
  %v1610 = vunpack.c.l.b16 %v1541
  %v1611 = vunpack.c.h.b16 %v1541
  %v1612 = vunpack.c.l.b16 %v1542
  %v1613 = vunpack.c.h.b16 %v1542
  %v1614 = vunpack.c.l.b16 %v1543
  %v1615 = vunpack.c.h.b16 %v1543
  %v1616 = vunpack.c.l.b16 %v1544
  %v1617 = vunpack.c.h.b16 %v1544
  %v1618 = vunpack.c.l.b16 %v1545
  %v1619 = vunpack.c.h.b16 %v1545
  %v1620 = vunpack.c.l.b16 %v1546
  %v1621 = vunpack.c.h.b16 %v1546
  %v1622 = vunpack.c.l.b16 %v1547
  %v1623 = vunpack.c.h.b16 %v1547
  %v1624 = vunpack.c.l.b16 %v1548
  %v1625 = vunpack.c.h.b16 %v1548
  %v1626 = vunpack.c.l.b16 %v1549
  %v1627 = vunpack.c.h.b16 %v1549
  %v1628 = vunpack.c.l.b16 %v1550
  %v1629 = vunpack.c.h.b16 %v1550
  %v1630 = vunpack.c.l.b16 %v1551
  %v1631 = vunpack.c.h.b16 %v1551
  %v1632 = vunpack.c.l.b16 %v1552
  %v1633 = vunpack.c.h.b16 %v1552
  %v1634 = vunpack.c.l.b16 %v1553
  %v1635 = vunpack.c.h.b16 %v1553
  %v1636 = vunpack.c.l.b16 %v1554
  %v1637 = vunpack.c.h.b16 %v1554
  %v1638 = vunpack.c.l.b16 %v1555
  %v1639 = vunpack.c.h.b16 %v1555
  %v1640 = vunpack.c.l.b16 %v1556
  %v1641 = vunpack.c.h.b16 %v1556
  %v1642 = vunpack.c.l.b16 %v1557
  %v1643 = vunpack.c.h.b16 %v1557
  %v1644 = vunpack.c.l.b16 %v1558
  %v1645 = vunpack.c.h.b16 %v1558
  %v1646 = vunpack.c.l.b16 %v1559
  %v1647 = vunpack.c.h.b16 %v1559
  %v1648 = vunpack.c.l.b16 %v1560
  %v1649 = vunpack.c.h.b16 %v1560
  %v1650 = vunpack.c.l.b16 %v1561
  %v1651 = vunpack.c.h.b16 %v1561
  %v1652 = vunpack.c.l.b16 %v1562
  %v1653 = vunpack.c.h.b16 %v1562
  %v1654 = vunpack.c.l.b16 %v1563
  %v1655 = vunpack.c.h.b16 %v1563
  %v1656 = vunpack.c.l.b16 %v1564
  %v1657 = vunpack.c.h.b16 %v1564
  %v1658 = vunpack.c.l.b16 %v1565
  %v1659 = vunpack.c.h.b16 %v1565
  %v1660 = vunpack.c.l.b16 %v1566
  %v1661 = vunpack.c.h.b16 %v1566
  %v1662 = vunpack.c.l.b16 %v1567
  %v1663 = vunpack.c.h.b16 %v1567
  %v1664 = vpack.c.b16 %v1604, %v1600
  %v1665 = vpack.c.b16 %v1605, %v1601
  %v1666 = vpack.c.b16 %v1606, %v1602
  %v1667 = vpack.c.b16 %v1607, %v1603
  %v1668 = vpack.c.b16 %v1612, %v1608
  %v1669 = vpack.c.b16 %v1613, %v1609
  %v1670 = vpack.c.b16 %v1614, %v1610
  %v1671 = vpack.c.b16 %v1615, %v1611
  %v1672 = vpack.c.b16 %v1620, %v1616
  %v1673 = vpack.c.b16 %v1621, %v1617
  %v1674 = vpack.c.b16 %v1622, %v1618
  %v1675 = vpack.c.b16 %v1623, %v1619
  %v1676 = vpack.c.b16 %v1628, %v1624
  %v1677 = vpack.c.b16 %v1629, %v1625
  %v1678 = vpack.c.b16 %v1630, %v1626
  %v1679 = vpack.c.b16 %v1631, %v1627
  %v1680 = vpack.c.b16 %v1636, %v1632
  %v1681 = vpack.c.b16 %v1637, %v1633
  %v1682 = vpack.c.b16 %v1638, %v1634
  %v1683 = vpack.c.b16 %v1639, %v1635
  %v1684 = vpack.c.b16 %v1644, %v1640
  %v1685 = vpack.c.b16 %v1645, %v1641
  %v1686 = vpack.c.b16 %v1646, %v1642
  %v1687 = vpack.c.b16 %v1647, %v1643
  %v1688 = vpack.c.b16 %v1652, %v1648
  %v1689 = vpack.c.b16 %v1653, %v1649
  %v1690 = vpack.c.b16 %v1654, %v1650
  %v1691 = vpack.c.b16 %v1655, %v1651
  %v1692 = vpack.c.b16 %v1660, %v1656
  %v1693 = vpack.c.b16 %v1661, %v1657
  %v1694 = vpack.c.b16 %v1662, %v1658
  %v1695 = vpack.c.b16 %v1663, %v1659
  %1728 = vmatprep.subr.bf16.mxu0 %v1693
  %1729 = vmatpush1.bf16.msra.mxu0 %v1692
  %1730 = vmatprep.subr.bf16.mxu0 %v1689
  %1731 = vmatpush1.bf16.msra.mxu0 %v1688
  %1732 = vmatprep.subr.bf16.mxu0 %v1685
  %1733 = vmatpush1.bf16.msra.mxu0 %v1684
  %1734 = vmatprep.subr.bf16.mxu0 %v1681
  %1735 = vmatpush1.bf16.msra.mxu0 %v1680
  %1736 = vmatprep.subr.bf16.mxu0 %v1677
  %1737 = vmatpush1.bf16.msra.mxu0 %v1676
  %1738 = vmatprep.subr.bf16.mxu0 %v1673
  %1739 = vmatpush1.bf16.msra.mxu0 %v1672
  %1740 = vmatprep.subr.bf16.mxu0 %v1669
  %1741 = vmatpush1.bf16.msra.mxu0 %v1668
  %1742 = vmatprep.subr.bf16.mxu0 %v1665
  %1743 = vmatpush1.bf16.msra.mxu0 %v1664
  %1744 = vmatprep.subr.bf16.mxu0 0
  %1745 = vmatpush2.bf16.msra.mxu0 0
  %1746 = vmatprep.subr.bf16.mxu0 0
  %1747 = vmatpush2.bf16.msra.mxu0 0
  %1748 = vmatprep.subr.bf16.mxu0 0
  %1749 = vmatpush2.bf16.msra.mxu0 0
  %1750 = vmatprep.subr.bf16.mxu0 0
  %1751 = vmatpush2.bf16.msra.mxu0 0
  %1752 = vmatprep.subr.bf16.mxu0 0
  %1753 = vmatpush2.bf16.msra.mxu0 0
  %1754 = vmatprep.subr.bf16.mxu0 0
  %1755 = vmatpush2.bf16.msra.mxu0 0
  %1756 = vmatprep.subr.bf16.mxu0 0
  %1757 = vmatpush2.bf16.msra.mxu0 0
  %1758 = vmatprep.subr.bf16.mxu0 0
  %1759 = vmatpush2.bf16.msra.mxu0 0
  %1760 = vmatprep.mubr.bf16.mxu0 0
  %1761 = vmatmul.mubr.bf16.gmra.mxu0 0
  %v1762 = vpop.f32.mrf.mxu0
  %v1763 = vadd.f32 0.0, %v1762
  %v1764 = vpop.f32.mrf.mxu0
  %v1765 = vadd.f32 0.0, %v1764
  %v1766 = vpop.f32.mrf.mxu0
  %v1767 = vpop.f32.mrf.mxu0
  %1768 = vdwg.mxu0
  %1769 = vmatprep.subr.bf16.mxu0 %v1695
  %1770 = vmatpush1.bf16.msra.mxu0 %v1694
  %1771 = vmatprep.subr.bf16.mxu0 %v1691
  %1772 = vmatpush1.bf16.msra.mxu0 %v1690
  %1773 = vmatprep.subr.bf16.mxu0 %v1687
  %1774 = vmatpush1.bf16.msra.mxu0 %v1686
  %1775 = vmatprep.subr.bf16.mxu0 %v1683
  %1776 = vmatpush1.bf16.msra.mxu0 %v1682
  %1777 = vmatprep.subr.bf16.mxu0 %v1679
  %1778 = vmatpush1.bf16.msra.mxu0 %v1678
  %1779 = vmatprep.subr.bf16.mxu0 %v1675
  %1780 = vmatpush1.bf16.msra.mxu0 %v1674
  %1781 = vmatprep.subr.bf16.mxu0 %v1671
  %1782 = vmatpush1.bf16.msra.mxu0 %v1670
  %1783 = vmatprep.subr.bf16.mxu0 %v1667
  %1784 = vmatpush1.bf16.msra.mxu0 %v1666
  %1785 = vmatprep.subr.bf16.mxu0 0
  %1786 = vmatpush2.bf16.msra.mxu0 0
  %1787 = vmatprep.subr.bf16.mxu0 0
  %1788 = vmatpush2.bf16.msra.mxu0 0
  %1789 = vmatprep.subr.bf16.mxu0 0
  %1790 = vmatpush2.bf16.msra.mxu0 0
  %1791 = vmatprep.subr.bf16.mxu0 0
  %1792 = vmatpush2.bf16.msra.mxu0 0
  %1793 = vmatprep.subr.bf16.mxu0 0
  %1794 = vmatpush2.bf16.msra.mxu0 0
  %1795 = vmatprep.subr.bf16.mxu0 0
  %1796 = vmatpush2.bf16.msra.mxu0 0
  %1797 = vmatprep.subr.bf16.mxu0 0
  %1798 = vmatpush2.bf16.msra.mxu0 0
  %1799 = vmatprep.subr.bf16.mxu0 0
  %1800 = vmatpush2.bf16.msra.mxu0 0
  %1801 = vmatprep.mubr.bf16.mxu0 0
  %1802 = vmatmul.mubr.bf16.gmra.mxu0 0
  %v1803 = vpop.f32.mrf.mxu0
  %v1804 = vadd.f32 0.0, %v1803
  %v1805 = vpop.f32.mrf.mxu0
  %v1806 = vadd.f32 0.0, %v1805
  %v1807 = vpop.f32.mrf.mxu0
  %v1808 = vpop.f32.mrf.mxu0
  %1809 = vdwg.mxu0
  %v1810 = vadd.f32 %v1525, %v1763
  %v1811 = vadd.f32 %v1526, %v1765
  %v1812 = vadd.f32 %v1527, %v1804
  %v1813 = vadd.f32 %v1528, %v1806
  %v1814 = vld [vmem:[%s4] sm:$0xff]
  %v1815 = vld [vmem:[%s4 + $0x8] sm:$0xff]
  %v1816 = vld [vmem:[%s4 + $0x10] sm:$0xff]
  %v1817 = vld [vmem:[%s4 + $0x18] sm:$0xff]
  %v1818 = vld [vmem:[%s4 + $0x20] sm:$0xff]
  %v1819 = vld [vmem:[%s4 + $0x28] sm:$0xff]
  %v1820 = vld [vmem:[%s4 + $0x30] sm:$0xff]
  %v1821 = vld [vmem:[%s4 + $0x38] sm:$0xff]
  %v1822 = vld [vmem:[%s4 + $0x40] sm:$0xff]
  %v1823 = vld [vmem:[%s4 + $0x48] sm:$0xff]
  %v1824 = vld [vmem:[%s4 + $0x50] sm:$0xff]
  %v1825 = vld [vmem:[%s4 + $0x58] sm:$0xff]
  %v1826 = vld [vmem:[%s4 + $0x60] sm:$0xff]
  %v1827 = vld [vmem:[%s4 + $0x68] sm:$0xff]
  %v1828 = vld [vmem:[%s4 + $0x70] sm:$0xff]
  %v1829 = vld [vmem:[%s4 + $0x78] sm:$0xff]
  %v1830 = vld [vmem:[%s4 + $0x80] sm:$0xff]
  %v1831 = vld [vmem:[%s4 + $0x88] sm:$0xff]
  %v1832 = vld [vmem:[%s4 + $0x90] sm:$0xff]
  %v1833 = vld [vmem:[%s4 + $0x98] sm:$0xff]
  %v1834 = vld [vmem:[%s4 + $0xa0] sm:$0xff]
  %v1835 = vld [vmem:[%s4 + $0xa8] sm:$0xff]
  %v1836 = vld [vmem:[%s4 + $0xb0] sm:$0xff]
  %v1837 = vld [vmem:[%s4 + $0xb8] sm:$0xff]
  %v1838 = vld [vmem:[%s4 + $0xc0] sm:$0xff]
  %v1839 = vld [vmem:[%s4 + $0xc8] sm:$0xff]
  %v1840 = vld [vmem:[%s4 + $0xd0] sm:$0xff]
  %v1841 = vld [vmem:[%s4 + $0xd8] sm:$0xff]
  %v1842 = vld [vmem:[%s4 + $0xe0] sm:$0xff]
  %v1843 = vld [vmem:[%s4 + $0xe8] sm:$0xff]
  %v1844 = vld [vmem:[%s4 + $0xf0] sm:$0xff]
  %v1845 = vld [vmem:[%s4 + $0xf8] sm:$0xff]
  %v1878 = vunpack.c.l.b16 %v1814
  %v1879 = vunpack.c.h.b16 %v1814
  %v1880 = vunpack.c.l.b16 %v1815
  %v1881 = vunpack.c.h.b16 %v1815
  %v1882 = vunpack.c.l.b16 %v1816
  %v1883 = vunpack.c.h.b16 %v1816
  %v1884 = vunpack.c.l.b16 %v1817
  %v1885 = vunpack.c.h.b16 %v1817
  %v1886 = vunpack.c.l.b16 %v1818
  %v1887 = vunpack.c.h.b16 %v1818
  %v1888 = vunpack.c.l.b16 %v1819
  %v1889 = vunpack.c.h.b16 %v1819
  %v1890 = vunpack.c.l.b16 %v1820
  %v1891 = vunpack.c.h.b16 %v1820
  %v1892 = vunpack.c.l.b16 %v1821
  %v1893 = vunpack.c.h.b16 %v1821
  %v1894 = vunpack.c.l.b16 %v1822
  %v1895 = vunpack.c.h.b16 %v1822
  %v1896 = vunpack.c.l.b16 %v1823
  %v1897 = vunpack.c.h.b16 %v1823
  %v1898 = vunpack.c.l.b16 %v1824
  %v1899 = vunpack.c.h.b16 %v1824
  %v1900 = vunpack.c.l.b16 %v1825
  %v1901 = vunpack.c.h.b16 %v1825
  %v1902 = vunpack.c.l.b16 %v1826
  %v1903 = vunpack.c.h.b16 %v1826
  %v1904 = vunpack.c.l.b16 %v1827
  %v1905 = vunpack.c.h.b16 %v1827
  %v1906 = vunpack.c.l.b16 %v1828
  %v1907 = vunpack.c.h.b16 %v1828
  %v1908 = vunpack.c.l.b16 %v1829
  %v1909 = vunpack.c.h.b16 %v1829
  %v1910 = vunpack.c.l.b16 %v1830
  %v1911 = vunpack.c.h.b16 %v1830
  %v1912 = vunpack.c.l.b16 %v1831
  %v1913 = vunpack.c.h.b16 %v1831
  %v1914 = vunpack.c.l.b16 %v1832
  %v1915 = vunpack.c.h.b16 %v1832
  %v1916 = vunpack.c.l.b16 %v1833
  %v1917 = vunpack.c.h.b16 %v1833
  %v1918 = vunpack.c.l.b16 %v1834
  %v1919 = vunpack.c.h.b16 %v1834
  %v1920 = vunpack.c.l.b16 %v1835
  %v1921 = vunpack.c.h.b16 %v1835
  %v1922 = vunpack.c.l.b16 %v1836
  %v1923 = vunpack.c.h.b16 %v1836
  %v1924 = vunpack.c.l.b16 %v1837
  %v1925 = vunpack.c.h.b16 %v1837
  %v1926 = vunpack.c.l.b16 %v1838
  %v1927 = vunpack.c.h.b16 %v1838
  %v1928 = vunpack.c.l.b16 %v1839
  %v1929 = vunpack.c.h.b16 %v1839
  %v1930 = vunpack.c.l.b16 %v1840
  %v1931 = vunpack.c.h.b16 %v1840
  %v1932 = vunpack.c.l.b16 %v1841
  %v1933 = vunpack.c.h.b16 %v1841
  %v1934 = vunpack.c.l.b16 %v1842
  %v1935 = vunpack.c.h.b16 %v1842
  %v1936 = vunpack.c.l.b16 %v1843
  %v1937 = vunpack.c.h.b16 %v1843
  %v1938 = vunpack.c.l.b16 %v1844
  %v1939 = vunpack.c.h.b16 %v1844
  %v1940 = vunpack.c.l.b16 %v1845
  %v1941 = vunpack.c.h.b16 %v1845
  %v1942 = vpack.c.b16 %v1882, %v1878
  %v1943 = vpack.c.b16 %v1883, %v1879
  %v1944 = vpack.c.b16 %v1884, %v1880
  %v1945 = vpack.c.b16 %v1885, %v1881
  %v1946 = vpack.c.b16 %v1890, %v1886
  %v1947 = vpack.c.b16 %v1891, %v1887
  %v1948 = vpack.c.b16 %v1892, %v1888
  %v1949 = vpack.c.b16 %v1893, %v1889
  %v1950 = vpack.c.b16 %v1898, %v1894
  %v1951 = vpack.c.b16 %v1899, %v1895
  %v1952 = vpack.c.b16 %v1900, %v1896
  %v1953 = vpack.c.b16 %v1901, %v1897
  %v1954 = vpack.c.b16 %v1906, %v1902
  %v1955 = vpack.c.b16 %v1907, %v1903
  %v1956 = vpack.c.b16 %v1908, %v1904
  %v1957 = vpack.c.b16 %v1909, %v1905
  %v1958 = vpack.c.b16 %v1914, %v1910
  %v1959 = vpack.c.b16 %v1915, %v1911
  %v1960 = vpack.c.b16 %v1916, %v1912
  %v1961 = vpack.c.b16 %v1917, %v1913
  %v1962 = vpack.c.b16 %v1922, %v1918
  %v1963 = vpack.c.b16 %v1923, %v1919
  %v1964 = vpack.c.b16 %v1924, %v1920
  %v1965 = vpack.c.b16 %v1925, %v1921
  %v1966 = vpack.c.b16 %v1930, %v1926
  %v1967 = vpack.c.b16 %v1931, %v1927
  %v1968 = vpack.c.b16 %v1932, %v1928
  %v1969 = vpack.c.b16 %v1933, %v1929
  %v1970 = vpack.c.b16 %v1938, %v1934
  %v1971 = vpack.c.b16 %v1939, %v1935
  %v1972 = vpack.c.b16 %v1940, %v1936
  %v1973 = vpack.c.b16 %v1941, %v1937
  %2006 = vmatprep.subr.bf16.mxu0 %v1971
  %2007 = vmatpush1.bf16.msra.mxu0 %v1970
  %2008 = vmatprep.subr.bf16.mxu0 %v1967
  %2009 = vmatpush1.bf16.msra.mxu0 %v1966
  %2010 = vmatprep.subr.bf16.mxu0 %v1963
  %2011 = vmatpush1.bf16.msra.mxu0 %v1962
  %2012 = vmatprep.subr.bf16.mxu0 %v1959
  %2013 = vmatpush1.bf16.msra.mxu0 %v1958
  %2014 = vmatprep.subr.bf16.mxu0 %v1955
  %2015 = vmatpush1.bf16.msra.mxu0 %v1954
  %2016 = vmatprep.subr.bf16.mxu0 %v1951
  %2017 = vmatpush1.bf16.msra.mxu0 %v1950
  %2018 = vmatprep.subr.bf16.mxu0 %v1947
  %2019 = vmatpush1.bf16.msra.mxu0 %v1946
  %2020 = vmatprep.subr.bf16.mxu0 %v1943
  %2021 = vmatpush1.bf16.msra.mxu0 %v1942
  %2022 = vmatprep.subr.bf16.mxu0 0
  %2023 = vmatpush2.bf16.msra.mxu0 0
  %2024 = vmatprep.subr.bf16.mxu0 0
  %2025 = vmatpush2.bf16.msra.mxu0 0
  %2026 = vmatprep.subr.bf16.mxu0 0
  %2027 = vmatpush2.bf16.msra.mxu0 0
  %2028 = vmatprep.subr.bf16.mxu0 0
  %2029 = vmatpush2.bf16.msra.mxu0 0
  %2030 = vmatprep.subr.bf16.mxu0 0
  %2031 = vmatpush2.bf16.msra.mxu0 0
  %2032 = vmatprep.subr.bf16.mxu0 0
  %2033 = vmatpush2.bf16.msra.mxu0 0
  %2034 = vmatprep.subr.bf16.mxu0 0
  %2035 = vmatpush2.bf16.msra.mxu0 0
  %2036 = vmatprep.subr.bf16.mxu0 0
  %2037 = vmatpush2.bf16.msra.mxu0 0
  %2038 = vmatprep.mubr.bf16.mxu0 0
  %2039 = vmatmul.mubr.bf16.gmra.mxu0 0
  %v2040 = vpop.f32.mrf.mxu0
  %v2041 = vadd.f32 0.0, %v2040
  %v2042 = vpop.f32.mrf.mxu0
  %v2043 = vadd.f32 0.0, %v2042
  %v2044 = vpop.f32.mrf.mxu0
  %v2045 = vpop.f32.mrf.mxu0
  %2046 = vdwg.mxu0
  %2047 = vmatprep.subr.bf16.mxu0 %v1973
  %2048 = vmatpush1.bf16.msra.mxu0 %v1972
  %2049 = vmatprep.subr.bf16.mxu0 %v1969
  %2050 = vmatpush1.bf16.msra.mxu0 %v1968
  %2051 = vmatprep.subr.bf16.mxu0 %v1965
  %2052 = vmatpush1.bf16.msra.mxu0 %v1964
  %2053 = vmatprep.subr.bf16.mxu0 %v1961
  %2054 = vmatpush1.bf16.msra.mxu0 %v1960
  %2055 = vmatprep.subr.bf16.mxu0 %v1957
  %2056 = vmatpush1.bf16.msra.mxu0 %v1956
  %2057 = vmatprep.subr.bf16.mxu0 %v1953
  %2058 = vmatpush1.bf16.msra.mxu0 %v1952
  %2059 = vmatprep.subr.bf16.mxu0 %v1949
  %2060 = vmatpush1.bf16.msra.mxu0 %v1948
  %2061 = vmatprep.subr.bf16.mxu0 %v1945
  %2062 = vmatpush1.bf16.msra.mxu0 %v1944
  %2063 = vmatprep.subr.bf16.mxu0 0
  %2064 = vmatpush2.bf16.msra.mxu0 0
  %2065 = vmatprep.subr.bf16.mxu0 0
  %2066 = vmatpush2.bf16.msra.mxu0 0
  %2067 = vmatprep.subr.bf16.mxu0 0
  %2068 = vmatpush2.bf16.msra.mxu0 0
  %2069 = vmatprep.subr.bf16.mxu0 0
  %2070 = vmatpush2.bf16.msra.mxu0 0
  %2071 = vmatprep.subr.bf16.mxu0 0
  %2072 = vmatpush2.bf16.msra.mxu0 0
  %2073 = vmatprep.subr.bf16.mxu0 0
  %2074 = vmatpush2.bf16.msra.mxu0 0
  %2075 = vmatprep.subr.bf16.mxu0 0
  %2076 = vmatpush2.bf16.msra.mxu0 0
  %2077 = vmatprep.subr.bf16.mxu0 0
  %2078 = vmatpush2.bf16.msra.mxu0 0
  %2079 = vmatprep.mubr.bf16.mxu0 0
  %2080 = vmatmul.mubr.bf16.gmra.mxu0 0
  %v2081 = vpop.f32.mrf.mxu0
  %v2082 = vadd.f32 0.0, %v2081
  %v2083 = vpop.f32.mrf.mxu0
  %v2084 = vadd.f32 0.0, %v2083
  %v2085 = vpop.f32.mrf.mxu0
  %v2086 = vpop.f32.mrf.mxu0
  %2087 = vdwg.mxu0
  %v2088 = vadd.f32 %v1532, %v2041
  %v2089 = vadd.f32 %v1533, %v2043
  %v2090 = vadd.f32 %v1534, %v2082
  %v2091 = vadd.f32 %v1535, %v2084
  %v2092 = vxor.u32 %v1810, 2147483648
  %v2093 = vmul.f32 %v2092, 1.442695
  %v2094 = vpow.pop %v2093
  %v2095 = vadd.f32 %v2094, 1.0
  %v2096 = vrcp.pop %v2095
  %v2097 = vmul.f32 1.0, %v2096
  %v2098 = vxor.u32 %v1811, 2147483648
  %v2099 = vmul.f32 %v2098, 1.442695
  %v2100 = vpow.pop %v2099
  %v2101 = vadd.f32 %v2100, 1.0
  %v2102 = vrcp.pop %v2101
  %v2103 = vmul.f32 1.0, %v2102
  %v2104 = vtanh.pop %v1812
  %v2105 = vxor.u32 %v1813, 2147483648
  %v2106 = vmul.f32 %v2105, 1.442695
  %v2107 = vpow.pop %v2106
  %v2108 = vadd.f32 %v2107, 1.0
  %v2109 = vrcp.pop %v2108
  %v2110 = vmul.f32 1.0, %v2109
  %v2111 = vmul.f32 %v2103, 0.0
  %v2112 = vmul.f32 %v2097, %v2104
  %v2113 = vadd.f32 %v2111, %v2112
  %v2114 = vtanh.pop %v2113
  %v2115 = vmul.f32 %v2110, %v2114
  %v2116 = vxor.u32 %v2088, 2147483648
  %v2117 = vmul.f32 %v2116, 1.442695
  %v2118 = vpow.pop %v2117
  %v2119 = vadd.f32 %v2118, 1.0
  %v2120 = vrcp.pop %v2119
  %v2121 = vmul.f32 1.0, %v2120
  %v2122 = vxor.u32 %v2089, 2147483648
  %v2123 = vmul.f32 %v2122, 1.442695
  %v2124 = vpow.pop %v2123
  %v2125 = vadd.f32 %v2124, 1.0
  %v2126 = vrcp.pop %v2125
  %v2127 = vmul.f32 1.0, %v2126
  %v2128 = vtanh.pop %v2090
  %v2129 = vxor.u32 %v2091, 2147483648
  %v2130 = vmul.f32 %v2129, 1.442695
  %v2131 = vpow.pop %v2130
  %v2132 = vadd.f32 %v2131, 1.0
  %v2133 = vrcp.pop %v2132
  %v2134 = vmul.f32 1.0, %v2133
  %v2135 = vmul.f32 %v2127, 0.0
  %v2136 = vmul.f32 %v2121, %v2128
  %v2137 = vadd.f32 %v2135, %v2136
  %v2138 = vtanh.pop %v2137
  %v2139 = vmul.f32 %v2134, %v2138
  %s2140 = smul.u32 1, 8
  %s2141 = smul.addr %s2140, 8
  %s2142 = scalar_lea.vmem [#allocation2], %s2141
  %v2143 = vld [vmem:[%s2142] sm:$0xff]
  %v2144 = vld [vmem:[%s2142 + $0x8] sm:$0xff]
  %v2145 = vld [vmem:[%s2142 + $0x10] sm:$0xff]
  %v2146 = vld [vmem:[%s2142 + $0x18] sm:$0xff]
  %s2147 = smul.u32 14, 8
  %s2148 = smul.addr %s2147, 8
  %s2149 = scalar_lea.vmem [#allocation2], %s2148
  %v2150 = vld [vmem:[%s2149 + $0x20] sm:$0xff]
  %v2151 = vld [vmem:[%s2149 + $0x28] sm:$0xff]
  %v2152 = vld [vmem:[%s2149 + $0x30] sm:$0xff]
  %v2153 = vld [vmem:[%s2149 + $0x38] sm:$0xff]
  %v2154 = vpack.c.bf16 %v2115, %v2115
  %2155 = vmatprep.subr.bf16.mxu0 %v1693
  %2156 = vmatpush1.bf16.msra.mxu0 %v1692
  %2157 = vmatprep.subr.bf16.mxu0 %v1689
  %2158 = vmatpush1.bf16.msra.mxu0 %v1688
  %2159 = vmatprep.subr.bf16.mxu0 %v1685
  %2160 = vmatpush1.bf16.msra.mxu0 %v1684
  %2161 = vmatprep.subr.bf16.mxu0 %v1681
  %2162 = vmatpush1.bf16.msra.mxu0 %v1680
  %2163 = vmatprep.subr.bf16.mxu0 %v1677
  %2164 = vmatpush1.bf16.msra.mxu0 %v1676
  %2165 = vmatprep.subr.bf16.mxu0 %v1673
  %2166 = vmatpush1.bf16.msra.mxu0 %v1672
  %2167 = vmatprep.subr.bf16.mxu0 %v1669
  %2168 = vmatpush1.bf16.msra.mxu0 %v1668
  %2169 = vmatprep.subr.bf16.mxu0 %v1665
  %2170 = vmatpush1.bf16.msra.mxu0 %v1664
  %2171 = vmatprep.subr.bf16.mxu0 0
  %2172 = vmatpush2.bf16.msra.mxu0 0
  %2173 = vmatprep.subr.bf16.mxu0 0
  %2174 = vmatpush2.bf16.msra.mxu0 0
  %2175 = vmatprep.subr.bf16.mxu0 0
  %2176 = vmatpush2.bf16.msra.mxu0 0
  %2177 = vmatprep.subr.bf16.mxu0 0
  %2178 = vmatpush2.bf16.msra.mxu0 0
  %2179 = vmatprep.subr.bf16.mxu0 0
  %2180 = vmatpush2.bf16.msra.mxu0 0
  %2181 = vmatprep.subr.bf16.mxu0 0
  %2182 = vmatpush2.bf16.msra.mxu0 0
  %2183 = vmatprep.subr.bf16.mxu0 0
  %2184 = vmatpush2.bf16.msra.mxu0 0
  %2185 = vmatprep.subr.bf16.mxu0 0
  %2186 = vmatpush2.bf16.msra.mxu0 0
  %2187 = vmatprep.mubr.bf16.mxu0 0
  %2188 = vmatmul.mubr.bf16.gmra.mxu0 %v2154
  %v2189 = vpop.f32.mrf.mxu0
  %v2190 = vadd.f32 0.0, %v2189
  %v2191 = vpop.f32.mrf.mxu0
  %v2192 = vadd.f32 0.0, %v2191
  %v2193 = vpop.f32.mrf.mxu0
  %v2194 = vpop.f32.mrf.mxu0
  %2195 = vdwg.mxu0
  %2196 = vmatprep.subr.bf16.mxu0 %v1695
  %2197 = vmatpush1.bf16.msra.mxu0 %v1694
  %2198 = vmatprep.subr.bf16.mxu0 %v1691
  %2199 = vmatpush1.bf16.msra.mxu0 %v1690
  %2200 = vmatprep.subr.bf16.mxu0 %v1687
  %2201 = vmatpush1.bf16.msra.mxu0 %v1686
  %2202 = vmatprep.subr.bf16.mxu0 %v1683
  %2203 = vmatpush1.bf16.msra.mxu0 %v1682
  %2204 = vmatprep.subr.bf16.mxu0 %v1679
  %2205 = vmatpush1.bf16.msra.mxu0 %v1678
  %2206 = vmatprep.subr.bf16.mxu0 %v1675
  %2207 = vmatpush1.bf16.msra.mxu0 %v1674
  %2208 = vmatprep.subr.bf16.mxu0 %v1671
  %2209 = vmatpush1.bf16.msra.mxu0 %v1670
  %2210 = vmatprep.subr.bf16.mxu0 %v1667
  %2211 = vmatpush1.bf16.msra.mxu0 %v1666
  %2212 = vmatprep.subr.bf16.mxu0 0
  %2213 = vmatpush2.bf16.msra.mxu0 0
  %2214 = vmatprep.subr.bf16.mxu0 0
  %2215 = vmatpush2.bf16.msra.mxu0 0
  %2216 = vmatprep.subr.bf16.mxu0 0
  %2217 = vmatpush2.bf16.msra.mxu0 0
  %2218 = vmatprep.subr.bf16.mxu0 0
  %2219 = vmatpush2.bf16.msra.mxu0 0
  %2220 = vmatprep.subr.bf16.mxu0 0
  %2221 = vmatpush2.bf16.msra.mxu0 0
  %2222 = vmatprep.subr.bf16.mxu0 0
  %2223 = vmatpush2.bf16.msra.mxu0 0
  %2224 = vmatprep.subr.bf16.mxu0 0
  %2225 = vmatpush2.bf16.msra.mxu0 0
  %2226 = vmatprep.subr.bf16.mxu0 0
  %2227 = vmatpush2.bf16.msra.mxu0 0
  %2228 = vmatprep.mubr.bf16.mxu0 0
  %2229 = vmatmul.mubr.bf16.gmra.mxu0 %v2154
  %v2230 = vpop.f32.mrf.mxu0
  %v2231 = vadd.f32 0.0, %v2230
  %v2232 = vpop.f32.mrf.mxu0
  %v2233 = vadd.f32 0.0, %v2232
  %v2234 = vpop.f32.mrf.mxu0
  %v2235 = vpop.f32.mrf.mxu0
  %2236 = vdwg.mxu0
  %v2237 = vadd.f32 %v2143, %v2190
  %v2238 = vadd.f32 %v2144, %v2192
  %v2239 = vadd.f32 %v2145, %v2231
  %v2240 = vadd.f32 %v2146, %v2233
  %v2241 = vpack.c.bf16 %v2139, %v2139
  %2242 = vmatprep.subr.bf16.mxu0 %v1971
  %2243 = vmatpush1.bf16.msra.mxu0 %v1970
  %2244 = vmatprep.subr.bf16.mxu0 %v1967
  %2245 = vmatpush1.bf16.msra.mxu0 %v1966
  %2246 = vmatprep.subr.bf16.mxu0 %v1963
  %2247 = vmatpush1.bf16.msra.mxu0 %v1962
  %2248 = vmatprep.subr.bf16.mxu0 %v1959
  %2249 = vmatpush1.bf16.msra.mxu0 %v1958
  %2250 = vmatprep.subr.bf16.mxu0 %v1955
  %2251 = vmatpush1.bf16.msra.mxu0 %v1954
  %2252 = vmatprep.subr.bf16.mxu0 %v1951
  %2253 = vmatpush1.bf16.msra.mxu0 %v1950
  %2254 = vmatprep.subr.bf16.mxu0 %v1947
  %2255 = vmatpush1.bf16.msra.mxu0 %v1946
  %2256 = vmatprep.subr.bf16.mxu0 %v1943
  %2257 = vmatpush1.bf16.msra.mxu0 %v1942
  %2258 = vmatprep.subr.bf16.mxu0 0
  %2259 = vmatpush2.bf16.msra.mxu0 0
  %2260 = vmatprep.subr.bf16.mxu0 0
  %2261 = vmatpush2.bf16.msra.mxu0 0
  %2262 = vmatprep.subr.bf16.mxu0 0
  %2263 = vmatpush2.bf16.msra.mxu0 0
  %2264 = vmatprep.subr.bf16.mxu0 0
  %2265 = vmatpush2.bf16.msra.mxu0 0
  %2266 = vmatprep.subr.bf16.mxu0 0
  %2267 = vmatpush2.bf16.msra.mxu0 0
  %2268 = vmatprep.subr.bf16.mxu0 0
  %2269 = vmatpush2.bf16.msra.mxu0 0
  %2270 = vmatprep.subr.bf16.mxu0 0
  %2271 = vmatpush2.bf16.msra.mxu0 0
  %2272 = vmatprep.subr.bf16.mxu0 0
  %2273 = vmatpush2.bf16.msra.mxu0 0
  %2274 = vmatprep.mubr.bf16.mxu0 0
  %2275 = vmatmul.mubr.bf16.gmra.mxu0 %v2241
  %v2276 = vpop.f32.mrf.mxu0
  %v2277 = vadd.f32 0.0, %v2276
  %v2278 = vpop.f32.mrf.mxu0
  %v2279 = vadd.f32 0.0, %v2278
  %v2280 = vpop.f32.mrf.mxu0
  %v2281 = vpop.f32.mrf.mxu0
  %2282 = vdwg.mxu0
  %2283 = vmatprep.subr.bf16.mxu0 %v1973
  %2284 = vmatpush1.bf16.msra.mxu0 %v1972
  %2285 = vmatprep.subr.bf16.mxu0 %v1969
  %2286 = vmatpush1.bf16.msra.mxu0 %v1968
  %2287 = vmatprep.subr.bf16.mxu0 %v1965
  %2288 = vmatpush1.bf16.msra.mxu0 %v1964
  %2289 = vmatprep.subr.bf16.mxu0 %v1961
  %2290 = vmatpush1.bf16.msra.mxu0 %v1960
  %2291 = vmatprep.subr.bf16.mxu0 %v1957
  %2292 = vmatpush1.bf16.msra.mxu0 %v1956
  %2293 = vmatprep.subr.bf16.mxu0 %v1953
  %2294 = vmatpush1.bf16.msra.mxu0 %v1952
  %2295 = vmatprep.subr.bf16.mxu0 %v1949
  %2296 = vmatpush1.bf16.msra.mxu0 %v1948
  %2297 = vmatprep.subr.bf16.mxu0 %v1945
  %2298 = vmatpush1.bf16.msra.mxu0 %v1944
  %2299 = vmatprep.subr.bf16.mxu0 0
  %2300 = vmatpush2.bf16.msra.mxu0 0
  %2301 = vmatprep.subr.bf16.mxu0 0
  %2302 = vmatpush2.bf16.msra.mxu0 0
  %2303 = vmatprep.subr.bf16.mxu0 0
  %2304 = vmatpush2.bf16.msra.mxu0 0
  %2305 = vmatprep.subr.bf16.mxu0 0
  %2306 = vmatpush2.bf16.msra.mxu0 0
  %2307 = vmatprep.subr.bf16.mxu0 0
  %2308 = vmatpush2.bf16.msra.mxu0 0
  %2309 = vmatprep.subr.bf16.mxu0 0
  %2310 = vmatpush2.bf16.msra.mxu0 0
  %2311 = vmatprep.subr.bf16.mxu0 0
  %2312 = vmatpush2.bf16.msra.mxu0 0
  %2313 = vmatprep.subr.bf16.mxu0 0
  %2314 = vmatpush2.bf16.msra.mxu0 0
  %2315 = vmatprep.mubr.bf16.mxu0 0
  %2316 = vmatmul.mubr.bf16.gmra.mxu0 %v2241
  %v2317 = vpop.f32.mrf.mxu0
  %v2318 = vadd.f32 0.0, %v2317
  %v2319 = vpop.f32.mrf.mxu0
  %v2320 = vadd.f32 0.0, %v2319
  %v2321 = vpop.f32.mrf.mxu0
  %v2322 = vpop.f32.mrf.mxu0
  %2323 = vdwg.mxu0
  %v2324 = vadd.f32 %v2150, %v2277
  %v2325 = vadd.f32 %v2151, %v2279
  %v2326 = vadd.f32 %v2152, %v2318
  %v2327 = vadd.f32 %v2153, %v2320
  %v2328 = vxor.u32 %v2237, 2147483648
  %v2329 = vmul.f32 %v2328, 1.442695
  %v2330 = vpow.pop %v2329
  %v2331 = vadd.f32 %v2330, 1.0
  %v2332 = vrcp.pop %v2331
  %v2333 = vmul.f32 1.0, %v2332
  %v2334 = vxor.u32 %v2238, 2147483648
  %v2335 = vmul.f32 %v2334, 1.442695
  %v2336 = vpow.pop %v2335
  %v2337 = vadd.f32 %v2336, 1.0
  %v2338 = vrcp.pop %v2337
  %v2339 = vmul.f32 1.0, %v2338
  %v2340 = vtanh.pop %v2239
  %v2341 = vxor.u32 %v2240, 2147483648
  %v2342 = vmul.f32 %v2341, 1.442695
  %v2343 = vpow.pop %v2342
  %v2344 = vadd.f32 %v2343, 1.0
  %v2345 = vrcp.pop %v2344
  %v2346 = vmul.f32 1.0, %v2345
  %v2347 = vmul.f32 %v2339, %v2113
  %v2348 = vmul.f32 %v2333, %v2340
  %v2349 = vadd.f32 %v2347, %v2348
  %v2350 = vtanh.pop %v2349
  %v2351 = vmul.f32 %v2346, %v2350
  %v2352 = vxor.u32 %v2324, 2147483648
  %v2353 = vmul.f32 %v2352, 1.442695
  %v2354 = vpow.pop %v2353
  %v2355 = vadd.f32 %v2354, 1.0
  %v2356 = vrcp.pop %v2355
  %v2357 = vmul.f32 1.0, %v2356
  %v2358 = vxor.u32 %v2325, 2147483648
  %v2359 = vmul.f32 %v2358, 1.442695
  %v2360 = vpow.pop %v2359
  %v2361 = vadd.f32 %v2360, 1.0
  %v2362 = vrcp.pop %v2361
  %v2363 = vmul.f32 1.0, %v2362
  %v2364 = vtanh.pop %v2326
  %v2365 = vxor.u32 %v2327, 2147483648
  %v2366 = vmul.f32 %v2365, 1.442695
  %v2367 = vpow.pop %v2366
  %v2368 = vadd.f32 %v2367, 1.0
  %v2369 = vrcp.pop %v2368
  %v2370 = vmul.f32 1.0, %v2369
  %v2371 = vmul.f32 %v2363, %v2137
  %v2372 = vmul.f32 %v2357, %v2364
  %v2373 = vadd.f32 %v2371, %v2372
  %v2374 = vtanh.pop %v2373
  %v2375 = vmul.f32 %v2370, %v2374
  %s2376 = smul.u32 2, 8
  %s2377 = smul.addr %s2376, 8
  %s2378 = scalar_lea.vmem [#allocation2], %s2377
  %v2379 = vld [vmem:[%s2378] sm:$0xff]
  %v2380 = vld [vmem:[%s2378 + $0x8] sm:$0xff]
  %v2381 = vld [vmem:[%s2378 + $0x10] sm:$0xff]
  %v2382 = vld [vmem:[%s2378 + $0x18] sm:$0xff]
  %s2383 = smul.u32 13, 8
  %s2384 = smul.addr %s2383, 8
  %s2385 = scalar_lea.vmem [#allocation2], %s2384
  %v2386 = vld [vmem:[%s2385 + $0x20] sm:$0xff]
  %v2387 = vld [vmem:[%s2385 + $0x28] sm:$0xff]
  %v2388 = vld [vmem:[%s2385 + $0x30] sm:$0xff]
  %v2389 = vld [vmem:[%s2385 + $0x38] sm:$0xff]
  %v2390 = vpack.c.bf16 %v2351, %v2351
  %2391 = vmatprep.subr.bf16.mxu0 %v1693
  %2392 = vmatpush1.bf16.msra.mxu0 %v1692
  %2393 = vmatprep.subr.bf16.mxu0 %v1689
  %2394 = vmatpush1.bf16.msra.mxu0 %v1688
  %2395 = vmatprep.subr.bf16.mxu0 %v1685
  %2396 = vmatpush1.bf16.msra.mxu0 %v1684
  %2397 = vmatprep.subr.bf16.mxu0 %v1681
  %2398 = vmatpush1.bf16.msra.mxu0 %v1680
  %2399 = vmatprep.subr.bf16.mxu0 %v1677
  %2400 = vmatpush1.bf16.msra.mxu0 %v1676
  %2401 = vmatprep.subr.bf16.mxu0 %v1673
  %2402 = vmatpush1.bf16.msra.mxu0 %v1672
  %2403 = vmatprep.subr.bf16.mxu0 %v1669
  %2404 = vmatpush1.bf16.msra.mxu0 %v1668
  %2405 = vmatprep.subr.bf16.mxu0 %v1665
  %2406 = vmatpush1.bf16.msra.mxu0 %v1664
  %2407 = vmatprep.subr.bf16.mxu0 0
  %2408 = vmatpush2.bf16.msra.mxu0 0
  %2409 = vmatprep.subr.bf16.mxu0 0
  %2410 = vmatpush2.bf16.msra.mxu0 0
  %2411 = vmatprep.subr.bf16.mxu0 0
  %2412 = vmatpush2.bf16.msra.mxu0 0
  %2413 = vmatprep.subr.bf16.mxu0 0
  %2414 = vmatpush2.bf16.msra.mxu0 0
  %2415 = vmatprep.subr.bf16.mxu0 0
  %2416 = vmatpush2.bf16.msra.mxu0 0
  %2417 = vmatprep.subr.bf16.mxu0 0
  %2418 = vmatpush2.bf16.msra.mxu0 0
  %2419 = vmatprep.subr.bf16.mxu0 0
  %2420 = vmatpush2.bf16.msra.mxu0 0
  %2421 = vmatprep.subr.bf16.mxu0 0
  %2422 = vmatpush2.bf16.msra.mxu0 0
  %2423 = vmatprep.mubr.bf16.mxu0 0
  %2424 = vmatmul.mubr.bf16.gmra.mxu0 %v2390
  %v2425 = vpop.f32.mrf.mxu0
  %v2426 = vadd.f32 0.0, %v2425
  %v2427 = vpop.f32.mrf.mxu0
  %v2428 = vadd.f32 0.0, %v2427
  %v2429 = vpop.f32.mrf.mxu0
  %v2430 = vpop.f32.mrf.mxu0
  %2431 = vdwg.mxu0
  %2432 = vmatprep.subr.bf16.mxu0 %v1695
  %2433 = vmatpush1.bf16.msra.mxu0 %v1694
  %2434 = vmatprep.subr.bf16.mxu0 %v1691
  %2435 = vmatpush1.bf16.msra.mxu0 %v1690
  %2436 = vmatprep.subr.bf16.mxu0 %v1687
  %2437 = vmatpush1.bf16.msra.mxu0 %v1686
  %2438 = vmatprep.subr.bf16.mxu0 %v1683
  %2439 = vmatpush1.bf16.msra.mxu0 %v1682
  %2440 = vmatprep.subr.bf16.mxu0 %v1679
  %2441 = vmatpush1.bf16.msra.mxu0 %v1678
  %2442 = vmatprep.subr.bf16.mxu0 %v1675
  %2443 = vmatpush1.bf16.msra.mxu0 %v1674
  %2444 = vmatprep.subr.bf16.mxu0 %v1671
  %2445 = vmatpush1.bf16.msra.mxu0 %v1670
  %2446 = vmatprep.subr.bf16.mxu0 %v1667
  %2447 = vmatpush1.bf16.msra.mxu0 %v1666
  %2448 = vmatprep.subr.bf16.mxu0 0
  %2449 = vmatpush2.bf16.msra.mxu0 0
  %2450 = vmatprep.subr.bf16.mxu0 0
  %2451 = vmatpush2.bf16.msra.mxu0 0
  %2452 = vmatprep.subr.bf16.mxu0 0
  %2453 = vmatpush2.bf16.msra.mxu0 0
  %2454 = vmatprep.subr.bf16.mxu0 0
  %2455 = vmatpush2.bf16.msra.mxu0 0
  %2456 = vmatprep.subr.bf16.mxu0 0
  %2457 = vmatpush2.bf16.msra.mxu0 0
  %2458 = vmatprep.subr.bf16.mxu0 0
  %2459 = vmatpush2.bf16.msra.mxu0 0
  %2460 = vmatprep.subr.bf16.mxu0 0
  %2461 = vmatpush2.bf16.msra.mxu0 0
  %2462 = vmatprep.subr.bf16.mxu0 0
  %2463 = vmatpush2.bf16.msra.mxu0 0
  %2464 = vmatprep.mubr.bf16.mxu0 0
  %2465 = vmatmul.mubr.bf16.gmra.mxu0 %v2390
  %v2466 = vpop.f32.mrf.mxu0
  %v2467 = vadd.f32 0.0, %v2466
  %v2468 = vpop.f32.mrf.mxu0
  %v2469 = vadd.f32 0.0, %v2468
  %v2470 = vpop.f32.mrf.mxu0
  %v2471 = vpop.f32.mrf.mxu0
  %2472 = vdwg.mxu0
  %v2473 = vadd.f32 %v2379, %v2426
  %v2474 = vadd.f32 %v2380, %v2428
  %v2475 = vadd.f32 %v2381, %v2467
  %v2476 = vadd.f32 %v2382, %v2469
  %v2477 = vpack.c.bf16 %v2375, %v2375
  %2478 = vmatprep.subr.bf16.mxu0 %v1971
  %2479 = vmatpush1.bf16.msra.mxu0 %v1970
  %2480 = vmatprep.subr.bf16.mxu0 %v1967
  %2481 = vmatpush1.bf16.msra.mxu0 %v1966
  %2482 = vmatprep.subr.bf16.mxu0 %v1963
  %2483 = vmatpush1.bf16.msra.mxu0 %v1962
  %2484 = vmatprep.subr.bf16.mxu0 %v1959
  %2485 = vmatpush1.bf16.msra.mxu0 %v1958
  %2486 = vmatprep.subr.bf16.mxu0 %v1955
  %2487 = vmatpush1.bf16.msra.mxu0 %v1954
  %2488 = vmatprep.subr.bf16.mxu0 %v1951
  %2489 = vmatpush1.bf16.msra.mxu0 %v1950
  %2490 = vmatprep.subr.bf16.mxu0 %v1947
  %2491 = vmatpush1.bf16.msra.mxu0 %v1946
  %2492 = vmatprep.subr.bf16.mxu0 %v1943
  %2493 = vmatpush1.bf16.msra.mxu0 %v1942
  %2494 = vmatprep.subr.bf16.mxu0 0
  %2495 = vmatpush2.bf16.msra.mxu0 0
  %2496 = vmatprep.subr.bf16.mxu0 0
  %2497 = vmatpush2.bf16.msra.mxu0 0
  %2498 = vmatprep.subr.bf16.mxu0 0
  %2499 = vmatpush2.bf16.msra.mxu0 0
  %2500 = vmatprep.subr.bf16.mxu0 0
  %2501 = vmatpush2.bf16.msra.mxu0 0
  %2502 = vmatprep.subr.bf16.mxu0 0
  %2503 = vmatpush2.bf16.msra.mxu0 0
  %2504 = vmatprep.subr.bf16.mxu0 0
  %2505 = vmatpush2.bf16.msra.mxu0 0
  %2506 = vmatprep.subr.bf16.mxu0 0
  %2507 = vmatpush2.bf16.msra.mxu0 0
  %2508 = vmatprep.subr.bf16.mxu0 0
  %2509 = vmatpush2.bf16.msra.mxu0 0
  %2510 = vmatprep.mubr.bf16.mxu0 0
  %2511 = vmatmul.mubr.bf16.gmra.mxu0 %v2477
  %v2512 = vpop.f32.mrf.mxu0
  %v2513 = vadd.f32 0.0, %v2512
  %v2514 = vpop.f32.mrf.mxu0
  %v2515 = vadd.f32 0.0, %v2514
  %v2516 = vpop.f32.mrf.mxu0
  %v2517 = vpop.f32.mrf.mxu0
  %2518 = vdwg.mxu0
  %2519 = vmatprep.subr.bf16.mxu0 %v1973
  %2520 = vmatpush1.bf16.msra.mxu0 %v1972
  %2521 = vmatprep.subr.bf16.mxu0 %v1969
  %2522 = vmatpush1.bf16.msra.mxu0 %v1968
  %2523 = vmatprep.subr.bf16.mxu0 %v1965
  %2524 = vmatpush1.bf16.msra.mxu0 %v1964
  %2525 = vmatprep.subr.bf16.mxu0 %v1961
  %2526 = vmatpush1.bf16.msra.mxu0 %v1960
  %2527 = vmatprep.subr.bf16.mxu0 %v1957
  %2528 = vmatpush1.bf16.msra.mxu0 %v1956
  %2529 = vmatprep.subr.bf16.mxu0 %v1953
  %2530 = vmatpush1.bf16.msra.mxu0 %v1952
  %2531 = vmatprep.subr.bf16.mxu0 %v1949
  %2532 = vmatpush1.bf16.msra.mxu0 %v1948
  %2533 = vmatprep.subr.bf16.mxu0 %v1945
  %2534 = vmatpush1.bf16.msra.mxu0 %v1944
  %2535 = vmatprep.subr.bf16.mxu0 0
  %2536 = vmatpush2.bf16.msra.mxu0 0
  %2537 = vmatprep.subr.bf16.mxu0 0
  %2538 = vmatpush2.bf16.msra.mxu0 0
  %2539 = vmatprep.subr.bf16.mxu0 0
  %2540 = vmatpush2.bf16.msra.mxu0 0
  %2541 = vmatprep.subr.bf16.mxu0 0
  %2542 = vmatpush2.bf16.msra.mxu0 0
  %2543 = vmatprep.subr.bf16.mxu0 0
  %2544 = vmatpush2.bf16.msra.mxu0 0
  %2545 = vmatprep.subr.bf16.mxu0 0
  %2546 = vmatpush2.bf16.msra.mxu0 0
  %2547 = vmatprep.subr.bf16.mxu0 0
  %2548 = vmatpush2.bf16.msra.mxu0 0
  %2549 = vmatprep.subr.bf16.mxu0 0
  %2550 = vmatpush2.bf16.msra.mxu0 0
  %2551 = vmatprep.mubr.bf16.mxu0 0
  %2552 = vmatmul.mubr.bf16.gmra.mxu0 %v2477
  %v2553 = vpop.f32.mrf.mxu0
  %v2554 = vadd.f32 0.0, %v2553
  %v2555 = vpop.f32.mrf.mxu0
  %v2556 = vadd.f32 0.0, %v2555
  %v2557 = vpop.f32.mrf.mxu0
  %v2558 = vpop.f32.mrf.mxu0
  %2559 = vdwg.mxu0
  %v2560 = vadd.f32 %v2386, %v2513
  %v2561 = vadd.f32 %v2387, %v2515
  %v2562 = vadd.f32 %v2388, %v2554
  %v2563 = vadd.f32 %v2389, %v2556
  %v2564 = vxor.u32 %v2473, 2147483648
  %v2565 = vmul.f32 %v2564, 1.442695
  %v2566 = vpow.pop %v2565
  %v2567 = vadd.f32 %v2566, 1.0
  %v2568 = vrcp.pop %v2567
  %v2569 = vmul.f32 1.0, %v2568
  %v2570 = vxor.u32 %v2474, 2147483648
  %v2571 = vmul.f32 %v2570, 1.442695
  %v2572 = vpow.pop %v2571
  %v2573 = vadd.f32 %v2572, 1.0
  %v2574 = vrcp.pop %v2573
  %v2575 = vmul.f32 1.0, %v2574
  %v2576 = vtanh.pop %v2475
  %v2577 = vxor.u32 %v2476, 2147483648
  %v2578 = vmul.f32 %v2577, 1.442695
  %v2579 = vpow.pop %v2578
  %v2580 = vadd.f32 %v2579, 1.0
  %v2581 = vrcp.pop %v2580
  %v2582 = vmul.f32 1.0, %v2581
  %v2583 = vmul.f32 %v2575, %v2349
  %v2584 = vmul.f32 %v2569, %v2576
  %v2585 = vadd.f32 %v2583, %v2584
  %v2586 = vtanh.pop %v2585
  %v2587 = vmul.f32 %v2582, %v2586
  %v2588 = vxor.u32 %v2560, 2147483648
  %v2589 = vmul.f32 %v2588, 1.442695
  %v2590 = vpow.pop %v2589
  %v2591 = vadd.f32 %v2590, 1.0
  %v2592 = vrcp.pop %v2591
  %v2593 = vmul.f32 1.0, %v2592
  %v2594 = vxor.u32 %v2561, 2147483648
  %v2595 = vmul.f32 %v2594, 1.442695
  %v2596 = vpow.pop %v2595
  %v2597 = vadd.f32 %v2596, 1.0
  %v2598 = vrcp.pop %v2597
  %v2599 = vmul.f32 1.0, %v2598
  %v2600 = vtanh.pop %v2562
  %v2601 = vxor.u32 %v2563, 2147483648
  %v2602 = vmul.f32 %v2601, 1.442695
  %v2603 = vpow.pop %v2602
  %v2604 = vadd.f32 %v2603, 1.0
  %v2605 = vrcp.pop %v2604
  %v2606 = vmul.f32 1.0, %v2605
  %v2607 = vmul.f32 %v2599, %v2373
  %v2608 = vmul.f32 %v2593, %v2600
  %v2609 = vadd.f32 %v2607, %v2608
  %v2610 = vtanh.pop %v2609
  %v2611 = vmul.f32 %v2606, %v2610
  %s2612 = smul.u32 3, 8
  %s2613 = smul.addr %s2612, 8
  %s2614 = scalar_lea.vmem [#allocation2], %s2613
  %v2615 = vld [vmem:[%s2614] sm:$0xff]
  %v2616 = vld [vmem:[%s2614 + $0x8] sm:$0xff]
  %v2617 = vld [vmem:[%s2614 + $0x10] sm:$0xff]
  %v2618 = vld [vmem:[%s2614 + $0x18] sm:$0xff]
  %s2619 = smul.u32 12, 8
  %s2620 = smul.addr %s2619, 8
  %s2621 = scalar_lea.vmem [#allocation2], %s2620
  %v2622 = vld [vmem:[%s2621 + $0x20] sm:$0xff]
  %v2623 = vld [vmem:[%s2621 + $0x28] sm:$0xff]
  %v2624 = vld [vmem:[%s2621 + $0x30] sm:$0xff]
  %v2625 = vld [vmem:[%s2621 + $0x38] sm:$0xff]
  %v2626 = vpack.c.bf16 %v2587, %v2587
  %2627 = vmatprep.subr.bf16.mxu0 %v1693
  %2628 = vmatpush1.bf16.msra.mxu0 %v1692
  %2629 = vmatprep.subr.bf16.mxu0 %v1689
  %2630 = vmatpush1.bf16.msra.mxu0 %v1688
  %2631 = vmatprep.subr.bf16.mxu0 %v1685
  %2632 = vmatpush1.bf16.msra.mxu0 %v1684
  %2633 = vmatprep.subr.bf16.mxu0 %v1681
  %2634 = vmatpush1.bf16.msra.mxu0 %v1680
  %2635 = vmatprep.subr.bf16.mxu0 %v1677
  %2636 = vmatpush1.bf16.msra.mxu0 %v1676
  %2637 = vmatprep.subr.bf16.mxu0 %v1673
  %2638 = vmatpush1.bf16.msra.mxu0 %v1672
  %2639 = vmatprep.subr.bf16.mxu0 %v1669
  %2640 = vmatpush1.bf16.msra.mxu0 %v1668
  %2641 = vmatprep.subr.bf16.mxu0 %v1665
  %2642 = vmatpush1.bf16.msra.mxu0 %v1664
  %2643 = vmatprep.subr.bf16.mxu0 0
  %2644 = vmatpush2.bf16.msra.mxu0 0
  %2645 = vmatprep.subr.bf16.mxu0 0
  %2646 = vmatpush2.bf16.msra.mxu0 0
  %2647 = vmatprep.subr.bf16.mxu0 0
  %2648 = vmatpush2.bf16.msra.mxu0 0
  %2649 = vmatprep.subr.bf16.mxu0 0
  %2650 = vmatpush2.bf16.msra.mxu0 0
  %2651 = vmatprep.subr.bf16.mxu0 0
  %2652 = vmatpush2.bf16.msra.mxu0 0
  %2653 = vmatprep.subr.bf16.mxu0 0
  %2654 = vmatpush2.bf16.msra.mxu0 0
  %2655 = vmatprep.subr.bf16.mxu0 0
  %2656 = vmatpush2.bf16.msra.mxu0 0
  %2657 = vmatprep.subr.bf16.mxu0 0
  %2658 = vmatpush2.bf16.msra.mxu0 0
  %2659 = vmatprep.mubr.bf16.mxu0 0
  %2660 = vmatmul.mubr.bf16.gmra.mxu0 %v2626
  %v2661 = vpop.f32.mrf.mxu0
  %v2662 = vadd.f32 0.0, %v2661
  %v2663 = vpop.f32.mrf.mxu0
  %v2664 = vadd.f32 0.0, %v2663
  %v2665 = vpop.f32.mrf.mxu0
  %v2666 = vpop.f32.mrf.mxu0
  %2667 = vdwg.mxu0
  %2668 = vmatprep.subr.bf16.mxu0 %v1695
  %2669 = vmatpush1.bf16.msra.mxu0 %v1694
  %2670 = vmatprep.subr.bf16.mxu0 %v1691
  %2671 = vmatpush1.bf16.msra.mxu0 %v1690
  %2672 = vmatprep.subr.bf16.mxu0 %v1687
  %2673 = vmatpush1.bf16.msra.mxu0 %v1686
  %2674 = vmatprep.subr.bf16.mxu0 %v1683
  %2675 = vmatpush1.bf16.msra.mxu0 %v1682
  %2676 = vmatprep.subr.bf16.mxu0 %v1679
  %2677 = vmatpush1.bf16.msra.mxu0 %v1678
  %2678 = vmatprep.subr.bf16.mxu0 %v1675
  %2679 = vmatpush1.bf16.msra.mxu0 %v1674
  %2680 = vmatprep.subr.bf16.mxu0 %v1671
  %2681 = vmatpush1.bf16.msra.mxu0 %v1670
  %2682 = vmatprep.subr.bf16.mxu0 %v1667
  %2683 = vmatpush1.bf16.msra.mxu0 %v1666
  %2684 = vmatprep.subr.bf16.mxu0 0
  %2685 = vmatpush2.bf16.msra.mxu0 0
  %2686 = vmatprep.subr.bf16.mxu0 0
  %2687 = vmatpush2.bf16.msra.mxu0 0
  %2688 = vmatprep.subr.bf16.mxu0 0
  %2689 = vmatpush2.bf16.msra.mxu0 0
  %2690 = vmatprep.subr.bf16.mxu0 0
  %2691 = vmatpush2.bf16.msra.mxu0 0
  %2692 = vmatprep.subr.bf16.mxu0 0
  %2693 = vmatpush2.bf16.msra.mxu0 0
  %2694 = vmatprep.subr.bf16.mxu0 0
  %2695 = vmatpush2.bf16.msra.mxu0 0
  %2696 = vmatprep.subr.bf16.mxu0 0
  %2697 = vmatpush2.bf16.msra.mxu0 0
  %2698 = vmatprep.subr.bf16.mxu0 0
  %2699 = vmatpush2.bf16.msra.mxu0 0
  %2700 = vmatprep.mubr.bf16.mxu0 0
  %2701 = vmatmul.mubr.bf16.gmra.mxu0 %v2626
  %v2702 = vpop.f32.mrf.mxu0
  %v2703 = vadd.f32 0.0, %v2702
  %v2704 = vpop.f32.mrf.mxu0
  %v2705 = vadd.f32 0.0, %v2704
  %v2706 = vpop.f32.mrf.mxu0
  %v2707 = vpop.f32.mrf.mxu0
  %2708 = vdwg.mxu0
  %v2709 = vadd.f32 %v2615, %v2662
  %v2710 = vadd.f32 %v2616, %v2664
  %v2711 = vadd.f32 %v2617, %v2703
  %v2712 = vadd.f32 %v2618, %v2705
  %v2713 = vpack.c.bf16 %v2611, %v2611
  %2714 = vmatprep.subr.bf16.mxu0 %v1971
  %2715 = vmatpush1.bf16.msra.mxu0 %v1970
  %2716 = vmatprep.subr.bf16.mxu0 %v1967
  %2717 = vmatpush1.bf16.msra.mxu0 %v1966
  %2718 = vmatprep.subr.bf16.mxu0 %v1963
  %2719 = vmatpush1.bf16.msra.mxu0 %v1962
  %2720 = vmatprep.subr.bf16.mxu0 %v1959
  %2721 = vmatpush1.bf16.msra.mxu0 %v1958
  %2722 = vmatprep.subr.bf16.mxu0 %v1955
  %2723 = vmatpush1.bf16.msra.mxu0 %v1954
  %2724 = vmatprep.subr.bf16.mxu0 %v1951
  %2725 = vmatpush1.bf16.msra.mxu0 %v1950
  %2726 = vmatprep.subr.bf16.mxu0 %v1947
  %2727 = vmatpush1.bf16.msra.mxu0 %v1946
  %2728 = vmatprep.subr.bf16.mxu0 %v1943
  %2729 = vmatpush1.bf16.msra.mxu0 %v1942
  %2730 = vmatprep.subr.bf16.mxu0 0
  %2731 = vmatpush2.bf16.msra.mxu0 0
  %2732 = vmatprep.subr.bf16.mxu0 0
  %2733 = vmatpush2.bf16.msra.mxu0 0
  %2734 = vmatprep.subr.bf16.mxu0 0
  %2735 = vmatpush2.bf16.msra.mxu0 0
  %2736 = vmatprep.subr.bf16.mxu0 0
  %2737 = vmatpush2.bf16.msra.mxu0 0
  %2738 = vmatprep.subr.bf16.mxu0 0
  %2739 = vmatpush2.bf16.msra.mxu0 0
  %2740 = vmatprep.subr.bf16.mxu0 0
  %2741 = vmatpush2.bf16.msra.mxu0 0
  %2742 = vmatprep.subr.bf16.mxu0 0
  %2743 = vmatpush2.bf16.msra.mxu0 0
  %2744 = vmatprep.subr.bf16.mxu0 0
  %2745 = vmatpush2.bf16.msra.mxu0 0
  %2746 = vmatprep.mubr.bf16.mxu0 0
  %2747 = vmatmul.mubr.bf16.gmra.mxu0 %v2713
  %v2748 = vpop.f32.mrf.mxu0
  %v2749 = vadd.f32 0.0, %v2748
  %v2750 = vpop.f32.mrf.mxu0
  %v2751 = vadd.f32 0.0, %v2750
  %v2752 = vpop.f32.mrf.mxu0
  %v2753 = vpop.f32.mrf.mxu0
  %2754 = vdwg.mxu0
  %2755 = vmatprep.subr.bf16.mxu0 %v1973
  %2756 = vmatpush1.bf16.msra.mxu0 %v1972
  %2757 = vmatprep.subr.bf16.mxu0 %v1969
  %2758 = vmatpush1.bf16.msra.mxu0 %v1968
  %2759 = vmatprep.subr.bf16.mxu0 %v1965
  %2760 = vmatpush1.bf16.msra.mxu0 %v1964
  %2761 = vmatprep.subr.bf16.mxu0 %v1961
  %2762 = vmatpush1.bf16.msra.mxu0 %v1960
  %2763 = vmatprep.subr.bf16.mxu0 %v1957
  %2764 = vmatpush1.bf16.msra.mxu0 %v1956
  %2765 = vmatprep.subr.bf16.mxu0 %v1953
  %2766 = vmatpush1.bf16.msra.mxu0 %v1952
  %2767 = vmatprep.subr.bf16.mxu0 %v1949
  %2768 = vmatpush1.bf16.msra.mxu0 %v1948
  %2769 = vmatprep.subr.bf16.mxu0 %v1945
  %2770 = vmatpush1.bf16.msra.mxu0 %v1944
  %2771 = vmatprep.subr.bf16.mxu0 0
  %2772 = vmatpush2.bf16.msra.mxu0 0
  %2773 = vmatprep.subr.bf16.mxu0 0
  %2774 = vmatpush2.bf16.msra.mxu0 0
  %2775 = vmatprep.subr.bf16.mxu0 0
  %2776 = vmatpush2.bf16.msra.mxu0 0
  %2777 = vmatprep.subr.bf16.mxu0 0
  %2778 = vmatpush2.bf16.msra.mxu0 0
  %2779 = vmatprep.subr.bf16.mxu0 0
  %2780 = vmatpush2.bf16.msra.mxu0 0
  %2781 = vmatprep.subr.bf16.mxu0 0
  %2782 = vmatpush2.bf16.msra.mxu0 0
  %2783 = vmatprep.subr.bf16.mxu0 0
  %2784 = vmatpush2.bf16.msra.mxu0 0
  %2785 = vmatprep.subr.bf16.mxu0 0
  %2786 = vmatpush2.bf16.msra.mxu0 0
  %2787 = vmatprep.mubr.bf16.mxu0 0
  %2788 = vmatmul.mubr.bf16.gmra.mxu0 %v2713
  %v2789 = vpop.f32.mrf.mxu0
  %v2790 = vadd.f32 0.0, %v2789
  %v2791 = vpop.f32.mrf.mxu0
  %v2792 = vadd.f32 0.0, %v2791
  %v2793 = vpop.f32.mrf.mxu0
  %v2794 = vpop.f32.mrf.mxu0
  %2795 = vdwg.mxu0
  %v2796 = vadd.f32 %v2622, %v2749
  %v2797 = vadd.f32 %v2623, %v2751
  %v2798 = vadd.f32 %v2624, %v2790
  %v2799 = vadd.f32 %v2625, %v2792
  %v2800 = vxor.u32 %v2709, 2147483648
  %v2801 = vmul.f32 %v2800, 1.442695
  %v2802 = vpow.pop %v2801
  %v2803 = vadd.f32 %v2802, 1.0
  %v2804 = vrcp.pop %v2803
  %v2805 = vmul.f32 1.0, %v2804
  %v2806 = vxor.u32 %v2710, 2147483648
  %v2807 = vmul.f32 %v2806, 1.442695
  %v2808 = vpow.pop %v2807
  %v2809 = vadd.f32 %v2808, 1.0
  %v2810 = vrcp.pop %v2809
  %v2811 = vmul.f32 1.0, %v2810
  %v2812 = vtanh.pop %v2711
  %v2813 = vxor.u32 %v2712, 2147483648
  %v2814 = vmul.f32 %v2813, 1.442695
  %v2815 = vpow.pop %v2814
  %v2816 = vadd.f32 %v2815, 1.0
  %v2817 = vrcp.pop %v2816
  %v2818 = vmul.f32 1.0, %v2817
  %v2819 = vmul.f32 %v2811, %v2585
  %v2820 = vmul.f32 %v2805, %v2812
  %v2821 = vadd.f32 %v2819, %v2820
  %v2822 = vtanh.pop %v2821
  %v2823 = vmul.f32 %v2818, %v2822
  %v2824 = vxor.u32 %v2796, 2147483648
  %v2825 = vmul.f32 %v2824, 1.442695
  %v2826 = vpow.pop %v2825
  %v2827 = vadd.f32 %v2826, 1.0
  %v2828 = vrcp.pop %v2827
  %v2829 = vmul.f32 1.0, %v2828
  %v2830 = vxor.u32 %v2797, 2147483648
  %v2831 = vmul.f32 %v2830, 1.442695
  %v2832 = vpow.pop %v2831
  %v2833 = vadd.f32 %v2832, 1.0
  %v2834 = vrcp.pop %v2833
  %v2835 = vmul.f32 1.0, %v2834
  %v2836 = vtanh.pop %v2798
  %v2837 = vxor.u32 %v2799, 2147483648
  %v2838 = vmul.f32 %v2837, 1.442695
  %v2839 = vpow.pop %v2838
  %v2840 = vadd.f32 %v2839, 1.0
  %v2841 = vrcp.pop %v2840
  %v2842 = vmul.f32 1.0, %v2841
  %v2843 = vmul.f32 %v2835, %v2609
  %v2844 = vmul.f32 %v2829, %v2836
  %v2845 = vadd.f32 %v2843, %v2844
  %v2846 = vtanh.pop %v2845
  %v2847 = vmul.f32 %v2842, %v2846
  %s2848 = smul.u32 4, 8
  %s2849 = smul.addr %s2848, 8
  %s2850 = scalar_lea.vmem [#allocation2], %s2849
  %v2851 = vld [vmem:[%s2850] sm:$0xff]
  %v2852 = vld [vmem:[%s2850 + $0x8] sm:$0xff]
  %v2853 = vld [vmem:[%s2850 + $0x10] sm:$0xff]
  %v2854 = vld [vmem:[%s2850 + $0x18] sm:$0xff]
  %s2855 = smul.u32 11, 8
  %s2856 = smul.addr %s2855, 8
  %s2857 = scalar_lea.vmem [#allocation2], %s2856
  %v2858 = vld [vmem:[%s2857 + $0x20] sm:$0xff]
  %v2859 = vld [vmem:[%s2857 + $0x28] sm:$0xff]
  %v2860 = vld [vmem:[%s2857 + $0x30] sm:$0xff]
  %v2861 = vld [vmem:[%s2857 + $0x38] sm:$0xff]
  %v2862 = vpack.c.bf16 %v2823, %v2823
  %2863 = vmatprep.subr.bf16.mxu0 %v1693
  %2864 = vmatpush1.bf16.msra.mxu0 %v1692
  %2865 = vmatprep.subr.bf16.mxu0 %v1689
  %2866 = vmatpush1.bf16.msra.mxu0 %v1688
  %2867 = vmatprep.subr.bf16.mxu0 %v1685
  %2868 = vmatpush1.bf16.msra.mxu0 %v1684
  %2869 = vmatprep.subr.bf16.mxu0 %v1681
  %2870 = vmatpush1.bf16.msra.mxu0 %v1680
  %2871 = vmatprep.subr.bf16.mxu0 %v1677
  %2872 = vmatpush1.bf16.msra.mxu0 %v1676
  %2873 = vmatprep.subr.bf16.mxu0 %v1673
  %2874 = vmatpush1.bf16.msra.mxu0 %v1672
  %2875 = vmatprep.subr.bf16.mxu0 %v1669
  %2876 = vmatpush1.bf16.msra.mxu0 %v1668
  %2877 = vmatprep.subr.bf16.mxu0 %v1665
  %2878 = vmatpush1.bf16.msra.mxu0 %v1664
  %2879 = vmatprep.subr.bf16.mxu0 0
  %2880 = vmatpush2.bf16.msra.mxu0 0
  %2881 = vmatprep.subr.bf16.mxu0 0
  %2882 = vmatpush2.bf16.msra.mxu0 0
  %2883 = vmatprep.subr.bf16.mxu0 0
  %2884 = vmatpush2.bf16.msra.mxu0 0
  %2885 = vmatprep.subr.bf16.mxu0 0
  %2886 = vmatpush2.bf16.msra.mxu0 0
  %2887 = vmatprep.subr.bf16.mxu0 0
  %2888 = vmatpush2.bf16.msra.mxu0 0
  %2889 = vmatprep.subr.bf16.mxu0 0
  %2890 = vmatpush2.bf16.msra.mxu0 0
  %2891 = vmatprep.subr.bf16.mxu0 0
  %2892 = vmatpush2.bf16.msra.mxu0 0
  %2893 = vmatprep.subr.bf16.mxu0 0
  %2894 = vmatpush2.bf16.msra.mxu0 0
  %2895 = vmatprep.mubr.bf16.mxu0 0
  %2896 = vmatmul.mubr.bf16.gmra.mxu0 %v2862
  %v2897 = vpop.f32.mrf.mxu0
  %v2898 = vadd.f32 0.0, %v2897
  %v2899 = vpop.f32.mrf.mxu0
  %v2900 = vadd.f32 0.0, %v2899
  %v2901 = vpop.f32.mrf.mxu0
  %v2902 = vpop.f32.mrf.mxu0
  %2903 = vdwg.mxu0
  %2904 = vmatprep.subr.bf16.mxu0 %v1695
  %2905 = vmatpush1.bf16.msra.mxu0 %v1694
  %2906 = vmatprep.subr.bf16.mxu0 %v1691
  %2907 = vmatpush1.bf16.msra.mxu0 %v1690
  %2908 = vmatprep.subr.bf16.mxu0 %v1687
  %2909 = vmatpush1.bf16.msra.mxu0 %v1686
  %2910 = vmatprep.subr.bf16.mxu0 %v1683
  %2911 = vmatpush1.bf16.msra.mxu0 %v1682
  %2912 = vmatprep.subr.bf16.mxu0 %v1679
  %2913 = vmatpush1.bf16.msra.mxu0 %v1678
  %2914 = vmatprep.subr.bf16.mxu0 %v1675
  %2915 = vmatpush1.bf16.msra.mxu0 %v1674
  %2916 = vmatprep.subr.bf16.mxu0 %v1671
  %2917 = vmatpush1.bf16.msra.mxu0 %v1670
  %2918 = vmatprep.subr.bf16.mxu0 %v1667
  %2919 = vmatpush1.bf16.msra.mxu0 %v1666
  %2920 = vmatprep.subr.bf16.mxu0 0
  %2921 = vmatpush2.bf16.msra.mxu0 0
  %2922 = vmatprep.subr.bf16.mxu0 0
  %2923 = vmatpush2.bf16.msra.mxu0 0
  %2924 = vmatprep.subr.bf16.mxu0 0
  %2925 = vmatpush2.bf16.msra.mxu0 0
  %2926 = vmatprep.subr.bf16.mxu0 0
  %2927 = vmatpush2.bf16.msra.mxu0 0
  %2928 = vmatprep.subr.bf16.mxu0 0
  %2929 = vmatpush2.bf16.msra.mxu0 0
  %2930 = vmatprep.subr.bf16.mxu0 0
  %2931 = vmatpush2.bf16.msra.mxu0 0
  %2932 = vmatprep.subr.bf16.mxu0 0
  %2933 = vmatpush2.bf16.msra.mxu0 0
  %2934 = vmatprep.subr.bf16.mxu0 0
  %2935 = vmatpush2.bf16.msra.mxu0 0
  %2936 = vmatprep.mubr.bf16.mxu0 0
  %2937 = vmatmul.mubr.bf16.gmra.mxu0 %v2862
  %v2938 = vpop.f32.mrf.mxu0
  %v2939 = vadd.f32 0.0, %v2938
  %v2940 = vpop.f32.mrf.mxu0
  %v2941 = vadd.f32 0.0, %v2940
  %v2942 = vpop.f32.mrf.mxu0
  %v2943 = vpop.f32.mrf.mxu0
  %2944 = vdwg.mxu0
  %v2945 = vadd.f32 %v2851, %v2898
  %v2946 = vadd.f32 %v2852, %v2900
  %v2947 = vadd.f32 %v2853, %v2939
  %v2948 = vadd.f32 %v2854, %v2941
  %v2949 = vpack.c.bf16 %v2847, %v2847
  %2950 = vmatprep.subr.bf16.mxu0 %v1971
  %2951 = vmatpush1.bf16.msra.mxu0 %v1970
  %2952 = vmatprep.subr.bf16.mxu0 %v1967
  %2953 = vmatpush1.bf16.msra.mxu0 %v1966
  %2954 = vmatprep.subr.bf16.mxu0 %v1963
  %2955 = vmatpush1.bf16.msra.mxu0 %v1962
  %2956 = vmatprep.subr.bf16.mxu0 %v1959
  %2957 = vmatpush1.bf16.msra.mxu0 %v1958
  %2958 = vmatprep.subr.bf16.mxu0 %v1955
  %2959 = vmatpush1.bf16.msra.mxu0 %v1954
  %2960 = vmatprep.subr.bf16.mxu0 %v1951
  %2961 = vmatpush1.bf16.msra.mxu0 %v1950
  %2962 = vmatprep.subr.bf16.mxu0 %v1947
  %2963 = vmatpush1.bf16.msra.mxu0 %v1946
  %2964 = vmatprep.subr.bf16.mxu0 %v1943
  %2965 = vmatpush1.bf16.msra.mxu0 %v1942
  %2966 = vmatprep.subr.bf16.mxu0 0
  %2967 = vmatpush2.bf16.msra.mxu0 0
  %2968 = vmatprep.subr.bf16.mxu0 0
  %2969 = vmatpush2.bf16.msra.mxu0 0
  %2970 = vmatprep.subr.bf16.mxu0 0
  %2971 = vmatpush2.bf16.msra.mxu0 0
  %2972 = vmatprep.subr.bf16.mxu0 0
  %2973 = vmatpush2.bf16.msra.mxu0 0
  %2974 = vmatprep.subr.bf16.mxu0 0
  %2975 = vmatpush2.bf16.msra.mxu0 0
  %2976 = vmatprep.subr.bf16.mxu0 0
  %2977 = vmatpush2.bf16.msra.mxu0 0
  %2978 = vmatprep.subr.bf16.mxu0 0
  %2979 = vmatpush2.bf16.msra.mxu0 0
  %2980 = vmatprep.subr.bf16.mxu0 0
  %2981 = vmatpush2.bf16.msra.mxu0 0
  %2982 = vmatprep.mubr.bf16.mxu0 0
  %2983 = vmatmul.mubr.bf16.gmra.mxu0 %v2949
  %v2984 = vpop.f32.mrf.mxu0
  %v2985 = vadd.f32 0.0, %v2984
  %v2986 = vpop.f32.mrf.mxu0
  %v2987 = vadd.f32 0.0, %v2986
  %v2988 = vpop.f32.mrf.mxu0
  %v2989 = vpop.f32.mrf.mxu0
  %2990 = vdwg.mxu0
  %2991 = vmatprep.subr.bf16.mxu0 %v1973
  %2992 = vmatpush1.bf16.msra.mxu0 %v1972
  %2993 = vmatprep.subr.bf16.mxu0 %v1969
  %2994 = vmatpush1.bf16.msra.mxu0 %v1968
  %2995 = vmatprep.subr.bf16.mxu0 %v1965
  %2996 = vmatpush1.bf16.msra.mxu0 %v1964
  %2997 = vmatprep.subr.bf16.mxu0 %v1961
  %2998 = vmatpush1.bf16.msra.mxu0 %v1960
  %2999 = vmatprep.subr.bf16.mxu0 %v1957
  %3000 = vmatpush1.bf16.msra.mxu0 %v1956
  %3001 = vmatprep.subr.bf16.mxu0 %v1953
  %3002 = vmatpush1.bf16.msra.mxu0 %v1952
  %3003 = vmatprep.subr.bf16.mxu0 %v1949
  %3004 = vmatpush1.bf16.msra.mxu0 %v1948
  %3005 = vmatprep.subr.bf16.mxu0 %v1945
  %3006 = vmatpush1.bf16.msra.mxu0 %v1944
  %3007 = vmatprep.subr.bf16.mxu0 0
  %3008 = vmatpush2.bf16.msra.mxu0 0
  %3009 = vmatprep.subr.bf16.mxu0 0
  %3010 = vmatpush2.bf16.msra.mxu0 0
  %3011 = vmatprep.subr.bf16.mxu0 0
  %3012 = vmatpush2.bf16.msra.mxu0 0
  %3013 = vmatprep.subr.bf16.mxu0 0
  %3014 = vmatpush2.bf16.msra.mxu0 0
  %3015 = vmatprep.subr.bf16.mxu0 0
  %3016 = vmatpush2.bf16.msra.mxu0 0
  %3017 = vmatprep.subr.bf16.mxu0 0
  %3018 = vmatpush2.bf16.msra.mxu0 0
  %3019 = vmatprep.subr.bf16.mxu0 0
  %3020 = vmatpush2.bf16.msra.mxu0 0
  %3021 = vmatprep.subr.bf16.mxu0 0
  %3022 = vmatpush2.bf16.msra.mxu0 0
  %3023 = vmatprep.mubr.bf16.mxu0 0
  %3024 = vmatmul.mubr.bf16.gmra.mxu0 %v2949
  %v3025 = vpop.f32.mrf.mxu0
  %v3026 = vadd.f32 0.0, %v3025
  %v3027 = vpop.f32.mrf.mxu0
  %v3028 = vadd.f32 0.0, %v3027
  %v3029 = vpop.f32.mrf.mxu0
  %v3030 = vpop.f32.mrf.mxu0
  %3031 = vdwg.mxu0
  %v3032 = vadd.f32 %v2858, %v2985
  %v3033 = vadd.f32 %v2859, %v2987
  %v3034 = vadd.f32 %v2860, %v3026
  %v3035 = vadd.f32 %v2861, %v3028
  %v3036 = vxor.u32 %v2945, 2147483648
  %v3037 = vmul.f32 %v3036, 1.442695
  %v3038 = vpow.pop %v3037
  %v3039 = vadd.f32 %v3038, 1.0
  %v3040 = vrcp.pop %v3039
  %v3041 = vmul.f32 1.0, %v3040
  %v3042 = vxor.u32 %v2946, 2147483648
  %v3043 = vmul.f32 %v3042, 1.442695
  %v3044 = vpow.pop %v3043
  %v3045 = vadd.f32 %v3044, 1.0
  %v3046 = vrcp.pop %v3045
  %v3047 = vmul.f32 1.0, %v3046
  %v3048 = vtanh.pop %v2947
  %v3049 = vxor.u32 %v2948, 2147483648
  %v3050 = vmul.f32 %v3049, 1.442695
  %v3051 = vpow.pop %v3050
  %v3052 = vadd.f32 %v3051, 1.0
  %v3053 = vrcp.pop %v3052
  %v3054 = vmul.f32 1.0, %v3053
  %v3055 = vmul.f32 %v3047, %v2821
  %v3056 = vmul.f32 %v3041, %v3048
  %v3057 = vadd.f32 %v3055, %v3056
  %v3058 = vtanh.pop %v3057
  %v3059 = vmul.f32 %v3054, %v3058
  %v3060 = vxor.u32 %v3032, 2147483648
  %v3061 = vmul.f32 %v3060, 1.442695
  %v3062 = vpow.pop %v3061
  %v3063 = vadd.f32 %v3062, 1.0
  %v3064 = vrcp.pop %v3063
  %v3065 = vmul.f32 1.0, %v3064
  %v3066 = vxor.u32 %v3033, 2147483648
  %v3067 = vmul.f32 %v3066, 1.442695
  %v3068 = vpow.pop %v3067
  %v3069 = vadd.f32 %v3068, 1.0
  %v3070 = vrcp.pop %v3069
  %v3071 = vmul.f32 1.0, %v3070
  %v3072 = vtanh.pop %v3034
  %v3073 = vxor.u32 %v3035, 2147483648
  %v3074 = vmul.f32 %v3073, 1.442695
  %v3075 = vpow.pop %v3074
  %v3076 = vadd.f32 %v3075, 1.0
  %v3077 = vrcp.pop %v3076
  %v3078 = vmul.f32 1.0, %v3077
  %v3079 = vmul.f32 %v3071, %v2845
  %v3080 = vmul.f32 %v3065, %v3072
  %v3081 = vadd.f32 %v3079, %v3080
  %v3082 = vtanh.pop %v3081
  %v3083 = vmul.f32 %v3078, %v3082
  %s3084 = smul.u32 5, 8
  %s3085 = smul.addr %s3084, 8
  %s3086 = scalar_lea.vmem [#allocation2], %s3085
  %v3087 = vld [vmem:[%s3086] sm:$0xff]
  %v3088 = vld [vmem:[%s3086 + $0x8] sm:$0xff]
  %v3089 = vld [vmem:[%s3086 + $0x10] sm:$0xff]
  %v3090 = vld [vmem:[%s3086 + $0x18] sm:$0xff]
  %s3091 = smul.u32 10, 8
  %s3092 = smul.addr %s3091, 8
  %s3093 = scalar_lea.vmem [#allocation2], %s3092
  %v3094 = vld [vmem:[%s3093 + $0x20] sm:$0xff]
  %v3095 = vld [vmem:[%s3093 + $0x28] sm:$0xff]
  %v3096 = vld [vmem:[%s3093 + $0x30] sm:$0xff]
  %v3097 = vld [vmem:[%s3093 + $0x38] sm:$0xff]
  %v3098 = vpack.c.bf16 %v3059, %v3059
  %3099 = vmatprep.subr.bf16.mxu0 %v1693
  %3100 = vmatpush1.bf16.msra.mxu0 %v1692
  %3101 = vmatprep.subr.bf16.mxu0 %v1689
  %3102 = vmatpush1.bf16.msra.mxu0 %v1688
  %3103 = vmatprep.subr.bf16.mxu0 %v1685
  %3104 = vmatpush1.bf16.msra.mxu0 %v1684
  %3105 = vmatprep.subr.bf16.mxu0 %v1681
  %3106 = vmatpush1.bf16.msra.mxu0 %v1680
  %3107 = vmatprep.subr.bf16.mxu0 %v1677
  %3108 = vmatpush1.bf16.msra.mxu0 %v1676
  %3109 = vmatprep.subr.bf16.mxu0 %v1673
  %3110 = vmatpush1.bf16.msra.mxu0 %v1672
  %3111 = vmatprep.subr.bf16.mxu0 %v1669
  %3112 = vmatpush1.bf16.msra.mxu0 %v1668
  %3113 = vmatprep.subr.bf16.mxu0 %v1665
  %3114 = vmatpush1.bf16.msra.mxu0 %v1664
  %3115 = vmatprep.subr.bf16.mxu0 0
  %3116 = vmatpush2.bf16.msra.mxu0 0
  %3117 = vmatprep.subr.bf16.mxu0 0
  %3118 = vmatpush2.bf16.msra.mxu0 0
  %3119 = vmatprep.subr.bf16.mxu0 0
  %3120 = vmatpush2.bf16.msra.mxu0 0
  %3121 = vmatprep.subr.bf16.mxu0 0
  %3122 = vmatpush2.bf16.msra.mxu0 0
  %3123 = vmatprep.subr.bf16.mxu0 0
  %3124 = vmatpush2.bf16.msra.mxu0 0
  %3125 = vmatprep.subr.bf16.mxu0 0
  %3126 = vmatpush2.bf16.msra.mxu0 0
  %3127 = vmatprep.subr.bf16.mxu0 0
  %3128 = vmatpush2.bf16.msra.mxu0 0
  %3129 = vmatprep.subr.bf16.mxu0 0
  %3130 = vmatpush2.bf16.msra.mxu0 0
  %3131 = vmatprep.mubr.bf16.mxu0 0
  %3132 = vmatmul.mubr.bf16.gmra.mxu0 %v3098
  %v3133 = vpop.f32.mrf.mxu0
  %v3134 = vadd.f32 0.0, %v3133
  %v3135 = vpop.f32.mrf.mxu0
  %v3136 = vadd.f32 0.0, %v3135
  %v3137 = vpop.f32.mrf.mxu0
  %v3138 = vpop.f32.mrf.mxu0
  %3139 = vdwg.mxu0
  %3140 = vmatprep.subr.bf16.mxu0 %v1695
  %3141 = vmatpush1.bf16.msra.mxu0 %v1694
  %3142 = vmatprep.subr.bf16.mxu0 %v1691
  %3143 = vmatpush1.bf16.msra.mxu0 %v1690
  %3144 = vmatprep.subr.bf16.mxu0 %v1687
  %3145 = vmatpush1.bf16.msra.mxu0 %v1686
  %3146 = vmatprep.subr.bf16.mxu0 %v1683
  %3147 = vmatpush1.bf16.msra.mxu0 %v1682
  %3148 = vmatprep.subr.bf16.mxu0 %v1679
  %3149 = vmatpush1.bf16.msra.mxu0 %v1678
  %3150 = vmatprep.subr.bf16.mxu0 %v1675
  %3151 = vmatpush1.bf16.msra.mxu0 %v1674
  %3152 = vmatprep.subr.bf16.mxu0 %v1671
  %3153 = vmatpush1.bf16.msra.mxu0 %v1670
  %3154 = vmatprep.subr.bf16.mxu0 %v1667
  %3155 = vmatpush1.bf16.msra.mxu0 %v1666
  %3156 = vmatprep.subr.bf16.mxu0 0
  %3157 = vmatpush2.bf16.msra.mxu0 0
  %3158 = vmatprep.subr.bf16.mxu0 0
  %3159 = vmatpush2.bf16.msra.mxu0 0
  %3160 = vmatprep.subr.bf16.mxu0 0
  %3161 = vmatpush2.bf16.msra.mxu0 0
  %3162 = vmatprep.subr.bf16.mxu0 0
  %3163 = vmatpush2.bf16.msra.mxu0 0
  %3164 = vmatprep.subr.bf16.mxu0 0
  %3165 = vmatpush2.bf16.msra.mxu0 0
  %3166 = vmatprep.subr.bf16.mxu0 0
  %3167 = vmatpush2.bf16.msra.mxu0 0
  %3168 = vmatprep.subr.bf16.mxu0 0
  %3169 = vmatpush2.bf16.msra.mxu0 0
  %3170 = vmatprep.subr.bf16.mxu0 0
  %3171 = vmatpush2.bf16.msra.mxu0 0
  %3172 = vmatprep.mubr.bf16.mxu0 0
  %3173 = vmatmul.mubr.bf16.gmra.mxu0 %v3098
  %v3174 = vpop.f32.mrf.mxu0
  %v3175 = vadd.f32 0.0, %v3174
  %v3176 = vpop.f32.mrf.mxu0
  %v3177 = vadd.f32 0.0, %v3176
  %v3178 = vpop.f32.mrf.mxu0
  %v3179 = vpop.f32.mrf.mxu0
  %3180 = vdwg.mxu0
  %v3181 = vadd.f32 %v3087, %v3134
  %v3182 = vadd.f32 %v3088, %v3136
  %v3183 = vadd.f32 %v3089, %v3175
  %v3184 = vadd.f32 %v3090, %v3177
  %v3185 = vpack.c.bf16 %v3083, %v3083
  %3186 = vmatprep.subr.bf16.mxu0 %v1971
  %3187 = vmatpush1.bf16.msra.mxu0 %v1970
  %3188 = vmatprep.subr.bf16.mxu0 %v1967
  %3189 = vmatpush1.bf16.msra.mxu0 %v1966
  %3190 = vmatprep.subr.bf16.mxu0 %v1963
  %3191 = vmatpush1.bf16.msra.mxu0 %v1962
  %3192 = vmatprep.subr.bf16.mxu0 %v1959
  %3193 = vmatpush1.bf16.msra.mxu0 %v1958
  %3194 = vmatprep.subr.bf16.mxu0 %v1955
  %3195 = vmatpush1.bf16.msra.mxu0 %v1954
  %3196 = vmatprep.subr.bf16.mxu0 %v1951
  %3197 = vmatpush1.bf16.msra.mxu0 %v1950
  %3198 = vmatprep.subr.bf16.mxu0 %v1947
  %3199 = vmatpush1.bf16.msra.mxu0 %v1946
  %3200 = vmatprep.subr.bf16.mxu0 %v1943
  %3201 = vmatpush1.bf16.msra.mxu0 %v1942
  %3202 = vmatprep.subr.bf16.mxu0 0
  %3203 = vmatpush2.bf16.msra.mxu0 0
  %3204 = vmatprep.subr.bf16.mxu0 0
  %3205 = vmatpush2.bf16.msra.mxu0 0
  %3206 = vmatprep.subr.bf16.mxu0 0
  %3207 = vmatpush2.bf16.msra.mxu0 0
  %3208 = vmatprep.subr.bf16.mxu0 0
  %3209 = vmatpush2.bf16.msra.mxu0 0
  %3210 = vmatprep.subr.bf16.mxu0 0
  %3211 = vmatpush2.bf16.msra.mxu0 0
  %3212 = vmatprep.subr.bf16.mxu0 0
  %3213 = vmatpush2.bf16.msra.mxu0 0
  %3214 = vmatprep.subr.bf16.mxu0 0
  %3215 = vmatpush2.bf16.msra.mxu0 0
  %3216 = vmatprep.subr.bf16.mxu0 0
  %3217 = vmatpush2.bf16.msra.mxu0 0
  %3218 = vmatprep.mubr.bf16.mxu0 0
  %3219 = vmatmul.mubr.bf16.gmra.mxu0 %v3185
  %v3220 = vpop.f32.mrf.mxu0
  %v3221 = vadd.f32 0.0, %v3220
  %v3222 = vpop.f32.mrf.mxu0
  %v3223 = vadd.f32 0.0, %v3222
  %v3224 = vpop.f32.mrf.mxu0
  %v3225 = vpop.f32.mrf.mxu0
  %3226 = vdwg.mxu0
  %3227 = vmatprep.subr.bf16.mxu0 %v1973
  %3228 = vmatpush1.bf16.msra.mxu0 %v1972
  %3229 = vmatprep.subr.bf16.mxu0 %v1969
  %3230 = vmatpush1.bf16.msra.mxu0 %v1968
  %3231 = vmatprep.subr.bf16.mxu0 %v1965
  %3232 = vmatpush1.bf16.msra.mxu0 %v1964
  %3233 = vmatprep.subr.bf16.mxu0 %v1961
  %3234 = vmatpush1.bf16.msra.mxu0 %v1960
  %3235 = vmatprep.subr.bf16.mxu0 %v1957
  %3236 = vmatpush1.bf16.msra.mxu0 %v1956
  %3237 = vmatprep.subr.bf16.mxu0 %v1953
  %3238 = vmatpush1.bf16.msra.mxu0 %v1952
  %3239 = vmatprep.subr.bf16.mxu0 %v1949
  %3240 = vmatpush1.bf16.msra.mxu0 %v1948
  %3241 = vmatprep.subr.bf16.mxu0 %v1945
  %3242 = vmatpush1.bf16.msra.mxu0 %v1944
  %3243 = vmatprep.subr.bf16.mxu0 0
  %3244 = vmatpush2.bf16.msra.mxu0 0
  %3245 = vmatprep.subr.bf16.mxu0 0
  %3246 = vmatpush2.bf16.msra.mxu0 0
  %3247 = vmatprep.subr.bf16.mxu0 0
  %3248 = vmatpush2.bf16.msra.mxu0 0
  %3249 = vmatprep.subr.bf16.mxu0 0
  %3250 = vmatpush2.bf16.msra.mxu0 0
  %3251 = vmatprep.subr.bf16.mxu0 0
  %3252 = vmatpush2.bf16.msra.mxu0 0
  %3253 = vmatprep.subr.bf16.mxu0 0
  %3254 = vmatpush2.bf16.msra.mxu0 0
  %3255 = vmatprep.subr.bf16.mxu0 0
  %3256 = vmatpush2.bf16.msra.mxu0 0
  %3257 = vmatprep.subr.bf16.mxu0 0
  %3258 = vmatpush2.bf16.msra.mxu0 0
  %3259 = vmatprep.mubr.bf16.mxu0 0
  %3260 = vmatmul.mubr.bf16.gmra.mxu0 %v3185
  %v3261 = vpop.f32.mrf.mxu0
  %v3262 = vadd.f32 0.0, %v3261
  %v3263 = vpop.f32.mrf.mxu0
  %v3264 = vadd.f32 0.0, %v3263
  %v3265 = vpop.f32.mrf.mxu0
  %v3266 = vpop.f32.mrf.mxu0
  %3267 = vdwg.mxu0
  %v3268 = vadd.f32 %v3094, %v3221
  %v3269 = vadd.f32 %v3095, %v3223
  %v3270 = vadd.f32 %v3096, %v3262
  %v3271 = vadd.f32 %v3097, %v3264
  %v3272 = vxor.u32 %v3181, 2147483648
  %v3273 = vmul.f32 %v3272, 1.442695
  %v3274 = vpow.pop %v3273
  %v3275 = vadd.f32 %v3274, 1.0
  %v3276 = vrcp.pop %v3275
  %v3277 = vmul.f32 1.0, %v3276
  %v3278 = vxor.u32 %v3182, 2147483648
  %v3279 = vmul.f32 %v3278, 1.442695
  %v3280 = vpow.pop %v3279
  %v3281 = vadd.f32 %v3280, 1.0
  %v3282 = vrcp.pop %v3281
  %v3283 = vmul.f32 1.0, %v3282
  %v3284 = vtanh.pop %v3183
  %v3285 = vxor.u32 %v3184, 2147483648
  %v3286 = vmul.f32 %v3285, 1.442695
  %v3287 = vpow.pop %v3286
  %v3288 = vadd.f32 %v3287, 1.0
  %v3289 = vrcp.pop %v3288
  %v3290 = vmul.f32 1.0, %v3289
  %v3291 = vmul.f32 %v3283, %v3057
  %v3292 = vmul.f32 %v3277, %v3284
  %v3293 = vadd.f32 %v3291, %v3292
  %v3294 = vtanh.pop %v3293
  %v3295 = vmul.f32 %v3290, %v3294
  %v3296 = vxor.u32 %v3268, 2147483648
  %v3297 = vmul.f32 %v3296, 1.442695
  %v3298 = vpow.pop %v3297
  %v3299 = vadd.f32 %v3298, 1.0
  %v3300 = vrcp.pop %v3299
  %v3301 = vmul.f32 1.0, %v3300
  %v3302 = vxor.u32 %v3269, 2147483648
  %v3303 = vmul.f32 %v3302, 1.442695
  %v3304 = vpow.pop %v3303
  %v3305 = vadd.f32 %v3304, 1.0
  %v3306 = vrcp.pop %v3305
  %v3307 = vmul.f32 1.0, %v3306
  %v3308 = vtanh.pop %v3270
  %v3309 = vxor.u32 %v3271, 2147483648
  %v3310 = vmul.f32 %v3309, 1.442695
  %v3311 = vpow.pop %v3310
  %v3312 = vadd.f32 %v3311, 1.0
  %v3313 = vrcp.pop %v3312
  %v3314 = vmul.f32 1.0, %v3313
  %v3315 = vmul.f32 %v3307, %v3081
  %v3316 = vmul.f32 %v3301, %v3308
  %v3317 = vadd.f32 %v3315, %v3316
  %v3318 = vtanh.pop %v3317
  %v3319 = vmul.f32 %v3314, %v3318
  %s3320 = smul.u32 6, 8
  %s3321 = smul.addr %s3320, 8
  %s3322 = scalar_lea.vmem [#allocation2], %s3321
  %v3323 = vld [vmem:[%s3322] sm:$0xff]
  %v3324 = vld [vmem:[%s3322 + $0x8] sm:$0xff]
  %v3325 = vld [vmem:[%s3322 + $0x10] sm:$0xff]
  %v3326 = vld [vmem:[%s3322 + $0x18] sm:$0xff]
  %s3327 = smul.u32 9, 8
  %s3328 = smul.addr %s3327, 8
  %s3329 = scalar_lea.vmem [#allocation2], %s3328
  %v3330 = vld [vmem:[%s3329 + $0x20] sm:$0xff]
  %v3331 = vld [vmem:[%s3329 + $0x28] sm:$0xff]
  %v3332 = vld [vmem:[%s3329 + $0x30] sm:$0xff]
  %v3333 = vld [vmem:[%s3329 + $0x38] sm:$0xff]
  %v3334 = vpack.c.bf16 %v3295, %v3295
  %3335 = vmatprep.subr.bf16.mxu0 %v1693
  %3336 = vmatpush1.bf16.msra.mxu0 %v1692
  %3337 = vmatprep.subr.bf16.mxu0 %v1689
  %3338 = vmatpush1.bf16.msra.mxu0 %v1688
  %3339 = vmatprep.subr.bf16.mxu0 %v1685
  %3340 = vmatpush1.bf16.msra.mxu0 %v1684
  %3341 = vmatprep.subr.bf16.mxu0 %v1681
  %3342 = vmatpush1.bf16.msra.mxu0 %v1680
  %3343 = vmatprep.subr.bf16.mxu0 %v1677
  %3344 = vmatpush1.bf16.msra.mxu0 %v1676
  %3345 = vmatprep.subr.bf16.mxu0 %v1673
  %3346 = vmatpush1.bf16.msra.mxu0 %v1672
  %3347 = vmatprep.subr.bf16.mxu0 %v1669
  %3348 = vmatpush1.bf16.msra.mxu0 %v1668
  %3349 = vmatprep.subr.bf16.mxu0 %v1665
  %3350 = vmatpush1.bf16.msra.mxu0 %v1664
  %3351 = vmatprep.subr.bf16.mxu0 0
  %3352 = vmatpush2.bf16.msra.mxu0 0
  %3353 = vmatprep.subr.bf16.mxu0 0
  %3354 = vmatpush2.bf16.msra.mxu0 0
  %3355 = vmatprep.subr.bf16.mxu0 0
  %3356 = vmatpush2.bf16.msra.mxu0 0
  %3357 = vmatprep.subr.bf16.mxu0 0
  %3358 = vmatpush2.bf16.msra.mxu0 0
  %3359 = vmatprep.subr.bf16.mxu0 0
  %3360 = vmatpush2.bf16.msra.mxu0 0
  %3361 = vmatprep.subr.bf16.mxu0 0
  %3362 = vmatpush2.bf16.msra.mxu0 0
  %3363 = vmatprep.subr.bf16.mxu0 0
  %3364 = vmatpush2.bf16.msra.mxu0 0
  %3365 = vmatprep.subr.bf16.mxu0 0
  %3366 = vmatpush2.bf16.msra.mxu0 0
  %3367 = vmatprep.mubr.bf16.mxu0 0
  %3368 = vmatmul.mubr.bf16.gmra.mxu0 %v3334
  %v3369 = vpop.f32.mrf.mxu0
  %v3370 = vadd.f32 0.0, %v3369
  %v3371 = vpop.f32.mrf.mxu0
  %v3372 = vadd.f32 0.0, %v3371
  %v3373 = vpop.f32.mrf.mxu0
  %v3374 = vpop.f32.mrf.mxu0
  %3375 = vdwg.mxu0
  %3376 = vmatprep.subr.bf16.mxu0 %v1695
  %3377 = vmatpush1.bf16.msra.mxu0 %v1694
  %3378 = vmatprep.subr.bf16.mxu0 %v1691
  %3379 = vmatpush1.bf16.msra.mxu0 %v1690
  %3380 = vmatprep.subr.bf16.mxu0 %v1687
  %3381 = vmatpush1.bf16.msra.mxu0 %v1686
  %3382 = vmatprep.subr.bf16.mxu0 %v1683
  %3383 = vmatpush1.bf16.msra.mxu0 %v1682
  %3384 = vmatprep.subr.bf16.mxu0 %v1679
  %3385 = vmatpush1.bf16.msra.mxu0 %v1678
  %3386 = vmatprep.subr.bf16.mxu0 %v1675
  %3387 = vmatpush1.bf16.msra.mxu0 %v1674
  %3388 = vmatprep.subr.bf16.mxu0 %v1671
  %3389 = vmatpush1.bf16.msra.mxu0 %v1670
  %3390 = vmatprep.subr.bf16.mxu0 %v1667
  %3391 = vmatpush1.bf16.msra.mxu0 %v1666
  %3392 = vmatprep.subr.bf16.mxu0 0
  %3393 = vmatpush2.bf16.msra.mxu0 0
  %3394 = vmatprep.subr.bf16.mxu0 0
  %3395 = vmatpush2.bf16.msra.mxu0 0
  %3396 = vmatprep.subr.bf16.mxu0 0
  %3397 = vmatpush2.bf16.msra.mxu0 0
  %3398 = vmatprep.subr.bf16.mxu0 0
  %3399 = vmatpush2.bf16.msra.mxu0 0
  %3400 = vmatprep.subr.bf16.mxu0 0
  %3401 = vmatpush2.bf16.msra.mxu0 0
  %3402 = vmatprep.subr.bf16.mxu0 0
  %3403 = vmatpush2.bf16.msra.mxu0 0
  %3404 = vmatprep.subr.bf16.mxu0 0
  %3405 = vmatpush2.bf16.msra.mxu0 0
  %3406 = vmatprep.subr.bf16.mxu0 0
  %3407 = vmatpush2.bf16.msra.mxu0 0
  %3408 = vmatprep.mubr.bf16.mxu0 0
  %3409 = vmatmul.mubr.bf16.gmra.mxu0 %v3334
  %v3410 = vpop.f32.mrf.mxu0
  %v3411 = vadd.f32 0.0, %v3410
  %v3412 = vpop.f32.mrf.mxu0
  %v3413 = vadd.f32 0.0, %v3412
  %v3414 = vpop.f32.mrf.mxu0
  %v3415 = vpop.f32.mrf.mxu0
  %3416 = vdwg.mxu0
  %v3417 = vadd.f32 %v3323, %v3370
  %v3418 = vadd.f32 %v3324, %v3372
  %v3419 = vadd.f32 %v3325, %v3411
  %v3420 = vadd.f32 %v3326, %v3413
  %v3421 = vpack.c.bf16 %v3319, %v3319
  %3422 = vmatprep.subr.bf16.mxu0 %v1971
  %3423 = vmatpush1.bf16.msra.mxu0 %v1970
  %3424 = vmatprep.subr.bf16.mxu0 %v1967
  %3425 = vmatpush1.bf16.msra.mxu0 %v1966
  %3426 = vmatprep.subr.bf16.mxu0 %v1963
  %3427 = vmatpush1.bf16.msra.mxu0 %v1962
  %3428 = vmatprep.subr.bf16.mxu0 %v1959
  %3429 = vmatpush1.bf16.msra.mxu0 %v1958
  %3430 = vmatprep.subr.bf16.mxu0 %v1955
  %3431 = vmatpush1.bf16.msra.mxu0 %v1954
  %3432 = vmatprep.subr.bf16.mxu0 %v1951
  %3433 = vmatpush1.bf16.msra.mxu0 %v1950
  %3434 = vmatprep.subr.bf16.mxu0 %v1947
  %3435 = vmatpush1.bf16.msra.mxu0 %v1946
  %3436 = vmatprep.subr.bf16.mxu0 %v1943
  %3437 = vmatpush1.bf16.msra.mxu0 %v1942
  %3438 = vmatprep.subr.bf16.mxu0 0
  %3439 = vmatpush2.bf16.msra.mxu0 0
  %3440 = vmatprep.subr.bf16.mxu0 0
  %3441 = vmatpush2.bf16.msra.mxu0 0
  %3442 = vmatprep.subr.bf16.mxu0 0
  %3443 = vmatpush2.bf16.msra.mxu0 0
  %3444 = vmatprep.subr.bf16.mxu0 0
  %3445 = vmatpush2.bf16.msra.mxu0 0
  %3446 = vmatprep.subr.bf16.mxu0 0
  %3447 = vmatpush2.bf16.msra.mxu0 0
  %3448 = vmatprep.subr.bf16.mxu0 0
  %3449 = vmatpush2.bf16.msra.mxu0 0
  %3450 = vmatprep.subr.bf16.mxu0 0
  %3451 = vmatpush2.bf16.msra.mxu0 0
  %3452 = vmatprep.subr.bf16.mxu0 0
  %3453 = vmatpush2.bf16.msra.mxu0 0
  %3454 = vmatprep.mubr.bf16.mxu0 0
  %3455 = vmatmul.mubr.bf16.gmra.mxu0 %v3421
  %v3456 = vpop.f32.mrf.mxu0
  %v3457 = vadd.f32 0.0, %v3456
  %v3458 = vpop.f32.mrf.mxu0
  %v3459 = vadd.f32 0.0, %v3458
  %v3460 = vpop.f32.mrf.mxu0
  %v3461 = vpop.f32.mrf.mxu0
  %3462 = vdwg.mxu0
  %3463 = vmatprep.subr.bf16.mxu0 %v1973
  %3464 = vmatpush1.bf16.msra.mxu0 %v1972
  %3465 = vmatprep.subr.bf16.mxu0 %v1969
  %3466 = vmatpush1.bf16.msra.mxu0 %v1968
  %3467 = vmatprep.subr.bf16.mxu0 %v1965
  %3468 = vmatpush1.bf16.msra.mxu0 %v1964
  %3469 = vmatprep.subr.bf16.mxu0 %v1961
  %3470 = vmatpush1.bf16.msra.mxu0 %v1960
  %3471 = vmatprep.subr.bf16.mxu0 %v1957
  %3472 = vmatpush1.bf16.msra.mxu0 %v1956
  %3473 = vmatprep.subr.bf16.mxu0 %v1953
  %3474 = vmatpush1.bf16.msra.mxu0 %v1952
  %3475 = vmatprep.subr.bf16.mxu0 %v1949
  %3476 = vmatpush1.bf16.msra.mxu0 %v1948
  %3477 = vmatprep.subr.bf16.mxu0 %v1945
  %3478 = vmatpush1.bf16.msra.mxu0 %v1944
  %3479 = vmatprep.subr.bf16.mxu0 0
  %3480 = vmatpush2.bf16.msra.mxu0 0
  %3481 = vmatprep.subr.bf16.mxu0 0
  %3482 = vmatpush2.bf16.msra.mxu0 0
  %3483 = vmatprep.subr.bf16.mxu0 0
  %3484 = vmatpush2.bf16.msra.mxu0 0
  %3485 = vmatprep.subr.bf16.mxu0 0
  %3486 = vmatpush2.bf16.msra.mxu0 0
  %3487 = vmatprep.subr.bf16.mxu0 0
  %3488 = vmatpush2.bf16.msra.mxu0 0
  %3489 = vmatprep.subr.bf16.mxu0 0
  %3490 = vmatpush2.bf16.msra.mxu0 0
  %3491 = vmatprep.subr.bf16.mxu0 0
  %3492 = vmatpush2.bf16.msra.mxu0 0
  %3493 = vmatprep.subr.bf16.mxu0 0
  %3494 = vmatpush2.bf16.msra.mxu0 0
  %3495 = vmatprep.mubr.bf16.mxu0 0
  %3496 = vmatmul.mubr.bf16.gmra.mxu0 %v3421
  %v3497 = vpop.f32.mrf.mxu0
  %v3498 = vadd.f32 0.0, %v3497
  %v3499 = vpop.f32.mrf.mxu0
  %v3500 = vadd.f32 0.0, %v3499
  %v3501 = vpop.f32.mrf.mxu0
  %v3502 = vpop.f32.mrf.mxu0
  %3503 = vdwg.mxu0
  %v3504 = vadd.f32 %v3330, %v3457
  %v3505 = vadd.f32 %v3331, %v3459
  %v3506 = vadd.f32 %v3332, %v3498
  %v3507 = vadd.f32 %v3333, %v3500
  %v3508 = vxor.u32 %v3417, 2147483648
  %v3509 = vmul.f32 %v3508, 1.442695
  %v3510 = vpow.pop %v3509
  %v3511 = vadd.f32 %v3510, 1.0
  %v3512 = vrcp.pop %v3511
  %v3513 = vmul.f32 1.0, %v3512
  %v3514 = vxor.u32 %v3418, 2147483648
  %v3515 = vmul.f32 %v3514, 1.442695
  %v3516 = vpow.pop %v3515
  %v3517 = vadd.f32 %v3516, 1.0
  %v3518 = vrcp.pop %v3517
  %v3519 = vmul.f32 1.0, %v3518
  %v3520 = vtanh.pop %v3419
  %v3521 = vxor.u32 %v3420, 2147483648
  %v3522 = vmul.f32 %v3521, 1.442695
  %v3523 = vpow.pop %v3522
  %v3524 = vadd.f32 %v3523, 1.0
  %v3525 = vrcp.pop %v3524
  %v3526 = vmul.f32 1.0, %v3525
  %v3527 = vmul.f32 %v3519, %v3293
  %v3528 = vmul.f32 %v3513, %v3520
  %v3529 = vadd.f32 %v3527, %v3528
  %v3530 = vtanh.pop %v3529
  %v3531 = vmul.f32 %v3526, %v3530
  %v3532 = vxor.u32 %v3504, 2147483648
  %v3533 = vmul.f32 %v3532, 1.442695
  %v3534 = vpow.pop %v3533
  %v3535 = vadd.f32 %v3534, 1.0
  %v3536 = vrcp.pop %v3535
  %v3537 = vmul.f32 1.0, %v3536
  %v3538 = vxor.u32 %v3505, 2147483648
  %v3539 = vmul.f32 %v3538, 1.442695
  %v3540 = vpow.pop %v3539
  %v3541 = vadd.f32 %v3540, 1.0
  %v3542 = vrcp.pop %v3541
  %v3543 = vmul.f32 1.0, %v3542
  %v3544 = vtanh.pop %v3506
  %v3545 = vxor.u32 %v3507, 2147483648
  %v3546 = vmul.f32 %v3545, 1.442695
  %v3547 = vpow.pop %v3546
  %v3548 = vadd.f32 %v3547, 1.0
  %v3549 = vrcp.pop %v3548
  %v3550 = vmul.f32 1.0, %v3549
  %v3551 = vmul.f32 %v3543, %v3317
  %v3552 = vmul.f32 %v3537, %v3544
  %v3553 = vadd.f32 %v3551, %v3552
  %v3554 = vtanh.pop %v3553
  %v3555 = vmul.f32 %v3550, %v3554
  %s3556 = smul.u32 7, 8
  %s3557 = smul.addr %s3556, 8
  %s3558 = scalar_lea.vmem [#allocation2], %s3557
  %v3559 = vld [vmem:[%s3558] sm:$0xff]
  %v3560 = vld [vmem:[%s3558 + $0x8] sm:$0xff]
  %v3561 = vld [vmem:[%s3558 + $0x10] sm:$0xff]
  %v3562 = vld [vmem:[%s3558 + $0x18] sm:$0xff]
  %s3563 = smul.u32 8, 8
  %s3564 = smul.addr %s3563, 8
  %s3565 = scalar_lea.vmem [#allocation2], %s3564
  %v3566 = vld [vmem:[%s3565 + $0x20] sm:$0xff]
  %v3567 = vld [vmem:[%s3565 + $0x28] sm:$0xff]
  %v3568 = vld [vmem:[%s3565 + $0x30] sm:$0xff]
  %v3569 = vld [vmem:[%s3565 + $0x38] sm:$0xff]
  %v3570 = vpack.c.bf16 %v3531, %v3531
  %3571 = vmatprep.subr.bf16.mxu0 %v1693
  %3572 = vmatpush1.bf16.msra.mxu0 %v1692
  %3573 = vmatprep.subr.bf16.mxu0 %v1689
  %3574 = vmatpush1.bf16.msra.mxu0 %v1688
  %3575 = vmatprep.subr.bf16.mxu0 %v1685
  %3576 = vmatpush1.bf16.msra.mxu0 %v1684
  %3577 = vmatprep.subr.bf16.mxu0 %v1681
  %3578 = vmatpush1.bf16.msra.mxu0 %v1680
  %3579 = vmatprep.subr.bf16.mxu0 %v1677
  %3580 = vmatpush1.bf16.msra.mxu0 %v1676
  %3581 = vmatprep.subr.bf16.mxu0 %v1673
  %3582 = vmatpush1.bf16.msra.mxu0 %v1672
  %3583 = vmatprep.subr.bf16.mxu0 %v1669
  %3584 = vmatpush1.bf16.msra.mxu0 %v1668
  %3585 = vmatprep.subr.bf16.mxu0 %v1665
  %3586 = vmatpush1.bf16.msra.mxu0 %v1664
  %3587 = vmatprep.subr.bf16.mxu0 0
  %3588 = vmatpush2.bf16.msra.mxu0 0
  %3589 = vmatprep.subr.bf16.mxu0 0
  %3590 = vmatpush2.bf16.msra.mxu0 0
  %3591 = vmatprep.subr.bf16.mxu0 0
  %3592 = vmatpush2.bf16.msra.mxu0 0
  %3593 = vmatprep.subr.bf16.mxu0 0
  %3594 = vmatpush2.bf16.msra.mxu0 0
  %3595 = vmatprep.subr.bf16.mxu0 0
  %3596 = vmatpush2.bf16.msra.mxu0 0
  %3597 = vmatprep.subr.bf16.mxu0 0
  %3598 = vmatpush2.bf16.msra.mxu0 0
  %3599 = vmatprep.subr.bf16.mxu0 0
  %3600 = vmatpush2.bf16.msra.mxu0 0
  %3601 = vmatprep.subr.bf16.mxu0 0
  %3602 = vmatpush2.bf16.msra.mxu0 0
  %3603 = vmatprep.mubr.bf16.mxu0 0
  %3604 = vmatmul.mubr.bf16.gmra.mxu0 %v3570
  %v3605 = vpop.f32.mrf.mxu0
  %v3606 = vadd.f32 0.0, %v3605
  %v3607 = vpop.f32.mrf.mxu0
  %v3608 = vadd.f32 0.0, %v3607
  %v3609 = vpop.f32.mrf.mxu0
  %v3610 = vpop.f32.mrf.mxu0
  %3611 = vdwg.mxu0
  %3612 = vmatprep.subr.bf16.mxu0 %v1695
  %3613 = vmatpush1.bf16.msra.mxu0 %v1694
  %3614 = vmatprep.subr.bf16.mxu0 %v1691
  %3615 = vmatpush1.bf16.msra.mxu0 %v1690
  %3616 = vmatprep.subr.bf16.mxu0 %v1687
  %3617 = vmatpush1.bf16.msra.mxu0 %v1686
  %3618 = vmatprep.subr.bf16.mxu0 %v1683
  %3619 = vmatpush1.bf16.msra.mxu0 %v1682
  %3620 = vmatprep.subr.bf16.mxu0 %v1679
  %3621 = vmatpush1.bf16.msra.mxu0 %v1678
  %3622 = vmatprep.subr.bf16.mxu0 %v1675
  %3623 = vmatpush1.bf16.msra.mxu0 %v1674
  %3624 = vmatprep.subr.bf16.mxu0 %v1671
  %3625 = vmatpush1.bf16.msra.mxu0 %v1670
  %3626 = vmatprep.subr.bf16.mxu0 %v1667
  %3627 = vmatpush1.bf16.msra.mxu0 %v1666
  %3628 = vmatprep.subr.bf16.mxu0 0
  %3629 = vmatpush2.bf16.msra.mxu0 0
  %3630 = vmatprep.subr.bf16.mxu0 0
  %3631 = vmatpush2.bf16.msra.mxu0 0
  %3632 = vmatprep.subr.bf16.mxu0 0
  %3633 = vmatpush2.bf16.msra.mxu0 0
  %3634 = vmatprep.subr.bf16.mxu0 0
  %3635 = vmatpush2.bf16.msra.mxu0 0
  %3636 = vmatprep.subr.bf16.mxu0 0
  %3637 = vmatpush2.bf16.msra.mxu0 0
  %3638 = vmatprep.subr.bf16.mxu0 0
  %3639 = vmatpush2.bf16.msra.mxu0 0
  %3640 = vmatprep.subr.bf16.mxu0 0
  %3641 = vmatpush2.bf16.msra.mxu0 0
  %3642 = vmatprep.subr.bf16.mxu0 0
  %3643 = vmatpush2.bf16.msra.mxu0 0
  %3644 = vmatprep.mubr.bf16.mxu0 0
  %3645 = vmatmul.mubr.bf16.gmra.mxu0 %v3570
  %v3646 = vpop.f32.mrf.mxu0
  %v3647 = vadd.f32 0.0, %v3646
  %v3648 = vpop.f32.mrf.mxu0
  %v3649 = vadd.f32 0.0, %v3648
  %v3650 = vpop.f32.mrf.mxu0
  %v3651 = vpop.f32.mrf.mxu0
  %3652 = vdwg.mxu0
  %v3653 = vadd.f32 %v3559, %v3606
  %v3654 = vadd.f32 %v3560, %v3608
  %v3655 = vadd.f32 %v3561, %v3647
  %v3656 = vadd.f32 %v3562, %v3649
  %v3657 = vpack.c.bf16 %v3555, %v3555
  %3658 = vmatprep.subr.bf16.mxu0 %v1971
  %3659 = vmatpush1.bf16.msra.mxu0 %v1970
  %3660 = vmatprep.subr.bf16.mxu0 %v1967
  %3661 = vmatpush1.bf16.msra.mxu0 %v1966
  %3662 = vmatprep.subr.bf16.mxu0 %v1963
  %3663 = vmatpush1.bf16.msra.mxu0 %v1962
  %3664 = vmatprep.subr.bf16.mxu0 %v1959
  %3665 = vmatpush1.bf16.msra.mxu0 %v1958
  %3666 = vmatprep.subr.bf16.mxu0 %v1955
  %3667 = vmatpush1.bf16.msra.mxu0 %v1954
  %3668 = vmatprep.subr.bf16.mxu0 %v1951
  %3669 = vmatpush1.bf16.msra.mxu0 %v1950
  %3670 = vmatprep.subr.bf16.mxu0 %v1947
  %3671 = vmatpush1.bf16.msra.mxu0 %v1946
  %3672 = vmatprep.subr.bf16.mxu0 %v1943
  %3673 = vmatpush1.bf16.msra.mxu0 %v1942
  %3674 = vmatprep.subr.bf16.mxu0 0
  %3675 = vmatpush2.bf16.msra.mxu0 0
  %3676 = vmatprep.subr.bf16.mxu0 0
  %3677 = vmatpush2.bf16.msra.mxu0 0
  %3678 = vmatprep.subr.bf16.mxu0 0
  %3679 = vmatpush2.bf16.msra.mxu0 0
  %3680 = vmatprep.subr.bf16.mxu0 0
  %3681 = vmatpush2.bf16.msra.mxu0 0
  %3682 = vmatprep.subr.bf16.mxu0 0
  %3683 = vmatpush2.bf16.msra.mxu0 0
  %3684 = vmatprep.subr.bf16.mxu0 0
  %3685 = vmatpush2.bf16.msra.mxu0 0
  %3686 = vmatprep.subr.bf16.mxu0 0
  %3687 = vmatpush2.bf16.msra.mxu0 0
  %3688 = vmatprep.subr.bf16.mxu0 0
  %3689 = vmatpush2.bf16.msra.mxu0 0
  %3690 = vmatprep.mubr.bf16.mxu0 0
  %3691 = vmatmul.mubr.bf16.gmra.mxu0 %v3657
  %v3692 = vpop.f32.mrf.mxu0
  %v3693 = vadd.f32 0.0, %v3692
  %v3694 = vpop.f32.mrf.mxu0
  %v3695 = vadd.f32 0.0, %v3694
  %v3696 = vpop.f32.mrf.mxu0
  %v3697 = vpop.f32.mrf.mxu0
  %3698 = vdwg.mxu0
  %3699 = vmatprep.subr.bf16.mxu0 %v1973
  %3700 = vmatpush1.bf16.msra.mxu0 %v1972
  %3701 = vmatprep.subr.bf16.mxu0 %v1969
  %3702 = vmatpush1.bf16.msra.mxu0 %v1968
  %3703 = vmatprep.subr.bf16.mxu0 %v1965
  %3704 = vmatpush1.bf16.msra.mxu0 %v1964
  %3705 = vmatprep.subr.bf16.mxu0 %v1961
  %3706 = vmatpush1.bf16.msra.mxu0 %v1960
  %3707 = vmatprep.subr.bf16.mxu0 %v1957
  %3708 = vmatpush1.bf16.msra.mxu0 %v1956
  %3709 = vmatprep.subr.bf16.mxu0 %v1953
  %3710 = vmatpush1.bf16.msra.mxu0 %v1952
  %3711 = vmatprep.subr.bf16.mxu0 %v1949
  %3712 = vmatpush1.bf16.msra.mxu0 %v1948
  %3713 = vmatprep.subr.bf16.mxu0 %v1945
  %3714 = vmatpush1.bf16.msra.mxu0 %v1944
  %3715 = vmatprep.subr.bf16.mxu0 0
  %3716 = vmatpush2.bf16.msra.mxu0 0
  %3717 = vmatprep.subr.bf16.mxu0 0
  %3718 = vmatpush2.bf16.msra.mxu0 0
  %3719 = vmatprep.subr.bf16.mxu0 0
  %3720 = vmatpush2.bf16.msra.mxu0 0
  %3721 = vmatprep.subr.bf16.mxu0 0
  %3722 = vmatpush2.bf16.msra.mxu0 0
  %3723 = vmatprep.subr.bf16.mxu0 0
  %3724 = vmatpush2.bf16.msra.mxu0 0
  %3725 = vmatprep.subr.bf16.mxu0 0
  %3726 = vmatpush2.bf16.msra.mxu0 0
  %3727 = vmatprep.subr.bf16.mxu0 0
  %3728 = vmatpush2.bf16.msra.mxu0 0
  %3729 = vmatprep.subr.bf16.mxu0 0
  %3730 = vmatpush2.bf16.msra.mxu0 0
  %3731 = vmatprep.mubr.bf16.mxu0 0
  %3732 = vmatmul.mubr.bf16.gmra.mxu0 %v3657
  %v3733 = vpop.f32.mrf.mxu0
  %v3734 = vadd.f32 0.0, %v3733
  %v3735 = vpop.f32.mrf.mxu0
  %v3736 = vadd.f32 0.0, %v3735
  %v3737 = vpop.f32.mrf.mxu0
  %v3738 = vpop.f32.mrf.mxu0
  %3739 = vdwg.mxu0
  %v3740 = vadd.f32 %v3566, %v3693
  %v3741 = vadd.f32 %v3567, %v3695
  %v3742 = vadd.f32 %v3568, %v3734
  %v3743 = vadd.f32 %v3569, %v3736
  %v3744 = vxor.u32 %v3653, 2147483648
  %v3745 = vmul.f32 %v3744, 1.442695
  %v3746 = vpow.pop %v3745
  %v3747 = vadd.f32 %v3746, 1.0
  %v3748 = vrcp.pop %v3747
  %v3749 = vmul.f32 1.0, %v3748
  %v3750 = vxor.u32 %v3654, 2147483648
  %v3751 = vmul.f32 %v3750, 1.442695
  %v3752 = vpow.pop %v3751
  %v3753 = vadd.f32 %v3752, 1.0
  %v3754 = vrcp.pop %v3753
  %v3755 = vmul.f32 1.0, %v3754
  %v3756 = vtanh.pop %v3655
  %v3757 = vxor.u32 %v3656, 2147483648
  %v3758 = vmul.f32 %v3757, 1.442695
  %v3759 = vpow.pop %v3758
  %v3760 = vadd.f32 %v3759, 1.0
  %v3761 = vrcp.pop %v3760
  %v3762 = vmul.f32 1.0, %v3761
  %v3763 = vmul.f32 %v3755, %v3529
  %v3764 = vmul.f32 %v3749, %v3756
  %v3765 = vadd.f32 %v3763, %v3764
  %v3766 = vtanh.pop %v3765
  %v3767 = vmul.f32 %v3762, %v3766
  %v3768 = vxor.u32 %v3740, 2147483648
  %v3769 = vmul.f32 %v3768, 1.442695
  %v3770 = vpow.pop %v3769
  %v3771 = vadd.f32 %v3770, 1.0
  %v3772 = vrcp.pop %v3771
  %v3773 = vmul.f32 1.0, %v3772
  %v3774 = vxor.u32 %v3741, 2147483648
  %v3775 = vmul.f32 %v3774, 1.442695
  %v3776 = vpow.pop %v3775
  %v3777 = vadd.f32 %v3776, 1.0
  %v3778 = vrcp.pop %v3777
  %v3779 = vmul.f32 1.0, %v3778
  %v3780 = vtanh.pop %v3742
  %v3781 = vxor.u32 %v3743, 2147483648
  %v3782 = vmul.f32 %v3781, 1.442695
  %v3783 = vpow.pop %v3782
  %v3784 = vadd.f32 %v3783, 1.0
  %v3785 = vrcp.pop %v3784
  %v3786 = vmul.f32 1.0, %v3785
  %v3787 = vmul.f32 %v3779, %v3553
  %v3788 = vmul.f32 %v3773, %v3780
  %v3789 = vadd.f32 %v3787, %v3788
  %v3790 = vtanh.pop %v3789
  %v3791 = vmul.f32 %v3786, %v3790
  %v3792 = vld [vmem:[%s3565] sm:$0xff]
  %v3793 = vld [vmem:[%s3565 + $0x8] sm:$0xff]
  %v3794 = vld [vmem:[%s3565 + $0x10] sm:$0xff]
  %v3795 = vld [vmem:[%s3565 + $0x18] sm:$0xff]
  %v3796 = vld [vmem:[%s3558 + $0x20] sm:$0xff]
  %v3797 = vld [vmem:[%s3558 + $0x28] sm:$0xff]
  %v3798 = vld [vmem:[%s3558 + $0x30] sm:$0xff]
  %v3799 = vld [vmem:[%s3558 + $0x38] sm:$0xff]
  %v3800 = vpack.c.bf16 %v3767, %v3767
  %3801 = vmatprep.subr.bf16.mxu0 %v1693
  %3802 = vmatpush1.bf16.msra.mxu0 %v1692
  %3803 = vmatprep.subr.bf16.mxu0 %v1689
  %3804 = vmatpush1.bf16.msra.mxu0 %v1688
  %3805 = vmatprep.subr.bf16.mxu0 %v1685
  %3806 = vmatpush1.bf16.msra.mxu0 %v1684
  %3807 = vmatprep.subr.bf16.mxu0 %v1681
  %3808 = vmatpush1.bf16.msra.mxu0 %v1680
  %3809 = vmatprep.subr.bf16.mxu0 %v1677
  %3810 = vmatpush1.bf16.msra.mxu0 %v1676
  %3811 = vmatprep.subr.bf16.mxu0 %v1673
  %3812 = vmatpush1.bf16.msra.mxu0 %v1672
  %3813 = vmatprep.subr.bf16.mxu0 %v1669
  %3814 = vmatpush1.bf16.msra.mxu0 %v1668
  %3815 = vmatprep.subr.bf16.mxu0 %v1665
  %3816 = vmatpush1.bf16.msra.mxu0 %v1664
  %3817 = vmatprep.subr.bf16.mxu0 0
  %3818 = vmatpush2.bf16.msra.mxu0 0
  %3819 = vmatprep.subr.bf16.mxu0 0
  %3820 = vmatpush2.bf16.msra.mxu0 0
  %3821 = vmatprep.subr.bf16.mxu0 0
  %3822 = vmatpush2.bf16.msra.mxu0 0
  %3823 = vmatprep.subr.bf16.mxu0 0
  %3824 = vmatpush2.bf16.msra.mxu0 0
  %3825 = vmatprep.subr.bf16.mxu0 0
  %3826 = vmatpush2.bf16.msra.mxu0 0
  %3827 = vmatprep.subr.bf16.mxu0 0
  %3828 = vmatpush2.bf16.msra.mxu0 0
  %3829 = vmatprep.subr.bf16.mxu0 0
  %3830 = vmatpush2.bf16.msra.mxu0 0
  %3831 = vmatprep.subr.bf16.mxu0 0
  %3832 = vmatpush2.bf16.msra.mxu0 0
  %3833 = vmatprep.mubr.bf16.mxu0 0
  %3834 = vmatmul.mubr.bf16.gmra.mxu0 %v3800
  %v3835 = vpop.f32.mrf.mxu0
  %v3836 = vadd.f32 0.0, %v3835
  %v3837 = vpop.f32.mrf.mxu0
  %v3838 = vadd.f32 0.0, %v3837
  %v3839 = vpop.f32.mrf.mxu0
  %v3840 = vpop.f32.mrf.mxu0
  %3841 = vdwg.mxu0
  %3842 = vmatprep.subr.bf16.mxu0 %v1695
  %3843 = vmatpush1.bf16.msra.mxu0 %v1694
  %3844 = vmatprep.subr.bf16.mxu0 %v1691
  %3845 = vmatpush1.bf16.msra.mxu0 %v1690
  %3846 = vmatprep.subr.bf16.mxu0 %v1687
  %3847 = vmatpush1.bf16.msra.mxu0 %v1686
  %3848 = vmatprep.subr.bf16.mxu0 %v1683
  %3849 = vmatpush1.bf16.msra.mxu0 %v1682
  %3850 = vmatprep.subr.bf16.mxu0 %v1679
  %3851 = vmatpush1.bf16.msra.mxu0 %v1678
  %3852 = vmatprep.subr.bf16.mxu0 %v1675
  %3853 = vmatpush1.bf16.msra.mxu0 %v1674
  %3854 = vmatprep.subr.bf16.mxu0 %v1671
  %3855 = vmatpush1.bf16.msra.mxu0 %v1670
  %3856 = vmatprep.subr.bf16.mxu0 %v1667
  %3857 = vmatpush1.bf16.msra.mxu0 %v1666
  %3858 = vmatprep.subr.bf16.mxu0 0
  %3859 = vmatpush2.bf16.msra.mxu0 0
  %3860 = vmatprep.subr.bf16.mxu0 0
  %3861 = vmatpush2.bf16.msra.mxu0 0
  %3862 = vmatprep.subr.bf16.mxu0 0
  %3863 = vmatpush2.bf16.msra.mxu0 0
  %3864 = vmatprep.subr.bf16.mxu0 0
  %3865 = vmatpush2.bf16.msra.mxu0 0
  %3866 = vmatprep.subr.bf16.mxu0 0
  %3867 = vmatpush2.bf16.msra.mxu0 0
  %3868 = vmatprep.subr.bf16.mxu0 0
  %3869 = vmatpush2.bf16.msra.mxu0 0
  %3870 = vmatprep.subr.bf16.mxu0 0
  %3871 = vmatpush2.bf16.msra.mxu0 0
  %3872 = vmatprep.subr.bf16.mxu0 0
  %3873 = vmatpush2.bf16.msra.mxu0 0
  %3874 = vmatprep.mubr.bf16.mxu0 0
  %3875 = vmatmul.mubr.bf16.gmra.mxu0 %v3800
  %v3876 = vpop.f32.mrf.mxu0
  %v3877 = vadd.f32 0.0, %v3876
  %v3878 = vpop.f32.mrf.mxu0
  %v3879 = vadd.f32 0.0, %v3878
  %v3880 = vpop.f32.mrf.mxu0
  %v3881 = vpop.f32.mrf.mxu0
  %3882 = vdwg.mxu0
  %v3883 = vadd.f32 %v3792, %v3836
  %v3884 = vadd.f32 %v3793, %v3838
  %v3885 = vadd.f32 %v3794, %v3877
  %v3886 = vadd.f32 %v3795, %v3879
  %v3887 = vpack.c.bf16 %v3791, %v3791
  %3888 = vmatprep.subr.bf16.mxu0 %v1971
  %3889 = vmatpush1.bf16.msra.mxu0 %v1970
  %3890 = vmatprep.subr.bf16.mxu0 %v1967
  %3891 = vmatpush1.bf16.msra.mxu0 %v1966
  %3892 = vmatprep.subr.bf16.mxu0 %v1963
  %3893 = vmatpush1.bf16.msra.mxu0 %v1962
  %3894 = vmatprep.subr.bf16.mxu0 %v1959
  %3895 = vmatpush1.bf16.msra.mxu0 %v1958
  %3896 = vmatprep.subr.bf16.mxu0 %v1955
  %3897 = vmatpush1.bf16.msra.mxu0 %v1954
  %3898 = vmatprep.subr.bf16.mxu0 %v1951
  %3899 = vmatpush1.bf16.msra.mxu0 %v1950
  %3900 = vmatprep.subr.bf16.mxu0 %v1947
  %3901 = vmatpush1.bf16.msra.mxu0 %v1946
  %3902 = vmatprep.subr.bf16.mxu0 %v1943
  %3903 = vmatpush1.bf16.msra.mxu0 %v1942
  %3904 = vmatprep.subr.bf16.mxu0 0
  %3905 = vmatpush2.bf16.msra.mxu0 0
  %3906 = vmatprep.subr.bf16.mxu0 0
  %3907 = vmatpush2.bf16.msra.mxu0 0
  %3908 = vmatprep.subr.bf16.mxu0 0
  %3909 = vmatpush2.bf16.msra.mxu0 0
  %3910 = vmatprep.subr.bf16.mxu0 0
  %3911 = vmatpush2.bf16.msra.mxu0 0
  %3912 = vmatprep.subr.bf16.mxu0 0
  %3913 = vmatpush2.bf16.msra.mxu0 0
  %3914 = vmatprep.subr.bf16.mxu0 0
  %3915 = vmatpush2.bf16.msra.mxu0 0
  %3916 = vmatprep.subr.bf16.mxu0 0
  %3917 = vmatpush2.bf16.msra.mxu0 0
  %3918 = vmatprep.subr.bf16.mxu0 0
  %3919 = vmatpush2.bf16.msra.mxu0 0
  %3920 = vmatprep.mubr.bf16.mxu0 0
  %3921 = vmatmul.mubr.bf16.gmra.mxu0 %v3887
  %v3922 = vpop.f32.mrf.mxu0
  %v3923 = vadd.f32 0.0, %v3922
  %v3924 = vpop.f32.mrf.mxu0
  %v3925 = vadd.f32 0.0, %v3924
  %v3926 = vpop.f32.mrf.mxu0
  %v3927 = vpop.f32.mrf.mxu0
  %3928 = vdwg.mxu0
  %3929 = vmatprep.subr.bf16.mxu0 %v1973
  %3930 = vmatpush1.bf16.msra.mxu0 %v1972
  %3931 = vmatprep.subr.bf16.mxu0 %v1969
  %3932 = vmatpush1.bf16.msra.mxu0 %v1968
  %3933 = vmatprep.subr.bf16.mxu0 %v1965
  %3934 = vmatpush1.bf16.msra.mxu0 %v1964
  %3935 = vmatprep.subr.bf16.mxu0 %v1961
  %3936 = vmatpush1.bf16.msra.mxu0 %v1960
  %3937 = vmatprep.subr.bf16.mxu0 %v1957
  %3938 = vmatpush1.bf16.msra.mxu0 %v1956
  %3939 = vmatprep.subr.bf16.mxu0 %v1953
  %3940 = vmatpush1.bf16.msra.mxu0 %v1952
  %3941 = vmatprep.subr.bf16.mxu0 %v1949
  %3942 = vmatpush1.bf16.msra.mxu0 %v1948
  %3943 = vmatprep.subr.bf16.mxu0 %v1945
  %3944 = vmatpush1.bf16.msra.mxu0 %v1944
  %3945 = vmatprep.subr.bf16.mxu0 0
  %3946 = vmatpush2.bf16.msra.mxu0 0
  %3947 = vmatprep.subr.bf16.mxu0 0
  %3948 = vmatpush2.bf16.msra.mxu0 0
  %3949 = vmatprep.subr.bf16.mxu0 0
  %3950 = vmatpush2.bf16.msra.mxu0 0
  %3951 = vmatprep.subr.bf16.mxu0 0
  %3952 = vmatpush2.bf16.msra.mxu0 0
  %3953 = vmatprep.subr.bf16.mxu0 0
  %3954 = vmatpush2.bf16.msra.mxu0 0
  %3955 = vmatprep.subr.bf16.mxu0 0
  %3956 = vmatpush2.bf16.msra.mxu0 0
  %3957 = vmatprep.subr.bf16.mxu0 0
  %3958 = vmatpush2.bf16.msra.mxu0 0
  %3959 = vmatprep.subr.bf16.mxu0 0
  %3960 = vmatpush2.bf16.msra.mxu0 0
  %3961 = vmatprep.mubr.bf16.mxu0 0
  %3962 = vmatmul.mubr.bf16.gmra.mxu0 %v3887
  %v3963 = vpop.f32.mrf.mxu0
  %v3964 = vadd.f32 0.0, %v3963
  %v3965 = vpop.f32.mrf.mxu0
  %v3966 = vadd.f32 0.0, %v3965
  %v3967 = vpop.f32.mrf.mxu0
  %v3968 = vpop.f32.mrf.mxu0
  %3969 = vdwg.mxu0
  %v3970 = vadd.f32 %v3796, %v3923
  %v3971 = vadd.f32 %v3797, %v3925
  %v3972 = vadd.f32 %v3798, %v3964
  %v3973 = vadd.f32 %v3799, %v3966
  %v3974 = vxor.u32 %v3883, 2147483648
  %v3975 = vmul.f32 %v3974, 1.442695
  %v3976 = vpow.pop %v3975
  %v3977 = vadd.f32 %v3976, 1.0
  %v3978 = vrcp.pop %v3977
  %v3979 = vmul.f32 1.0, %v3978
  %v3980 = vxor.u32 %v3884, 2147483648
  %v3981 = vmul.f32 %v3980, 1.442695
  %v3982 = vpow.pop %v3981
  %v3983 = vadd.f32 %v3982, 1.0
  %v3984 = vrcp.pop %v3983
  %v3985 = vmul.f32 1.0, %v3984
  %v3986 = vtanh.pop %v3885
  %v3987 = vxor.u32 %v3886, 2147483648
  %v3988 = vmul.f32 %v3987, 1.442695
  %v3989 = vpow.pop %v3988
  %v3990 = vadd.f32 %v3989, 1.0
  %v3991 = vrcp.pop %v3990
  %v3992 = vmul.f32 1.0, %v3991
  %v3993 = vmul.f32 %v3985, %v3765
  %v3994 = vmul.f32 %v3979, %v3986
  %v3995 = vadd.f32 %v3993, %v3994
  %v3996 = vtanh.pop %v3995
  %v3997 = vmul.f32 %v3992, %v3996
  %v3998 = vxor.u32 %v3970, 2147483648
  %v3999 = vmul.f32 %v3998, 1.442695
  %v4000 = vpow.pop %v3999
  %v4001 = vadd.f32 %v4000, 1.0
  %v4002 = vrcp.pop %v4001
  %v4003 = vmul.f32 1.0, %v4002
  %v4004 = vxor.u32 %v3971, 2147483648
  %v4005 = vmul.f32 %v4004, 1.442695
  %v4006 = vpow.pop %v4005
  %v4007 = vadd.f32 %v4006, 1.0
  %v4008 = vrcp.pop %v4007
  %v4009 = vmul.f32 1.0, %v4008
  %v4010 = vtanh.pop %v3972
  %v4011 = vxor.u32 %v3973, 2147483648
  %v4012 = vmul.f32 %v4011, 1.442695
  %v4013 = vpow.pop %v4012
  %v4014 = vadd.f32 %v4013, 1.0
  %v4015 = vrcp.pop %v4014
  %v4016 = vmul.f32 1.0, %v4015
  %v4017 = vmul.f32 %v4009, %v3789
  %v4018 = vmul.f32 %v4003, %v4010
  %v4019 = vadd.f32 %v4017, %v4018
  %v4020 = vtanh.pop %v4019
  %v4021 = vmul.f32 %v4016, %v4020
  %v4022 = vld [vmem:[%s3329] sm:$0xff]
  %v4023 = vld [vmem:[%s3329 + $0x8] sm:$0xff]
  %v4024 = vld [vmem:[%s3329 + $0x10] sm:$0xff]
  %v4025 = vld [vmem:[%s3329 + $0x18] sm:$0xff]
  %v4026 = vld [vmem:[%s3322 + $0x20] sm:$0xff]
  %v4027 = vld [vmem:[%s3322 + $0x28] sm:$0xff]
  %v4028 = vld [vmem:[%s3322 + $0x30] sm:$0xff]
  %v4029 = vld [vmem:[%s3322 + $0x38] sm:$0xff]
  %v4030 = vpack.c.bf16 %v3997, %v3997
  %4031 = vmatprep.subr.bf16.mxu0 %v1693
  %4032 = vmatpush1.bf16.msra.mxu0 %v1692
  %4033 = vmatprep.subr.bf16.mxu0 %v1689
  %4034 = vmatpush1.bf16.msra.mxu0 %v1688
  %4035 = vmatprep.subr.bf16.mxu0 %v1685
  %4036 = vmatpush1.bf16.msra.mxu0 %v1684
  %4037 = vmatprep.subr.bf16.mxu0 %v1681
  %4038 = vmatpush1.bf16.msra.mxu0 %v1680
  %4039 = vmatprep.subr.bf16.mxu0 %v1677
  %4040 = vmatpush1.bf16.msra.mxu0 %v1676
  %4041 = vmatprep.subr.bf16.mxu0 %v1673
  %4042 = vmatpush1.bf16.msra.mxu0 %v1672
  %4043 = vmatprep.subr.bf16.mxu0 %v1669
  %4044 = vmatpush1.bf16.msra.mxu0 %v1668
  %4045 = vmatprep.subr.bf16.mxu0 %v1665
  %4046 = vmatpush1.bf16.msra.mxu0 %v1664
  %4047 = vmatprep.subr.bf16.mxu0 0
  %4048 = vmatpush2.bf16.msra.mxu0 0
  %4049 = vmatprep.subr.bf16.mxu0 0
  %4050 = vmatpush2.bf16.msra.mxu0 0
  %4051 = vmatprep.subr.bf16.mxu0 0
  %4052 = vmatpush2.bf16.msra.mxu0 0
  %4053 = vmatprep.subr.bf16.mxu0 0
  %4054 = vmatpush2.bf16.msra.mxu0 0
  %4055 = vmatprep.subr.bf16.mxu0 0
  %4056 = vmatpush2.bf16.msra.mxu0 0
  %4057 = vmatprep.subr.bf16.mxu0 0
  %4058 = vmatpush2.bf16.msra.mxu0 0
  %4059 = vmatprep.subr.bf16.mxu0 0
  %4060 = vmatpush2.bf16.msra.mxu0 0
  %4061 = vmatprep.subr.bf16.mxu0 0
  %4062 = vmatpush2.bf16.msra.mxu0 0
  %4063 = vmatprep.mubr.bf16.mxu0 0
  %4064 = vmatmul.mubr.bf16.gmra.mxu0 %v4030
  %v4065 = vpop.f32.mrf.mxu0
  %v4066 = vadd.f32 0.0, %v4065
  %v4067 = vpop.f32.mrf.mxu0
  %v4068 = vadd.f32 0.0, %v4067
  %v4069 = vpop.f32.mrf.mxu0
  %v4070 = vpop.f32.mrf.mxu0
  %4071 = vdwg.mxu0
  %4072 = vmatprep.subr.bf16.mxu0 %v1695
  %4073 = vmatpush1.bf16.msra.mxu0 %v1694
  %4074 = vmatprep.subr.bf16.mxu0 %v1691
  %4075 = vmatpush1.bf16.msra.mxu0 %v1690
  %4076 = vmatprep.subr.bf16.mxu0 %v1687
  %4077 = vmatpush1.bf16.msra.mxu0 %v1686
  %4078 = vmatprep.subr.bf16.mxu0 %v1683
  %4079 = vmatpush1.bf16.msra.mxu0 %v1682
  %4080 = vmatprep.subr.bf16.mxu0 %v1679
  %4081 = vmatpush1.bf16.msra.mxu0 %v1678
  %4082 = vmatprep.subr.bf16.mxu0 %v1675
  %4083 = vmatpush1.bf16.msra.mxu0 %v1674
  %4084 = vmatprep.subr.bf16.mxu0 %v1671
  %4085 = vmatpush1.bf16.msra.mxu0 %v1670
  %4086 = vmatprep.subr.bf16.mxu0 %v1667
  %4087 = vmatpush1.bf16.msra.mxu0 %v1666
  %4088 = vmatprep.subr.bf16.mxu0 0
  %4089 = vmatpush2.bf16.msra.mxu0 0
  %4090 = vmatprep.subr.bf16.mxu0 0
  %4091 = vmatpush2.bf16.msra.mxu0 0
  %4092 = vmatprep.subr.bf16.mxu0 0
  %4093 = vmatpush2.bf16.msra.mxu0 0
  %4094 = vmatprep.subr.bf16.mxu0 0
  %4095 = vmatpush2.bf16.msra.mxu0 0
  %4096 = vmatprep.subr.bf16.mxu0 0
  %4097 = vmatpush2.bf16.msra.mxu0 0
  %4098 = vmatprep.subr.bf16.mxu0 0
  %4099 = vmatpush2.bf16.msra.mxu0 0
  %4100 = vmatprep.subr.bf16.mxu0 0
  %4101 = vmatpush2.bf16.msra.mxu0 0
  %4102 = vmatprep.subr.bf16.mxu0 0
  %4103 = vmatpush2.bf16.msra.mxu0 0
  %4104 = vmatprep.mubr.bf16.mxu0 0
  %4105 = vmatmul.mubr.bf16.gmra.mxu0 %v4030
  %v4106 = vpop.f32.mrf.mxu0
  %v4107 = vadd.f32 0.0, %v4106
  %v4108 = vpop.f32.mrf.mxu0
  %v4109 = vadd.f32 0.0, %v4108
  %v4110 = vpop.f32.mrf.mxu0
  %v4111 = vpop.f32.mrf.mxu0
  %4112 = vdwg.mxu0
  %v4113 = vadd.f32 %v4022, %v4066
  %v4114 = vadd.f32 %v4023, %v4068
  %v4115 = vadd.f32 %v4024, %v4107
  %v4116 = vadd.f32 %v4025, %v4109
  %v4117 = vpack.c.bf16 %v4021, %v4021
  %4118 = vmatprep.subr.bf16.mxu0 %v1971
  %4119 = vmatpush1.bf16.msra.mxu0 %v1970
  %4120 = vmatprep.subr.bf16.mxu0 %v1967
  %4121 = vmatpush1.bf16.msra.mxu0 %v1966
  %4122 = vmatprep.subr.bf16.mxu0 %v1963
  %4123 = vmatpush1.bf16.msra.mxu0 %v1962
  %4124 = vmatprep.subr.bf16.mxu0 %v1959
  %4125 = vmatpush1.bf16.msra.mxu0 %v1958
  %4126 = vmatprep.subr.bf16.mxu0 %v1955
  %4127 = vmatpush1.bf16.msra.mxu0 %v1954
  %4128 = vmatprep.subr.bf16.mxu0 %v1951
  %4129 = vmatpush1.bf16.msra.mxu0 %v1950
  %4130 = vmatprep.subr.bf16.mxu0 %v1947
  %4131 = vmatpush1.bf16.msra.mxu0 %v1946
  %4132 = vmatprep.subr.bf16.mxu0 %v1943
  %4133 = vmatpush1.bf16.msra.mxu0 %v1942
  %4134 = vmatprep.subr.bf16.mxu0 0
  %4135 = vmatpush2.bf16.msra.mxu0 0
  %4136 = vmatprep.subr.bf16.mxu0 0
  %4137 = vmatpush2.bf16.msra.mxu0 0
  %4138 = vmatprep.subr.bf16.mxu0 0
  %4139 = vmatpush2.bf16.msra.mxu0 0
  %4140 = vmatprep.subr.bf16.mxu0 0
  %4141 = vmatpush2.bf16.msra.mxu0 0
  %4142 = vmatprep.subr.bf16.mxu0 0
  %4143 = vmatpush2.bf16.msra.mxu0 0
  %4144 = vmatprep.subr.bf16.mxu0 0
  %4145 = vmatpush2.bf16.msra.mxu0 0
  %4146 = vmatprep.subr.bf16.mxu0 0
  %4147 = vmatpush2.bf16.msra.mxu0 0
  %4148 = vmatprep.subr.bf16.mxu0 0
  %4149 = vmatpush2.bf16.msra.mxu0 0
  %4150 = vmatprep.mubr.bf16.mxu0 0
  %4151 = vmatmul.mubr.bf16.gmra.mxu0 %v4117
  %v4152 = vpop.f32.mrf.mxu0
  %v4153 = vadd.f32 0.0, %v4152
  %v4154 = vpop.f32.mrf.mxu0
  %v4155 = vadd.f32 0.0, %v4154
  %v4156 = vpop.f32.mrf.mxu0
  %v4157 = vpop.f32.mrf.mxu0
  %4158 = vdwg.mxu0
  %4159 = vmatprep.subr.bf16.mxu0 %v1973
  %4160 = vmatpush1.bf16.msra.mxu0 %v1972
  %4161 = vmatprep.subr.bf16.mxu0 %v1969
  %4162 = vmatpush1.bf16.msra.mxu0 %v1968
  %4163 = vmatprep.subr.bf16.mxu0 %v1965
  %4164 = vmatpush1.bf16.msra.mxu0 %v1964
  %4165 = vmatprep.subr.bf16.mxu0 %v1961
  %4166 = vmatpush1.bf16.msra.mxu0 %v1960
  %4167 = vmatprep.subr.bf16.mxu0 %v1957
  %4168 = vmatpush1.bf16.msra.mxu0 %v1956
  %4169 = vmatprep.subr.bf16.mxu0 %v1953
  %4170 = vmatpush1.bf16.msra.mxu0 %v1952
  %4171 = vmatprep.subr.bf16.mxu0 %v1949
  %4172 = vmatpush1.bf16.msra.mxu0 %v1948
  %4173 = vmatprep.subr.bf16.mxu0 %v1945
  %4174 = vmatpush1.bf16.msra.mxu0 %v1944
  %4175 = vmatprep.subr.bf16.mxu0 0
  %4176 = vmatpush2.bf16.msra.mxu0 0
  %4177 = vmatprep.subr.bf16.mxu0 0
  %4178 = vmatpush2.bf16.msra.mxu0 0
  %4179 = vmatprep.subr.bf16.mxu0 0
  %4180 = vmatpush2.bf16.msra.mxu0 0
  %4181 = vmatprep.subr.bf16.mxu0 0
  %4182 = vmatpush2.bf16.msra.mxu0 0
  %4183 = vmatprep.subr.bf16.mxu0 0
  %4184 = vmatpush2.bf16.msra.mxu0 0
  %4185 = vmatprep.subr.bf16.mxu0 0
  %4186 = vmatpush2.bf16.msra.mxu0 0
  %4187 = vmatprep.subr.bf16.mxu0 0
  %4188 = vmatpush2.bf16.msra.mxu0 0
  %4189 = vmatprep.subr.bf16.mxu0 0
  %4190 = vmatpush2.bf16.msra.mxu0 0
  %4191 = vmatprep.mubr.bf16.mxu0 0
  %4192 = vmatmul.mubr.bf16.gmra.mxu0 %v4117
  %v4193 = vpop.f32.mrf.mxu0
  %v4194 = vadd.f32 0.0, %v4193
  %v4195 = vpop.f32.mrf.mxu0
  %v4196 = vadd.f32 0.0, %v4195
  %v4197 = vpop.f32.mrf.mxu0
  %v4198 = vpop.f32.mrf.mxu0
  %4199 = vdwg.mxu0
  %v4200 = vadd.f32 %v4026, %v4153
  %v4201 = vadd.f32 %v4027, %v4155
  %v4202 = vadd.f32 %v4028, %v4194
  %v4203 = vadd.f32 %v4029, %v4196
  %v4204 = vxor.u32 %v4113, 2147483648
  %v4205 = vmul.f32 %v4204, 1.442695
  %v4206 = vpow.pop %v4205
  %v4207 = vadd.f32 %v4206, 1.0
  %v4208 = vrcp.pop %v4207
  %v4209 = vmul.f32 1.0, %v4208
  %v4210 = vxor.u32 %v4114, 2147483648
  %v4211 = vmul.f32 %v4210, 1.442695
  %v4212 = vpow.pop %v4211
  %v4213 = vadd.f32 %v4212, 1.0
  %v4214 = vrcp.pop %v4213
  %v4215 = vmul.f32 1.0, %v4214
  %v4216 = vtanh.pop %v4115
  %v4217 = vxor.u32 %v4116, 2147483648
  %v4218 = vmul.f32 %v4217, 1.442695
  %v4219 = vpow.pop %v4218
  %v4220 = vadd.f32 %v4219, 1.0
  %v4221 = vrcp.pop %v4220
  %v4222 = vmul.f32 1.0, %v4221
  %v4223 = vmul.f32 %v4215, %v3995
  %v4224 = vmul.f32 %v4209, %v4216
  %v4225 = vadd.f32 %v4223, %v4224
  %v4226 = vtanh.pop %v4225
  %v4227 = vmul.f32 %v4222, %v4226
  %v4228 = vxor.u32 %v4200, 2147483648
  %v4229 = vmul.f32 %v4228, 1.442695
  %v4230 = vpow.pop %v4229
  %v4231 = vadd.f32 %v4230, 1.0
  %v4232 = vrcp.pop %v4231
  %v4233 = vmul.f32 1.0, %v4232
  %v4234 = vxor.u32 %v4201, 2147483648
  %v4235 = vmul.f32 %v4234, 1.442695
  %v4236 = vpow.pop %v4235
  %v4237 = vadd.f32 %v4236, 1.0
  %v4238 = vrcp.pop %v4237
  %v4239 = vmul.f32 1.0, %v4238
  %v4240 = vtanh.pop %v4202
  %v4241 = vxor.u32 %v4203, 2147483648
  %v4242 = vmul.f32 %v4241, 1.442695
  %v4243 = vpow.pop %v4242
  %v4244 = vadd.f32 %v4243, 1.0
  %v4245 = vrcp.pop %v4244
  %v4246 = vmul.f32 1.0, %v4245
  %v4247 = vmul.f32 %v4239, %v4019
  %v4248 = vmul.f32 %v4233, %v4240
  %v4249 = vadd.f32 %v4247, %v4248
  %v4250 = vtanh.pop %v4249
  %v4251 = vmul.f32 %v4246, %v4250
  %v4252 = vld [vmem:[%s3093] sm:$0xff]
  %v4253 = vld [vmem:[%s3093 + $0x8] sm:$0xff]
  %v4254 = vld [vmem:[%s3093 + $0x10] sm:$0xff]
  %v4255 = vld [vmem:[%s3093 + $0x18] sm:$0xff]
  %v4256 = vld [vmem:[%s3086 + $0x20] sm:$0xff]
  %v4257 = vld [vmem:[%s3086 + $0x28] sm:$0xff]
  %v4258 = vld [vmem:[%s3086 + $0x30] sm:$0xff]
  %v4259 = vld [vmem:[%s3086 + $0x38] sm:$0xff]
  %v4260 = vpack.c.bf16 %v4227, %v4227
  %4261 = vmatprep.subr.bf16.mxu0 %v1693
  %4262 = vmatpush1.bf16.msra.mxu0 %v1692
  %4263 = vmatprep.subr.bf16.mxu0 %v1689
  %4264 = vmatpush1.bf16.msra.mxu0 %v1688
  %4265 = vmatprep.subr.bf16.mxu0 %v1685
  %4266 = vmatpush1.bf16.msra.mxu0 %v1684
  %4267 = vmatprep.subr.bf16.mxu0 %v1681
  %4268 = vmatpush1.bf16.msra.mxu0 %v1680
  %4269 = vmatprep.subr.bf16.mxu0 %v1677
  %4270 = vmatpush1.bf16.msra.mxu0 %v1676
  %4271 = vmatprep.subr.bf16.mxu0 %v1673
  %4272 = vmatpush1.bf16.msra.mxu0 %v1672
  %4273 = vmatprep.subr.bf16.mxu0 %v1669
  %4274 = vmatpush1.bf16.msra.mxu0 %v1668
  %4275 = vmatprep.subr.bf16.mxu0 %v1665
  %4276 = vmatpush1.bf16.msra.mxu0 %v1664
  %4277 = vmatprep.subr.bf16.mxu0 0
  %4278 = vmatpush2.bf16.msra.mxu0 0
  %4279 = vmatprep.subr.bf16.mxu0 0
  %4280 = vmatpush2.bf16.msra.mxu0 0
  %4281 = vmatprep.subr.bf16.mxu0 0
  %4282 = vmatpush2.bf16.msra.mxu0 0
  %4283 = vmatprep.subr.bf16.mxu0 0
  %4284 = vmatpush2.bf16.msra.mxu0 0
  %4285 = vmatprep.subr.bf16.mxu0 0
  %4286 = vmatpush2.bf16.msra.mxu0 0
  %4287 = vmatprep.subr.bf16.mxu0 0
  %4288 = vmatpush2.bf16.msra.mxu0 0
  %4289 = vmatprep.subr.bf16.mxu0 0
  %4290 = vmatpush2.bf16.msra.mxu0 0
  %4291 = vmatprep.subr.bf16.mxu0 0
  %4292 = vmatpush2.bf16.msra.mxu0 0
  %4293 = vmatprep.mubr.bf16.mxu0 0
  %4294 = vmatmul.mubr.bf16.gmra.mxu0 %v4260
  %v4295 = vpop.f32.mrf.mxu0
  %v4296 = vadd.f32 0.0, %v4295
  %v4297 = vpop.f32.mrf.mxu0
  %v4298 = vadd.f32 0.0, %v4297
  %v4299 = vpop.f32.mrf.mxu0
  %v4300 = vpop.f32.mrf.mxu0
  %4301 = vdwg.mxu0
  %4302 = vmatprep.subr.bf16.mxu0 %v1695
  %4303 = vmatpush1.bf16.msra.mxu0 %v1694
  %4304 = vmatprep.subr.bf16.mxu0 %v1691
  %4305 = vmatpush1.bf16.msra.mxu0 %v1690
  %4306 = vmatprep.subr.bf16.mxu0 %v1687
  %4307 = vmatpush1.bf16.msra.mxu0 %v1686
  %4308 = vmatprep.subr.bf16.mxu0 %v1683
  %4309 = vmatpush1.bf16.msra.mxu0 %v1682
  %4310 = vmatprep.subr.bf16.mxu0 %v1679
  %4311 = vmatpush1.bf16.msra.mxu0 %v1678
  %4312 = vmatprep.subr.bf16.mxu0 %v1675
  %4313 = vmatpush1.bf16.msra.mxu0 %v1674
  %4314 = vmatprep.subr.bf16.mxu0 %v1671
  %4315 = vmatpush1.bf16.msra.mxu0 %v1670
  %4316 = vmatprep.subr.bf16.mxu0 %v1667
  %4317 = vmatpush1.bf16.msra.mxu0 %v1666
  %4318 = vmatprep.subr.bf16.mxu0 0
  %4319 = vmatpush2.bf16.msra.mxu0 0
  %4320 = vmatprep.subr.bf16.mxu0 0
  %4321 = vmatpush2.bf16.msra.mxu0 0
  %4322 = vmatprep.subr.bf16.mxu0 0
  %4323 = vmatpush2.bf16.msra.mxu0 0
  %4324 = vmatprep.subr.bf16.mxu0 0
  %4325 = vmatpush2.bf16.msra.mxu0 0
  %4326 = vmatprep.subr.bf16.mxu0 0
  %4327 = vmatpush2.bf16.msra.mxu0 0
  %4328 = vmatprep.subr.bf16.mxu0 0
  %4329 = vmatpush2.bf16.msra.mxu0 0
  %4330 = vmatprep.subr.bf16.mxu0 0
  %4331 = vmatpush2.bf16.msra.mxu0 0
  %4332 = vmatprep.subr.bf16.mxu0 0
  %4333 = vmatpush2.bf16.msra.mxu0 0
  %4334 = vmatprep.mubr.bf16.mxu0 0
  %4335 = vmatmul.mubr.bf16.gmra.mxu0 %v4260
  %v4336 = vpop.f32.mrf.mxu0
  %v4337 = vadd.f32 0.0, %v4336
  %v4338 = vpop.f32.mrf.mxu0
  %v4339 = vadd.f32 0.0, %v4338
  %v4340 = vpop.f32.mrf.mxu0
  %v4341 = vpop.f32.mrf.mxu0
  %4342 = vdwg.mxu0
  %v4343 = vadd.f32 %v4252, %v4296
  %v4344 = vadd.f32 %v4253, %v4298
  %v4345 = vadd.f32 %v4254, %v4337
  %v4346 = vadd.f32 %v4255, %v4339
  %v4347 = vpack.c.bf16 %v4251, %v4251
  %4348 = vmatprep.subr.bf16.mxu0 %v1971
  %4349 = vmatpush1.bf16.msra.mxu0 %v1970
  %4350 = vmatprep.subr.bf16.mxu0 %v1967
  %4351 = vmatpush1.bf16.msra.mxu0 %v1966
  %4352 = vmatprep.subr.bf16.mxu0 %v1963
  %4353 = vmatpush1.bf16.msra.mxu0 %v1962
  %4354 = vmatprep.subr.bf16.mxu0 %v1959
  %4355 = vmatpush1.bf16.msra.mxu0 %v1958
  %4356 = vmatprep.subr.bf16.mxu0 %v1955
  %4357 = vmatpush1.bf16.msra.mxu0 %v1954
  %4358 = vmatprep.subr.bf16.mxu0 %v1951
  %4359 = vmatpush1.bf16.msra.mxu0 %v1950
  %4360 = vmatprep.subr.bf16.mxu0 %v1947
  %4361 = vmatpush1.bf16.msra.mxu0 %v1946
  %4362 = vmatprep.subr.bf16.mxu0 %v1943
  %4363 = vmatpush1.bf16.msra.mxu0 %v1942
  %4364 = vmatprep.subr.bf16.mxu0 0
  %4365 = vmatpush2.bf16.msra.mxu0 0
  %4366 = vmatprep.subr.bf16.mxu0 0
  %4367 = vmatpush2.bf16.msra.mxu0 0
  %4368 = vmatprep.subr.bf16.mxu0 0
  %4369 = vmatpush2.bf16.msra.mxu0 0
  %4370 = vmatprep.subr.bf16.mxu0 0
  %4371 = vmatpush2.bf16.msra.mxu0 0
  %4372 = vmatprep.subr.bf16.mxu0 0
  %4373 = vmatpush2.bf16.msra.mxu0 0
  %4374 = vmatprep.subr.bf16.mxu0 0
  %4375 = vmatpush2.bf16.msra.mxu0 0
  %4376 = vmatprep.subr.bf16.mxu0 0
  %4377 = vmatpush2.bf16.msra.mxu0 0
  %4378 = vmatprep.subr.bf16.mxu0 0
  %4379 = vmatpush2.bf16.msra.mxu0 0
  %4380 = vmatprep.mubr.bf16.mxu0 0
  %4381 = vmatmul.mubr.bf16.gmra.mxu0 %v4347
  %v4382 = vpop.f32.mrf.mxu0
  %v4383 = vadd.f32 0.0, %v4382
  %v4384 = vpop.f32.mrf.mxu0
  %v4385 = vadd.f32 0.0, %v4384
  %v4386 = vpop.f32.mrf.mxu0
  %v4387 = vpop.f32.mrf.mxu0
  %4388 = vdwg.mxu0
  %4389 = vmatprep.subr.bf16.mxu0 %v1973
  %4390 = vmatpush1.bf16.msra.mxu0 %v1972
  %4391 = vmatprep.subr.bf16.mxu0 %v1969
  %4392 = vmatpush1.bf16.msra.mxu0 %v1968
  %4393 = vmatprep.subr.bf16.mxu0 %v1965
  %4394 = vmatpush1.bf16.msra.mxu0 %v1964
  %4395 = vmatprep.subr.bf16.mxu0 %v1961
  %4396 = vmatpush1.bf16.msra.mxu0 %v1960
  %4397 = vmatprep.subr.bf16.mxu0 %v1957
  %4398 = vmatpush1.bf16.msra.mxu0 %v1956
  %4399 = vmatprep.subr.bf16.mxu0 %v1953
  %4400 = vmatpush1.bf16.msra.mxu0 %v1952
  %4401 = vmatprep.subr.bf16.mxu0 %v1949
  %4402 = vmatpush1.bf16.msra.mxu0 %v1948
  %4403 = vmatprep.subr.bf16.mxu0 %v1945
  %4404 = vmatpush1.bf16.msra.mxu0 %v1944
  %4405 = vmatprep.subr.bf16.mxu0 0
  %4406 = vmatpush2.bf16.msra.mxu0 0
  %4407 = vmatprep.subr.bf16.mxu0 0
  %4408 = vmatpush2.bf16.msra.mxu0 0
  %4409 = vmatprep.subr.bf16.mxu0 0
  %4410 = vmatpush2.bf16.msra.mxu0 0
  %4411 = vmatprep.subr.bf16.mxu0 0
  %4412 = vmatpush2.bf16.msra.mxu0 0
  %4413 = vmatprep.subr.bf16.mxu0 0
  %4414 = vmatpush2.bf16.msra.mxu0 0
  %4415 = vmatprep.subr.bf16.mxu0 0
  %4416 = vmatpush2.bf16.msra.mxu0 0
  %4417 = vmatprep.subr.bf16.mxu0 0
  %4418 = vmatpush2.bf16.msra.mxu0 0
  %4419 = vmatprep.subr.bf16.mxu0 0
  %4420 = vmatpush2.bf16.msra.mxu0 0
  %4421 = vmatprep.mubr.bf16.mxu0 0
  %4422 = vmatmul.mubr.bf16.gmra.mxu0 %v4347
  %v4423 = vpop.f32.mrf.mxu0
  %v4424 = vadd.f32 0.0, %v4423
  %v4425 = vpop.f32.mrf.mxu0
  %v4426 = vadd.f32 0.0, %v4425
  %v4427 = vpop.f32.mrf.mxu0
  %v4428 = vpop.f32.mrf.mxu0
  %4429 = vdwg.mxu0
  %v4430 = vadd.f32 %v4256, %v4383
  %v4431 = vadd.f32 %v4257, %v4385
  %v4432 = vadd.f32 %v4258, %v4424
  %v4433 = vadd.f32 %v4259, %v4426
  %v4434 = vxor.u32 %v4343, 2147483648
  %v4435 = vmul.f32 %v4434, 1.442695
  %v4436 = vpow.pop %v4435
  %v4437 = vadd.f32 %v4436, 1.0
  %v4438 = vrcp.pop %v4437
  %v4439 = vmul.f32 1.0, %v4438
  %v4440 = vxor.u32 %v4344, 2147483648
  %v4441 = vmul.f32 %v4440, 1.442695
  %v4442 = vpow.pop %v4441
  %v4443 = vadd.f32 %v4442, 1.0
  %v4444 = vrcp.pop %v4443
  %v4445 = vmul.f32 1.0, %v4444
  %v4446 = vtanh.pop %v4345
  %v4447 = vxor.u32 %v4346, 2147483648
  %v4448 = vmul.f32 %v4447, 1.442695
  %v4449 = vpow.pop %v4448
  %v4450 = vadd.f32 %v4449, 1.0
  %v4451 = vrcp.pop %v4450
  %v4452 = vmul.f32 1.0, %v4451
  %v4453 = vmul.f32 %v4445, %v4225
  %v4454 = vmul.f32 %v4439, %v4446
  %v4455 = vadd.f32 %v4453, %v4454
  %v4456 = vtanh.pop %v4455
  %v4457 = vmul.f32 %v4452, %v4456
  %v4458 = vxor.u32 %v4430, 2147483648
  %v4459 = vmul.f32 %v4458, 1.442695
  %v4460 = vpow.pop %v4459
  %v4461 = vadd.f32 %v4460, 1.0
  %v4462 = vrcp.pop %v4461
  %v4463 = vmul.f32 1.0, %v4462
  %v4464 = vxor.u32 %v4431, 2147483648
  %v4465 = vmul.f32 %v4464, 1.442695
  %v4466 = vpow.pop %v4465
  %v4467 = vadd.f32 %v4466, 1.0
  %v4468 = vrcp.pop %v4467
  %v4469 = vmul.f32 1.0, %v4468
  %v4470 = vtanh.pop %v4432
  %v4471 = vxor.u32 %v4433, 2147483648
  %v4472 = vmul.f32 %v4471, 1.442695
  %v4473 = vpow.pop %v4472
  %v4474 = vadd.f32 %v4473, 1.0
  %v4475 = vrcp.pop %v4474
  %v4476 = vmul.f32 1.0, %v4475
  %v4477 = vmul.f32 %v4469, %v4249
  %v4478 = vmul.f32 %v4463, %v4470
  %v4479 = vadd.f32 %v4477, %v4478
  %v4480 = vtanh.pop %v4479
  %v4481 = vmul.f32 %v4476, %v4480
  %v4482 = vld [vmem:[%s2857] sm:$0xff]
  %v4483 = vld [vmem:[%s2857 + $0x8] sm:$0xff]
  %v4484 = vld [vmem:[%s2857 + $0x10] sm:$0xff]
  %v4485 = vld [vmem:[%s2857 + $0x18] sm:$0xff]
  %v4486 = vld [vmem:[%s2850 + $0x20] sm:$0xff]
  %v4487 = vld [vmem:[%s2850 + $0x28] sm:$0xff]
  %v4488 = vld [vmem:[%s2850 + $0x30] sm:$0xff]
  %v4489 = vld [vmem:[%s2850 + $0x38] sm:$0xff]
  %v4490 = vpack.c.bf16 %v4457, %v4457
  %4491 = vmatprep.subr.bf16.mxu0 %v1693
  %4492 = vmatpush1.bf16.msra.mxu0 %v1692
  %4493 = vmatprep.subr.bf16.mxu0 %v1689
  %4494 = vmatpush1.bf16.msra.mxu0 %v1688
  %4495 = vmatprep.subr.bf16.mxu0 %v1685
  %4496 = vmatpush1.bf16.msra.mxu0 %v1684
  %4497 = vmatprep.subr.bf16.mxu0 %v1681
  %4498 = vmatpush1.bf16.msra.mxu0 %v1680
  %4499 = vmatprep.subr.bf16.mxu0 %v1677
  %4500 = vmatpush1.bf16.msra.mxu0 %v1676
  %4501 = vmatprep.subr.bf16.mxu0 %v1673
  %4502 = vmatpush1.bf16.msra.mxu0 %v1672
  %4503 = vmatprep.subr.bf16.mxu0 %v1669
  %4504 = vmatpush1.bf16.msra.mxu0 %v1668
  %4505 = vmatprep.subr.bf16.mxu0 %v1665
  %4506 = vmatpush1.bf16.msra.mxu0 %v1664
  %4507 = vmatprep.subr.bf16.mxu0 0
  %4508 = vmatpush2.bf16.msra.mxu0 0
  %4509 = vmatprep.subr.bf16.mxu0 0
  %4510 = vmatpush2.bf16.msra.mxu0 0
  %4511 = vmatprep.subr.bf16.mxu0 0
  %4512 = vmatpush2.bf16.msra.mxu0 0
  %4513 = vmatprep.subr.bf16.mxu0 0
  %4514 = vmatpush2.bf16.msra.mxu0 0
  %4515 = vmatprep.subr.bf16.mxu0 0
  %4516 = vmatpush2.bf16.msra.mxu0 0
  %4517 = vmatprep.subr.bf16.mxu0 0
  %4518 = vmatpush2.bf16.msra.mxu0 0
  %4519 = vmatprep.subr.bf16.mxu0 0
  %4520 = vmatpush2.bf16.msra.mxu0 0
  %4521 = vmatprep.subr.bf16.mxu0 0
  %4522 = vmatpush2.bf16.msra.mxu0 0
  %4523 = vmatprep.mubr.bf16.mxu0 0
  %4524 = vmatmul.mubr.bf16.gmra.mxu0 %v4490
  %v4525 = vpop.f32.mrf.mxu0
  %v4526 = vadd.f32 0.0, %v4525
  %v4527 = vpop.f32.mrf.mxu0
  %v4528 = vadd.f32 0.0, %v4527
  %v4529 = vpop.f32.mrf.mxu0
  %v4530 = vpop.f32.mrf.mxu0
  %4531 = vdwg.mxu0
  %4532 = vmatprep.subr.bf16.mxu0 %v1695
  %4533 = vmatpush1.bf16.msra.mxu0 %v1694
  %4534 = vmatprep.subr.bf16.mxu0 %v1691
  %4535 = vmatpush1.bf16.msra.mxu0 %v1690
  %4536 = vmatprep.subr.bf16.mxu0 %v1687
  %4537 = vmatpush1.bf16.msra.mxu0 %v1686
  %4538 = vmatprep.subr.bf16.mxu0 %v1683
  %4539 = vmatpush1.bf16.msra.mxu0 %v1682
  %4540 = vmatprep.subr.bf16.mxu0 %v1679
  %4541 = vmatpush1.bf16.msra.mxu0 %v1678
  %4542 = vmatprep.subr.bf16.mxu0 %v1675
  %4543 = vmatpush1.bf16.msra.mxu0 %v1674
  %4544 = vmatprep.subr.bf16.mxu0 %v1671
  %4545 = vmatpush1.bf16.msra.mxu0 %v1670
  %4546 = vmatprep.subr.bf16.mxu0 %v1667
  %4547 = vmatpush1.bf16.msra.mxu0 %v1666
  %4548 = vmatprep.subr.bf16.mxu0 0
  %4549 = vmatpush2.bf16.msra.mxu0 0
  %4550 = vmatprep.subr.bf16.mxu0 0
  %4551 = vmatpush2.bf16.msra.mxu0 0
  %4552 = vmatprep.subr.bf16.mxu0 0
  %4553 = vmatpush2.bf16.msra.mxu0 0
  %4554 = vmatprep.subr.bf16.mxu0 0
  %4555 = vmatpush2.bf16.msra.mxu0 0
  %4556 = vmatprep.subr.bf16.mxu0 0
  %4557 = vmatpush2.bf16.msra.mxu0 0
  %4558 = vmatprep.subr.bf16.mxu0 0
  %4559 = vmatpush2.bf16.msra.mxu0 0
  %4560 = vmatprep.subr.bf16.mxu0 0
  %4561 = vmatpush2.bf16.msra.mxu0 0
  %4562 = vmatprep.subr.bf16.mxu0 0
  %4563 = vmatpush2.bf16.msra.mxu0 0
  %4564 = vmatprep.mubr.bf16.mxu0 0
  %4565 = vmatmul.mubr.bf16.gmra.mxu0 %v4490
  %v4566 = vpop.f32.mrf.mxu0
  %v4567 = vadd.f32 0.0, %v4566
  %v4568 = vpop.f32.mrf.mxu0
  %v4569 = vadd.f32 0.0, %v4568
  %v4570 = vpop.f32.mrf.mxu0
  %v4571 = vpop.f32.mrf.mxu0
  %4572 = vdwg.mxu0
  %v4573 = vadd.f32 %v4482, %v4526
  %v4574 = vadd.f32 %v4483, %v4528
  %v4575 = vadd.f32 %v4484, %v4567
  %v4576 = vadd.f32 %v4485, %v4569
  %v4577 = vpack.c.bf16 %v4481, %v4481
  %4578 = vmatprep.subr.bf16.mxu0 %v1971
  %4579 = vmatpush1.bf16.msra.mxu0 %v1970
  %4580 = vmatprep.subr.bf16.mxu0 %v1967
  %4581 = vmatpush1.bf16.msra.mxu0 %v1966
  %4582 = vmatprep.subr.bf16.mxu0 %v1963
  %4583 = vmatpush1.bf16.msra.mxu0 %v1962
  %4584 = vmatprep.subr.bf16.mxu0 %v1959
  %4585 = vmatpush1.bf16.msra.mxu0 %v1958
  %4586 = vmatprep.subr.bf16.mxu0 %v1955
  %4587 = vmatpush1.bf16.msra.mxu0 %v1954
  %4588 = vmatprep.subr.bf16.mxu0 %v1951
  %4589 = vmatpush1.bf16.msra.mxu0 %v1950
  %4590 = vmatprep.subr.bf16.mxu0 %v1947
  %4591 = vmatpush1.bf16.msra.mxu0 %v1946
  %4592 = vmatprep.subr.bf16.mxu0 %v1943
  %4593 = vmatpush1.bf16.msra.mxu0 %v1942
  %4594 = vmatprep.subr.bf16.mxu0 0
  %4595 = vmatpush2.bf16.msra.mxu0 0
  %4596 = vmatprep.subr.bf16.mxu0 0
  %4597 = vmatpush2.bf16.msra.mxu0 0
  %4598 = vmatprep.subr.bf16.mxu0 0
  %4599 = vmatpush2.bf16.msra.mxu0 0
  %4600 = vmatprep.subr.bf16.mxu0 0
  %4601 = vmatpush2.bf16.msra.mxu0 0
  %4602 = vmatprep.subr.bf16.mxu0 0
  %4603 = vmatpush2.bf16.msra.mxu0 0
  %4604 = vmatprep.subr.bf16.mxu0 0
  %4605 = vmatpush2.bf16.msra.mxu0 0
  %4606 = vmatprep.subr.bf16.mxu0 0
  %4607 = vmatpush2.bf16.msra.mxu0 0
  %4608 = vmatprep.subr.bf16.mxu0 0
  %4609 = vmatpush2.bf16.msra.mxu0 0
  %4610 = vmatprep.mubr.bf16.mxu0 0
  %4611 = vmatmul.mubr.bf16.gmra.mxu0 %v4577
  %v4612 = vpop.f32.mrf.mxu0
  %v4613 = vadd.f32 0.0, %v4612
  %v4614 = vpop.f32.mrf.mxu0
  %v4615 = vadd.f32 0.0, %v4614
  %v4616 = vpop.f32.mrf.mxu0
  %v4617 = vpop.f32.mrf.mxu0
  %4618 = vdwg.mxu0
  %4619 = vmatprep.subr.bf16.mxu0 %v1973
  %4620 = vmatpush1.bf16.msra.mxu0 %v1972
  %4621 = vmatprep.subr.bf16.mxu0 %v1969
  %4622 = vmatpush1.bf16.msra.mxu0 %v1968
  %4623 = vmatprep.subr.bf16.mxu0 %v1965
  %4624 = vmatpush1.bf16.msra.mxu0 %v1964
  %4625 = vmatprep.subr.bf16.mxu0 %v1961
  %4626 = vmatpush1.bf16.msra.mxu0 %v1960
  %4627 = vmatprep.subr.bf16.mxu0 %v1957
  %4628 = vmatpush1.bf16.msra.mxu0 %v1956
  %4629 = vmatprep.subr.bf16.mxu0 %v1953
  %4630 = vmatpush1.bf16.msra.mxu0 %v1952
  %4631 = vmatprep.subr.bf16.mxu0 %v1949
  %4632 = vmatpush1.bf16.msra.mxu0 %v1948
  %4633 = vmatprep.subr.bf16.mxu0 %v1945
  %4634 = vmatpush1.bf16.msra.mxu0 %v1944
  %4635 = vmatprep.subr.bf16.mxu0 0
  %4636 = vmatpush2.bf16.msra.mxu0 0
  %4637 = vmatprep.subr.bf16.mxu0 0
  %4638 = vmatpush2.bf16.msra.mxu0 0
  %4639 = vmatprep.subr.bf16.mxu0 0
  %4640 = vmatpush2.bf16.msra.mxu0 0
  %4641 = vmatprep.subr.bf16.mxu0 0
  %4642 = vmatpush2.bf16.msra.mxu0 0
  %4643 = vmatprep.subr.bf16.mxu0 0
  %4644 = vmatpush2.bf16.msra.mxu0 0
  %4645 = vmatprep.subr.bf16.mxu0 0
  %4646 = vmatpush2.bf16.msra.mxu0 0
  %4647 = vmatprep.subr.bf16.mxu0 0
  %4648 = vmatpush2.bf16.msra.mxu0 0
  %4649 = vmatprep.subr.bf16.mxu0 0
  %4650 = vmatpush2.bf16.msra.mxu0 0
  %4651 = vmatprep.mubr.bf16.mxu0 0
  %4652 = vmatmul.mubr.bf16.gmra.mxu0 %v4577
  %v4653 = vpop.f32.mrf.mxu0
  %v4654 = vadd.f32 0.0, %v4653
  %v4655 = vpop.f32.mrf.mxu0
  %v4656 = vadd.f32 0.0, %v4655
  %v4657 = vpop.f32.mrf.mxu0
  %v4658 = vpop.f32.mrf.mxu0
  %4659 = vdwg.mxu0
  %v4660 = vadd.f32 %v4486, %v4613
  %v4661 = vadd.f32 %v4487, %v4615
  %v4662 = vadd.f32 %v4488, %v4654
  %v4663 = vadd.f32 %v4489, %v4656
  %v4664 = vxor.u32 %v4573, 2147483648
  %v4665 = vmul.f32 %v4664, 1.442695
  %v4666 = vpow.pop %v4665
  %v4667 = vadd.f32 %v4666, 1.0
  %v4668 = vrcp.pop %v4667
  %v4669 = vmul.f32 1.0, %v4668
  %v4670 = vxor.u32 %v4574, 2147483648
  %v4671 = vmul.f32 %v4670, 1.442695
  %v4672 = vpow.pop %v4671
  %v4673 = vadd.f32 %v4672, 1.0
  %v4674 = vrcp.pop %v4673
  %v4675 = vmul.f32 1.0, %v4674
  %v4676 = vtanh.pop %v4575
  %v4677 = vxor.u32 %v4576, 2147483648
  %v4678 = vmul.f32 %v4677, 1.442695
  %v4679 = vpow.pop %v4678
  %v4680 = vadd.f32 %v4679, 1.0
  %v4681 = vrcp.pop %v4680
  %v4682 = vmul.f32 1.0, %v4681
  %v4683 = vmul.f32 %v4675, %v4455
  %v4684 = vmul.f32 %v4669, %v4676
  %v4685 = vadd.f32 %v4683, %v4684
  %v4686 = vtanh.pop %v4685
  %v4687 = vmul.f32 %v4682, %v4686
  %v4688 = vxor.u32 %v4660, 2147483648
  %v4689 = vmul.f32 %v4688, 1.442695
  %v4690 = vpow.pop %v4689
  %v4691 = vadd.f32 %v4690, 1.0
  %v4692 = vrcp.pop %v4691
  %v4693 = vmul.f32 1.0, %v4692
  %v4694 = vxor.u32 %v4661, 2147483648
  %v4695 = vmul.f32 %v4694, 1.442695
  %v4696 = vpow.pop %v4695
  %v4697 = vadd.f32 %v4696, 1.0
  %v4698 = vrcp.pop %v4697
  %v4699 = vmul.f32 1.0, %v4698
  %v4700 = vtanh.pop %v4662
  %v4701 = vxor.u32 %v4663, 2147483648
  %v4702 = vmul.f32 %v4701, 1.442695
  %v4703 = vpow.pop %v4702
  %v4704 = vadd.f32 %v4703, 1.0
  %v4705 = vrcp.pop %v4704
  %v4706 = vmul.f32 1.0, %v4705
  %v4707 = vmul.f32 %v4699, %v4479
  %v4708 = vmul.f32 %v4693, %v4700
  %v4709 = vadd.f32 %v4707, %v4708
  %v4710 = vtanh.pop %v4709
  %v4711 = vmul.f32 %v4706, %v4710
  %v4712 = vld [vmem:[%s2621] sm:$0xff]
  %v4713 = vld [vmem:[%s2621 + $0x8] sm:$0xff]
  %v4714 = vld [vmem:[%s2621 + $0x10] sm:$0xff]
  %v4715 = vld [vmem:[%s2621 + $0x18] sm:$0xff]
  %v4716 = vld [vmem:[%s2614 + $0x20] sm:$0xff]
  %v4717 = vld [vmem:[%s2614 + $0x28] sm:$0xff]
  %v4718 = vld [vmem:[%s2614 + $0x30] sm:$0xff]
  %v4719 = vld [vmem:[%s2614 + $0x38] sm:$0xff]
  %v4720 = vpack.c.bf16 %v4687, %v4687
  %4721 = vmatprep.subr.bf16.mxu0 %v1693
  %4722 = vmatpush1.bf16.msra.mxu0 %v1692
  %4723 = vmatprep.subr.bf16.mxu0 %v1689
  %4724 = vmatpush1.bf16.msra.mxu0 %v1688
  %4725 = vmatprep.subr.bf16.mxu0 %v1685
  %4726 = vmatpush1.bf16.msra.mxu0 %v1684
  %4727 = vmatprep.subr.bf16.mxu0 %v1681
  %4728 = vmatpush1.bf16.msra.mxu0 %v1680
  %4729 = vmatprep.subr.bf16.mxu0 %v1677
  %4730 = vmatpush1.bf16.msra.mxu0 %v1676
  %4731 = vmatprep.subr.bf16.mxu0 %v1673
  %4732 = vmatpush1.bf16.msra.mxu0 %v1672
  %4733 = vmatprep.subr.bf16.mxu0 %v1669
  %4734 = vmatpush1.bf16.msra.mxu0 %v1668
  %4735 = vmatprep.subr.bf16.mxu0 %v1665
  %4736 = vmatpush1.bf16.msra.mxu0 %v1664
  %4737 = vmatprep.subr.bf16.mxu0 0
  %4738 = vmatpush2.bf16.msra.mxu0 0
  %4739 = vmatprep.subr.bf16.mxu0 0
  %4740 = vmatpush2.bf16.msra.mxu0 0
  %4741 = vmatprep.subr.bf16.mxu0 0
  %4742 = vmatpush2.bf16.msra.mxu0 0
  %4743 = vmatprep.subr.bf16.mxu0 0
  %4744 = vmatpush2.bf16.msra.mxu0 0
  %4745 = vmatprep.subr.bf16.mxu0 0
  %4746 = vmatpush2.bf16.msra.mxu0 0
  %4747 = vmatprep.subr.bf16.mxu0 0
  %4748 = vmatpush2.bf16.msra.mxu0 0
  %4749 = vmatprep.subr.bf16.mxu0 0
  %4750 = vmatpush2.bf16.msra.mxu0 0
  %4751 = vmatprep.subr.bf16.mxu0 0
  %4752 = vmatpush2.bf16.msra.mxu0 0
  %4753 = vmatprep.mubr.bf16.mxu0 0
  %4754 = vmatmul.mubr.bf16.gmra.mxu0 %v4720
  %v4755 = vpop.f32.mrf.mxu0
  %v4756 = vadd.f32 0.0, %v4755
  %v4757 = vpop.f32.mrf.mxu0
  %v4758 = vadd.f32 0.0, %v4757
  %v4759 = vpop.f32.mrf.mxu0
  %v4760 = vpop.f32.mrf.mxu0
  %4761 = vdwg.mxu0
  %4762 = vmatprep.subr.bf16.mxu0 %v1695
  %4763 = vmatpush1.bf16.msra.mxu0 %v1694
  %4764 = vmatprep.subr.bf16.mxu0 %v1691
  %4765 = vmatpush1.bf16.msra.mxu0 %v1690
  %4766 = vmatprep.subr.bf16.mxu0 %v1687
  %4767 = vmatpush1.bf16.msra.mxu0 %v1686
  %4768 = vmatprep.subr.bf16.mxu0 %v1683
  %4769 = vmatpush1.bf16.msra.mxu0 %v1682
  %4770 = vmatprep.subr.bf16.mxu0 %v1679
  %4771 = vmatpush1.bf16.msra.mxu0 %v1678
  %4772 = vmatprep.subr.bf16.mxu0 %v1675
  %4773 = vmatpush1.bf16.msra.mxu0 %v1674
  %4774 = vmatprep.subr.bf16.mxu0 %v1671
  %4775 = vmatpush1.bf16.msra.mxu0 %v1670
  %4776 = vmatprep.subr.bf16.mxu0 %v1667
  %4777 = vmatpush1.bf16.msra.mxu0 %v1666
  %4778 = vmatprep.subr.bf16.mxu0 0
  %4779 = vmatpush2.bf16.msra.mxu0 0
  %4780 = vmatprep.subr.bf16.mxu0 0
  %4781 = vmatpush2.bf16.msra.mxu0 0
  %4782 = vmatprep.subr.bf16.mxu0 0
  %4783 = vmatpush2.bf16.msra.mxu0 0
  %4784 = vmatprep.subr.bf16.mxu0 0
  %4785 = vmatpush2.bf16.msra.mxu0 0
  %4786 = vmatprep.subr.bf16.mxu0 0
  %4787 = vmatpush2.bf16.msra.mxu0 0
  %4788 = vmatprep.subr.bf16.mxu0 0
  %4789 = vmatpush2.bf16.msra.mxu0 0
  %4790 = vmatprep.subr.bf16.mxu0 0
  %4791 = vmatpush2.bf16.msra.mxu0 0
  %4792 = vmatprep.subr.bf16.mxu0 0
  %4793 = vmatpush2.bf16.msra.mxu0 0
  %4794 = vmatprep.mubr.bf16.mxu0 0
  %4795 = vmatmul.mubr.bf16.gmra.mxu0 %v4720
  %v4796 = vpop.f32.mrf.mxu0
  %v4797 = vadd.f32 0.0, %v4796
  %v4798 = vpop.f32.mrf.mxu0
  %v4799 = vadd.f32 0.0, %v4798
  %v4800 = vpop.f32.mrf.mxu0
  %v4801 = vpop.f32.mrf.mxu0
  %4802 = vdwg.mxu0
  %v4803 = vadd.f32 %v4712, %v4756
  %v4804 = vadd.f32 %v4713, %v4758
  %v4805 = vadd.f32 %v4714, %v4797
  %v4806 = vadd.f32 %v4715, %v4799
  %v4807 = vpack.c.bf16 %v4711, %v4711
  %4808 = vmatprep.subr.bf16.mxu0 %v1971
  %4809 = vmatpush1.bf16.msra.mxu0 %v1970
  %4810 = vmatprep.subr.bf16.mxu0 %v1967
  %4811 = vmatpush1.bf16.msra.mxu0 %v1966
  %4812 = vmatprep.subr.bf16.mxu0 %v1963
  %4813 = vmatpush1.bf16.msra.mxu0 %v1962
  %4814 = vmatprep.subr.bf16.mxu0 %v1959
  %4815 = vmatpush1.bf16.msra.mxu0 %v1958
  %4816 = vmatprep.subr.bf16.mxu0 %v1955
  %4817 = vmatpush1.bf16.msra.mxu0 %v1954
  %4818 = vmatprep.subr.bf16.mxu0 %v1951
  %4819 = vmatpush1.bf16.msra.mxu0 %v1950
  %4820 = vmatprep.subr.bf16.mxu0 %v1947
  %4821 = vmatpush1.bf16.msra.mxu0 %v1946
  %4822 = vmatprep.subr.bf16.mxu0 %v1943
  %4823 = vmatpush1.bf16.msra.mxu0 %v1942
  %4824 = vmatprep.subr.bf16.mxu0 0
  %4825 = vmatpush2.bf16.msra.mxu0 0
  %4826 = vmatprep.subr.bf16.mxu0 0
  %4827 = vmatpush2.bf16.msra.mxu0 0
  %4828 = vmatprep.subr.bf16.mxu0 0
  %4829 = vmatpush2.bf16.msra.mxu0 0
  %4830 = vmatprep.subr.bf16.mxu0 0
  %4831 = vmatpush2.bf16.msra.mxu0 0
  %4832 = vmatprep.subr.bf16.mxu0 0
  %4833 = vmatpush2.bf16.msra.mxu0 0
  %4834 = vmatprep.subr.bf16.mxu0 0
  %4835 = vmatpush2.bf16.msra.mxu0 0
  %4836 = vmatprep.subr.bf16.mxu0 0
  %4837 = vmatpush2.bf16.msra.mxu0 0
  %4838 = vmatprep.subr.bf16.mxu0 0
  %4839 = vmatpush2.bf16.msra.mxu0 0
  %4840 = vmatprep.mubr.bf16.mxu0 0
  %4841 = vmatmul.mubr.bf16.gmra.mxu0 %v4807
  %v4842 = vpop.f32.mrf.mxu0
  %v4843 = vadd.f32 0.0, %v4842
  %v4844 = vpop.f32.mrf.mxu0
  %v4845 = vadd.f32 0.0, %v4844
  %v4846 = vpop.f32.mrf.mxu0
  %v4847 = vpop.f32.mrf.mxu0
  %4848 = vdwg.mxu0
  %4849 = vmatprep.subr.bf16.mxu0 %v1973
  %4850 = vmatpush1.bf16.msra.mxu0 %v1972
  %4851 = vmatprep.subr.bf16.mxu0 %v1969
  %4852 = vmatpush1.bf16.msra.mxu0 %v1968
  %4853 = vmatprep.subr.bf16.mxu0 %v1965
  %4854 = vmatpush1.bf16.msra.mxu0 %v1964
  %4855 = vmatprep.subr.bf16.mxu0 %v1961
  %4856 = vmatpush1.bf16.msra.mxu0 %v1960
  %4857 = vmatprep.subr.bf16.mxu0 %v1957
  %4858 = vmatpush1.bf16.msra.mxu0 %v1956
  %4859 = vmatprep.subr.bf16.mxu0 %v1953
  %4860 = vmatpush1.bf16.msra.mxu0 %v1952
  %4861 = vmatprep.subr.bf16.mxu0 %v1949
  %4862 = vmatpush1.bf16.msra.mxu0 %v1948
  %4863 = vmatprep.subr.bf16.mxu0 %v1945
  %4864 = vmatpush1.bf16.msra.mxu0 %v1944
  %4865 = vmatprep.subr.bf16.mxu0 0
  %4866 = vmatpush2.bf16.msra.mxu0 0
  %4867 = vmatprep.subr.bf16.mxu0 0
  %4868 = vmatpush2.bf16.msra.mxu0 0
  %4869 = vmatprep.subr.bf16.mxu0 0
  %4870 = vmatpush2.bf16.msra.mxu0 0
  %4871 = vmatprep.subr.bf16.mxu0 0
  %4872 = vmatpush2.bf16.msra.mxu0 0
  %4873 = vmatprep.subr.bf16.mxu0 0
  %4874 = vmatpush2.bf16.msra.mxu0 0
  %4875 = vmatprep.subr.bf16.mxu0 0
  %4876 = vmatpush2.bf16.msra.mxu0 0
  %4877 = vmatprep.subr.bf16.mxu0 0
  %4878 = vmatpush2.bf16.msra.mxu0 0
  %4879 = vmatprep.subr.bf16.mxu0 0
  %4880 = vmatpush2.bf16.msra.mxu0 0
  %4881 = vmatprep.mubr.bf16.mxu0 0
  %4882 = vmatmul.mubr.bf16.gmra.mxu0 %v4807
  %v4883 = vpop.f32.mrf.mxu0
  %v4884 = vadd.f32 0.0, %v4883
  %v4885 = vpop.f32.mrf.mxu0
  %v4886 = vadd.f32 0.0, %v4885
  %v4887 = vpop.f32.mrf.mxu0
  %v4888 = vpop.f32.mrf.mxu0
  %4889 = vdwg.mxu0
  %v4890 = vadd.f32 %v4716, %v4843
  %v4891 = vadd.f32 %v4717, %v4845
  %v4892 = vadd.f32 %v4718, %v4884
  %v4893 = vadd.f32 %v4719, %v4886
  %v4894 = vxor.u32 %v4803, 2147483648
  %v4895 = vmul.f32 %v4894, 1.442695
  %v4896 = vpow.pop %v4895
  %v4897 = vadd.f32 %v4896, 1.0
  %v4898 = vrcp.pop %v4897
  %v4899 = vmul.f32 1.0, %v4898
  %v4900 = vxor.u32 %v4804, 2147483648
  %v4901 = vmul.f32 %v4900, 1.442695
  %v4902 = vpow.pop %v4901
  %v4903 = vadd.f32 %v4902, 1.0
  %v4904 = vrcp.pop %v4903
  %v4905 = vmul.f32 1.0, %v4904
  %v4906 = vtanh.pop %v4805
  %v4907 = vxor.u32 %v4806, 2147483648
  %v4908 = vmul.f32 %v4907, 1.442695
  %v4909 = vpow.pop %v4908
  %v4910 = vadd.f32 %v4909, 1.0
  %v4911 = vrcp.pop %v4910
  %v4912 = vmul.f32 1.0, %v4911
  %v4913 = vmul.f32 %v4905, %v4685
  %v4914 = vmul.f32 %v4899, %v4906
  %v4915 = vadd.f32 %v4913, %v4914
  %v4916 = vtanh.pop %v4915
  %v4917 = vmul.f32 %v4912, %v4916
  %v4918 = vxor.u32 %v4890, 2147483648
  %v4919 = vmul.f32 %v4918, 1.442695
  %v4920 = vpow.pop %v4919
  %v4921 = vadd.f32 %v4920, 1.0
  %v4922 = vrcp.pop %v4921
  %v4923 = vmul.f32 1.0, %v4922
  %v4924 = vxor.u32 %v4891, 2147483648
  %v4925 = vmul.f32 %v4924, 1.442695
  %v4926 = vpow.pop %v4925
  %v4927 = vadd.f32 %v4926, 1.0
  %v4928 = vrcp.pop %v4927
  %v4929 = vmul.f32 1.0, %v4928
  %v4930 = vtanh.pop %v4892
  %v4931 = vxor.u32 %v4893, 2147483648
  %v4932 = vmul.f32 %v4931, 1.442695
  %v4933 = vpow.pop %v4932
  %v4934 = vadd.f32 %v4933, 1.0
  %v4935 = vrcp.pop %v4934
  %v4936 = vmul.f32 1.0, %v4935
  %v4937 = vmul.f32 %v4929, %v4709
  %v4938 = vmul.f32 %v4923, %v4930
  %v4939 = vadd.f32 %v4937, %v4938
  %v4940 = vtanh.pop %v4939
  %v4941 = vmul.f32 %v4936, %v4940
  %v4942 = vld [vmem:[%s2385] sm:$0xff]
  %v4943 = vld [vmem:[%s2385 + $0x8] sm:$0xff]
  %v4944 = vld [vmem:[%s2385 + $0x10] sm:$0xff]
  %v4945 = vld [vmem:[%s2385 + $0x18] sm:$0xff]
  %v4946 = vld [vmem:[%s2378 + $0x20] sm:$0xff]
  %v4947 = vld [vmem:[%s2378 + $0x28] sm:$0xff]
  %v4948 = vld [vmem:[%s2378 + $0x30] sm:$0xff]
  %v4949 = vld [vmem:[%s2378 + $0x38] sm:$0xff]
  %v4950 = vpack.c.bf16 %v4917, %v4917
  %4951 = vmatprep.subr.bf16.mxu0 %v1693
  %4952 = vmatpush1.bf16.msra.mxu0 %v1692
  %4953 = vmatprep.subr.bf16.mxu0 %v1689
  %4954 = vmatpush1.bf16.msra.mxu0 %v1688
  %4955 = vmatprep.subr.bf16.mxu0 %v1685
  %4956 = vmatpush1.bf16.msra.mxu0 %v1684
  %4957 = vmatprep.subr.bf16.mxu0 %v1681
  %4958 = vmatpush1.bf16.msra.mxu0 %v1680
  %4959 = vmatprep.subr.bf16.mxu0 %v1677
  %4960 = vmatpush1.bf16.msra.mxu0 %v1676
  %4961 = vmatprep.subr.bf16.mxu0 %v1673
  %4962 = vmatpush1.bf16.msra.mxu0 %v1672
  %4963 = vmatprep.subr.bf16.mxu0 %v1669
  %4964 = vmatpush1.bf16.msra.mxu0 %v1668
  %4965 = vmatprep.subr.bf16.mxu0 %v1665
  %4966 = vmatpush1.bf16.msra.mxu0 %v1664
  %4967 = vmatprep.subr.bf16.mxu0 0
  %4968 = vmatpush2.bf16.msra.mxu0 0
  %4969 = vmatprep.subr.bf16.mxu0 0
  %4970 = vmatpush2.bf16.msra.mxu0 0
  %4971 = vmatprep.subr.bf16.mxu0 0
  %4972 = vmatpush2.bf16.msra.mxu0 0
  %4973 = vmatprep.subr.bf16.mxu0 0
  %4974 = vmatpush2.bf16.msra.mxu0 0
  %4975 = vmatprep.subr.bf16.mxu0 0
  %4976 = vmatpush2.bf16.msra.mxu0 0
  %4977 = vmatprep.subr.bf16.mxu0 0
  %4978 = vmatpush2.bf16.msra.mxu0 0
  %4979 = vmatprep.subr.bf16.mxu0 0
  %4980 = vmatpush2.bf16.msra.mxu0 0
  %4981 = vmatprep.subr.bf16.mxu0 0
  %4982 = vmatpush2.bf16.msra.mxu0 0
  %4983 = vmatprep.mubr.bf16.mxu0 0
  %4984 = vmatmul.mubr.bf16.gmra.mxu0 %v4950
  %v4985 = vpop.f32.mrf.mxu0
  %v4986 = vadd.f32 0.0, %v4985
  %v4987 = vpop.f32.mrf.mxu0
  %v4988 = vadd.f32 0.0, %v4987
  %v4989 = vpop.f32.mrf.mxu0
  %v4990 = vpop.f32.mrf.mxu0
  %4991 = vdwg.mxu0
  %4992 = vmatprep.subr.bf16.mxu0 %v1695
  %4993 = vmatpush1.bf16.msra.mxu0 %v1694
  %4994 = vmatprep.subr.bf16.mxu0 %v1691
  %4995 = vmatpush1.bf16.msra.mxu0 %v1690
  %4996 = vmatprep.subr.bf16.mxu0 %v1687
  %4997 = vmatpush1.bf16.msra.mxu0 %v1686
  %4998 = vmatprep.subr.bf16.mxu0 %v1683
  %4999 = vmatpush1.bf16.msra.mxu0 %v1682
  %5000 = vmatprep.subr.bf16.mxu0 %v1679
  %5001 = vmatpush1.bf16.msra.mxu0 %v1678
  %5002 = vmatprep.subr.bf16.mxu0 %v1675
  %5003 = vmatpush1.bf16.msra.mxu0 %v1674
  %5004 = vmatprep.subr.bf16.mxu0 %v1671
  %5005 = vmatpush1.bf16.msra.mxu0 %v1670
  %5006 = vmatprep.subr.bf16.mxu0 %v1667
  %5007 = vmatpush1.bf16.msra.mxu0 %v1666
  %5008 = vmatprep.subr.bf16.mxu0 0
  %5009 = vmatpush2.bf16.msra.mxu0 0
  %5010 = vmatprep.subr.bf16.mxu0 0
  %5011 = vmatpush2.bf16.msra.mxu0 0
  %5012 = vmatprep.subr.bf16.mxu0 0
  %5013 = vmatpush2.bf16.msra.mxu0 0
  %5014 = vmatprep.subr.bf16.mxu0 0
  %5015 = vmatpush2.bf16.msra.mxu0 0
  %5016 = vmatprep.subr.bf16.mxu0 0
  %5017 = vmatpush2.bf16.msra.mxu0 0
  %5018 = vmatprep.subr.bf16.mxu0 0
  %5019 = vmatpush2.bf16.msra.mxu0 0
  %5020 = vmatprep.subr.bf16.mxu0 0
  %5021 = vmatpush2.bf16.msra.mxu0 0
  %5022 = vmatprep.subr.bf16.mxu0 0
  %5023 = vmatpush2.bf16.msra.mxu0 0
  %5024 = vmatprep.mubr.bf16.mxu0 0
  %5025 = vmatmul.mubr.bf16.gmra.mxu0 %v4950
  %v5026 = vpop.f32.mrf.mxu0
  %v5027 = vadd.f32 0.0, %v5026
  %v5028 = vpop.f32.mrf.mxu0
  %v5029 = vadd.f32 0.0, %v5028
  %v5030 = vpop.f32.mrf.mxu0
  %v5031 = vpop.f32.mrf.mxu0
  %5032 = vdwg.mxu0
  %v5033 = vadd.f32 %v4942, %v4986
  %v5034 = vadd.f32 %v4943, %v4988
  %v5035 = vadd.f32 %v4944, %v5027
  %v5036 = vadd.f32 %v4945, %v5029
  %v5037 = vpack.c.bf16 %v4941, %v4941
  %5038 = vmatprep.subr.bf16.mxu0 %v1971
  %5039 = vmatpush1.bf16.msra.mxu0 %v1970
  %5040 = vmatprep.subr.bf16.mxu0 %v1967
  %5041 = vmatpush1.bf16.msra.mxu0 %v1966
  %5042 = vmatprep.subr.bf16.mxu0 %v1963
  %5043 = vmatpush1.bf16.msra.mxu0 %v1962
  %5044 = vmatprep.subr.bf16.mxu0 %v1959
  %5045 = vmatpush1.bf16.msra.mxu0 %v1958
  %5046 = vmatprep.subr.bf16.mxu0 %v1955
  %5047 = vmatpush1.bf16.msra.mxu0 %v1954
  %5048 = vmatprep.subr.bf16.mxu0 %v1951
  %5049 = vmatpush1.bf16.msra.mxu0 %v1950
  %5050 = vmatprep.subr.bf16.mxu0 %v1947
  %5051 = vmatpush1.bf16.msra.mxu0 %v1946
  %5052 = vmatprep.subr.bf16.mxu0 %v1943
  %5053 = vmatpush1.bf16.msra.mxu0 %v1942
  %5054 = vmatprep.subr.bf16.mxu0 0
  %5055 = vmatpush2.bf16.msra.mxu0 0
  %5056 = vmatprep.subr.bf16.mxu0 0
  %5057 = vmatpush2.bf16.msra.mxu0 0
  %5058 = vmatprep.subr.bf16.mxu0 0
  %5059 = vmatpush2.bf16.msra.mxu0 0
  %5060 = vmatprep.subr.bf16.mxu0 0
  %5061 = vmatpush2.bf16.msra.mxu0 0
  %5062 = vmatprep.subr.bf16.mxu0 0
  %5063 = vmatpush2.bf16.msra.mxu0 0
  %5064 = vmatprep.subr.bf16.mxu0 0
  %5065 = vmatpush2.bf16.msra.mxu0 0
  %5066 = vmatprep.subr.bf16.mxu0 0
  %5067 = vmatpush2.bf16.msra.mxu0 0
  %5068 = vmatprep.subr.bf16.mxu0 0
  %5069 = vmatpush2.bf16.msra.mxu0 0
  %5070 = vmatprep.mubr.bf16.mxu0 0
  %5071 = vmatmul.mubr.bf16.gmra.mxu0 %v5037
  %v5072 = vpop.f32.mrf.mxu0
  %v5073 = vadd.f32 0.0, %v5072
  %v5074 = vpop.f32.mrf.mxu0
  %v5075 = vadd.f32 0.0, %v5074
  %v5076 = vpop.f32.mrf.mxu0
  %v5077 = vpop.f32.mrf.mxu0
  %5078 = vdwg.mxu0
  %5079 = vmatprep.subr.bf16.mxu0 %v1973
  %5080 = vmatpush1.bf16.msra.mxu0 %v1972
  %5081 = vmatprep.subr.bf16.mxu0 %v1969
  %5082 = vmatpush1.bf16.msra.mxu0 %v1968
  %5083 = vmatprep.subr.bf16.mxu0 %v1965
  %5084 = vmatpush1.bf16.msra.mxu0 %v1964
  %5085 = vmatprep.subr.bf16.mxu0 %v1961
  %5086 = vmatpush1.bf16.msra.mxu0 %v1960
  %5087 = vmatprep.subr.bf16.mxu0 %v1957
  %5088 = vmatpush1.bf16.msra.mxu0 %v1956
  %5089 = vmatprep.subr.bf16.mxu0 %v1953
  %5090 = vmatpush1.bf16.msra.mxu0 %v1952
  %5091 = vmatprep.subr.bf16.mxu0 %v1949
  %5092 = vmatpush1.bf16.msra.mxu0 %v1948
  %5093 = vmatprep.subr.bf16.mxu0 %v1945
  %5094 = vmatpush1.bf16.msra.mxu0 %v1944
  %5095 = vmatprep.subr.bf16.mxu0 0
  %5096 = vmatpush2.bf16.msra.mxu0 0
  %5097 = vmatprep.subr.bf16.mxu0 0
  %5098 = vmatpush2.bf16.msra.mxu0 0
  %5099 = vmatprep.subr.bf16.mxu0 0
  %5100 = vmatpush2.bf16.msra.mxu0 0
  %5101 = vmatprep.subr.bf16.mxu0 0
  %5102 = vmatpush2.bf16.msra.mxu0 0
  %5103 = vmatprep.subr.bf16.mxu0 0
  %5104 = vmatpush2.bf16.msra.mxu0 0
  %5105 = vmatprep.subr.bf16.mxu0 0
  %5106 = vmatpush2.bf16.msra.mxu0 0
  %5107 = vmatprep.subr.bf16.mxu0 0
  %5108 = vmatpush2.bf16.msra.mxu0 0
  %5109 = vmatprep.subr.bf16.mxu0 0
  %5110 = vmatpush2.bf16.msra.mxu0 0
  %5111 = vmatprep.mubr.bf16.mxu0 0
  %5112 = vmatmul.mubr.bf16.gmra.mxu0 %v5037
  %v5113 = vpop.f32.mrf.mxu0
  %v5114 = vadd.f32 0.0, %v5113
  %v5115 = vpop.f32.mrf.mxu0
  %v5116 = vadd.f32 0.0, %v5115
  %v5117 = vpop.f32.mrf.mxu0
  %v5118 = vpop.f32.mrf.mxu0
  %5119 = vdwg.mxu0
  %v5120 = vadd.f32 %v4946, %v5073
  %v5121 = vadd.f32 %v4947, %v5075
  %v5122 = vadd.f32 %v4948, %v5114
  %v5123 = vadd.f32 %v4949, %v5116
  %v5124 = vxor.u32 %v5033, 2147483648
  %v5125 = vmul.f32 %v5124, 1.442695
  %v5126 = vpow.pop %v5125
  %v5127 = vadd.f32 %v5126, 1.0
  %v5128 = vrcp.pop %v5127
  %v5129 = vmul.f32 1.0, %v5128
  %v5130 = vxor.u32 %v5034, 2147483648
  %v5131 = vmul.f32 %v5130, 1.442695
  %v5132 = vpow.pop %v5131
  %v5133 = vadd.f32 %v5132, 1.0
  %v5134 = vrcp.pop %v5133
  %v5135 = vmul.f32 1.0, %v5134
  %v5136 = vtanh.pop %v5035
  %v5137 = vxor.u32 %v5036, 2147483648
  %v5138 = vmul.f32 %v5137, 1.442695
  %v5139 = vpow.pop %v5138
  %v5140 = vadd.f32 %v5139, 1.0
  %v5141 = vrcp.pop %v5140
  %v5142 = vmul.f32 1.0, %v5141
  %v5143 = vmul.f32 %v5135, %v4915
  %v5144 = vmul.f32 %v5129, %v5136
  %v5145 = vadd.f32 %v5143, %v5144
  %v5146 = vtanh.pop %v5145
  %v5147 = vmul.f32 %v5142, %v5146
  %v5148 = vxor.u32 %v5120, 2147483648
  %v5149 = vmul.f32 %v5148, 1.442695
  %v5150 = vpow.pop %v5149
  %v5151 = vadd.f32 %v5150, 1.0
  %v5152 = vrcp.pop %v5151
  %v5153 = vmul.f32 1.0, %v5152
  %v5154 = vxor.u32 %v5121, 2147483648
  %v5155 = vmul.f32 %v5154, 1.442695
  %v5156 = vpow.pop %v5155
  %v5157 = vadd.f32 %v5156, 1.0
  %v5158 = vrcp.pop %v5157
  %v5159 = vmul.f32 1.0, %v5158
  %v5160 = vtanh.pop %v5122
  %v5161 = vxor.u32 %v5123, 2147483648
  %v5162 = vmul.f32 %v5161, 1.442695
  %v5163 = vpow.pop %v5162
  %v5164 = vadd.f32 %v5163, 1.0
  %v5165 = vrcp.pop %v5164
  %v5166 = vmul.f32 1.0, %v5165
  %v5167 = vmul.f32 %v5159, %v4939
  %v5168 = vmul.f32 %v5153, %v5160
  %v5169 = vadd.f32 %v5167, %v5168
  %v5170 = vtanh.pop %v5169
  %v5171 = vmul.f32 %v5166, %v5170
  %v5172 = vld [vmem:[%s2149] sm:$0xff]
  %v5173 = vld [vmem:[%s2149 + $0x8] sm:$0xff]
  %v5174 = vld [vmem:[%s2149 + $0x10] sm:$0xff]
  %v5175 = vld [vmem:[%s2149 + $0x18] sm:$0xff]
  %v5176 = vld [vmem:[%s2142 + $0x20] sm:$0xff]
  %v5177 = vld [vmem:[%s2142 + $0x28] sm:$0xff]
  %v5178 = vld [vmem:[%s2142 + $0x30] sm:$0xff]
  %v5179 = vld [vmem:[%s2142 + $0x38] sm:$0xff]
  %v5180 = vpack.c.bf16 %v5147, %v5147
  %5181 = vmatprep.subr.bf16.mxu0 %v1693
  %5182 = vmatpush1.bf16.msra.mxu0 %v1692
  %5183 = vmatprep.subr.bf16.mxu0 %v1689
  %5184 = vmatpush1.bf16.msra.mxu0 %v1688
  %5185 = vmatprep.subr.bf16.mxu0 %v1685
  %5186 = vmatpush1.bf16.msra.mxu0 %v1684
  %5187 = vmatprep.subr.bf16.mxu0 %v1681
  %5188 = vmatpush1.bf16.msra.mxu0 %v1680
  %5189 = vmatprep.subr.bf16.mxu0 %v1677
  %5190 = vmatpush1.bf16.msra.mxu0 %v1676
  %5191 = vmatprep.subr.bf16.mxu0 %v1673
  %5192 = vmatpush1.bf16.msra.mxu0 %v1672
  %5193 = vmatprep.subr.bf16.mxu0 %v1669
  %5194 = vmatpush1.bf16.msra.mxu0 %v1668
  %5195 = vmatprep.subr.bf16.mxu0 %v1665
  %5196 = vmatpush1.bf16.msra.mxu0 %v1664
  %5197 = vmatprep.subr.bf16.mxu0 0
  %5198 = vmatpush2.bf16.msra.mxu0 0
  %5199 = vmatprep.subr.bf16.mxu0 0
  %5200 = vmatpush2.bf16.msra.mxu0 0
  %5201 = vmatprep.subr.bf16.mxu0 0
  %5202 = vmatpush2.bf16.msra.mxu0 0
  %5203 = vmatprep.subr.bf16.mxu0 0
  %5204 = vmatpush2.bf16.msra.mxu0 0
  %5205 = vmatprep.subr.bf16.mxu0 0
  %5206 = vmatpush2.bf16.msra.mxu0 0
  %5207 = vmatprep.subr.bf16.mxu0 0
  %5208 = vmatpush2.bf16.msra.mxu0 0
  %5209 = vmatprep.subr.bf16.mxu0 0
  %5210 = vmatpush2.bf16.msra.mxu0 0
  %5211 = vmatprep.subr.bf16.mxu0 0
  %5212 = vmatpush2.bf16.msra.mxu0 0
  %5213 = vmatprep.mubr.bf16.mxu0 0
  %5214 = vmatmul.mubr.bf16.gmra.mxu0 %v5180
  %v5215 = vpop.f32.mrf.mxu0
  %v5216 = vadd.f32 0.0, %v5215
  %v5217 = vpop.f32.mrf.mxu0
  %v5218 = vadd.f32 0.0, %v5217
  %v5219 = vpop.f32.mrf.mxu0
  %v5220 = vpop.f32.mrf.mxu0
  %5221 = vdwg.mxu0
  %5222 = vmatprep.subr.bf16.mxu0 %v1695
  %5223 = vmatpush1.bf16.msra.mxu0 %v1694
  %5224 = vmatprep.subr.bf16.mxu0 %v1691
  %5225 = vmatpush1.bf16.msra.mxu0 %v1690
  %5226 = vmatprep.subr.bf16.mxu0 %v1687
  %5227 = vmatpush1.bf16.msra.mxu0 %v1686
  %5228 = vmatprep.subr.bf16.mxu0 %v1683
  %5229 = vmatpush1.bf16.msra.mxu0 %v1682
  %5230 = vmatprep.subr.bf16.mxu0 %v1679
  %5231 = vmatpush1.bf16.msra.mxu0 %v1678
  %5232 = vmatprep.subr.bf16.mxu0 %v1675
  %5233 = vmatpush1.bf16.msra.mxu0 %v1674
  %5234 = vmatprep.subr.bf16.mxu0 %v1671
  %5235 = vmatpush1.bf16.msra.mxu0 %v1670
  %5236 = vmatprep.subr.bf16.mxu0 %v1667
  %5237 = vmatpush1.bf16.msra.mxu0 %v1666
  %5238 = vmatprep.subr.bf16.mxu0 0
  %5239 = vmatpush2.bf16.msra.mxu0 0
  %5240 = vmatprep.subr.bf16.mxu0 0
  %5241 = vmatpush2.bf16.msra.mxu0 0
  %5242 = vmatprep.subr.bf16.mxu0 0
  %5243 = vmatpush2.bf16.msra.mxu0 0
  %5244 = vmatprep.subr.bf16.mxu0 0
  %5245 = vmatpush2.bf16.msra.mxu0 0
  %5246 = vmatprep.subr.bf16.mxu0 0
  %5247 = vmatpush2.bf16.msra.mxu0 0
  %5248 = vmatprep.subr.bf16.mxu0 0
  %5249 = vmatpush2.bf16.msra.mxu0 0
  %5250 = vmatprep.subr.bf16.mxu0 0
  %5251 = vmatpush2.bf16.msra.mxu0 0
  %5252 = vmatprep.subr.bf16.mxu0 0
  %5253 = vmatpush2.bf16.msra.mxu0 0
  %5254 = vmatprep.mubr.bf16.mxu0 0
  %5255 = vmatmul.mubr.bf16.gmra.mxu0 %v5180
  %v5256 = vpop.f32.mrf.mxu0
  %v5257 = vadd.f32 0.0, %v5256
  %v5258 = vpop.f32.mrf.mxu0
  %v5259 = vadd.f32 0.0, %v5258
  %v5260 = vpop.f32.mrf.mxu0
  %v5261 = vpop.f32.mrf.mxu0
  %5262 = vdwg.mxu0
  %v5263 = vadd.f32 %v5172, %v5216
  %v5264 = vadd.f32 %v5173, %v5218
  %v5265 = vadd.f32 %v5174, %v5257
  %v5266 = vadd.f32 %v5175, %v5259
  %v5267 = vpack.c.bf16 %v5171, %v5171
  %5268 = vmatprep.subr.bf16.mxu0 %v1971
  %5269 = vmatpush1.bf16.msra.mxu0 %v1970
  %5270 = vmatprep.subr.bf16.mxu0 %v1967
  %5271 = vmatpush1.bf16.msra.mxu0 %v1966
  %5272 = vmatprep.subr.bf16.mxu0 %v1963
  %5273 = vmatpush1.bf16.msra.mxu0 %v1962
  %5274 = vmatprep.subr.bf16.mxu0 %v1959
  %5275 = vmatpush1.bf16.msra.mxu0 %v1958
  %5276 = vmatprep.subr.bf16.mxu0 %v1955
  %5277 = vmatpush1.bf16.msra.mxu0 %v1954
  %5278 = vmatprep.subr.bf16.mxu0 %v1951
  %5279 = vmatpush1.bf16.msra.mxu0 %v1950
  %5280 = vmatprep.subr.bf16.mxu0 %v1947
  %5281 = vmatpush1.bf16.msra.mxu0 %v1946
  %5282 = vmatprep.subr.bf16.mxu0 %v1943
  %5283 = vmatpush1.bf16.msra.mxu0 %v1942
  %5284 = vmatprep.subr.bf16.mxu0 0
  %5285 = vmatpush2.bf16.msra.mxu0 0
  %5286 = vmatprep.subr.bf16.mxu0 0
  %5287 = vmatpush2.bf16.msra.mxu0 0
  %5288 = vmatprep.subr.bf16.mxu0 0
  %5289 = vmatpush2.bf16.msra.mxu0 0
  %5290 = vmatprep.subr.bf16.mxu0 0
  %5291 = vmatpush2.bf16.msra.mxu0 0
  %5292 = vmatprep.subr.bf16.mxu0 0
  %5293 = vmatpush2.bf16.msra.mxu0 0
  %5294 = vmatprep.subr.bf16.mxu0 0
  %5295 = vmatpush2.bf16.msra.mxu0 0
  %5296 = vmatprep.subr.bf16.mxu0 0
  %5297 = vmatpush2.bf16.msra.mxu0 0
  %5298 = vmatprep.subr.bf16.mxu0 0
  %5299 = vmatpush2.bf16.msra.mxu0 0
  %5300 = vmatprep.mubr.bf16.mxu0 0
  %5301 = vmatmul.mubr.bf16.gmra.mxu0 %v5267
  %v5302 = vpop.f32.mrf.mxu0
  %v5303 = vadd.f32 0.0, %v5302
  %v5304 = vpop.f32.mrf.mxu0
  %v5305 = vadd.f32 0.0, %v5304
  %v5306 = vpop.f32.mrf.mxu0
  %v5307 = vpop.f32.mrf.mxu0
  %5308 = vdwg.mxu0
  %5309 = vmatprep.subr.bf16.mxu0 %v1973
  %5310 = vmatpush1.bf16.msra.mxu0 %v1972
  %5311 = vmatprep.subr.bf16.mxu0 %v1969
  %5312 = vmatpush1.bf16.msra.mxu0 %v1968
  %5313 = vmatprep.subr.bf16.mxu0 %v1965
  %5314 = vmatpush1.bf16.msra.mxu0 %v1964
  %5315 = vmatprep.subr.bf16.mxu0 %v1961
  %5316 = vmatpush1.bf16.msra.mxu0 %v1960
  %5317 = vmatprep.subr.bf16.mxu0 %v1957
  %5318 = vmatpush1.bf16.msra.mxu0 %v1956
  %5319 = vmatprep.subr.bf16.mxu0 %v1953
  %5320 = vmatpush1.bf16.msra.mxu0 %v1952
  %5321 = vmatprep.subr.bf16.mxu0 %v1949
  %5322 = vmatpush1.bf16.msra.mxu0 %v1948
  %5323 = vmatprep.subr.bf16.mxu0 %v1945
  %5324 = vmatpush1.bf16.msra.mxu0 %v1944
  %5325 = vmatprep.subr.bf16.mxu0 0
  %5326 = vmatpush2.bf16.msra.mxu0 0
  %5327 = vmatprep.subr.bf16.mxu0 0
  %5328 = vmatpush2.bf16.msra.mxu0 0
  %5329 = vmatprep.subr.bf16.mxu0 0
  %5330 = vmatpush2.bf16.msra.mxu0 0
  %5331 = vmatprep.subr.bf16.mxu0 0
  %5332 = vmatpush2.bf16.msra.mxu0 0
  %5333 = vmatprep.subr.bf16.mxu0 0
  %5334 = vmatpush2.bf16.msra.mxu0 0
  %5335 = vmatprep.subr.bf16.mxu0 0
  %5336 = vmatpush2.bf16.msra.mxu0 0
  %5337 = vmatprep.subr.bf16.mxu0 0
  %5338 = vmatpush2.bf16.msra.mxu0 0
  %5339 = vmatprep.subr.bf16.mxu0 0
  %5340 = vmatpush2.bf16.msra.mxu0 0
  %5341 = vmatprep.mubr.bf16.mxu0 0
  %5342 = vmatmul.mubr.bf16.gmra.mxu0 %v5267
  %v5343 = vpop.f32.mrf.mxu0
  %v5344 = vadd.f32 0.0, %v5343
  %v5345 = vpop.f32.mrf.mxu0
  %v5346 = vadd.f32 0.0, %v5345
  %v5347 = vpop.f32.mrf.mxu0
  %v5348 = vpop.f32.mrf.mxu0
  %5349 = vdwg.mxu0
  %v5350 = vadd.f32 %v5176, %v5303
  %v5351 = vadd.f32 %v5177, %v5305
  %v5352 = vadd.f32 %v5178, %v5344
  %v5353 = vadd.f32 %v5179, %v5346
  %v5354 = vxor.u32 %v5263, 2147483648
  %v5355 = vmul.f32 %v5354, 1.442695
  %v5356 = vpow.pop %v5355
  %v5357 = vadd.f32 %v5356, 1.0
  %v5358 = vrcp.pop %v5357
  %v5359 = vmul.f32 1.0, %v5358
  %v5360 = vxor.u32 %v5264, 2147483648
  %v5361 = vmul.f32 %v5360, 1.442695
  %v5362 = vpow.pop %v5361
  %v5363 = vadd.f32 %v5362, 1.0
  %v5364 = vrcp.pop %v5363
  %v5365 = vmul.f32 1.0, %v5364
  %v5366 = vtanh.pop %v5265
  %v5367 = vxor.u32 %v5266, 2147483648
  %v5368 = vmul.f32 %v5367, 1.442695
  %v5369 = vpow.pop %v5368
  %v5370 = vadd.f32 %v5369, 1.0
  %v5371 = vrcp.pop %v5370
  %v5372 = vmul.f32 1.0, %v5371
  %v5373 = vmul.f32 %v5365, %v5145
  %v5374 = vmul.f32 %v5359, %v5366
  %v5375 = vadd.f32 %v5373, %v5374
  %v5376 = vtanh.pop %v5375
  %v5377 = vmul.f32 %v5372, %v5376
  %v5378 = vxor.u32 %v5350, 2147483648
  %v5379 = vmul.f32 %v5378, 1.442695
  %v5380 = vpow.pop %v5379
  %v5381 = vadd.f32 %v5380, 1.0
  %v5382 = vrcp.pop %v5381
  %v5383 = vmul.f32 1.0, %v5382
  %v5384 = vxor.u32 %v5351, 2147483648
  %v5385 = vmul.f32 %v5384, 1.442695
  %v5386 = vpow.pop %v5385
  %v5387 = vadd.f32 %v5386, 1.0
  %v5388 = vrcp.pop %v5387
  %v5389 = vmul.f32 1.0, %v5388
  %v5390 = vtanh.pop %v5352
  %v5391 = vxor.u32 %v5353, 2147483648
  %v5392 = vmul.f32 %v5391, 1.442695
  %v5393 = vpow.pop %v5392
  %v5394 = vadd.f32 %v5393, 1.0
  %v5395 = vrcp.pop %v5394
  %v5396 = vmul.f32 1.0, %v5395
  %v5397 = vmul.f32 %v5389, %v5169
  %v5398 = vmul.f32 %v5383, %v5390
  %v5399 = vadd.f32 %v5397, %v5398
  %v5400 = vtanh.pop %v5399
  %v5401 = vmul.f32 %v5396, %v5400
  %v5402 = vld [vmem:[%s1531] sm:$0xff]
  %v5403 = vld [vmem:[%s1531 + $0x8] sm:$0xff]
  %v5404 = vld [vmem:[%s1531 + $0x10] sm:$0xff]
  %v5405 = vld [vmem:[%s1531 + $0x18] sm:$0xff]
  %v5406 = vld [vmem:[%s1524 + $0x20] sm:$0xff]
  %v5407 = vld [vmem:[%s1524 + $0x28] sm:$0xff]
  %v5408 = vld [vmem:[%s1524 + $0x30] sm:$0xff]
  %v5409 = vld [vmem:[%s1524 + $0x38] sm:$0xff]
  %v5410 = vpack.c.bf16 %v5377, %v5377
  %5411 = vmatprep.subr.bf16.mxu0 %v1693
  %5412 = vmatpush1.bf16.msra.mxu0 %v1692
  %5413 = vmatprep.subr.bf16.mxu0 %v1689
  %5414 = vmatpush1.bf16.msra.mxu0 %v1688
  %5415 = vmatprep.subr.bf16.mxu0 %v1685
  %5416 = vmatpush1.bf16.msra.mxu0 %v1684
  %5417 = vmatprep.subr.bf16.mxu0 %v1681
  %5418 = vmatpush1.bf16.msra.mxu0 %v1680
  %5419 = vmatprep.subr.bf16.mxu0 %v1677
  %5420 = vmatpush1.bf16.msra.mxu0 %v1676
  %5421 = vmatprep.subr.bf16.mxu0 %v1673
  %5422 = vmatpush1.bf16.msra.mxu0 %v1672
  %5423 = vmatprep.subr.bf16.mxu0 %v1669
  %5424 = vmatpush1.bf16.msra.mxu0 %v1668
  %5425 = vmatprep.subr.bf16.mxu0 %v1665
  %5426 = vmatpush1.bf16.msra.mxu0 %v1664
  %5427 = vmatprep.subr.bf16.mxu0 0
  %5428 = vmatpush2.bf16.msra.mxu0 0
  %5429 = vmatprep.subr.bf16.mxu0 0
  %5430 = vmatpush2.bf16.msra.mxu0 0
  %5431 = vmatprep.subr.bf16.mxu0 0
  %5432 = vmatpush2.bf16.msra.mxu0 0
  %5433 = vmatprep.subr.bf16.mxu0 0
  %5434 = vmatpush2.bf16.msra.mxu0 0
  %5435 = vmatprep.subr.bf16.mxu0 0
  %5436 = vmatpush2.bf16.msra.mxu0 0
  %5437 = vmatprep.subr.bf16.mxu0 0
  %5438 = vmatpush2.bf16.msra.mxu0 0
  %5439 = vmatprep.subr.bf16.mxu0 0
  %5440 = vmatpush2.bf16.msra.mxu0 0
  %5441 = vmatprep.subr.bf16.mxu0 0
  %5442 = vmatpush2.bf16.msra.mxu0 0
  %5443 = vmatprep.mubr.bf16.mxu0 0
  %5444 = vmatmul.mubr.bf16.gmra.mxu0 %v5410
  %v5445 = vpop.f32.mrf.mxu0
  %v5446 = vadd.f32 0.0, %v5445
  %v5447 = vpop.f32.mrf.mxu0
  %v5448 = vadd.f32 0.0, %v5447
  %v5449 = vpop.f32.mrf.mxu0
  %v5450 = vpop.f32.mrf.mxu0
  %5451 = vdwg.mxu0
  %5452 = vmatprep.subr.bf16.mxu0 %v1695
  %5453 = vmatpush1.bf16.msra.mxu0 %v1694
  %5454 = vmatprep.subr.bf16.mxu0 %v1691
  %5455 = vmatpush1.bf16.msra.mxu0 %v1690
  %5456 = vmatprep.subr.bf16.mxu0 %v1687
  %5457 = vmatpush1.bf16.msra.mxu0 %v1686
  %5458 = vmatprep.subr.bf16.mxu0 %v1683
  %5459 = vmatpush1.bf16.msra.mxu0 %v1682
  %5460 = vmatprep.subr.bf16.mxu0 %v1679
  %5461 = vmatpush1.bf16.msra.mxu0 %v1678
  %5462 = vmatprep.subr.bf16.mxu0 %v1675
  %5463 = vmatpush1.bf16.msra.mxu0 %v1674
  %5464 = vmatprep.subr.bf16.mxu0 %v1671
  %5465 = vmatpush1.bf16.msra.mxu0 %v1670
  %5466 = vmatprep.subr.bf16.mxu0 %v1667
  %5467 = vmatpush1.bf16.msra.mxu0 %v1666
  %5468 = vmatprep.subr.bf16.mxu0 0
  %5469 = vmatpush2.bf16.msra.mxu0 0
  %5470 = vmatprep.subr.bf16.mxu0 0
  %5471 = vmatpush2.bf16.msra.mxu0 0
  %5472 = vmatprep.subr.bf16.mxu0 0
  %5473 = vmatpush2.bf16.msra.mxu0 0
  %5474 = vmatprep.subr.bf16.mxu0 0
  %5475 = vmatpush2.bf16.msra.mxu0 0
  %5476 = vmatprep.subr.bf16.mxu0 0
  %5477 = vmatpush2.bf16.msra.mxu0 0
  %5478 = vmatprep.subr.bf16.mxu0 0
  %5479 = vmatpush2.bf16.msra.mxu0 0
  %5480 = vmatprep.subr.bf16.mxu0 0
  %5481 = vmatpush2.bf16.msra.mxu0 0
  %5482 = vmatprep.subr.bf16.mxu0 0
  %5483 = vmatpush2.bf16.msra.mxu0 0
  %5484 = vmatprep.mubr.bf16.mxu0 0
  %5485 = vmatmul.mubr.bf16.gmra.mxu0 %v5410
  %v5486 = vpop.f32.mrf.mxu0
  %v5487 = vadd.f32 0.0, %v5486
  %v5488 = vpop.f32.mrf.mxu0
  %v5489 = vadd.f32 0.0, %v5488
  %v5490 = vpop.f32.mrf.mxu0
  %v5491 = vpop.f32.mrf.mxu0
  %5492 = vdwg.mxu0
  %v5493 = vadd.f32 %v5402, %v5446
  %v5494 = vadd.f32 %v5403, %v5448
  %v5495 = vadd.f32 %v5404, %v5487
  %v5496 = vadd.f32 %v5405, %v5489
  %v5497 = vpack.c.bf16 %v5401, %v5401
  %5498 = vmatprep.subr.bf16.mxu0 %v1971
  %5499 = vmatpush1.bf16.msra.mxu0 %v1970
  %5500 = vmatprep.subr.bf16.mxu0 %v1967
  %5501 = vmatpush1.bf16.msra.mxu0 %v1966
  %5502 = vmatprep.subr.bf16.mxu0 %v1963
  %5503 = vmatpush1.bf16.msra.mxu0 %v1962
  %5504 = vmatprep.subr.bf16.mxu0 %v1959
  %5505 = vmatpush1.bf16.msra.mxu0 %v1958
  %5506 = vmatprep.subr.bf16.mxu0 %v1955
  %5507 = vmatpush1.bf16.msra.mxu0 %v1954
  %5508 = vmatprep.subr.bf16.mxu0 %v1951
  %5509 = vmatpush1.bf16.msra.mxu0 %v1950
  %5510 = vmatprep.subr.bf16.mxu0 %v1947
  %5511 = vmatpush1.bf16.msra.mxu0 %v1946
  %5512 = vmatprep.subr.bf16.mxu0 %v1943
  %5513 = vmatpush1.bf16.msra.mxu0 %v1942
  %5514 = vmatprep.subr.bf16.mxu0 0
  %5515 = vmatpush2.bf16.msra.mxu0 0
  %5516 = vmatprep.subr.bf16.mxu0 0
  %5517 = vmatpush2.bf16.msra.mxu0 0
  %5518 = vmatprep.subr.bf16.mxu0 0
  %5519 = vmatpush2.bf16.msra.mxu0 0
  %5520 = vmatprep.subr.bf16.mxu0 0
  %5521 = vmatpush2.bf16.msra.mxu0 0
  %5522 = vmatprep.subr.bf16.mxu0 0
  %5523 = vmatpush2.bf16.msra.mxu0 0
  %5524 = vmatprep.subr.bf16.mxu0 0
  %5525 = vmatpush2.bf16.msra.mxu0 0
  %5526 = vmatprep.subr.bf16.mxu0 0
  %5527 = vmatpush2.bf16.msra.mxu0 0
  %5528 = vmatprep.subr.bf16.mxu0 0
  %5529 = vmatpush2.bf16.msra.mxu0 0
  %5530 = vmatprep.mubr.bf16.mxu0 0
  %5531 = vmatmul.mubr.bf16.gmra.mxu0 %v5497
  %v5532 = vpop.f32.mrf.mxu0
  %v5533 = vadd.f32 0.0, %v5532
  %v5534 = vpop.f32.mrf.mxu0
  %v5535 = vadd.f32 0.0, %v5534
  %v5536 = vpop.f32.mrf.mxu0
  %v5537 = vpop.f32.mrf.mxu0
  %5538 = vdwg.mxu0
  %5539 = vmatprep.subr.bf16.mxu0 %v1973
  %5540 = vmatpush1.bf16.msra.mxu0 %v1972
  %5541 = vmatprep.subr.bf16.mxu0 %v1969
  %5542 = vmatpush1.bf16.msra.mxu0 %v1968
  %5543 = vmatprep.subr.bf16.mxu0 %v1965
  %5544 = vmatpush1.bf16.msra.mxu0 %v1964
  %5545 = vmatprep.subr.bf16.mxu0 %v1961
  %5546 = vmatpush1.bf16.msra.mxu0 %v1960
  %5547 = vmatprep.subr.bf16.mxu0 %v1957
  %5548 = vmatpush1.bf16.msra.mxu0 %v1956
  %5549 = vmatprep.subr.bf16.mxu0 %v1953
  %5550 = vmatpush1.bf16.msra.mxu0 %v1952
  %5551 = vmatprep.subr.bf16.mxu0 %v1949
  %5552 = vmatpush1.bf16.msra.mxu0 %v1948
  %5553 = vmatprep.subr.bf16.mxu0 %v1945
  %5554 = vmatpush1.bf16.msra.mxu0 %v1944
  %5555 = vmatprep.subr.bf16.mxu0 0
  %5556 = vmatpush2.bf16.msra.mxu0 0
  %5557 = vmatprep.subr.bf16.mxu0 0
  %5558 = vmatpush2.bf16.msra.mxu0 0
  %5559 = vmatprep.subr.bf16.mxu0 0
  %5560 = vmatpush2.bf16.msra.mxu0 0
  %5561 = vmatprep.subr.bf16.mxu0 0
  %5562 = vmatpush2.bf16.msra.mxu0 0
  %5563 = vmatprep.subr.bf16.mxu0 0
  %5564 = vmatpush2.bf16.msra.mxu0 0
  %5565 = vmatprep.subr.bf16.mxu0 0
  %5566 = vmatpush2.bf16.msra.mxu0 0
  %5567 = vmatprep.subr.bf16.mxu0 0
  %5568 = vmatpush2.bf16.msra.mxu0 0
  %5569 = vmatprep.subr.bf16.mxu0 0
  %5570 = vmatpush2.bf16.msra.mxu0 0
  %5571 = vmatprep.mubr.bf16.mxu0 0
  %5572 = vmatmul.mubr.bf16.gmra.mxu0 %v5497
  %v5573 = vpop.f32.mrf.mxu0
  %v5574 = vadd.f32 0.0, %v5573
  %v5575 = vpop.f32.mrf.mxu0
  %v5576 = vadd.f32 0.0, %v5575
  %v5577 = vpop.f32.mrf.mxu0
  %v5578 = vpop.f32.mrf.mxu0
  %5579 = vdwg.mxu0
  %v5580 = vadd.f32 %v5406, %v5533
  %v5581 = vadd.f32 %v5407, %v5535
  %v5582 = vadd.f32 %v5408, %v5574
  %v5583 = vadd.f32 %v5409, %v5576
  %v5584 = vxor.u32 %v5493, 2147483648
  %v5585 = vmul.f32 %v5584, 1.442695
  %v5586 = vpow.pop %v5585
  %v5587 = vadd.f32 %v5586, 1.0
  %v5588 = vrcp.pop %v5587
  %v5589 = vmul.f32 1.0, %v5588
  %v5590 = vxor.u32 %v5494, 2147483648
  %v5591 = vmul.f32 %v5590, 1.442695
  %v5592 = vpow.pop %v5591
  %v5593 = vadd.f32 %v5592, 1.0
  %v5594 = vrcp.pop %v5593
  %v5595 = vmul.f32 1.0, %v5594
  %v5596 = vtanh.pop %v5495
  %v5597 = vxor.u32 %v5496, 2147483648
  %v5598 = vmul.f32 %v5597, 1.442695
  %v5599 = vpow.pop %v5598
  %v5600 = vadd.f32 %v5599, 1.0
  %v5601 = vrcp.pop %v5600
  %v5602 = vmul.f32 1.0, %v5601
  %v5603 = vmul.f32 %v5595, %v5375
  %v5604 = vmul.f32 %v5589, %v5596
  %v5605 = vadd.f32 %v5603, %v5604
  %v5606 = vtanh.pop %v5605
  %v5607 = vmul.f32 %v5602, %v5606
  %v5608 = vxor.u32 %v5580, 2147483648
  %v5609 = vmul.f32 %v5608, 1.442695
  %v5610 = vpow.pop %v5609
  %v5611 = vadd.f32 %v5610, 1.0
  %v5612 = vrcp.pop %v5611
  %v5613 = vmul.f32 1.0, %v5612
  %v5614 = vxor.u32 %v5581, 2147483648
  %v5615 = vmul.f32 %v5614, 1.442695
  %v5616 = vpow.pop %v5615
  %v5617 = vadd.f32 %v5616, 1.0
  %v5618 = vrcp.pop %v5617
  %v5619 = vmul.f32 1.0, %v5618
  %v5620 = vtanh.pop %v5582
  %v5621 = vxor.u32 %v5583, 2147483648
  %v5622 = vmul.f32 %v5621, 1.442695
  %v5623 = vpow.pop %v5622
  %v5624 = vadd.f32 %v5623, 1.0
  %v5625 = vrcp.pop %v5624
  %v5626 = vmul.f32 1.0, %v5625
  %v5627 = vmul.f32 %v5619, %v5399
  %v5628 = vmul.f32 %v5613, %v5620
  %v5629 = vadd.f32 %v5627, %v5628
  %v5630 = vtanh.pop %v5629
  %v5631 = vmul.f32 %v5626, %v5630
  %v5632 = vld [vmem:[%s5] sm:$0xff]
  %v5633 = vld [vmem:[%s5 + $0x8] sm:$0xff]
  %v5634 = vld [vmem:[%s5 + $0x10] sm:$0xff]
  %v5635 = vld [vmem:[%s5 + $0x18] sm:$0xff]
  %v5636 = vld [vmem:[%s5 + $0x20] sm:$0xff]
  %v5637 = vld [vmem:[%s5 + $0x28] sm:$0xff]
  %v5638 = vld [vmem:[%s5 + $0x30] sm:$0xff]
  %v5639 = vld [vmem:[%s5 + $0x38] sm:$0xff]
  %v5640 = vld [vmem:[%s5 + $0x40] sm:$0xff]
  %v5641 = vld [vmem:[%s5 + $0x48] sm:$0xff]
  %v5642 = vld [vmem:[%s5 + $0x50] sm:$0xff]
  %v5643 = vld [vmem:[%s5 + $0x58] sm:$0xff]
  %v5644 = vld [vmem:[%s5 + $0x60] sm:$0xff]
  %v5645 = vld [vmem:[%s5 + $0x68] sm:$0xff]
  %v5646 = vld [vmem:[%s5 + $0x70] sm:$0xff]
  %v5647 = vld [vmem:[%s5 + $0x78] sm:$0xff]
  %v5648 = vld [vmem:[%s6] sm:$0xff]
  %v5649 = vld [vmem:[%s6 + $0x8] sm:$0xff]
  %v5650 = vld [vmem:[%s6 + $0x10] sm:$0xff]
  %v5651 = vld [vmem:[%s6 + $0x18] sm:$0xff]
  %v5652 = vld [vmem:[%s6 + $0x20] sm:$0xff]
  %v5653 = vld [vmem:[%s6 + $0x28] sm:$0xff]
  %v5654 = vld [vmem:[%s6 + $0x30] sm:$0xff]
  %v5655 = vld [vmem:[%s6 + $0x38] sm:$0xff]
  %v5656 = vld [vmem:[%s6 + $0x40] sm:$0xff]
  %v5657 = vld [vmem:[%s6 + $0x48] sm:$0xff]
  %v5658 = vld [vmem:[%s6 + $0x50] sm:$0xff]
  %v5659 = vld [vmem:[%s6 + $0x58] sm:$0xff]
  %v5660 = vld [vmem:[%s6 + $0x60] sm:$0xff]
  %v5661 = vld [vmem:[%s6 + $0x68] sm:$0xff]
  %v5662 = vld [vmem:[%s6 + $0x70] sm:$0xff]
  %v5663 = vld [vmem:[%s6 + $0x78] sm:$0xff]
  %5664 = vmatprep.subr.mxu0 0.0
  %5665 = vmatpush1.msra.mxu0 %v5663
  %5666 = vmatprep.subr.mxu0 0.0
  %5667 = vmatpush1.msra.mxu0 %v5662
  %5668 = vmatprep.subr.mxu0 0.0
  %5669 = vmatpush1.msra.mxu0 %v5661
  %5670 = vmatprep.subr.mxu0 0.0
  %5671 = vmatpush1.msra.mxu0 %v5660
  %5672 = vmatprep.subr.mxu0 0.0
  %5673 = vmatpush1.msra.mxu0 %v5659
  %5674 = vmatprep.subr.mxu0 0.0
  %5675 = vmatpush1.msra.mxu0 %v5658
  %5676 = vmatprep.subr.mxu0 0.0
  %5677 = vmatpush1.msra.mxu0 %v5657
  %5678 = vmatprep.subr.mxu0 0.0
  %5679 = vmatpush1.msra.mxu0 %v5656
  %5680 = vmatprep.subr.mxu0 0.0
  %5681 = vmatpush1.msra.mxu0 %v5655
  %5682 = vmatprep.subr.mxu0 0.0
  %5683 = vmatpush1.msra.mxu0 %v5654
  %5684 = vmatprep.subr.mxu0 0.0
  %5685 = vmatpush1.msra.mxu0 %v5653
  %5686 = vmatprep.subr.mxu0 0.0
  %5687 = vmatpush1.msra.mxu0 %v5652
  %5688 = vmatprep.subr.mxu0 0.0
  %5689 = vmatpush1.msra.mxu0 %v5651
  %5690 = vmatprep.subr.mxu0 0.0
  %5691 = vmatpush1.msra.mxu0 %v5650
  %5692 = vmatprep.subr.mxu0 0.0
  %5693 = vmatpush1.msra.mxu0 %v5649
  %5694 = vmatprep.subr.mxu0 0.0
  %5695 = vmatpush1.msra.mxu0 %v5648
  %5696 = vmatprep.subr.mxu0 0.0
  %5697 = vmatpush2.msra.mxu0 0.0
  %5698 = vmatprep.subr.mxu0 0.0
  %5699 = vmatpush2.msra.mxu0 0.0
  %5700 = vmatprep.subr.mxu0 0.0
  %5701 = vmatpush2.msra.mxu0 0.0
  %5702 = vmatprep.subr.mxu0 0.0
  %5703 = vmatpush2.msra.mxu0 0.0
  %5704 = vmatprep.subr.mxu0 0.0
  %5705 = vmatpush2.msra.mxu0 0.0
  %5706 = vmatprep.subr.mxu0 0.0
  %5707 = vmatpush2.msra.mxu0 0.0
  %5708 = vmatprep.subr.mxu0 0.0
  %5709 = vmatpush2.msra.mxu0 0.0
  %5710 = vmatprep.subr.mxu0 0.0
  %5711 = vmatpush2.msra.mxu0 0.0
  %5712 = vmatprep.subr.mxu0 0.0
  %5713 = vmatpush2.msra.mxu0 0.0
  %5714 = vmatprep.subr.mxu0 0.0
  %5715 = vmatpush2.msra.mxu0 0.0
  %5716 = vmatprep.subr.mxu0 0.0
  %5717 = vmatpush2.msra.mxu0 0.0
  %5718 = vmatprep.subr.mxu0 0.0
  %5719 = vmatpush2.msra.mxu0 0.0
  %5720 = vmatprep.subr.mxu0 0.0
  %5721 = vmatpush2.msra.mxu0 0.0
  %5722 = vmatprep.subr.mxu0 0.0
  %5723 = vmatpush2.msra.mxu0 0.0
  %5724 = vmatprep.subr.mxu0 0.0
  %5725 = vmatpush2.msra.mxu0 0.0
  %5726 = vmatprep.subr.mxu0 0.0
  %5727 = vmatpush2.msra.mxu0 0.0
  %5728 = vmatprep.mubr.f32.mxu0 0.0
  %5729 = vmatmul.mubr.f32.gmra.mxu0 %v5631
  %v5730 = vpop.f32.mrf.mxu0
  %v5731 = vadd.f32 0.0, %v5730
  %v5732 = vpop.f32.mrf.mxu0
  %5733 = vdwg.mxu0
  %5734 = vmatprep.subr.mxu0 0.0
  %5735 = vmatpush1.msra.mxu0 %v5647
  %5736 = vmatprep.subr.mxu0 0.0
  %5737 = vmatpush1.msra.mxu0 %v5646
  %5738 = vmatprep.subr.mxu0 0.0
  %5739 = vmatpush1.msra.mxu0 %v5645
  %5740 = vmatprep.subr.mxu0 0.0
  %5741 = vmatpush1.msra.mxu0 %v5644
  %5742 = vmatprep.subr.mxu0 0.0
  %5743 = vmatpush1.msra.mxu0 %v5643
  %5744 = vmatprep.subr.mxu0 0.0
  %5745 = vmatpush1.msra.mxu0 %v5642
  %5746 = vmatprep.subr.mxu0 0.0
  %5747 = vmatpush1.msra.mxu0 %v5641
  %5748 = vmatprep.subr.mxu0 0.0
  %5749 = vmatpush1.msra.mxu0 %v5640
  %5750 = vmatprep.subr.mxu0 0.0
  %5751 = vmatpush1.msra.mxu0 %v5639
  %5752 = vmatprep.subr.mxu0 0.0
  %5753 = vmatpush1.msra.mxu0 %v5638
  %5754 = vmatprep.subr.mxu0 0.0
  %5755 = vmatpush1.msra.mxu0 %v5637
  %5756 = vmatprep.subr.mxu0 0.0
  %5757 = vmatpush1.msra.mxu0 %v5636
  %5758 = vmatprep.subr.mxu0 0.0
  %5759 = vmatpush1.msra.mxu0 %v5635
  %5760 = vmatprep.subr.mxu0 0.0
  %5761 = vmatpush1.msra.mxu0 %v5634
  %5762 = vmatprep.subr.mxu0 0.0
  %5763 = vmatpush1.msra.mxu0 %v5633
  %5764 = vmatprep.subr.mxu0 0.0
  %5765 = vmatpush1.msra.mxu0 %v5632
  %5766 = vmatprep.subr.mxu0 0.0
  %5767 = vmatpush2.msra.mxu0 0.0
  %5768 = vmatprep.subr.mxu0 0.0
  %5769 = vmatpush2.msra.mxu0 0.0
  %5770 = vmatprep.subr.mxu0 0.0
  %5771 = vmatpush2.msra.mxu0 0.0
  %5772 = vmatprep.subr.mxu0 0.0
  %5773 = vmatpush2.msra.mxu0 0.0
  %5774 = vmatprep.subr.mxu0 0.0
  %5775 = vmatpush2.msra.mxu0 0.0
  %5776 = vmatprep.subr.mxu0 0.0
  %5777 = vmatpush2.msra.mxu0 0.0
  %5778 = vmatprep.subr.mxu0 0.0
  %5779 = vmatpush2.msra.mxu0 0.0
  %5780 = vmatprep.subr.mxu0 0.0
  %5781 = vmatpush2.msra.mxu0 0.0
  %5782 = vmatprep.subr.mxu0 0.0
  %5783 = vmatpush2.msra.mxu0 0.0
  %5784 = vmatprep.subr.mxu0 0.0
  %5785 = vmatpush2.msra.mxu0 0.0
  %5786 = vmatprep.subr.mxu0 0.0
  %5787 = vmatpush2.msra.mxu0 0.0
  %5788 = vmatprep.subr.mxu0 0.0
  %5789 = vmatpush2.msra.mxu0 0.0
  %5790 = vmatprep.subr.mxu0 0.0
  %5791 = vmatpush2.msra.mxu0 0.0
  %5792 = vmatprep.subr.mxu0 0.0
  %5793 = vmatpush2.msra.mxu0 0.0
  %5794 = vmatprep.subr.mxu0 0.0
  %5795 = vmatpush2.msra.mxu0 0.0
  %5796 = vmatprep.subr.mxu0 0.0
  %5797 = vmatpush2.msra.mxu0 0.0
  %5798 = vmatprep.mubr.f32.mxu0 0.0
  %5799 = vmatmul.mubr.f32.gmra.mxu0 %v5607
  %v5800 = vpop.f32.mrf.mxu0
  %v5801 = vadd.f32 %v5731, %v5800
  %v5802 = vpop.f32.mrf.mxu0
  %5803 = vdwg.mxu0
  %v5804 = vld [vmem:[%s7] sm:$0x1]
  %v5806 = vlaneseq
  %v5807 = vshrl.u32 %v5806, 7
  %v5808 = vsub.s32 0, %v5807
  %v5809 = vrot.slane %v5804, %v5808
  %v5811 = vadd.f32 %v5801, %v5809
  %v5812 = vmax.f32 %v5811, 0.0
  %v5813 = vld [vmem:[%s8] sm:$0xff]
  %v5814 = vld [vmem:[%s8 + $0x8] sm:$0xff]
  %v5815 = vld [vmem:[%s8 + $0x10] sm:$0xff]
  %v5816 = vld [vmem:[%s8 + $0x18] sm:$0xff]
  %v5817 = vld [vmem:[%s8 + $0x20] sm:$0xff]
  %v5818 = vld [vmem:[%s8 + $0x28] sm:$0xff]
  %v5819 = vld [vmem:[%s8 + $0x30] sm:$0xff]
  %v5820 = vld [vmem:[%s8 + $0x38] sm:$0xff]
  %v5821 = vld [vmem:[%s9] sm:$0x1]
  %v5823 = vlaneseq
  %v5824 = vshrl.u32 %v5823, 7
  %v5825 = vsub.s32 0, %v5824
  %v5826 = vrot.slane %v5821, %v5825
  %vm5828 = vcmask 523264
  %v5830 = vsel %vm5828, %v5812, 0
  %5832 = vmatprep.subr.mxu0 0.0
  %5833 = vmatpush1.msra.mxu0 0.0
  %5834 = vmatprep.subr.mxu0 0.0
  %5835 = vmatpush1.msra.mxu0 0.0
  %5836 = vmatprep.subr.mxu0 0.0
  %5837 = vmatpush1.msra.mxu0 0.0
  %5838 = vmatprep.subr.mxu0 0.0
  %5839 = vmatpush1.msra.mxu0 0.0
  %5840 = vmatprep.subr.mxu0 0.0
  %5841 = vmatpush1.msra.mxu0 0.0
  %5842 = vmatprep.subr.mxu0 0.0
  %5843 = vmatpush1.msra.mxu0 0.0
  %5844 = vmatprep.subr.mxu0 0.0
  %5845 = vmatpush1.msra.mxu0 0.0
  %5846 = vmatprep.subr.mxu0 0.0
  %5847 = vmatpush1.msra.mxu0 0.0
  %5848 = vmatprep.subr.mxu0 0.0
  %5849 = vmatpush1.msra.mxu0 %v5820
  %5850 = vmatprep.subr.mxu0 0.0
  %5851 = vmatpush1.msra.mxu0 %v5819
  %5852 = vmatprep.subr.mxu0 0.0
  %5853 = vmatpush1.msra.mxu0 %v5818
  %5854 = vmatprep.subr.mxu0 0.0
  %5855 = vmatpush1.msra.mxu0 %v5817
  %5856 = vmatprep.subr.mxu0 0.0
  %5857 = vmatpush1.msra.mxu0 %v5816
  %5858 = vmatprep.subr.mxu0 0.0
  %5859 = vmatpush1.msra.mxu0 %v5815
  %5860 = vmatprep.subr.mxu0 0.0
  %5861 = vmatpush1.msra.mxu0 %v5814
  %5862 = vmatprep.subr.mxu0 0.0
  %5863 = vmatpush1.msra.mxu0 %v5813
  %5864 = vmatprep.subr.mxu0 0.0
  %5865 = vmatpush2.msra.mxu0 0.0
  %5866 = vmatprep.subr.mxu0 0.0
  %5867 = vmatpush2.msra.mxu0 0.0
  %5868 = vmatprep.subr.mxu0 0.0
  %5869 = vmatpush2.msra.mxu0 0.0
  %5870 = vmatprep.subr.mxu0 0.0
  %5871 = vmatpush2.msra.mxu0 0.0
  %5872 = vmatprep.subr.mxu0 0.0
  %5873 = vmatpush2.msra.mxu0 0.0
  %5874 = vmatprep.subr.mxu0 0.0
  %5875 = vmatpush2.msra.mxu0 0.0
  %5876 = vmatprep.subr.mxu0 0.0
  %5877 = vmatpush2.msra.mxu0 0.0
  %5878 = vmatprep.subr.mxu0 0.0
  %5879 = vmatpush2.msra.mxu0 0.0
  %5880 = vmatprep.subr.mxu0 0.0
  %5881 = vmatpush2.msra.mxu0 0.0
  %5882 = vmatprep.subr.mxu0 0.0
  %5883 = vmatpush2.msra.mxu0 0.0
  %5884 = vmatprep.subr.mxu0 0.0
  %5885 = vmatpush2.msra.mxu0 0.0
  %5886 = vmatprep.subr.mxu0 0.0
  %5887 = vmatpush2.msra.mxu0 0.0
  %5888 = vmatprep.subr.mxu0 0.0
  %5889 = vmatpush2.msra.mxu0 0.0
  %5890 = vmatprep.subr.mxu0 0.0
  %5891 = vmatpush2.msra.mxu0 0.0
  %5892 = vmatprep.subr.mxu0 0.0
  %5893 = vmatpush2.msra.mxu0 0.0
  %5894 = vmatprep.subr.mxu0 0.0
  %5895 = vmatpush2.msra.mxu0 0.0
  %5896 = vmatprep.mubr.f32.mxu0 0.0
  %5897 = vmatmul.mubr.f32.gmra.mxu0 %v5830
  %v5898 = vpop.f32.mrf.mxu0
  %v5899 = vadd.f32 %v5826, %v5898
  %v5900 = vpop.f32.mrf.mxu0
  %5901 = vdwg.mxu0
  %5902 = vst [vmem:[%s10] sm:$0xff] %v5899
  // Predicated region
  $region42: #{lstm_classifier_forward.1} parent=0 // pred_check
    _
  $region43: #{lstm_classifier_forward.1} parent=0 // pred_check_branch
    %5904 = sbr.rel (0) target = $region45
  $region44: #{lstm_classifier_forward.1} parent=0 // pred_region
    _
  $region45: #{lstm_classifier_forward.1} parent=0 // pred_fallthru
    _
  // Predicated region
  $region46: #{lstm_classifier_forward.1} parent=0 // pred_check
    _
  $region47: #{lstm_classifier_forward.1} parent=0 // pred_check_branch
    %5906 = sbr.rel (0) target = $region49
  $region48: #{lstm_classifier_forward.1} parent=0 // pred_region
    _
  $region49: #{lstm_classifier_forward.1} parent=0 // pred_fallthru
    _

</llo_original>
